<compile_context>
chip_gen: v7x
topology: tpu7x:2x2x1
jax: 0.10.0
libtpu: 0.0.40
codegen_flags: <defaults>
</compile_context>

<pallas_src>
import jax
import jax.numpy as jnp
from jax.experimental import pallas as pl
from jax.experimental.pallas import tpu as pltpu

IN_FEATURES = 25088            # 512 * 7 * 7 (VGG feature map, as in the module)
HIDDEN_UNITS = 256             # stand-in for args.hidden_units
HIDDEN_HALF = 128              # per-core column split of the hidden dim
N_HIDDEN_BLOCKS = HIDDEN_UNITS // HIDDEN_HALF   # = 2 ("parallel" axis)
NUM_CLASSES = 102
NUM_CLASSES_PAD = 128          # padded to lane width
K_TILE = 12544                 # 25088 / 2, multiple of 128 -> 2 reduction steps
NEG_BIG = -1e30                # finite "minus infinity" for padded classes


def _fc1_relu_kernel(x_ref, w1_ref, b1_ref, h_ref, acc_ref):
    """grid = (hidden_half [parallel], k_step [arbitrary]).

    Each (h, k) step accumulates x_tile(bf16) @ w1_tile(bf16) into an f32
    VMEM scratch; the last k step applies bias + ReLU and writes the
    128-column hidden half it owns.
    """
    k = pl.program_id(1)

    @pl.when(k == 0)
    def _():
        acc_ref[...] = jnp.zeros_like(acc_ref)

    acc_ref[...] += jnp.dot(
        x_ref[...].astype(jnp.bfloat16),
        w1_ref[...],
        preferred_element_type=jnp.float32,
    )

    @pl.when(k == pl.num_programs(1) - 1)
    def _():
        h_ref[...] = jnp.maximum(acc_ref[...] + b1_ref[...], 0.0)


def _fc3_logsoftmax_kernel(h_ref, w3_ref, b3_ref, out_ref):
    """Tiny epilogue: logits = h(bf16) @ w3(bf16) + b3; log_softmax over dim 1."""
    h = h_ref[...].astype(jnp.bfloat16)
    logits = (
        jnp.dot(h, w3_ref[...], preferred_element_type=jnp.float32)
        + b3_ref[...]
    )
    m = jnp.max(logits, axis=-1, keepdims=True)
    z = logits - m
    lse = jnp.log(jnp.sum(jnp.exp(z), axis=-1, keepdims=True))
    out_ref[...] = (z - lse).astype(out_ref.dtype)


def prepare_params(w1, b1, w3, b3):
    """One-time (init) param prep.

    w1: (25088, H) f32   -> (25088, H) bf16
    b1: (H,)             -> (1, H) f32
    w3: (H, 102)         -> (H, 128) bf16, zero-padded columns
    b3: (102,)           -> (1, 128) f32, padded columns = -1e30 (class mask)
    """
    w1_p = w1.astype(jnp.bfloat16)
    b1_p = b1.reshape(1, HIDDEN_UNITS).astype(jnp.float32)
    w3_p = (
        jnp.zeros((HIDDEN_UNITS, NUM_CLASSES_PAD), jnp.bfloat16)
        .at[:, :NUM_CLASSES]
        .set(w3.astype(jnp.bfloat16))
    )
    b3_p = (
        jnp.full((1, NUM_CLASSES_PAD), NEG_BIG, jnp.float32)
        .at[0, :NUM_CLASSES]
        .set(b3.astype(jnp.float32))
    )
    return w1_p, b1_p, w3_p, b3_p


@jax.jit
def classifier_forward(x, w1_p, b1_p, w3_p, b3_p):
    """x: (B, 25088) f32; params from prepare_params(). Returns (B, 102) f32."""
    batch = x.shape[0]
    # TODO(synk): no batch tiling path; very large batches would blow VMEM.
    assert batch <= 256, "add a batch grid axis for larger batches"

    n_k = IN_FEATURES // K_TILE  # = 2 reduction steps

    # ---- fc1 + ReLU: HBM-streaming matmul, hidden dim split across cores ----
    h = pl.pallas_call(
        _fc1_relu_kernel,
        out_shape=jax.ShapeDtypeStruct((batch, HIDDEN_UNITS), jnp.float32),
        grid_spec=pltpu.PrefetchScalarGridSpec(
            num_scalar_prefetch=0,
            grid=(N_HIDDEN_BLOCKS, n_k),
            in_specs=[
                pl.BlockSpec((batch, K_TILE), lambda h, k: (0, k)),        # x tile
                pl.BlockSpec((K_TILE, HIDDEN_HALF), lambda h, k: (k, h)),  # w1 tile
                pl.BlockSpec((1, HIDDEN_HALF), lambda h, k: (0, h)),       # b1 half
            ],
            out_specs=pl.BlockSpec((batch, HIDDEN_HALF), lambda h, k: (0, h)),
            scratch_shapes=[pltpu.VMEM((batch, HIDDEN_HALF), jnp.float32)],
        ),
        compiler_params=pltpu.CompilerParams(
            dimension_semantics=("parallel", "arbitrary"),
            vmem_limit_bytes=32 * 1024 * 1024,
        ),
    )(x, w1_p, b1_p)

    # ---- fc3 + log_softmax: tiny fused epilogue kernel ----
    out = pl.pallas_call(
        _fc3_logsoftmax_kernel,
        out_shape=jax.ShapeDtypeStruct((batch, NUM_CLASSES_PAD), jnp.float32),
        grid_spec=pltpu.PrefetchScalarGridSpec(
            num_scalar_prefetch=0,
            grid=(1,),
            in_specs=[
                pl.BlockSpec((batch, HIDDEN_UNITS), lambda i: (0, 0)),
                pl.BlockSpec((HIDDEN_UNITS, NUM_CLASSES_PAD), lambda i: (0, 0)),
                pl.BlockSpec((1, NUM_CLASSES_PAD), lambda i: (0, 0)),
            ],
            out_specs=pl.BlockSpec((batch, NUM_CLASSES_PAD), lambda i: (0, 0)),
        ),
        compiler_params=pltpu.CompilerParams(
            dimension_semantics=("arbitrary",),
        ),
    )(h, w3_p, b3_p)

    return out[:, :NUM_CLASSES]


def _reference_f32(x, w1, b1, w3, b3):
    h = jnp.maximum(x @ w1 + b1, 0.0)
    logits = h @ w3 + b3
    return jax.nn.log_softmax(logits, axis=1)


def _reference_bf16(x, w1, b1, w3, b3):
    """Matches the kernel's precision: bf16 matmul operands, f32 accumulation."""
    h = jnp.maximum(
        jnp.dot(
            x.astype(jnp.bfloat16),
            w1.astype(jnp.bfloat16),
            preferred_element_type=jnp.float32,
        )
        + b1,
        0.0,
    )
    logits = (
        jnp.dot(
            h.astype(jnp.bfloat16),
            w3.astype(jnp.bfloat16),
            preferred_element_type=jnp.float32,
        )
        + b3
    )
    return jax.nn.log_softmax(logits, axis=1)


if __name__ == "__main__":
    key = jax.random.PRNGKey(0)
    k_x, k_w1, k_b1, k_w3, k_b3 = jax.random.split(key, 5)

    batch = 2
    x = jax.random.normal(k_x, (batch, IN_FEATURES), dtype=jnp.float32)

    # Deterministic synthetic parameters (shapes from the module's __init__).
    w1 = jax.random.normal(k_w1, (IN_FEATURES, HIDDEN_UNITS), dtype=jnp.float32) * 0.01
    b1 = jax.random.normal(k_b1, (HIDDEN_UNITS,), dtype=jnp.float32) * 0.01
    w3 = jax.random.normal(k_w3, (HIDDEN_UNITS, NUM_CLASSES), dtype=jnp.float32) * 0.01
    b3 = jax.random.normal(k_b3, (NUM_CLASSES,), dtype=jnp.float32) * 0.01

    # Init-time param prep (hoisted out of the per-call forward).
    w1_p, b1_p, w3_p, b3_p = prepare_params(w1, b1, w3, b3)

    out = classifier_forward(x, w1_p, b1_p, w3_p, b3_p)
    out = jax.block_until_ready(out)

    assert out.shape == (batch, NUM_CLASSES)

    # Tight check vs a precision-matched (bf16-matmul) reference.
    ref_bf16 = _reference_bf16(x, w1, b1, w3, b3)
    assert jnp.allclose(out, ref_bf16, atol=2e-3, rtol=2e-3), "mismatch vs bf16 reference"

    # Loose check vs the pure-f32 PyTorch-equivalent reference.
    ref_f32 = _reference_f32(x, w1, b1, w3, b3)
    assert jnp.allclose(out, ref_f32, atol=3e-2, rtol=3e-2), "mismatch vs f32 reference"

    # log_softmax rows must (log-)normalize to ~0.
    assert jnp.allclose(jax.nn.logsumexp(out, axis=1), 0.0, atol=1e-4)

    print("KERNEL_OK")
</pallas_src>

<mosaic_0001>
module attributes {stable_mosaic.version = 11 : i64} {
  func.func @_fc3_logsoftmax_kernel(%arg0: i32, %arg1: memref<2x256xf32, #tpu.memory_space<vmem>>, %arg2: memref<256x128xbf16, #tpu.memory_space<vmem>>, %arg3: memref<1x128xf32, #tpu.memory_space<vmem>>, %arg4: memref<2x128xf32, #tpu.memory_space<vmem>>) attributes {dimension_semantics = [#tpu.dimension_semantics<arbitrary>], iteration_bounds = array<i64: 1>, scalar_prefetch = 0 : i64, scratch_operands = 0 : i64, tpu.core_type = #tpu.core_type<tc>, window_params = [{pipeline_mode = #tpu.pipeline_mode<synchronous>, transform_indices = @transform_0, window_bounds = array<i64: 2, 256>}, {pipeline_mode = #tpu.pipeline_mode<synchronous>, transform_indices = @transform_1, window_bounds = array<i64: 256, 128>}, {pipeline_mode = #tpu.pipeline_mode<synchronous>, transform_indices = @transform_2, window_bounds = array<i64: 1, 128>}, {pipeline_mode = #tpu.pipeline_mode<synchronous>, transform_indices = @transform_3, window_bounds = array<i64: 2, 128>}]} {
    %c0 = arith.constant 0 : index
    %c0_0 = arith.constant 0 : index
    %0 = vector.load %arg1[%c0, %c0_0] : memref<2x256xf32, #tpu.memory_space<vmem>>, vector<2x256xf32>
    %1 = arith.truncf %0 : vector<2x256xf32> to vector<2x256xbf16>
    %c0_1 = arith.constant 0 : index
    %c0_2 = arith.constant 0 : index
    %2 = vector.load %arg2[%c0_1, %c0_2] : memref<256x128xbf16, #tpu.memory_space<vmem>>, vector<256x128xbf16>
    %cst = arith.constant dense<0.000000e+00> : vector<2x128xf32>
    %3 = tpu.matmul %1, %2, %cst {dimension_numbers = #tpu.dot_dimension_numbers<[1], [0], [0], [1], [0, 0, 1, 1], [], []>} : vector<2x256xbf16>, vector<256x128xbf16>, vector<2x128xf32> -> vector<2x128xf32>
    %c0_3 = arith.constant 0 : index
    %c0_4 = arith.constant 0 : index
    %4 = vector.load %arg3[%c0_3, %c0_4] : memref<1x128xf32, #tpu.memory_space<vmem>>, vector<1x128xf32>
    %5 = vector.broadcast %4 : vector<1x128xf32> to vector<2x128xf32>
    %6 = arith.addf %3, %5 : vector<2x128xf32>
    %cst_5 = arith.constant dense<0xFF800000> : vector<2xf32>
    %7 = vector.multi_reduction <maximumf>, %6, %cst_5 [1] : vector<2x128xf32> to vector<2xf32>
    %8 = vector.shape_cast %7 : vector<2xf32> to vector<2x1xf32>
    %9 = vector.broadcast %8 : vector<2x1xf32> to vector<2x128xf32>
    %10 = arith.subf %6, %9 : vector<2x128xf32>
    %11 = math.exp %10 : vector<2x128xf32>
    %cst_6 = arith.constant dense<0.000000e+00> : vector<2xf32>
    %12 = vector.multi_reduction <add>, %11, %cst_6 [1] : vector<2x128xf32> to vector<2xf32>
    %13 = vector.shape_cast %12 : vector<2xf32> to vector<2x1xf32>
    %14 = math.log %13 : vector<2x1xf32>
    %15 = vector.broadcast %14 : vector<2x1xf32> to vector<2x128xf32>
    %16 = arith.subf %10, %15 : vector<2x128xf32>
    %c0_7 = arith.constant 0 : index
    %c0_8 = arith.constant 0 : index
    %17 = vector.load %arg4[%c0_7, %c0_8] : memref<2x128xf32, #tpu.memory_space<vmem>>, vector<2x128xf32>
    tpu.vector_store %arg4[%c0_7, %c0_8], %16 {strides = array<i32>} : memref<2x128xf32, #tpu.memory_space<vmem>>, vector<2x128xf32>,
    return
  }
  func.func @transform_0(%arg0: i32) -> (i32, i32) {
    %c0_i32 = arith.constant 0 : i32
    %c0_i32_0 = arith.constant 0 : i32
    %c0_i32_1 = arith.constant 0 : i32
    return %c0_i32, %c0_i32_0 : i32, i32
  }
  func.func @transform_1(%arg0: i32) -> (i32, i32) {
    %c0_i32 = arith.constant 0 : i32
    %c0_i32_0 = arith.constant 0 : i32
    %c0_i32_1 = arith.constant 0 : i32
    return %c0_i32, %c0_i32_0 : i32, i32
  }
  func.func @transform_2(%arg0: i32) -> (i32, i32) {
    %c0_i32 = arith.constant 0 : i32
    %c0_i32_0 = arith.constant 0 : i32
    %c0_i32_1 = arith.constant 0 : i32
    return %c0_i32, %c0_i32_0 : i32, i32
  }
  func.func @transform_3(%arg0: i32) -> (i32, i32) {
    %c0_i32 = arith.constant 0 : i32
    %c0_i32_0 = arith.constant 0 : i32
    %c0_i32_1 = arith.constant 0 : i32
    return %c0_i32, %c0_i32_0 : i32, i32
  }
}

module attributes {stable_mosaic.version = 11 : i64} {
  func.func @_fc1_relu_kernel(%arg0: i32, %arg1: i32, %arg2: memref<2x12544xf32, #tpu.memory_space<vmem>>, %arg3: memref<12544x128xbf16, #tpu.memory_space<vmem>>, %arg4: memref<1x128xf32, #tpu.memory_space<vmem>>, %arg5: memref<2x128xf32, #tpu.memory_space<vmem>>, %arg6: memref<2x128xf32, #tpu.memory_space<vmem>>) attributes {dimension_semantics = [#tpu.dimension_semantics<parallel>, #tpu.dimension_semantics<arbitrary>], iteration_bounds = array<i64: 2, 2>, scalar_prefetch = 0 : i64, scratch_operands = 1 : i64, tpu.core_type = #tpu.core_type<tc>, window_params = [{transform_indices = @transform_0, window_bounds = array<i64: 2, 12544>}, {transform_indices = @transform_1, window_bounds = array<i64: 12544, 128>}, {transform_indices = @transform_2, window_bounds = array<i64: 1, 128>}, {transform_indices = @transform_3, window_bounds = array<i64: 2, 128>}]} {
    %c0_i32 = arith.constant 0 : i32
    %0 = arith.cmpi eq, %arg1, %c0_i32 : i32
    %1 = arith.extui %0 : i1 to i32
    %c0_i32_0 = arith.constant 0 : i32
    %2 = arith.cmpi ne, %1, %c0_i32_0 : i32
    scf.if %2 {
      %cst_9 = arith.constant 0.000000e+00 : f32
      %13 = vector.broadcast %cst_9 : f32 to vector<2x128xf32>
      %c0_10 = arith.constant 0 : index
      %c0_11 = arith.constant 0 : index
      %14 = vector.load %arg6[%c0_10, %c0_11] : memref<2x128xf32, #tpu.memory_space<vmem>>, vector<2x128xf32>
      tpu.vector_store %arg6[%c0_10, %c0_11], %13 {strides = array<i32>} : memref<2x128xf32, #tpu.memory_space<vmem>>, vector<2x128xf32>,
    } else {
    }
    %c0 = arith.constant 0 : index
    %c0_1 = arith.constant 0 : index
    %3 = vector.load %arg6[%c0, %c0_1] : memref<2x128xf32, #tpu.memory_space<vmem>>, vector<2x128xf32>
    %c0_2 = arith.constant 0 : index
    %c0_3 = arith.constant 0 : index
    %4 = vector.load %arg2[%c0_2, %c0_3] : memref<2x12544xf32, #tpu.memory_space<vmem>>, vector<2x12544xf32>
    %5 = arith.truncf %4 : vector<2x12544xf32> to vector<2x12544xbf16>
    %c0_4 = arith.constant 0 : index
    %c0_5 = arith.constant 0 : index
    %6 = vector.load %arg3[%c0_4, %c0_5] : memref<12544x128xbf16, #tpu.memory_space<vmem>>, vector<12544x128xbf16>
    %cst = arith.constant dense<0.000000e+00> : vector<2x128xf32>
    %7 = tpu.matmul %5, %6, %cst {dimension_numbers = #tpu.dot_dimension_numbers<[1], [0], [0], [1], [0, 0, 1, 1], [], []>} : vector<2x12544xbf16>, vector<12544x128xbf16>, vector<2x128xf32> -> vector<2x128xf32>
    %8 = arith.addf %3, %7 : vector<2x128xf32>
    %c0_6 = arith.constant 0 : index
    %c0_7 = arith.constant 0 : index
    %9 = vector.load %arg6[%c0_6, %c0_7] : memref<2x128xf32, #tpu.memory_space<vmem>>, vector<2x128xf32>
    tpu.vector_store %arg6[%c0_6, %c0_7], %8 {strides = array<i32>} : memref<2x128xf32, #tpu.memory_space<vmem>>, vector<2x128xf32>,
    %c1_i32 = arith.constant 1 : i32
    %10 = arith.cmpi eq, %arg1, %c1_i32 : i32
    %11 = arith.extui %10 : i1 to i32
    %c0_i32_8 = arith.constant 0 : i32
    %12 = arith.cmpi ne, %11, %c0_i32_8 : i32
    scf.if %12 {
      %c0_9 = arith.constant 0 : index
      %c0_10 = arith.constant 0 : index
      %13 = vector.load %arg6[%c0_9, %c0_10] : memref<2x128xf32, #tpu.memory_space<vmem>>, vector<2x128xf32>
      %c0_11 = arith.constant 0 : index
      %c0_12 = arith.constant 0 : index
      %14 = vector.load %arg4[%c0_11, %c0_12] : memref<1x128xf32, #tpu.memory_space<vmem>>, vector<1x128xf32>
      %15 = vector.broadcast %14 : vector<1x128xf32> to vector<2x128xf32>
      %16 = arith.addf %13, %15 : vector<2x128xf32>
      %cst_13 = arith.constant 0.000000e+00 : f32
      %17 = vector.broadcast %cst_13 : f32 to vector<2x128xf32>
      %18 = arith.maximumf %16, %17 : vector<2x128xf32>
      %c0_14 = arith.constant 0 : index
      %c0_15 = arith.constant 0 : index
      %19 = vector.load %arg5[%c0_14, %c0_15] : memref<2x128xf32, #tpu.memory_space<vmem>>, vector<2x128xf32>
      tpu.vector_store %arg5[%c0_14, %c0_15], %18 {strides = array<i32>} : memref<2x128xf32, #tpu.memory_space<vmem>>, vector<2x128xf32>,
    } else {
    }
    return
  }
  func.func @transform_0(%arg0: i32, %arg1: i32) -> (i32, i32) {
    %c0_i32 = arith.constant 0 : i32
    %c0_i32_0 = arith.constant 0 : i32
    return %c0_i32, %arg1 : i32, i32
  }
  func.func @transform_1(%arg0: i32, %arg1: i32) -> (i32, i32) {
    %c0_i32 = arith.constant 0 : i32
    return %arg1, %arg0 : i32, i32
  }
  func.func @transform_2(%arg0: i32, %arg1: i32) -> (i32, i32) {
    %c0_i32 = arith.constant 0 : i32
    %c0_i32_0 = arith.constant 0 : i32
    return %c0_i32, %arg0 : i32, i32
  }
  func.func @transform_3(%arg0: i32, %arg1: i32) -> (i32, i32) {
    %c0_i32 = arith.constant 0 : i32
    %c0_i32_0 = arith.constant 0 : i32
    return %c0_i32, %arg0 : i32, i32
  }
}

</mosaic_0001>

<llo_original>
// kernel: classifier_forward.3
$region0: #{classifier_forward.3}
  #allocation0 [shape = 'u32[]', space=smem, size = 0x4, offset = 0x4, fixed_abs, tag = 'smem constant byte address 0x4 - core index']
  #allocation1 [shape = 'u32[144,128]{1,0:T(1,128)}', space=vmem, size = 0x12000, scoped, tag = 'internal scratch']
  %s0 = inlined_call_operand.vmem [shape: f32[2,256], index: 0, kind: input, shape index: {}]
  %s1 = inlined_call_operand.vmem [shape: bf16[256,128], index: 1, kind: input, shape index: {}]
  %s2 = inlined_call_operand.vmem [shape: f32[1,128], index: 2, kind: input, shape index: {}]
  %s3 = inlined_call_operand.hbm [shape: f32[2,128], index: 3, kind: output, shape index: {}]
  %s4 = sld [smem:[#allocation0]]
  $region22: #{classifier_forward.3} parent=0
    _
  %s6 = ssub.s32 1, %s4
  %s7 = scalar_select 0, %s6, %s4
  $region1: #{classifier_forward.3} parent=0
    #allocation2 [shape = 'u8[1024]{0}', space=vmem, size = 0x400, scoped, tag = 'output window, operand 0, single buffered']
    #allocation3 [shape = 's32[1]{0}', space=sflag, size = 0x4, scoped, tag = 'scoped memory for classifier_forward.3']
    %8 = vsyncpa [#allocation3], 0
    // Predicated region
    $region2: #{classifier_forward.3} parent=1 // pred_check
      _
    $region3: #{classifier_forward.3} parent=1 // pred_check_branch
      %10 = sbr.rel (0) target = $region5
    $region4: #{classifier_forward.3} parent=1 // pred_region
      _
    $region5: #{classifier_forward.3} parent=1 // pred_fallthru
      _
    // Predicated region
    $region6: #{classifier_forward.3} parent=1 // pred_check
      _
    $region7: #{classifier_forward.3} parent=1 // pred_check_branch
      %12 = sbr.rel (0) target = $region9
    $region8: #{classifier_forward.3} parent=1 // pred_region
      _
    $region9: #{classifier_forward.3} parent=1 // pred_fallthru
      _
    // Predicated region
    $region10: #{classifier_forward.3} parent=1 // pred_check
      _
    $region11: #{classifier_forward.3} parent=1 // pred_check_branch
      %14 = sbr.rel (0) target = $region13
    $region12: #{classifier_forward.3} parent=1 // pred_region
      _
    $region13: #{classifier_forward.3} parent=1 // pred_fallthru
      _
    %v16 = vld [vmem:[%s0] sm:$0xf]
    %v19 = vunpack.c.l.s4 1983009808
    %v20 = vunpack.c.0.s8 %v19
    %v21 = vlaneseq
    %v22 = vshrl.u32 %v21, 7
    %v23 = vsub.s32 %v20, %v22
    %v24 = vrot.slane %v16, %v23
    %v25 = vcombine.high %v24, %v24
    %v28 = vpack.c.bf16 %v24, %v24
    %v29 = vpack.c.bf16 %v25, %v25
    %v30 = vld [vmem:[%s1] sm:$0xf]
    %v31 = vld [vmem:[%s1 + $0x4] sm:$0xf]
    %v32 = vld [vmem:[%s1 + $0x8] sm:$0xf]
    %v33 = vld [vmem:[%s1 + $0xc] sm:$0xf]
    %v34 = vld [vmem:[%s1 + $0x10] sm:$0xf]
    %v35 = vld [vmem:[%s1 + $0x14] sm:$0xf]
    %v36 = vld [vmem:[%s1 + $0x18] sm:$0xf]
    %v37 = vld [vmem:[%s1 + $0x1c] sm:$0xf]
    %v38 = vld [vmem:[%s1 + $0x20] sm:$0xf]
    %v39 = vld [vmem:[%s1 + $0x24] sm:$0xf]
    %v40 = vld [vmem:[%s1 + $0x28] sm:$0xf]
    %v41 = vld [vmem:[%s1 + $0x2c] sm:$0xf]
    %v42 = vld [vmem:[%s1 + $0x30] sm:$0xf]
    %v43 = vld [vmem:[%s1 + $0x34] sm:$0xf]
    %v44 = vld [vmem:[%s1 + $0x38] sm:$0xf]
    %v45 = vld [vmem:[%s1 + $0x3c] sm:$0xf]
    %v46 = vld [vmem:[%s1 + $0x40] sm:$0xf]
    %v47 = vld [vmem:[%s1 + $0x44] sm:$0xf]
    %v48 = vld [vmem:[%s1 + $0x48] sm:$0xf]
    %v49 = vld [vmem:[%s1 + $0x4c] sm:$0xf]
    %v50 = vld [vmem:[%s1 + $0x50] sm:$0xf]
    %v51 = vld [vmem:[%s1 + $0x54] sm:$0xf]
    %v52 = vld [vmem:[%s1 + $0x58] sm:$0xf]
    %v53 = vld [vmem:[%s1 + $0x5c] sm:$0xf]
    %v54 = vld [vmem:[%s1 + $0x60] sm:$0xf]
    %v55 = vld [vmem:[%s1 + $0x64] sm:$0xf]
    %v56 = vld [vmem:[%s1 + $0x68] sm:$0xf]
    %v57 = vld [vmem:[%s1 + $0x6c] sm:$0xf]
    %v58 = vld [vmem:[%s1 + $0x70] sm:$0xf]
    %v59 = vld [vmem:[%s1 + $0x74] sm:$0xf]
    %v60 = vld [vmem:[%s1 + $0x78] sm:$0xf]
    %v61 = vld [vmem:[%s1 + $0x7c] sm:$0xf]
    %v62 = vld [vmem:[%s2] sm:$0x1]
    %v64 = vlaneseq
    %v65 = vshrl.u32 %v64, 7
    %v66 = vsub.s32 0, %v65
    %v67 = vrot.slane %v62, %v66
    %v101 = vunpack.c.l.b16 %v30
    %v102 = vunpack.c.l.b16 %v31
    %v103 = vunpack.c.l.b16 %v32
    %v104 = vunpack.c.l.b16 %v33
    %v105 = vunpack.c.l.b16 %v34
    %v106 = vunpack.c.l.b16 %v35
    %v107 = vunpack.c.l.b16 %v36
    %v108 = vunpack.c.l.b16 %v37
    %v109 = vunpack.c.l.b16 %v38
    %v110 = vunpack.c.l.b16 %v39
    %v111 = vunpack.c.l.b16 %v40
    %v112 = vunpack.c.l.b16 %v41
    %v113 = vunpack.c.l.b16 %v42
    %v114 = vunpack.c.l.b16 %v43
    %v115 = vunpack.c.l.b16 %v44
    %v116 = vunpack.c.l.b16 %v45
    %v117 = vunpack.c.l.b16 %v46
    %v118 = vunpack.c.l.b16 %v47
    %v119 = vunpack.c.l.b16 %v48
    %v120 = vunpack.c.l.b16 %v49
    %v121 = vunpack.c.l.b16 %v50
    %v122 = vunpack.c.l.b16 %v51
    %v123 = vunpack.c.l.b16 %v52
    %v124 = vunpack.c.l.b16 %v53
    %v125 = vunpack.c.l.b16 %v54
    %v126 = vunpack.c.l.b16 %v55
    %v127 = vunpack.c.l.b16 %v56
    %v128 = vunpack.c.l.b16 %v57
    %v129 = vunpack.c.l.b16 %v58
    %v130 = vunpack.c.l.b16 %v59
    %v131 = vunpack.c.l.b16 %v60
    %v132 = vunpack.c.l.b16 %v61
    %v133 = vpack.c.b16 %v102, %v101
    %v134 = vpack.c.b16 %v104, %v103
    %v135 = vpack.c.b16 %v106, %v105
    %v136 = vpack.c.b16 %v108, %v107
    %v137 = vpack.c.b16 %v110, %v109
    %v138 = vpack.c.b16 %v112, %v111
    %v139 = vpack.c.b16 %v114, %v113
    %v140 = vpack.c.b16 %v116, %v115
    %v141 = vpack.c.b16 %v118, %v117
    %v142 = vpack.c.b16 %v120, %v119
    %v143 = vpack.c.b16 %v122, %v121
    %v144 = vpack.c.b16 %v124, %v123
    %v145 = vpack.c.b16 %v126, %v125
    %v146 = vpack.c.b16 %v128, %v127
    %v147 = vpack.c.b16 %v130, %v129
    %v148 = vpack.c.b16 %v132, %v131
    %165 = vmatprep.subr.bf16.mxu0 0
    %166 = vmatpush1.bf16.msra.mxu0 %v133
    %167 = vmatprep.subr.bf16.mxu0 0
    %168 = vmatpush1.bf16.msra.mxu0 %v134
    %169 = vmatprep.subr.bf16.mxu0 0
    %170 = vmatpush1.bf16.msra.mxu0 %v135
    %171 = vmatprep.subr.bf16.mxu0 0
    %172 = vmatpush1.bf16.msra.mxu0 %v136
    %173 = vmatprep.subr.bf16.mxu0 0
    %174 = vmatpush1.bf16.msra.mxu0 %v137
    %175 = vmatprep.subr.bf16.mxu0 0
    %176 = vmatpush1.bf16.msra.mxu0 %v138
    %177 = vmatprep.subr.bf16.mxu0 0
    %178 = vmatpush1.bf16.msra.mxu0 %v139
    %179 = vmatprep.subr.bf16.mxu0 0
    %180 = vmatpush1.bf16.msra.mxu0 %v140
    %181 = vmatprep.subr.bf16.mxu0 0
    %182 = vmatpush1.bf16.msra.mxu0 %v141
    %183 = vmatprep.subr.bf16.mxu0 0
    %184 = vmatpush1.bf16.msra.mxu0 %v142
    %185 = vmatprep.subr.bf16.mxu0 0
    %186 = vmatpush1.bf16.msra.mxu0 %v143
    %187 = vmatprep.subr.bf16.mxu0 0
    %188 = vmatpush1.bf16.msra.mxu0 %v144
    %189 = vmatprep.subr.bf16.mxu0 0
    %190 = vmatpush1.bf16.msra.mxu0 %v145
    %191 = vmatprep.subr.bf16.mxu0 0
    %192 = vmatpush1.bf16.msra.mxu0 %v146
    %193 = vmatprep.subr.bf16.mxu0 0
    %194 = vmatpush1.bf16.msra.mxu0 %v147
    %195 = vmatprep.subr.bf16.mxu0 0
    %196 = vmatpush1.bf16.msra.mxu0 %v148
    %197 = vmatprep.mubr.bf16.mxu0 %v29
    %198 = vmatmul.mubr.bf16.gmra.mrb[0].mxu0 %v28
    %v199 = vpop.f32.mrb[0].mxu0
    %v200 = vadd.f32 %v67, %v199
    %v201 = vpop.f32.mrb[0].mxu0
    %v202 = vpop.f32.mrb[0].mxu0
    %v203 = vpop.f32.mrb[0].mxu0
    %204 = vdwg.mxu0
    %vm205 = vcmask 1041408
    %v206 = vsel %vm205, %v200, -inf
    %207 = vmax.xlane.f32.xlu0 %v206
    %v208 = vpop.xlane.xlu0 %207
    %v209 = vsub.f32 %v200, %v208
    %v210 = vmul.f32 %v209, 1.442695
    %v211 = vpow.pop %v210
    %v212 = vsel %vm205, %v211, 0.0
    %213 = vadd.xlane.f32.xlu0 %v212
    %v214 = vpop.xlane.xlu0 %213
    %v215 = vlog2.pop %v214
    %v216 = vmul.f32 %v215, 0.6931472
    %v217 = vsub.f32 %v209, %v216
    %218 = vst [vmem:[#allocation2] sm:$0x3] %v217
    // Predicated region
    $region14: #{classifier_forward.3} parent=1 // pred_check
      _
    $region15: #{classifier_forward.3} parent=1 // pred_check_branch
      %220 = sbr.rel (0) target = $region17
    $region16: #{classifier_forward.3} parent=1 // pred_region
      %s222 = ssub.s32 32, 32
      %223 = vsyncadd [#allocation3], %s222
      %s225 = sshll.u32 [#allocation2], 4
      %s226 = int_to_ptr.vmem [resolvable:$true] %s225
      %228 = dma.vmem_to_hbm [thread:$0]  %s226, 32, %s3, [#allocation3]
    $region17: #{classifier_forward.3} parent=1 // pred_fallthru
      _
    // Predicated region
    $region18: #{classifier_forward.3} parent=1 // pred_check
      _
    $region19: #{classifier_forward.3} parent=1 // pred_check_branch
      %230 = sbr.rel (0) target = $region21
    $region20: #{classifier_forward.3} parent=1 // pred_region
      %231 = dma.done [#allocation3], 32
    $region21: #{classifier_forward.3} parent=1 // pred_fallthru
      _
    %232 = vsyncpa [#allocation3], 1

// kernel: classifier_forward.2
$region0: #{classifier_forward.2}
  #allocation0 [shape = 'u32[]', space=smem, size = 0x4, offset = 0x4, fixed_abs, tag = 'smem constant byte address 0x4 - core index']
  #allocation1 [shape = 'u32[144,128]{1,0:T(1,128)}', space=vmem, size = 0x12000, scoped, tag = 'internal scratch']
  #allocation2 [shape = 'f32[2,128]{1,0:T(2,128)}', space=vmem, size = 0x400, scoped, tag = 'scratch operand']
  %s0 = inlined_call_operand.hbm [shape: f32[2,25088], index: 0, kind: input, shape index: {}]
  %s1 = inlined_call_operand.hbm [shape: bf16[25088,256], index: 1, kind: input, shape index: {}]
  %s2 = inlined_call_operand.hbm [shape: f32[1,256], index: 2, kind: input, shape index: {}]
  %s3 = inlined_call_operand.vmem [shape: f32[2,256], index: 3, kind: output, shape index: {}]
  %s4 = sld [smem:[#allocation0]]
  $region65: #{classifier_forward.2} parent=0
    _
  %s6 = ssub.s32 1, %s4
  %s7 = scalar_select 0, %s6, %s4
  $region1: #{classifier_forward.2} parent=0
    #allocation3 [shape = 'u8[200704]{0}', space=vmem, size = 0x31000, scoped, tag = 'input window, operand 0']
    #allocation4 [shape = 's32[2]{0}', space=sflag, size = 0x8, scoped, tag = 'scoped memory for classifier_forward.2']
    #allocation5 [shape = 'u8[6422528]{0}', space=vmem, size = 0x620000, scoped, tag = 'input window, operand 1']
    #allocation6 [shape = 's32[2]{0}', space=sflag, size = 0x8, scoped, tag = 'scoped memory for classifier_forward.2']
    #allocation7 [shape = 'u8[1024]{0}', space=vmem, size = 0x400, scoped, tag = 'input window, operand 2']
    %8 = vsyncpa [#allocation4], 0
    %s9 = scalar_lea.sflag [#allocation4], 1
    %10 = vsyncpa %s9, 0
    %11 = vsyncpa [#allocation6], 0
    %s12 = scalar_lea.sflag [#allocation6], 1
    %13 = vsyncpa %s12, 0
    loop: start=0, step=1, limit=6
    $region2: #{classifier_forward.2} parent=1 // loop_pre_header
      _
    $region3: #{classifier_forward.2} parent=1 // loop_header
      %s15 = sphi 0, %s19
      %p16 = scmp.ge.s32.totalorder %s15, 6
      %s22 = sphi 0, %s34
      %s23 = sphi 0, %s30
      %s24 = sphi 0, %s22
      %s25 = sphi 0, %s23
      %s26 = sphi 0, %s24
      %s27 = sphi 0, %s25
      %s37 = sphi 0, %s39
      %s40 = sphi 0, %s37
      %s41 = sphi 0, %s40
      %s57 = sphi 0, %s41
      %s65 = sphi 0, %s67
      %s68 = sphi 0, %s65
      %s69 = sphi 0, %s68
      %s85 = sphi 0, %s69
      %s91 = sphi 0, %s93
      %s94 = sphi 0, %s91
      %s95 = sphi 0, %s94
      %s111 = sphi 0, %s95
      %s117 = sphi 0, %s119
      %s120 = sphi 0, %s117
      %s121 = sphi 0, %s120
      %s137 = sphi 0, %s121
    $region4: #{classifier_forward.2} parent=1 // loop_header_branch
      %18 = sbr.rel (%p16) target = $region8
    $region5: #{classifier_forward.2} parent=1 // loop_body
      %s20 = ssub.s32 %s15, 1
      %s21 = ssub.s32 %s15, 2
      %s28 = sadd.s32 1, %s23
      %p29 = scmp.ge.s32.totalorder %s28, 2
      %s30 = scalar_select %p29, 0, %s28
      %s31 = sadd.s32 1, %s22
      %s32 = scalar_select %p29, %s31, %s22
      %p33 = scmp.ge.s32.totalorder %s32, 2
      %s34 = scalar_select %p33, 0, %s32
      %s35 = ssub.s32 %s23, %s30
      %p36 = scmp.eq.s32.totalorder %s35, 0
      %s38 = sadd.s32 %s37, 1
      %s39 = scalar_select %p36, %s37, %s38
      %p42 = pneg %p36
      %p43 = scmp.eq.s32.totalorder %s15, 3
      %p44 = por %p42, %p43
      %p45 = scmp.ne.s32.totalorder %s37, %s40
      %p46 = scmp.eq.s32.totalorder %s15, 0
      %p47 = por %p45, %p46
      %p48 = scmp.ne.s32.totalorder %s37, %s40
      %p49 = scmp.eq.s32.totalorder %s20, 3
      %p50 = por %p48, %p49
      %p51 = scmp.ne.s32.totalorder %s40, %s41
      %p52 = scmp.eq.s32.totalorder %s20, 0
      %p53 = por %p51, %p52
      %p54 = scmp.ne.s32.totalorder %s40, %s41
      %p55 = scmp.eq.s32.totalorder %s21, 3
      %p56 = por %p54, %p55
      %p58 = scmp.ne.s32.totalorder %s41, %s57
      %p59 = scmp.eq.s32.totalorder %s21, 0
      %p60 = por %p58, %p59
      %s61 = ssub.s32 %s23, %s30
      %s62 = ssub.s32 %s22, %s34
      %s63 = sor.u32 %s61, %s62
      %p64 = scmp.eq.s32.totalorder %s63, 0
      %s66 = sadd.s32 %s65, 1
      %s67 = scalar_select %p64, %s65, %s66
      %p70 = pneg %p64
      %p71 = scmp.eq.s32.totalorder %s15, 3
      %p72 = por %p70, %p71
      %p73 = scmp.ne.s32.totalorder %s65, %s68
      %p74 = scmp.eq.s32.totalorder %s15, 0
      %p75 = por %p73, %p74
      %p76 = scmp.ne.s32.totalorder %s65, %s68
      %p77 = scmp.eq.s32.totalorder %s20, 3
      %p78 = por %p76, %p77
      %p79 = scmp.ne.s32.totalorder %s68, %s69
      %p80 = scmp.eq.s32.totalorder %s20, 0
      %p81 = por %p79, %p80
      %p82 = scmp.ne.s32.totalorder %s68, %s69
      %p83 = scmp.eq.s32.totalorder %s21, 3
      %p84 = por %p82, %p83
      %p86 = scmp.ne.s32.totalorder %s69, %s85
      %p87 = scmp.eq.s32.totalorder %s21, 0
      %p88 = por %p86, %p87
      %s89 = ssub.s32 %s22, %s34
      %p90 = scmp.eq.s32.totalorder %s89, 0
      %s92 = sadd.s32 %s91, 1
      %s93 = scalar_select %p90, %s91, %s92
      %p96 = pneg %p90
      %p97 = scmp.eq.s32.totalorder %s15, 3
      %p98 = por %p96, %p97
      %p99 = scmp.ne.s32.totalorder %s91, %s94
      %p100 = scmp.eq.s32.totalorder %s15, 0
      %p101 = por %p99, %p100
      %p102 = scmp.ne.s32.totalorder %s91, %s94
      %p103 = scmp.eq.s32.totalorder %s20, 3
      %p104 = por %p102, %p103
      %p105 = scmp.ne.s32.totalorder %s94, %s95
      %p106 = scmp.eq.s32.totalorder %s20, 0
      %p107 = por %p105, %p106
      %p108 = scmp.ne.s32.totalorder %s94, %s95
      %p109 = scmp.eq.s32.totalorder %s21, 3
      %p110 = por %p108, %p109
      %p112 = scmp.ne.s32.totalorder %s95, %s111
      %p113 = scmp.eq.s32.totalorder %s21, 0
      %p114 = por %p112, %p113
      %s115 = ssub.s32 %s22, %s34
      %p116 = scmp.eq.s32.totalorder %s115, 0
      %s118 = sadd.s32 %s117, 1
      %s119 = scalar_select %p116, %s117, %s118
      %p122 = pneg %p116
      %p123 = scmp.eq.s32.totalorder %s15, 3
      %p124 = por %p122, %p123
      %p125 = scmp.ne.s32.totalorder %s117, %s120
      %p126 = scmp.eq.s32.totalorder %s15, 0
      %p127 = por %p125, %p126
      %p128 = scmp.ne.s32.totalorder %s117, %s120
      %p129 = scmp.eq.s32.totalorder %s20, 3
      %p130 = por %p128, %p129
      %p131 = scmp.ne.s32.totalorder %s120, %s121
      %p132 = scmp.eq.s32.totalorder %s20, 0
      %p133 = por %p131, %p132
      %p134 = scmp.ne.s32.totalorder %s120, %s121
      %p135 = scmp.eq.s32.totalorder %s21, 3
      %p136 = por %p134, %p135
      %p138 = scmp.ne.s32.totalorder %s121, %s137
      %p139 = scmp.eq.s32.totalorder %s21, 0
      %p140 = por %p138, %p139
      %p141 = scmp.le.s32.totalorder 1, %s15
      %p142 = scmp.lt.s32.totalorder %s15, 5
      %p143 = pnand %p141, %p142
      %p144 = pneg %p143
      // Predicated region
      $region9: #{classifier_forward.2} parent=5 // pred_check
        _
      $region10: #{classifier_forward.2} parent=5 // pred_check_branch
        %146 = sbr.rel (%p143) target = $region12
      $region11: #{classifier_forward.2} parent=5 // pred_region
        %s147 = ssub.s32 %s15, 1
      $region12: #{classifier_forward.2} parent=5 // pred_fallthru
        _
      %p148 = scmp.lt.s32.totalorder %s15, 4
      // Predicated region
      $region13: #{classifier_forward.2} parent=5 // pred_check
        %p149 = pneg %p148
      $region14: #{classifier_forward.2} parent=5 // pred_check_branch
        %151 = sbr.rel (%p149) target = $region16
      $region15: #{classifier_forward.2} parent=5 // pred_region
        // Predicated region
        $region17: #{classifier_forward.2} parent=15 // pred_check
          %p152 = pneg %p47
        $region18: #{classifier_forward.2} parent=15 // pred_check_branch
          %154 = sbr.rel (%p152) target = $region20
        $region19: #{classifier_forward.2} parent=15 // pred_region
          %s155 = sand.u32 %s37, 1
          %s156 = scalar_lea.sflag [#allocation4], %s155
          %s157 = sand.u32 %s37, 1
          %s158 = smul.addr %s157, 196
          %s159 = scalar_lea.vmem [#allocation3], %s158
          %s160 = smul.u32 98, %s23
          %s162 = ssub.s32 3136, 3136
          %163 = vsyncadd %s156, %s162
          %s164 = smul.addr %s160, 32
          %s165 = scalar_lea.hbm %s0, %s164
          %s167 = sshll.u32 %s159, 4
          %s168 = int_to_ptr.vmem [resolvable:$true] %s167
          %170 = dma.hbm_to_vmem [thread:$0]  %s165, 3136, %s168, %s156
        $region20: #{classifier_forward.2} parent=15 // pred_fallthru
          _
        // Predicated region
        $region21: #{classifier_forward.2} parent=15 // pred_check
          %p171 = pneg %p75
        $region22: #{classifier_forward.2} parent=15 // pred_check_branch
          %173 = sbr.rel (%p171) target = $region24
        $region23: #{classifier_forward.2} parent=15 // pred_region
          %s174 = sand.u32 %s15, 1
          %s175 = scalar_lea.sflag [#allocation6], %s174
          %s176 = sand.u32 %s65, 1
          %s177 = smul.addr %s176, 6272
          %s178 = scalar_lea.vmem [#allocation5], %s177
          %s179 = smul.u32 1568, %s23
          %s181 = ssub.s32 100352, 100352
          %182 = vsyncadd %s175, %s181
          %s183 = smul.addr %s179, 2
          %s184 = sadd.s32 %s22, %s183
          %s185 = smul.addr %s184, 64
          %s186 = scalar_lea.hbm %s1, %s185
          %s187 = sshll.u32 %s178, 4
          %s188 = int_to_ptr.vmem [resolvable:$true] %s187
          %193 = dma.hbm_to_vmem [thread:$0]  %s186, 100352, %s188, %s175, 128, 64, 4
        $region24: #{classifier_forward.2} parent=15 // pred_fallthru
          _
        // Predicated region
        $region25: #{classifier_forward.2} parent=15 // pred_check
          %p194 = pneg %p101
        $region26: #{classifier_forward.2} parent=15 // pred_check_branch
          %196 = sbr.rel (%p194) target = $region28
        $region27: #{classifier_forward.2} parent=15 // pred_region
          %s197 = sand.u32 %s15, 1
          %s198 = scalar_lea.sflag [#allocation6], %s197
          %s199 = sand.u32 %s91, 1
          %s200 = scalar_lea.vmem [#allocation7], %s199
          %s202 = ssub.s32 16, 16
          %203 = vsyncadd %s198, %s202
          %s204 = smul.addr %s22, 16
          %s205 = scalar_lea.hbm %s2, %s204
          %s207 = sshll.u32 %s200, 4
          %s208 = int_to_ptr.vmem [resolvable:$true] %s207
          %210 = dma.hbm_to_vmem [thread:$0]  %s205, 16, %s208, %s198
        $region28: #{classifier_forward.2} parent=15 // pred_fallthru
          _
      $region16: #{classifier_forward.2} parent=5 // pred_fallthru
        _
      %p211 = scmp.le.s32.totalorder 1, %s15
      %p212 = scmp.lt.s32.totalorder %s15, 5
      %p213 = pnand %p211, %p212
      %p214 = pneg %p213
      // Predicated region
      $region29: #{classifier_forward.2} parent=5 // pred_check
        _
      $region30: #{classifier_forward.2} parent=5 // pred_check_branch
        %216 = sbr.rel (%p213) target = $region32
      $region31: #{classifier_forward.2} parent=5 // pred_region
        %s217 = ssub.s32 %s15, 1
        %s218 = sand.u32 %s40, 1
        %s219 = scalar_lea.sflag [#allocation4], %s218
        %s220 = sand.u32 %s40, 1
        %s221 = smul.addr %s220, 196
        %s222 = scalar_lea.vmem [#allocation3], %s221
        // Predicated region
        $region33: #{classifier_forward.2} parent=31 // pred_check
          %p223 = pneg %p53
        $region34: #{classifier_forward.2} parent=31 // pred_check_branch
          %225 = sbr.rel (%p223) target = $region36
        $region35: #{classifier_forward.2} parent=31 // pred_region
          %226 = dma.done %s219, 3136
        $region36: #{classifier_forward.2} parent=31 // pred_fallthru
          _
        %s227 = sand.u32 %s20, 1
        %s228 = scalar_lea.sflag [#allocation6], %s227
        %s229 = sand.u32 %s68, 1
        %s230 = smul.addr %s229, 6272
        %s231 = scalar_lea.vmem [#allocation5], %s230
        // Predicated region
        $region37: #{classifier_forward.2} parent=31 // pred_check
          %p232 = pneg %p81
        $region38: #{classifier_forward.2} parent=31 // pred_check_branch
          %234 = sbr.rel (%p232) target = $region40
        $region39: #{classifier_forward.2} parent=31 // pred_region
          %235 = dma.done %s228, 100352
        $region40: #{classifier_forward.2} parent=31 // pred_fallthru
          _
        %s236 = sand.u32 %s20, 1
        %s237 = scalar_lea.sflag [#allocation6], %s236
        %s238 = sand.u32 %s94, 1
        %s239 = scalar_lea.vmem [#allocation7], %s238
        // Predicated region
        $region41: #{classifier_forward.2} parent=31 // pred_check
          %p240 = pneg %p107
        $region42: #{classifier_forward.2} parent=31 // pred_check_branch
          %242 = sbr.rel (%p240) target = $region44
        $region43: #{classifier_forward.2} parent=31 // pred_region
          %243 = dma.done %s237, 16
        $region44: #{classifier_forward.2} parent=31 // pred_fallthru
          _
        %s244 = sand.u32 %s40, 1
        %s245 = scalar_lea.sflag [#allocation4], %s244
        %s246 = sand.u32 %s40, 1
        %s247 = smul.addr %s246, 196
        %s248 = scalar_lea.vmem [#allocation3], %s247
        %p249 = pneg %p53
        %p250 = pneg %p50
        %s251 = sand.u32 %s20, 1
        %s252 = scalar_lea.sflag [#allocation6], %s251
        %s253 = sand.u32 %s68, 1
        %s254 = smul.addr %s253, 6272
        %s255 = scalar_lea.vmem [#allocation5], %s254
        %p256 = pneg %p81
        %p257 = pneg %p78
        %s258 = sand.u32 %s20, 1
        %s259 = scalar_lea.sflag [#allocation6], %s258
        %s260 = sand.u32 %s94, 1
        %s261 = scalar_lea.vmem [#allocation7], %s260
        %p262 = pneg %p107
        %p263 = pneg %p104
        %p264 = pneg %p133
        %p265 = pneg %p130
        %p266 = scmp.lt.s32.totalorder %s24, 1
        %s267 = scalar_select %p266, %s24, 1
        %s268 = smul.addr %s267, 2
        %s269 = scalar_lea.vmem %s3, %s268
        %s270 = smul.u32 98, %s25
        %s271 = smul.u32 1568, %s25
        %p272 = scmp.lt.s32.totalorder %s24, 1
        %s273 = scalar_select %p272, %s24, 1
        %s274 = smul.addr %s273, 2
        %s275 = scalar_lea.vmem %s3, %s274
        %p277 = scmp.eq.s32.totalorder %s25, 0
        // Predicated region
        $region45: #{classifier_forward.2} parent=31 // pred_check
          %p278 = pneg %p277
        $region46: #{classifier_forward.2} parent=31 // pred_check_branch
          %280 = sbr.rel (%p278) target = $region48
        $region47: #{classifier_forward.2} parent=31 // pred_region
          %281 = vst [vmem:[#allocation2] sm:$0x3] 0.0
        $region48: #{classifier_forward.2} parent=31 // pred_fallthru
          _
        %v282 = vld [vmem:[#allocation2] sm:$0x3]
        %v283 = vld [vmem:[%s222] sm:$0xff]
        %v284 = vld [vmem:[%s222 + $0x8] sm:$0xff]
        %v285 = vld [vmem:[%s222 + $0x10] sm:$0xff]
        %v286 = vld [vmem:[%s222 + $0x18] sm:$0xff]
        %v287 = vld [vmem:[%s222 + $0x20] sm:$0xff]
        %v288 = vld [vmem:[%s222 + $0x28] sm:$0xff]
        %v289 = vld [vmem:[%s222 + $0x30] sm:$0xff]
        %v290 = vld [vmem:[%s222 + $0x38] sm:$0xff]
        %v291 = vld [vmem:[%s222 + $0x40] sm:$0xff]
        %v292 = vld [vmem:[%s222 + $0x48] sm:$0xff]
        %v293 = vld [vmem:[%s222 + $0x50] sm:$0xff]
        %v294 = vld [vmem:[%s222 + $0x58] sm:$0xff]
        %v295 = vld [vmem:[%s222 + $0x60] sm:$0xff]
        %v296 = vld [vmem:[%s222 + $0x68] sm:$0xff]
        %v297 = vld [vmem:[%s222 + $0x70] sm:$0xff]
        %v298 = vld [vmem:[%s222 + $0x78] sm:$0xff]
        %v299 = vld [vmem:[%s222 + $0x80] sm:$0xff]
        %v300 = vld [vmem:[%s222 + $0x88] sm:$0xff]
        %v301 = vld [vmem:[%s222 + $0x90] sm:$0xff]
        %v302 = vld [vmem:[%s222 + $0x98] sm:$0xff]
        %v303 = vld [vmem:[%s222 + $0xa0] sm:$0xff]
        %v304 = vld [vmem:[%s222 + $0xa8] sm:$0xff]
        %v305 = vld [vmem:[%s222 + $0xb0] sm:$0xff]
        %v306 = vld [vmem:[%s222 + $0xb8] sm:$0xff]
        %v307 = vld [vmem:[%s222 + $0xc0] sm:$0xf]
        %v333 = vcombine.high %v283, %v283
        %v335 = vunpack.c.l.s4 1983009808
        %v336 = vunpack.c.0.s8 %v335
        %v337 = vlaneseq
        %v338 = vshrl.u32 %v337, 7
        %v339 = vsub.s32 %v336, %v338
        %v340 = vrot.slane %v283, %v339
        %v342 = vunpack.c.l.s4 1983009808
        %v343 = vunpack.c.0.s8 %v342
        %v344 = vlaneseq
        %v345 = vshrl.u32 %v344, 7
        %v346 = vsub.s32 %v343, %v345
        %v347 = vrot.slane %v333, %v346
        %v348 = vcombine.high %v340, %v340
        %v349 = vcombine.high %v347, %v347
        %v350 = vcombine.high %v284, %v284
        %v352 = vunpack.c.l.s4 1983009808
        %v353 = vunpack.c.0.s8 %v352
        %v354 = vlaneseq
        %v355 = vshrl.u32 %v354, 7
        %v356 = vsub.s32 %v353, %v355
        %v357 = vrot.slane %v284, %v356
        %v359 = vunpack.c.l.s4 1983009808
        %v360 = vunpack.c.0.s8 %v359
        %v361 = vlaneseq
        %v362 = vshrl.u32 %v361, 7
        %v363 = vsub.s32 %v360, %v362
        %v364 = vrot.slane %v350, %v363
        %v365 = vcombine.high %v357, %v357
        %v366 = vcombine.high %v364, %v364
        %v367 = vcombine.high %v285, %v285
        %v369 = vunpack.c.l.s4 1983009808
        %v370 = vunpack.c.0.s8 %v369
        %v371 = vlaneseq
        %v372 = vshrl.u32 %v371, 7
        %v373 = vsub.s32 %v370, %v372
        %v374 = vrot.slane %v285, %v373
        %v376 = vunpack.c.l.s4 1983009808
        %v377 = vunpack.c.0.s8 %v376
        %v378 = vlaneseq
        %v379 = vshrl.u32 %v378, 7
        %v380 = vsub.s32 %v377, %v379
        %v381 = vrot.slane %v367, %v380
        %v382 = vcombine.high %v374, %v374
        %v383 = vcombine.high %v381, %v381
        %v384 = vcombine.high %v286, %v286
        %v386 = vunpack.c.l.s4 1983009808
        %v387 = vunpack.c.0.s8 %v386
        %v388 = vlaneseq
        %v389 = vshrl.u32 %v388, 7
        %v390 = vsub.s32 %v387, %v389
        %v391 = vrot.slane %v286, %v390
        %v393 = vunpack.c.l.s4 1983009808
        %v394 = vunpack.c.0.s8 %v393
        %v395 = vlaneseq
        %v396 = vshrl.u32 %v395, 7
        %v397 = vsub.s32 %v394, %v396
        %v398 = vrot.slane %v384, %v397
        %v399 = vcombine.high %v391, %v391
        %v400 = vcombine.high %v398, %v398
        %v401 = vcombine.high %v287, %v287
        %v403 = vunpack.c.l.s4 1983009808
        %v404 = vunpack.c.0.s8 %v403
        %v405 = vlaneseq
        %v406 = vshrl.u32 %v405, 7
        %v407 = vsub.s32 %v404, %v406
        %v408 = vrot.slane %v287, %v407
        %v410 = vunpack.c.l.s4 1983009808
        %v411 = vunpack.c.0.s8 %v410
        %v412 = vlaneseq
        %v413 = vshrl.u32 %v412, 7
        %v414 = vsub.s32 %v411, %v413
        %v415 = vrot.slane %v401, %v414
        %v416 = vcombine.high %v408, %v408
        %v417 = vcombine.high %v415, %v415
        %v418 = vcombine.high %v288, %v288
        %v420 = vunpack.c.l.s4 1983009808
        %v421 = vunpack.c.0.s8 %v420
        %v422 = vlaneseq
        %v423 = vshrl.u32 %v422, 7
        %v424 = vsub.s32 %v421, %v423
        %v425 = vrot.slane %v288, %v424
        %v427 = vunpack.c.l.s4 1983009808
        %v428 = vunpack.c.0.s8 %v427
        %v429 = vlaneseq
        %v430 = vshrl.u32 %v429, 7
        %v431 = vsub.s32 %v428, %v430
        %v432 = vrot.slane %v418, %v431
        %v433 = vcombine.high %v425, %v425
        %v434 = vcombine.high %v432, %v432
        %v435 = vcombine.high %v289, %v289
        %v437 = vunpack.c.l.s4 1983009808
        %v438 = vunpack.c.0.s8 %v437
        %v439 = vlaneseq
        %v440 = vshrl.u32 %v439, 7
        %v441 = vsub.s32 %v438, %v440
        %v442 = vrot.slane %v289, %v441
        %v444 = vunpack.c.l.s4 1983009808
        %v445 = vunpack.c.0.s8 %v444
        %v446 = vlaneseq
        %v447 = vshrl.u32 %v446, 7
        %v448 = vsub.s32 %v445, %v447
        %v449 = vrot.slane %v435, %v448
        %v450 = vcombine.high %v442, %v442
        %v451 = vcombine.high %v449, %v449
        %v452 = vcombine.high %v290, %v290
        %v454 = vunpack.c.l.s4 1983009808
        %v455 = vunpack.c.0.s8 %v454
        %v456 = vlaneseq
        %v457 = vshrl.u32 %v456, 7
        %v458 = vsub.s32 %v455, %v457
        %v459 = vrot.slane %v290, %v458
        %v461 = vunpack.c.l.s4 1983009808
        %v462 = vunpack.c.0.s8 %v461
        %v463 = vlaneseq
        %v464 = vshrl.u32 %v463, 7
        %v465 = vsub.s32 %v462, %v464
        %v466 = vrot.slane %v452, %v465
        %v467 = vcombine.high %v459, %v459
        %v468 = vcombine.high %v466, %v466
        %v469 = vcombine.high %v291, %v291
        %v471 = vunpack.c.l.s4 1983009808
        %v472 = vunpack.c.0.s8 %v471
        %v473 = vlaneseq
        %v474 = vshrl.u32 %v473, 7
        %v475 = vsub.s32 %v472, %v474
        %v476 = vrot.slane %v291, %v475
        %v478 = vunpack.c.l.s4 1983009808
        %v479 = vunpack.c.0.s8 %v478
        %v480 = vlaneseq
        %v481 = vshrl.u32 %v480, 7
        %v482 = vsub.s32 %v479, %v481
        %v483 = vrot.slane %v469, %v482
        %v484 = vcombine.high %v476, %v476
        %v485 = vcombine.high %v483, %v483
        %v486 = vcombine.high %v292, %v292
        %v488 = vunpack.c.l.s4 1983009808
        %v489 = vunpack.c.0.s8 %v488
        %v490 = vlaneseq
        %v491 = vshrl.u32 %v490, 7
        %v492 = vsub.s32 %v489, %v491
        %v493 = vrot.slane %v292, %v492
        %v495 = vunpack.c.l.s4 1983009808
        %v496 = vunpack.c.0.s8 %v495
        %v497 = vlaneseq
        %v498 = vshrl.u32 %v497, 7
        %v499 = vsub.s32 %v496, %v498
        %v500 = vrot.slane %v486, %v499
        %v501 = vcombine.high %v493, %v493
        %v502 = vcombine.high %v500, %v500
        %v503 = vcombine.high %v293, %v293
        %v505 = vunpack.c.l.s4 1983009808
        %v506 = vunpack.c.0.s8 %v505
        %v507 = vlaneseq
        %v508 = vshrl.u32 %v507, 7
        %v509 = vsub.s32 %v506, %v508
        %v510 = vrot.slane %v293, %v509
        %v512 = vunpack.c.l.s4 1983009808
        %v513 = vunpack.c.0.s8 %v512
        %v514 = vlaneseq
        %v515 = vshrl.u32 %v514, 7
        %v516 = vsub.s32 %v513, %v515
        %v517 = vrot.slane %v503, %v516
        %v518 = vcombine.high %v510, %v510
        %v519 = vcombine.high %v517, %v517
        %v520 = vcombine.high %v294, %v294
        %v522 = vunpack.c.l.s4 1983009808
        %v523 = vunpack.c.0.s8 %v522
        %v524 = vlaneseq
        %v525 = vshrl.u32 %v524, 7
        %v526 = vsub.s32 %v523, %v525
        %v527 = vrot.slane %v294, %v526
        %v529 = vunpack.c.l.s4 1983009808
        %v530 = vunpack.c.0.s8 %v529
        %v531 = vlaneseq
        %v532 = vshrl.u32 %v531, 7
        %v533 = vsub.s32 %v530, %v532
        %v534 = vrot.slane %v520, %v533
        %v535 = vcombine.high %v527, %v527
        %v536 = vcombine.high %v534, %v534
        %v537 = vcombine.high %v295, %v295
        %v539 = vunpack.c.l.s4 1983009808
        %v540 = vunpack.c.0.s8 %v539
        %v541 = vlaneseq
        %v542 = vshrl.u32 %v541, 7
        %v543 = vsub.s32 %v540, %v542
        %v544 = vrot.slane %v295, %v543
        %v546 = vunpack.c.l.s4 1983009808
        %v547 = vunpack.c.0.s8 %v546
        %v548 = vlaneseq
        %v549 = vshrl.u32 %v548, 7
        %v550 = vsub.s32 %v547, %v549
        %v551 = vrot.slane %v537, %v550
        %v552 = vcombine.high %v544, %v544
        %v553 = vcombine.high %v551, %v551
        %v554 = vcombine.high %v296, %v296
        %v556 = vunpack.c.l.s4 1983009808
        %v557 = vunpack.c.0.s8 %v556
        %v558 = vlaneseq
        %v559 = vshrl.u32 %v558, 7
        %v560 = vsub.s32 %v557, %v559
        %v561 = vrot.slane %v296, %v560
        %v563 = vunpack.c.l.s4 1983009808
        %v564 = vunpack.c.0.s8 %v563
        %v565 = vlaneseq
        %v566 = vshrl.u32 %v565, 7
        %v567 = vsub.s32 %v564, %v566
        %v568 = vrot.slane %v554, %v567
        %v569 = vcombine.high %v561, %v561
        %v570 = vcombine.high %v568, %v568
        %v571 = vcombine.high %v297, %v297
        %v573 = vunpack.c.l.s4 1983009808
        %v574 = vunpack.c.0.s8 %v573
        %v575 = vlaneseq
        %v576 = vshrl.u32 %v575, 7
        %v577 = vsub.s32 %v574, %v576
        %v578 = vrot.slane %v297, %v577
        %v580 = vunpack.c.l.s4 1983009808
        %v581 = vunpack.c.0.s8 %v580
        %v582 = vlaneseq
        %v583 = vshrl.u32 %v582, 7
        %v584 = vsub.s32 %v581, %v583
        %v585 = vrot.slane %v571, %v584
        %v586 = vcombine.high %v578, %v578
        %v587 = vcombine.high %v585, %v585
        %v588 = vcombine.high %v298, %v298
        %v590 = vunpack.c.l.s4 1983009808
        %v591 = vunpack.c.0.s8 %v590
        %v592 = vlaneseq
        %v593 = vshrl.u32 %v592, 7
        %v594 = vsub.s32 %v591, %v593
        %v595 = vrot.slane %v298, %v594
        %v597 = vunpack.c.l.s4 1983009808
        %v598 = vunpack.c.0.s8 %v597
        %v599 = vlaneseq
        %v600 = vshrl.u32 %v599, 7
        %v601 = vsub.s32 %v598, %v600
        %v602 = vrot.slane %v588, %v601
        %v603 = vcombine.high %v595, %v595
        %v604 = vcombine.high %v602, %v602
        %v605 = vcombine.high %v299, %v299
        %v607 = vunpack.c.l.s4 1983009808
        %v608 = vunpack.c.0.s8 %v607
        %v609 = vlaneseq
        %v610 = vshrl.u32 %v609, 7
        %v611 = vsub.s32 %v608, %v610
        %v612 = vrot.slane %v299, %v611
        %v614 = vunpack.c.l.s4 1983009808
        %v615 = vunpack.c.0.s8 %v614
        %v616 = vlaneseq
        %v617 = vshrl.u32 %v616, 7
        %v618 = vsub.s32 %v615, %v617
        %v619 = vrot.slane %v605, %v618
        %v620 = vcombine.high %v612, %v612
        %v621 = vcombine.high %v619, %v619
        %v622 = vcombine.high %v300, %v300
        %v624 = vunpack.c.l.s4 1983009808
        %v625 = vunpack.c.0.s8 %v624
        %v626 = vlaneseq
        %v627 = vshrl.u32 %v626, 7
        %v628 = vsub.s32 %v625, %v627
        %v629 = vrot.slane %v300, %v628
        %v631 = vunpack.c.l.s4 1983009808
        %v632 = vunpack.c.0.s8 %v631
        %v633 = vlaneseq
        %v634 = vshrl.u32 %v633, 7
        %v635 = vsub.s32 %v632, %v634
        %v636 = vrot.slane %v622, %v635
        %v637 = vcombine.high %v629, %v629
        %v638 = vcombine.high %v636, %v636
        %v639 = vcombine.high %v301, %v301
        %v641 = vunpack.c.l.s4 1983009808
        %v642 = vunpack.c.0.s8 %v641
        %v643 = vlaneseq
        %v644 = vshrl.u32 %v643, 7
        %v645 = vsub.s32 %v642, %v644
        %v646 = vrot.slane %v301, %v645
        %v648 = vunpack.c.l.s4 1983009808
        %v649 = vunpack.c.0.s8 %v648
        %v650 = vlaneseq
        %v651 = vshrl.u32 %v650, 7
        %v652 = vsub.s32 %v649, %v651
        %v653 = vrot.slane %v639, %v652
        %v654 = vcombine.high %v646, %v646
        %v655 = vcombine.high %v653, %v653
        %v656 = vcombine.high %v302, %v302
        %v658 = vunpack.c.l.s4 1983009808
        %v659 = vunpack.c.0.s8 %v658
        %v660 = vlaneseq
        %v661 = vshrl.u32 %v660, 7
        %v662 = vsub.s32 %v659, %v661
        %v663 = vrot.slane %v302, %v662
        %v665 = vunpack.c.l.s4 1983009808
        %v666 = vunpack.c.0.s8 %v665
        %v667 = vlaneseq
        %v668 = vshrl.u32 %v667, 7
        %v669 = vsub.s32 %v666, %v668
        %v670 = vrot.slane %v656, %v669
        %v671 = vcombine.high %v663, %v663
        %v672 = vcombine.high %v670, %v670
        %v673 = vcombine.high %v303, %v303
        %v675 = vunpack.c.l.s4 1983009808
        %v676 = vunpack.c.0.s8 %v675
        %v677 = vlaneseq
        %v678 = vshrl.u32 %v677, 7
        %v679 = vsub.s32 %v676, %v678
        %v680 = vrot.slane %v303, %v679
        %v682 = vunpack.c.l.s4 1983009808
        %v683 = vunpack.c.0.s8 %v682
        %v684 = vlaneseq
        %v685 = vshrl.u32 %v684, 7
        %v686 = vsub.s32 %v683, %v685
        %v687 = vrot.slane %v673, %v686
        %v688 = vcombine.high %v680, %v680
        %v689 = vcombine.high %v687, %v687
        %v690 = vcombine.high %v304, %v304
        %v692 = vunpack.c.l.s4 1983009808
        %v693 = vunpack.c.0.s8 %v692
        %v694 = vlaneseq
        %v695 = vshrl.u32 %v694, 7
        %v696 = vsub.s32 %v693, %v695
        %v697 = vrot.slane %v304, %v696
        %v699 = vunpack.c.l.s4 1983009808
        %v700 = vunpack.c.0.s8 %v699
        %v701 = vlaneseq
        %v702 = vshrl.u32 %v701, 7
        %v703 = vsub.s32 %v700, %v702
        %v704 = vrot.slane %v690, %v703
        %v705 = vcombine.high %v697, %v697
        %v706 = vcombine.high %v704, %v704
        %v707 = vcombine.high %v305, %v305
        %v709 = vunpack.c.l.s4 1983009808
        %v710 = vunpack.c.0.s8 %v709
        %v711 = vlaneseq
        %v712 = vshrl.u32 %v711, 7
        %v713 = vsub.s32 %v710, %v712
        %v714 = vrot.slane %v305, %v713
        %v716 = vunpack.c.l.s4 1983009808
        %v717 = vunpack.c.0.s8 %v716
        %v718 = vlaneseq
        %v719 = vshrl.u32 %v718, 7
        %v720 = vsub.s32 %v717, %v719
        %v721 = vrot.slane %v707, %v720
        %v722 = vcombine.high %v714, %v714
        %v723 = vcombine.high %v721, %v721
        %v724 = vcombine.high %v306, %v306
        %v726 = vunpack.c.l.s4 1983009808
        %v727 = vunpack.c.0.s8 %v726
        %v728 = vlaneseq
        %v729 = vshrl.u32 %v728, 7
        %v730 = vsub.s32 %v727, %v729
        %v731 = vrot.slane %v306, %v730
        %v733 = vunpack.c.l.s4 1983009808
        %v734 = vunpack.c.0.s8 %v733
        %v735 = vlaneseq
        %v736 = vshrl.u32 %v735, 7
        %v737 = vsub.s32 %v734, %v736
        %v738 = vrot.slane %v724, %v737
        %v739 = vcombine.high %v731, %v731
        %v740 = vcombine.high %v738, %v738
        %v742 = vunpack.c.l.s4 1983009808
        %v743 = vunpack.c.0.s8 %v742
        %v744 = vlaneseq
        %v745 = vshrl.u32 %v744, 7
        %v746 = vsub.s32 %v743, %v745
        %v747 = vrot.slane %v307, %v746
        %v748 = vcombine.high %v747, %v747
        %v847 = vpack.c.bf16 %v340, %v340
        %v848 = vpack.c.bf16 %v348, %v348
        %v849 = vpack.c.bf16 %v347, %v347
        %v850 = vpack.c.bf16 %v349, %v349
        %v851 = vpack.c.bf16 %v357, %v357
        %v852 = vpack.c.bf16 %v365, %v365
        %v853 = vpack.c.bf16 %v364, %v364
        %v854 = vpack.c.bf16 %v366, %v366
        %v855 = vpack.c.bf16 %v374, %v374
        %v856 = vpack.c.bf16 %v382, %v382
        %v857 = vpack.c.bf16 %v381, %v381
        %v858 = vpack.c.bf16 %v383, %v383
        %v859 = vpack.c.bf16 %v391, %v391
        %v860 = vpack.c.bf16 %v399, %v399
        %v861 = vpack.c.bf16 %v398, %v398
        %v862 = vpack.c.bf16 %v400, %v400
        %v863 = vpack.c.bf16 %v408, %v408
        %v864 = vpack.c.bf16 %v416, %v416
        %v865 = vpack.c.bf16 %v415, %v415
        %v866 = vpack.c.bf16 %v417, %v417
        %v867 = vpack.c.bf16 %v425, %v425
        %v868 = vpack.c.bf16 %v433, %v433
        %v869 = vpack.c.bf16 %v432, %v432
        %v870 = vpack.c.bf16 %v434, %v434
        %v871 = vpack.c.bf16 %v442, %v442
        %v872 = vpack.c.bf16 %v450, %v450
        %v873 = vpack.c.bf16 %v449, %v449
        %v874 = vpack.c.bf16 %v451, %v451
        %v875 = vpack.c.bf16 %v459, %v459
        %v876 = vpack.c.bf16 %v467, %v467
        %v877 = vpack.c.bf16 %v466, %v466
        %v878 = vpack.c.bf16 %v468, %v468
        %v879 = vpack.c.bf16 %v476, %v476
        %v880 = vpack.c.bf16 %v484, %v484
        %v881 = vpack.c.bf16 %v483, %v483
        %v882 = vpack.c.bf16 %v485, %v485
        %v883 = vpack.c.bf16 %v493, %v493
        %v884 = vpack.c.bf16 %v501, %v501
        %v885 = vpack.c.bf16 %v500, %v500
        %v886 = vpack.c.bf16 %v502, %v502
        %v887 = vpack.c.bf16 %v510, %v510
        %v888 = vpack.c.bf16 %v518, %v518
        %v889 = vpack.c.bf16 %v517, %v517
        %v890 = vpack.c.bf16 %v519, %v519
        %v891 = vpack.c.bf16 %v527, %v527
        %v892 = vpack.c.bf16 %v535, %v535
        %v893 = vpack.c.bf16 %v534, %v534
        %v894 = vpack.c.bf16 %v536, %v536
        %v895 = vpack.c.bf16 %v544, %v544
        %v896 = vpack.c.bf16 %v552, %v552
        %v897 = vpack.c.bf16 %v551, %v551
        %v898 = vpack.c.bf16 %v553, %v553
        %v899 = vpack.c.bf16 %v561, %v561
        %v900 = vpack.c.bf16 %v569, %v569
        %v901 = vpack.c.bf16 %v568, %v568
        %v902 = vpack.c.bf16 %v570, %v570
        %v903 = vpack.c.bf16 %v578, %v578
        %v904 = vpack.c.bf16 %v586, %v586
        %v905 = vpack.c.bf16 %v585, %v585
        %v906 = vpack.c.bf16 %v587, %v587
        %v907 = vpack.c.bf16 %v595, %v595
        %v908 = vpack.c.bf16 %v603, %v603
        %v909 = vpack.c.bf16 %v602, %v602
        %v910 = vpack.c.bf16 %v604, %v604
        %v911 = vpack.c.bf16 %v612, %v612
        %v912 = vpack.c.bf16 %v620, %v620
        %v913 = vpack.c.bf16 %v619, %v619
        %v914 = vpack.c.bf16 %v621, %v621
        %v915 = vpack.c.bf16 %v629, %v629
        %v916 = vpack.c.bf16 %v637, %v637
        %v917 = vpack.c.bf16 %v636, %v636
        %v918 = vpack.c.bf16 %v638, %v638
        %v919 = vpack.c.bf16 %v646, %v646
        %v920 = vpack.c.bf16 %v654, %v654
        %v921 = vpack.c.bf16 %v653, %v653
        %v922 = vpack.c.bf16 %v655, %v655
        %v923 = vpack.c.bf16 %v663, %v663
        %v924 = vpack.c.bf16 %v671, %v671
        %v925 = vpack.c.bf16 %v670, %v670
        %v926 = vpack.c.bf16 %v672, %v672
        %v927 = vpack.c.bf16 %v680, %v680
        %v928 = vpack.c.bf16 %v688, %v688
        %v929 = vpack.c.bf16 %v687, %v687
        %v930 = vpack.c.bf16 %v689, %v689
        %v931 = vpack.c.bf16 %v697, %v697
        %v932 = vpack.c.bf16 %v705, %v705
        %v933 = vpack.c.bf16 %v704, %v704
        %v934 = vpack.c.bf16 %v706, %v706
        %v935 = vpack.c.bf16 %v714, %v714
        %v936 = vpack.c.bf16 %v722, %v722
        %v937 = vpack.c.bf16 %v721, %v721
        %v938 = vpack.c.bf16 %v723, %v723
        %v939 = vpack.c.bf16 %v731, %v731
        %v940 = vpack.c.bf16 %v739, %v739
        %v941 = vpack.c.bf16 %v738, %v738
        %v942 = vpack.c.bf16 %v740, %v740
        %v943 = vpack.c.bf16 %v747, %v747
        %v944 = vpack.c.bf16 %v748, %v748
        %v945 = vld [vmem:[%s231] sm:$0xf]
        %v946 = vld [vmem:[%s231 + $0x4] sm:$0xf]
        %v947 = vld [vmem:[%s231 + $0x8] sm:$0xf]
        %v948 = vld [vmem:[%s231 + $0xc] sm:$0xf]
        %v949 = vld [vmem:[%s231 + $0x10] sm:$0xf]
        %v950 = vld [vmem:[%s231 + $0x14] sm:$0xf]
        %v951 = vld [vmem:[%s231 + $0x18] sm:$0xf]
        %v952 = vld [vmem:[%s231 + $0x1c] sm:$0xf]
        %v953 = vld [vmem:[%s231 + $0x20] sm:$0xf]
        %v954 = vld [vmem:[%s231 + $0x24] sm:$0xf]
        %v955 = vld [vmem:[%s231 + $0x28] sm:$0xf]
        %v956 = vld [vmem:[%s231 + $0x2c] sm:$0xf]
        %v957 = vld [vmem:[%s231 + $0x30] sm:$0xf]
        %v958 = vld [vmem:[%s231 + $0x34] sm:$0xf]
        %v959 = vld [vmem:[%s231 + $0x38] sm:$0xf]
        %v960 = vld [vmem:[%s231 + $0x3c] sm:$0xf]
        %v961 = vld [vmem:[%s231 + $0x40] sm:$0xf]
        %v962 = vld [vmem:[%s231 + $0x44] sm:$0xf]
        %v963 = vld [vmem:[%s231 + $0x48] sm:$0xf]
        %v964 = vld [vmem:[%s231 + $0x4c] sm:$0xf]
        %v965 = vld [vmem:[%s231 + $0x50] sm:$0xf]
        %v966 = vld [vmem:[%s231 + $0x54] sm:$0xf]
        %v967 = vld [vmem:[%s231 + $0x58] sm:$0xf]
        %v968 = vld [vmem:[%s231 + $0x5c] sm:$0xf]
        %v969 = vld [vmem:[%s231 + $0x60] sm:$0xf]
        %v970 = vld [vmem:[%s231 + $0x64] sm:$0xf]
        %v971 = vld [vmem:[%s231 + $0x68] sm:$0xf]
        %v972 = vld [vmem:[%s231 + $0x6c] sm:$0xf]
        %v973 = vld [vmem:[%s231 + $0x70] sm:$0xf]
        %v974 = vld [vmem:[%s231 + $0x74] sm:$0xf]
        %v975 = vld [vmem:[%s231 + $0x78] sm:$0xf]
        %v976 = vld [vmem:[%s231 + $0x7c] sm:$0xf]
        %v977 = vld [vmem:[%s231 + $0x80] sm:$0xf]
        %v978 = vld [vmem:[%s231 + $0x84] sm:$0xf]
        %v979 = vld [vmem:[%s231 + $0x88] sm:$0xf]
        %v980 = vld [vmem:[%s231 + $0x8c] sm:$0xf]
        %v981 = vld [vmem:[%s231 + $0x90] sm:$0xf]
        %v982 = vld [vmem:[%s231 + $0x94] sm:$0xf]
        %v983 = vld [vmem:[%s231 + $0x98] sm:$0xf]
        %v984 = vld [vmem:[%s231 + $0x9c] sm:$0xf]
        %v985 = vld [vmem:[%s231 + $0xa0] sm:$0xf]
        %v986 = vld [vmem:[%s231 + $0xa4] sm:$0xf]
        %v987 = vld [vmem:[%s231 + $0xa8] sm:$0xf]
        %v988 = vld [vmem:[%s231 + $0xac] sm:$0xf]
        %v989 = vld [vmem:[%s231 + $0xb0] sm:$0xf]
        %v990 = vld [vmem:[%s231 + $0xb4] sm:$0xf]
        %v991 = vld [vmem:[%s231 + $0xb8] sm:$0xf]
        %v992 = vld [vmem:[%s231 + $0xbc] sm:$0xf]
        %v993 = vld [vmem:[%s231 + $0xc0] sm:$0xf]
        %v994 = vld [vmem:[%s231 + $0xc4] sm:$0xf]
        %v995 = vld [vmem:[%s231 + $0xc8] sm:$0xf]
        %v996 = vld [vmem:[%s231 + $0xcc] sm:$0xf]
        %v997 = vld [vmem:[%s231 + $0xd0] sm:$0xf]
        %v998 = vld [vmem:[%s231 + $0xd4] sm:$0xf]
        %v999 = vld [vmem:[%s231 + $0xd8] sm:$0xf]
        %v1000 = vld [vmem:[%s231 + $0xdc] sm:$0xf]
        %v1001 = vld [vmem:[%s231 + $0xe0] sm:$0xf]
        %v1002 = vld [vmem:[%s231 + $0xe4] sm:$0xf]
        %v1003 = vld [vmem:[%s231 + $0xe8] sm:$0xf]
        %v1004 = vld [vmem:[%s231 + $0xec] sm:$0xf]
        %v1005 = vld [vmem:[%s231 + $0xf0] sm:$0xf]
        %v1006 = vld [vmem:[%s231 + $0xf4] sm:$0xf]
        %v1007 = vld [vmem:[%s231 + $0xf8] sm:$0xf]
        %v1008 = vld [vmem:[%s231 + $0xfc] sm:$0xf]
        %v1009 = vld [vmem:[%s231 + $0x100] sm:$0xf]
        %v1010 = vld [vmem:[%s231 + $0x104] sm:$0xf]
        %v1011 = vld [vmem:[%s231 + $0x108] sm:$0xf]
        %v1012 = vld [vmem:[%s231 + $0x10c] sm:$0xf]
        %v1013 = vld [vmem:[%s231 + $0x110] sm:$0xf]
        %v1014 = vld [vmem:[%s231 + $0x114] sm:$0xf]
        %v1015 = vld [vmem:[%s231 + $0x118] sm:$0xf]
        %v1016 = vld [vmem:[%s231 + $0x11c] sm:$0xf]
        %v1017 = vld [vmem:[%s231 + $0x120] sm:$0xf]
        %v1018 = vld [vmem:[%s231 + $0x124] sm:$0xf]
        %v1019 = vld [vmem:[%s231 + $0x128] sm:$0xf]
        %v1020 = vld [vmem:[%s231 + $0x12c] sm:$0xf]
        %v1021 = vld [vmem:[%s231 + $0x130] sm:$0xf]
        %v1022 = vld [vmem:[%s231 + $0x134] sm:$0xf]
        %v1023 = vld [vmem:[%s231 + $0x138] sm:$0xf]
        %v1024 = vld [vmem:[%s231 + $0x13c] sm:$0xf]
        %v1025 = vld [vmem:[%s231 + $0x140] sm:$0xf]
        %v1026 = vld [vmem:[%s231 + $0x144] sm:$0xf]
        %v1027 = vld [vmem:[%s231 + $0x148] sm:$0xf]
        %v1028 = vld [vmem:[%s231 + $0x14c] sm:$0xf]
        %v1029 = vld [vmem:[%s231 + $0x150] sm:$0xf]
        %v1030 = vld [vmem:[%s231 + $0x154] sm:$0xf]
        %v1031 = vld [vmem:[%s231 + $0x158] sm:$0xf]
        %v1032 = vld [vmem:[%s231 + $0x15c] sm:$0xf]
        %v1033 = vld [vmem:[%s231 + $0x160] sm:$0xf]
        %v1034 = vld [vmem:[%s231 + $0x164] sm:$0xf]
        %v1035 = vld [vmem:[%s231 + $0x168] sm:$0xf]
        %v1036 = vld [vmem:[%s231 + $0x16c] sm:$0xf]
        %v1037 = vld [vmem:[%s231 + $0x170] sm:$0xf]
        %v1038 = vld [vmem:[%s231 + $0x174] sm:$0xf]
        %v1039 = vld [vmem:[%s231 + $0x178] sm:$0xf]
        %v1040 = vld [vmem:[%s231 + $0x17c] sm:$0xf]
        %v1041 = vld [vmem:[%s231 + $0x180] sm:$0xf]
        %v1042 = vld [vmem:[%s231 + $0x184] sm:$0xf]
        %v1043 = vld [vmem:[%s231 + $0x188] sm:$0xf]
        %v1044 = vld [vmem:[%s231 + $0x18c] sm:$0xf]
        %v1045 = vld [vmem:[%s231 + $0x190] sm:$0xf]
        %v1046 = vld [vmem:[%s231 + $0x194] sm:$0xf]
        %v1047 = vld [vmem:[%s231 + $0x198] sm:$0xf]
        %v1048 = vld [vmem:[%s231 + $0x19c] sm:$0xf]
        %v1049 = vld [vmem:[%s231 + $0x1a0] sm:$0xf]
        %v1050 = vld [vmem:[%s231 + $0x1a4] sm:$0xf]
        %v1051 = vld [vmem:[%s231 + $0x1a8] sm:$0xf]
        %v1052 = vld [vmem:[%s231 + $0x1ac] sm:$0xf]
        %v1053 = vld [vmem:[%s231 + $0x1b0] sm:$0xf]
        %v1054 = vld [vmem:[%s231 + $0x1b4] sm:$0xf]
        %v1055 = vld [vmem:[%s231 + $0x1b8] sm:$0xf]
        %v1056 = vld [vmem:[%s231 + $0x1bc] sm:$0xf]
        %v1057 = vld [vmem:[%s231 + $0x1c0] sm:$0xf]
        %v1058 = vld [vmem:[%s231 + $0x1c4] sm:$0xf]
        %v1059 = vld [vmem:[%s231 + $0x1c8] sm:$0xf]
        %v1060 = vld [vmem:[%s231 + $0x1cc] sm:$0xf]
        %v1061 = vld [vmem:[%s231 + $0x1d0] sm:$0xf]
        %v1062 = vld [vmem:[%s231 + $0x1d4] sm:$0xf]
        %v1063 = vld [vmem:[%s231 + $0x1d8] sm:$0xf]
        %v1064 = vld [vmem:[%s231 + $0x1dc] sm:$0xf]
        %v1065 = vld [vmem:[%s231 + $0x1e0] sm:$0xf]
        %v1066 = vld [vmem:[%s231 + $0x1e4] sm:$0xf]
        %v1067 = vld [vmem:[%s231 + $0x1e8] sm:$0xf]
        %v1068 = vld [vmem:[%s231 + $0x1ec] sm:$0xf]
        %v1069 = vld [vmem:[%s231 + $0x1f0] sm:$0xf]
        %v1070 = vld [vmem:[%s231 + $0x1f4] sm:$0xf]
        %v1071 = vld [vmem:[%s231 + $0x1f8] sm:$0xf]
        %v1072 = vld [vmem:[%s231 + $0x1fc] sm:$0xf]
        %v1073 = vld [vmem:[%s231 + $0x200] sm:$0xf]
        %v1074 = vld [vmem:[%s231 + $0x204] sm:$0xf]
        %v1075 = vld [vmem:[%s231 + $0x208] sm:$0xf]
        %v1076 = vld [vmem:[%s231 + $0x20c] sm:$0xf]
        %v1077 = vld [vmem:[%s231 + $0x210] sm:$0xf]
        %v1078 = vld [vmem:[%s231 + $0x214] sm:$0xf]
        %v1079 = vld [vmem:[%s231 + $0x218] sm:$0xf]
        %v1080 = vld [vmem:[%s231 + $0x21c] sm:$0xf]
        %v1081 = vld [vmem:[%s231 + $0x220] sm:$0xf]
        %v1082 = vld [vmem:[%s231 + $0x224] sm:$0xf]
        %v1083 = vld [vmem:[%s231 + $0x228] sm:$0xf]
        %v1084 = vld [vmem:[%s231 + $0x22c] sm:$0xf]
        %v1085 = vld [vmem:[%s231 + $0x230] sm:$0xf]
        %v1086 = vld [vmem:[%s231 + $0x234] sm:$0xf]
        %v1087 = vld [vmem:[%s231 + $0x238] sm:$0xf]
        %v1088 = vld [vmem:[%s231 + $0x23c] sm:$0xf]
        %v1089 = vld [vmem:[%s231 + $0x240] sm:$0xf]
        %v1090 = vld [vmem:[%s231 + $0x244] sm:$0xf]
        %v1091 = vld [vmem:[%s231 + $0x248] sm:$0xf]
        %v1092 = vld [vmem:[%s231 + $0x24c] sm:$0xf]
        %v1093 = vld [vmem:[%s231 + $0x250] sm:$0xf]
        %v1094 = vld [vmem:[%s231 + $0x254] sm:$0xf]
        %v1095 = vld [vmem:[%s231 + $0x258] sm:$0xf]
        %v1096 = vld [vmem:[%s231 + $0x25c] sm:$0xf]
        %v1097 = vld [vmem:[%s231 + $0x260] sm:$0xf]
        %v1098 = vld [vmem:[%s231 + $0x264] sm:$0xf]
        %v1099 = vld [vmem:[%s231 + $0x268] sm:$0xf]
        %v1100 = vld [vmem:[%s231 + $0x26c] sm:$0xf]
        %v1101 = vld [vmem:[%s231 + $0x270] sm:$0xf]
        %v1102 = vld [vmem:[%s231 + $0x274] sm:$0xf]
        %v1103 = vld [vmem:[%s231 + $0x278] sm:$0xf]
        %v1104 = vld [vmem:[%s231 + $0x27c] sm:$0xf]
        %v1105 = vld [vmem:[%s231 + $0x280] sm:$0xf]
        %v1106 = vld [vmem:[%s231 + $0x284] sm:$0xf]
        %v1107 = vld [vmem:[%s231 + $0x288] sm:$0xf]
        %v1108 = vld [vmem:[%s231 + $0x28c] sm:$0xf]
        %v1109 = vld [vmem:[%s231 + $0x290] sm:$0xf]
        %v1110 = vld [vmem:[%s231 + $0x294] sm:$0xf]
        %v1111 = vld [vmem:[%s231 + $0x298] sm:$0xf]
        %v1112 = vld [vmem:[%s231 + $0x29c] sm:$0xf]
        %v1113 = vld [vmem:[%s231 + $0x2a0] sm:$0xf]
        %v1114 = vld [vmem:[%s231 + $0x2a4] sm:$0xf]
        %v1115 = vld [vmem:[%s231 + $0x2a8] sm:$0xf]
        %v1116 = vld [vmem:[%s231 + $0x2ac] sm:$0xf]
        %v1117 = vld [vmem:[%s231 + $0x2b0] sm:$0xf]
        %v1118 = vld [vmem:[%s231 + $0x2b4] sm:$0xf]
        %v1119 = vld [vmem:[%s231 + $0x2b8] sm:$0xf]
        %v1120 = vld [vmem:[%s231 + $0x2bc] sm:$0xf]
        %v1121 = vld [vmem:[%s231 + $0x2c0] sm:$0xf]
        %v1122 = vld [vmem:[%s231 + $0x2c4] sm:$0xf]
        %v1123 = vld [vmem:[%s231 + $0x2c8] sm:$0xf]
        %v1124 = vld [vmem:[%s231 + $0x2cc] sm:$0xf]
        %v1125 = vld [vmem:[%s231 + $0x2d0] sm:$0xf]
        %v1126 = vld [vmem:[%s231 + $0x2d4] sm:$0xf]
        %v1127 = vld [vmem:[%s231 + $0x2d8] sm:$0xf]
        %v1128 = vld [vmem:[%s231 + $0x2dc] sm:$0xf]
        %v1129 = vld [vmem:[%s231 + $0x2e0] sm:$0xf]
        %v1130 = vld [vmem:[%s231 + $0x2e4] sm:$0xf]
        %v1131 = vld [vmem:[%s231 + $0x2e8] sm:$0xf]
        %v1132 = vld [vmem:[%s231 + $0x2ec] sm:$0xf]
        %v1133 = vld [vmem:[%s231 + $0x2f0] sm:$0xf]
        %v1134 = vld [vmem:[%s231 + $0x2f4] sm:$0xf]
        %v1135 = vld [vmem:[%s231 + $0x2f8] sm:$0xf]
        %v1136 = vld [vmem:[%s231 + $0x2fc] sm:$0xf]
        %v1137 = vld [vmem:[%s231 + $0x300] sm:$0xf]
        %v1138 = vld [vmem:[%s231 + $0x304] sm:$0xf]
        %v1139 = vld [vmem:[%s231 + $0x308] sm:$0xf]
        %v1140 = vld [vmem:[%s231 + $0x30c] sm:$0xf]
        %v1141 = vld [vmem:[%s231 + $0x310] sm:$0xf]
        %v1142 = vld [vmem:[%s231 + $0x314] sm:$0xf]
        %v1143 = vld [vmem:[%s231 + $0x318] sm:$0xf]
        %v1144 = vld [vmem:[%s231 + $0x31c] sm:$0xf]
        %v1145 = vld [vmem:[%s231 + $0x320] sm:$0xf]
        %v1146 = vld [vmem:[%s231 + $0x324] sm:$0xf]
        %v1147 = vld [vmem:[%s231 + $0x328] sm:$0xf]
        %v1148 = vld [vmem:[%s231 + $0x32c] sm:$0xf]
        %v1149 = vld [vmem:[%s231 + $0x330] sm:$0xf]
        %v1150 = vld [vmem:[%s231 + $0x334] sm:$0xf]
        %v1151 = vld [vmem:[%s231 + $0x338] sm:$0xf]
        %v1152 = vld [vmem:[%s231 + $0x33c] sm:$0xf]
        %v1153 = vld [vmem:[%s231 + $0x340] sm:$0xf]
        %v1154 = vld [vmem:[%s231 + $0x344] sm:$0xf]
        %v1155 = vld [vmem:[%s231 + $0x348] sm:$0xf]
        %v1156 = vld [vmem:[%s231 + $0x34c] sm:$0xf]
        %v1157 = vld [vmem:[%s231 + $0x350] sm:$0xf]
        %v1158 = vld [vmem:[%s231 + $0x354] sm:$0xf]
        %v1159 = vld [vmem:[%s231 + $0x358] sm:$0xf]
        %v1160 = vld [vmem:[%s231 + $0x35c] sm:$0xf]
        %v1161 = vld [vmem:[%s231 + $0x360] sm:$0xf]
        %v1162 = vld [vmem:[%s231 + $0x364] sm:$0xf]
        %v1163 = vld [vmem:[%s231 + $0x368] sm:$0xf]
        %v1164 = vld [vmem:[%s231 + $0x36c] sm:$0xf]
        %v1165 = vld [vmem:[%s231 + $0x370] sm:$0xf]
        %v1166 = vld [vmem:[%s231 + $0x374] sm:$0xf]
        %v1167 = vld [vmem:[%s231 + $0x378] sm:$0xf]
        %v1168 = vld [vmem:[%s231 + $0x37c] sm:$0xf]
        %v1169 = vld [vmem:[%s231 + $0x380] sm:$0xf]
        %v1170 = vld [vmem:[%s231 + $0x384] sm:$0xf]
        %v1171 = vld [vmem:[%s231 + $0x388] sm:$0xf]
        %v1172 = vld [vmem:[%s231 + $0x38c] sm:$0xf]
        %v1173 = vld [vmem:[%s231 + $0x390] sm:$0xf]
        %v1174 = vld [vmem:[%s231 + $0x394] sm:$0xf]
        %v1175 = vld [vmem:[%s231 + $0x398] sm:$0xf]
        %v1176 = vld [vmem:[%s231 + $0x39c] sm:$0xf]
        %v1177 = vld [vmem:[%s231 + $0x3a0] sm:$0xf]
        %v1178 = vld [vmem:[%s231 + $0x3a4] sm:$0xf]
        %v1179 = vld [vmem:[%s231 + $0x3a8] sm:$0xf]
        %v1180 = vld [vmem:[%s231 + $0x3ac] sm:$0xf]
        %v1181 = vld [vmem:[%s231 + $0x3b0] sm:$0xf]
        %v1182 = vld [vmem:[%s231 + $0x3b4] sm:$0xf]
        %v1183 = vld [vmem:[%s231 + $0x3b8] sm:$0xf]
        %v1184 = vld [vmem:[%s231 + $0x3bc] sm:$0xf]
        %v1185 = vld [vmem:[%s231 + $0x3c0] sm:$0xf]
        %v1186 = vld [vmem:[%s231 + $0x3c4] sm:$0xf]
        %v1187 = vld [vmem:[%s231 + $0x3c8] sm:$0xf]
        %v1188 = vld [vmem:[%s231 + $0x3cc] sm:$0xf]
        %v1189 = vld [vmem:[%s231 + $0x3d0] sm:$0xf]
        %v1190 = vld [vmem:[%s231 + $0x3d4] sm:$0xf]
        %v1191 = vld [vmem:[%s231 + $0x3d8] sm:$0xf]
        %v1192 = vld [vmem:[%s231 + $0x3dc] sm:$0xf]
        %v1193 = vld [vmem:[%s231 + $0x3e0] sm:$0xf]
        %v1194 = vld [vmem:[%s231 + $0x3e4] sm:$0xf]
        %v1195 = vld [vmem:[%s231 + $0x3e8] sm:$0xf]
        %v1196 = vld [vmem:[%s231 + $0x3ec] sm:$0xf]
        %v1197 = vld [vmem:[%s231 + $0x3f0] sm:$0xf]
        %v1198 = vld [vmem:[%s231 + $0x3f4] sm:$0xf]
        %v1199 = vld [vmem:[%s231 + $0x3f8] sm:$0xf]
        %v1200 = vld [vmem:[%s231 + $0x3fc] sm:$0xf]
        %v1201 = vld [vmem:[%s231 + $0x400] sm:$0xf]
        %v1202 = vld [vmem:[%s231 + $0x404] sm:$0xf]
        %v1203 = vld [vmem:[%s231 + $0x408] sm:$0xf]
        %v1204 = vld [vmem:[%s231 + $0x40c] sm:$0xf]
        %v1205 = vld [vmem:[%s231 + $0x410] sm:$0xf]
        %v1206 = vld [vmem:[%s231 + $0x414] sm:$0xf]
        %v1207 = vld [vmem:[%s231 + $0x418] sm:$0xf]
        %v1208 = vld [vmem:[%s231 + $0x41c] sm:$0xf]
        %v1209 = vld [vmem:[%s231 + $0x420] sm:$0xf]
        %v1210 = vld [vmem:[%s231 + $0x424] sm:$0xf]
        %v1211 = vld [vmem:[%s231 + $0x428] sm:$0xf]
        %v1212 = vld [vmem:[%s231 + $0x42c] sm:$0xf]
        %v1213 = vld [vmem:[%s231 + $0x430] sm:$0xf]
        %v1214 = vld [vmem:[%s231 + $0x434] sm:$0xf]
        %v1215 = vld [vmem:[%s231 + $0x438] sm:$0xf]
        %v1216 = vld [vmem:[%s231 + $0x43c] sm:$0xf]
        %v1217 = vld [vmem:[%s231 + $0x440] sm:$0xf]
        %v1218 = vld [vmem:[%s231 + $0x444] sm:$0xf]
        %v1219 = vld [vmem:[%s231 + $0x448] sm:$0xf]
        %v1220 = vld [vmem:[%s231 + $0x44c] sm:$0xf]
        %v1221 = vld [vmem:[%s231 + $0x450] sm:$0xf]
        %v1222 = vld [vmem:[%s231 + $0x454] sm:$0xf]
        %v1223 = vld [vmem:[%s231 + $0x458] sm:$0xf]
        %v1224 = vld [vmem:[%s231 + $0x45c] sm:$0xf]
        %v1225 = vld [vmem:[%s231 + $0x460] sm:$0xf]
        %v1226 = vld [vmem:[%s231 + $0x464] sm:$0xf]
        %v1227 = vld [vmem:[%s231 + $0x468] sm:$0xf]
        %v1228 = vld [vmem:[%s231 + $0x46c] sm:$0xf]
        %v1229 = vld [vmem:[%s231 + $0x470] sm:$0xf]
        %v1230 = vld [vmem:[%s231 + $0x474] sm:$0xf]
        %v1231 = vld [vmem:[%s231 + $0x478] sm:$0xf]
        %v1232 = vld [vmem:[%s231 + $0x47c] sm:$0xf]
        %v1233 = vld [vmem:[%s231 + $0x480] sm:$0xf]
        %v1234 = vld [vmem:[%s231 + $0x484] sm:$0xf]
        %v1235 = vld [vmem:[%s231 + $0x488] sm:$0xf]
        %v1236 = vld [vmem:[%s231 + $0x48c] sm:$0xf]
        %v1237 = vld [vmem:[%s231 + $0x490] sm:$0xf]
        %v1238 = vld [vmem:[%s231 + $0x494] sm:$0xf]
        %v1239 = vld [vmem:[%s231 + $0x498] sm:$0xf]
        %v1240 = vld [vmem:[%s231 + $0x49c] sm:$0xf]
        %v1241 = vld [vmem:[%s231 + $0x4a0] sm:$0xf]
        %v1242 = vld [vmem:[%s231 + $0x4a4] sm:$0xf]
        %v1243 = vld [vmem:[%s231 + $0x4a8] sm:$0xf]
        %v1244 = vld [vmem:[%s231 + $0x4ac] sm:$0xf]
        %v1245 = vld [vmem:[%s231 + $0x4b0] sm:$0xf]
        %v1246 = vld [vmem:[%s231 + $0x4b4] sm:$0xf]
        %v1247 = vld [vmem:[%s231 + $0x4b8] sm:$0xf]
        %v1248 = vld [vmem:[%s231 + $0x4bc] sm:$0xf]
        %v1249 = vld [vmem:[%s231 + $0x4c0] sm:$0xf]
        %v1250 = vld [vmem:[%s231 + $0x4c4] sm:$0xf]
        %v1251 = vld [vmem:[%s231 + $0x4c8] sm:$0xf]
        %v1252 = vld [vmem:[%s231 + $0x4cc] sm:$0xf]
        %v1253 = vld [vmem:[%s231 + $0x4d0] sm:$0xf]
        %v1254 = vld [vmem:[%s231 + $0x4d4] sm:$0xf]
        %v1255 = vld [vmem:[%s231 + $0x4d8] sm:$0xf]
        %v1256 = vld [vmem:[%s231 + $0x4dc] sm:$0xf]
        %v1257 = vld [vmem:[%s231 + $0x4e0] sm:$0xf]
        %v1258 = vld [vmem:[%s231 + $0x4e4] sm:$0xf]
        %v1259 = vld [vmem:[%s231 + $0x4e8] sm:$0xf]
        %v1260 = vld [vmem:[%s231 + $0x4ec] sm:$0xf]
        %v1261 = vld [vmem:[%s231 + $0x4f0] sm:$0xf]
        %v1262 = vld [vmem:[%s231 + $0x4f4] sm:$0xf]
        %v1263 = vld [vmem:[%s231 + $0x4f8] sm:$0xf]
        %v1264 = vld [vmem:[%s231 + $0x4fc] sm:$0xf]
        %v1265 = vld [vmem:[%s231 + $0x500] sm:$0xf]
        %v1266 = vld [vmem:[%s231 + $0x504] sm:$0xf]
        %v1267 = vld [vmem:[%s231 + $0x508] sm:$0xf]
        %v1268 = vld [vmem:[%s231 + $0x50c] sm:$0xf]
        %v1269 = vld [vmem:[%s231 + $0x510] sm:$0xf]
        %v1270 = vld [vmem:[%s231 + $0x514] sm:$0xf]
        %v1271 = vld [vmem:[%s231 + $0x518] sm:$0xf]
        %v1272 = vld [vmem:[%s231 + $0x51c] sm:$0xf]
        %v1273 = vld [vmem:[%s231 + $0x520] sm:$0xf]
        %v1274 = vld [vmem:[%s231 + $0x524] sm:$0xf]
        %v1275 = vld [vmem:[%s231 + $0x528] sm:$0xf]
        %v1276 = vld [vmem:[%s231 + $0x52c] sm:$0xf]
        %v1277 = vld [vmem:[%s231 + $0x530] sm:$0xf]
        %v1278 = vld [vmem:[%s231 + $0x534] sm:$0xf]
        %v1279 = vld [vmem:[%s231 + $0x538] sm:$0xf]
        %v1280 = vld [vmem:[%s231 + $0x53c] sm:$0xf]
        %v1281 = vld [vmem:[%s231 + $0x540] sm:$0xf]
        %v1282 = vld [vmem:[%s231 + $0x544] sm:$0xf]
        %v1283 = vld [vmem:[%s231 + $0x548] sm:$0xf]
        %v1284 = vld [vmem:[%s231 + $0x54c] sm:$0xf]
        %v1285 = vld [vmem:[%s231 + $0x550] sm:$0xf]
        %v1286 = vld [vmem:[%s231 + $0x554] sm:$0xf]
        %v1287 = vld [vmem:[%s231 + $0x558] sm:$0xf]
        %v1288 = vld [vmem:[%s231 + $0x55c] sm:$0xf]
        %v1289 = vld [vmem:[%s231 + $0x560] sm:$0xf]
        %v1290 = vld [vmem:[%s231 + $0x564] sm:$0xf]
        %v1291 = vld [vmem:[%s231 + $0x568] sm:$0xf]
        %v1292 = vld [vmem:[%s231 + $0x56c] sm:$0xf]
        %v1293 = vld [vmem:[%s231 + $0x570] sm:$0xf]
        %v1294 = vld [vmem:[%s231 + $0x574] sm:$0xf]
        %v1295 = vld [vmem:[%s231 + $0x578] sm:$0xf]
        %v1296 = vld [vmem:[%s231 + $0x57c] sm:$0xf]
        %v1297 = vld [vmem:[%s231 + $0x580] sm:$0xf]
        %v1298 = vld [vmem:[%s231 + $0x584] sm:$0xf]
        %v1299 = vld [vmem:[%s231 + $0x588] sm:$0xf]
        %v1300 = vld [vmem:[%s231 + $0x58c] sm:$0xf]
        %v1301 = vld [vmem:[%s231 + $0x590] sm:$0xf]
        %v1302 = vld [vmem:[%s231 + $0x594] sm:$0xf]
        %v1303 = vld [vmem:[%s231 + $0x598] sm:$0xf]
        %v1304 = vld [vmem:[%s231 + $0x59c] sm:$0xf]
        %v1305 = vld [vmem:[%s231 + $0x5a0] sm:$0xf]
        %v1306 = vld [vmem:[%s231 + $0x5a4] sm:$0xf]
        %v1307 = vld [vmem:[%s231 + $0x5a8] sm:$0xf]
        %v1308 = vld [vmem:[%s231 + $0x5ac] sm:$0xf]
        %v1309 = vld [vmem:[%s231 + $0x5b0] sm:$0xf]
        %v1310 = vld [vmem:[%s231 + $0x5b4] sm:$0xf]
        %v1311 = vld [vmem:[%s231 + $0x5b8] sm:$0xf]
        %v1312 = vld [vmem:[%s231 + $0x5bc] sm:$0xf]
        %v1313 = vld [vmem:[%s231 + $0x5c0] sm:$0xf]
        %v1314 = vld [vmem:[%s231 + $0x5c4] sm:$0xf]
        %v1315 = vld [vmem:[%s231 + $0x5c8] sm:$0xf]
        %v1316 = vld [vmem:[%s231 + $0x5cc] sm:$0xf]
        %v1317 = vld [vmem:[%s231 + $0x5d0] sm:$0xf]
        %v1318 = vld [vmem:[%s231 + $0x5d4] sm:$0xf]
        %v1319 = vld [vmem:[%s231 + $0x5d8] sm:$0xf]
        %v1320 = vld [vmem:[%s231 + $0x5dc] sm:$0xf]
        %v1321 = vld [vmem:[%s231 + $0x5e0] sm:$0xf]
        %v1322 = vld [vmem:[%s231 + $0x5e4] sm:$0xf]
        %v1323 = vld [vmem:[%s231 + $0x5e8] sm:$0xf]
        %v1324 = vld [vmem:[%s231 + $0x5ec] sm:$0xf]
        %v1325 = vld [vmem:[%s231 + $0x5f0] sm:$0xf]
        %v1326 = vld [vmem:[%s231 + $0x5f4] sm:$0xf]
        %v1327 = vld [vmem:[%s231 + $0x5f8] sm:$0xf]
        %v1328 = vld [vmem:[%s231 + $0x5fc] sm:$0xf]
        %v1329 = vld [vmem:[%s231 + $0x600] sm:$0xf]
        %v1330 = vld [vmem:[%s231 + $0x604] sm:$0xf]
        %v1331 = vld [vmem:[%s231 + $0x608] sm:$0xf]
        %v1332 = vld [vmem:[%s231 + $0x60c] sm:$0xf]
        %v1333 = vld [vmem:[%s231 + $0x610] sm:$0xf]
        %v1334 = vld [vmem:[%s231 + $0x614] sm:$0xf]
        %v1335 = vld [vmem:[%s231 + $0x618] sm:$0xf]
        %v1336 = vld [vmem:[%s231 + $0x61c] sm:$0xf]
        %v1337 = vld [vmem:[%s231 + $0x620] sm:$0xf]
        %v1338 = vld [vmem:[%s231 + $0x624] sm:$0xf]
        %v1339 = vld [vmem:[%s231 + $0x628] sm:$0xf]
        %v1340 = vld [vmem:[%s231 + $0x62c] sm:$0xf]
        %v1341 = vld [vmem:[%s231 + $0x630] sm:$0xf]
        %v1342 = vld [vmem:[%s231 + $0x634] sm:$0xf]
        %v1343 = vld [vmem:[%s231 + $0x638] sm:$0xf]
        %v1344 = vld [vmem:[%s231 + $0x63c] sm:$0xf]
        %v1345 = vld [vmem:[%s231 + $0x640] sm:$0xf]
        %v1346 = vld [vmem:[%s231 + $0x644] sm:$0xf]
        %v1347 = vld [vmem:[%s231 + $0x648] sm:$0xf]
        %v1348 = vld [vmem:[%s231 + $0x64c] sm:$0xf]
        %v1349 = vld [vmem:[%s231 + $0x650] sm:$0xf]
        %v1350 = vld [vmem:[%s231 + $0x654] sm:$0xf]
        %v1351 = vld [vmem:[%s231 + $0x658] sm:$0xf]
        %v1352 = vld [vmem:[%s231 + $0x65c] sm:$0xf]
        %v1353 = vld [vmem:[%s231 + $0x660] sm:$0xf]
        %v1354 = vld [vmem:[%s231 + $0x664] sm:$0xf]
        %v1355 = vld [vmem:[%s231 + $0x668] sm:$0xf]
        %v1356 = vld [vmem:[%s231 + $0x66c] sm:$0xf]
        %v1357 = vld [vmem:[%s231 + $0x670] sm:$0xf]
        %v1358 = vld [vmem:[%s231 + $0x674] sm:$0xf]
        %v1359 = vld [vmem:[%s231 + $0x678] sm:$0xf]
        %v1360 = vld [vmem:[%s231 + $0x67c] sm:$0xf]
        %v1361 = vld [vmem:[%s231 + $0x680] sm:$0xf]
        %v1362 = vld [vmem:[%s231 + $0x684] sm:$0xf]
        %v1363 = vld [vmem:[%s231 + $0x688] sm:$0xf]
        %v1364 = vld [vmem:[%s231 + $0x68c] sm:$0xf]
        %v1365 = vld [vmem:[%s231 + $0x690] sm:$0xf]
        %v1366 = vld [vmem:[%s231 + $0x694] sm:$0xf]
        %v1367 = vld [vmem:[%s231 + $0x698] sm:$0xf]
        %v1368 = vld [vmem:[%s231 + $0x69c] sm:$0xf]
        %v1369 = vld [vmem:[%s231 + $0x6a0] sm:$0xf]
        %v1370 = vld [vmem:[%s231 + $0x6a4] sm:$0xf]
        %v1371 = vld [vmem:[%s231 + $0x6a8] sm:$0xf]
        %v1372 = vld [vmem:[%s231 + $0x6ac] sm:$0xf]
        %v1373 = vld [vmem:[%s231 + $0x6b0] sm:$0xf]
        %v1374 = vld [vmem:[%s231 + $0x6b4] sm:$0xf]
        %v1375 = vld [vmem:[%s231 + $0x6b8] sm:$0xf]
        %v1376 = vld [vmem:[%s231 + $0x6bc] sm:$0xf]
        %v1377 = vld [vmem:[%s231 + $0x6c0] sm:$0xf]
        %v1378 = vld [vmem:[%s231 + $0x6c4] sm:$0xf]
        %v1379 = vld [vmem:[%s231 + $0x6c8] sm:$0xf]
        %v1380 = vld [vmem:[%s231 + $0x6cc] sm:$0xf]
        %v1381 = vld [vmem:[%s231 + $0x6d0] sm:$0xf]
        %v1382 = vld [vmem:[%s231 + $0x6d4] sm:$0xf]
        %v1383 = vld [vmem:[%s231 + $0x6d8] sm:$0xf]
        %v1384 = vld [vmem:[%s231 + $0x6dc] sm:$0xf]
        %v1385 = vld [vmem:[%s231 + $0x6e0] sm:$0xf]
        %v1386 = vld [vmem:[%s231 + $0x6e4] sm:$0xf]
        %v1387 = vld [vmem:[%s231 + $0x6e8] sm:$0xf]
        %v1388 = vld [vmem:[%s231 + $0x6ec] sm:$0xf]
        %v1389 = vld [vmem:[%s231 + $0x6f0] sm:$0xf]
        %v1390 = vld [vmem:[%s231 + $0x6f4] sm:$0xf]
        %v1391 = vld [vmem:[%s231 + $0x6f8] sm:$0xf]
        %v1392 = vld [vmem:[%s231 + $0x6fc] sm:$0xf]
        %v1393 = vld [vmem:[%s231 + $0x700] sm:$0xf]
        %v1394 = vld [vmem:[%s231 + $0x704] sm:$0xf]
        %v1395 = vld [vmem:[%s231 + $0x708] sm:$0xf]
        %v1396 = vld [vmem:[%s231 + $0x70c] sm:$0xf]
        %v1397 = vld [vmem:[%s231 + $0x710] sm:$0xf]
        %v1398 = vld [vmem:[%s231 + $0x714] sm:$0xf]
        %v1399 = vld [vmem:[%s231 + $0x718] sm:$0xf]
        %v1400 = vld [vmem:[%s231 + $0x71c] sm:$0xf]
        %v1401 = vld [vmem:[%s231 + $0x720] sm:$0xf]
        %v1402 = vld [vmem:[%s231 + $0x724] sm:$0xf]
        %v1403 = vld [vmem:[%s231 + $0x728] sm:$0xf]
        %v1404 = vld [vmem:[%s231 + $0x72c] sm:$0xf]
        %v1405 = vld [vmem:[%s231 + $0x730] sm:$0xf]
        %v1406 = vld [vmem:[%s231 + $0x734] sm:$0xf]
        %v1407 = vld [vmem:[%s231 + $0x738] sm:$0xf]
        %v1408 = vld [vmem:[%s231 + $0x73c] sm:$0xf]
        %v1409 = vld [vmem:[%s231 + $0x740] sm:$0xf]
        %v1410 = vld [vmem:[%s231 + $0x744] sm:$0xf]
        %v1411 = vld [vmem:[%s231 + $0x748] sm:$0xf]
        %v1412 = vld [vmem:[%s231 + $0x74c] sm:$0xf]
        %v1413 = vld [vmem:[%s231 + $0x750] sm:$0xf]
        %v1414 = vld [vmem:[%s231 + $0x754] sm:$0xf]
        %v1415 = vld [vmem:[%s231 + $0x758] sm:$0xf]
        %v1416 = vld [vmem:[%s231 + $0x75c] sm:$0xf]
        %v1417 = vld [vmem:[%s231 + $0x760] sm:$0xf]
        %v1418 = vld [vmem:[%s231 + $0x764] sm:$0xf]
        %v1419 = vld [vmem:[%s231 + $0x768] sm:$0xf]
        %v1420 = vld [vmem:[%s231 + $0x76c] sm:$0xf]
        %v1421 = vld [vmem:[%s231 + $0x770] sm:$0xf]
        %v1422 = vld [vmem:[%s231 + $0x774] sm:$0xf]
        %v1423 = vld [vmem:[%s231 + $0x778] sm:$0xf]
        %v1424 = vld [vmem:[%s231 + $0x77c] sm:$0xf]
        %v1425 = vld [vmem:[%s231 + $0x780] sm:$0xf]
        %v1426 = vld [vmem:[%s231 + $0x784] sm:$0xf]
        %v1427 = vld [vmem:[%s231 + $0x788] sm:$0xf]
        %v1428 = vld [vmem:[%s231 + $0x78c] sm:$0xf]
        %v1429 = vld [vmem:[%s231 + $0x790] sm:$0xf]
        %v1430 = vld [vmem:[%s231 + $0x794] sm:$0xf]
        %v1431 = vld [vmem:[%s231 + $0x798] sm:$0xf]
        %v1432 = vld [vmem:[%s231 + $0x79c] sm:$0xf]
        %v1433 = vld [vmem:[%s231 + $0x7a0] sm:$0xf]
        %v1434 = vld [vmem:[%s231 + $0x7a4] sm:$0xf]
        %v1435 = vld [vmem:[%s231 + $0x7a8] sm:$0xf]
        %v1436 = vld [vmem:[%s231 + $0x7ac] sm:$0xf]
        %v1437 = vld [vmem:[%s231 + $0x7b0] sm:$0xf]
        %v1438 = vld [vmem:[%s231 + $0x7b4] sm:$0xf]
        %v1439 = vld [vmem:[%s231 + $0x7b8] sm:$0xf]
        %v1440 = vld [vmem:[%s231 + $0x7bc] sm:$0xf]
        %v1441 = vld [vmem:[%s231 + $0x7c0] sm:$0xf]
        %v1442 = vld [vmem:[%s231 + $0x7c4] sm:$0xf]
        %v1443 = vld [vmem:[%s231 + $0x7c8] sm:$0xf]
        %v1444 = vld [vmem:[%s231 + $0x7cc] sm:$0xf]
        %v1445 = vld [vmem:[%s231 + $0x7d0] sm:$0xf]
        %v1446 = vld [vmem:[%s231 + $0x7d4] sm:$0xf]
        %v1447 = vld [vmem:[%s231 + $0x7d8] sm:$0xf]
        %v1448 = vld [vmem:[%s231 + $0x7dc] sm:$0xf]
        %v1449 = vld [vmem:[%s231 + $0x7e0] sm:$0xf]
        %v1450 = vld [vmem:[%s231 + $0x7e4] sm:$0xf]
        %v1451 = vld [vmem:[%s231 + $0x7e8] sm:$0xf]
        %v1452 = vld [vmem:[%s231 + $0x7ec] sm:$0xf]
        %v1453 = vld [vmem:[%s231 + $0x7f0] sm:$0xf]
        %v1454 = vld [vmem:[%s231 + $0x7f4] sm:$0xf]
        %v1455 = vld [vmem:[%s231 + $0x7f8] sm:$0xf]
        %v1456 = vld [vmem:[%s231 + $0x7fc] sm:$0xf]
        %v1457 = vld [vmem:[%s231 + $0x800] sm:$0xf]
        %v1458 = vld [vmem:[%s231 + $0x804] sm:$0xf]
        %v1459 = vld [vmem:[%s231 + $0x808] sm:$0xf]
        %v1460 = vld [vmem:[%s231 + $0x80c] sm:$0xf]
        %v1461 = vld [vmem:[%s231 + $0x810] sm:$0xf]
        %v1462 = vld [vmem:[%s231 + $0x814] sm:$0xf]
        %v1463 = vld [vmem:[%s231 + $0x818] sm:$0xf]
        %v1464 = vld [vmem:[%s231 + $0x81c] sm:$0xf]
        %v1465 = vld [vmem:[%s231 + $0x820] sm:$0xf]
        %v1466 = vld [vmem:[%s231 + $0x824] sm:$0xf]
        %v1467 = vld [vmem:[%s231 + $0x828] sm:$0xf]
        %v1468 = vld [vmem:[%s231 + $0x82c] sm:$0xf]
        %v1469 = vld [vmem:[%s231 + $0x830] sm:$0xf]
        %v1470 = vld [vmem:[%s231 + $0x834] sm:$0xf]
        %v1471 = vld [vmem:[%s231 + $0x838] sm:$0xf]
        %v1472 = vld [vmem:[%s231 + $0x83c] sm:$0xf]
        %v1473 = vld [vmem:[%s231 + $0x840] sm:$0xf]
        %v1474 = vld [vmem:[%s231 + $0x844] sm:$0xf]
        %v1475 = vld [vmem:[%s231 + $0x848] sm:$0xf]
        %v1476 = vld [vmem:[%s231 + $0x84c] sm:$0xf]
        %v1477 = vld [vmem:[%s231 + $0x850] sm:$0xf]
        %v1478 = vld [vmem:[%s231 + $0x854] sm:$0xf]
        %v1479 = vld [vmem:[%s231 + $0x858] sm:$0xf]
        %v1480 = vld [vmem:[%s231 + $0x85c] sm:$0xf]
        %v1481 = vld [vmem:[%s231 + $0x860] sm:$0xf]
        %v1482 = vld [vmem:[%s231 + $0x864] sm:$0xf]
        %v1483 = vld [vmem:[%s231 + $0x868] sm:$0xf]
        %v1484 = vld [vmem:[%s231 + $0x86c] sm:$0xf]
        %v1485 = vld [vmem:[%s231 + $0x870] sm:$0xf]
        %v1486 = vld [vmem:[%s231 + $0x874] sm:$0xf]
        %v1487 = vld [vmem:[%s231 + $0x878] sm:$0xf]
        %v1488 = vld [vmem:[%s231 + $0x87c] sm:$0xf]
        %v1489 = vld [vmem:[%s231 + $0x880] sm:$0xf]
        %v1490 = vld [vmem:[%s231 + $0x884] sm:$0xf]
        %v1491 = vld [vmem:[%s231 + $0x888] sm:$0xf]
        %v1492 = vld [vmem:[%s231 + $0x88c] sm:$0xf]
        %v1493 = vld [vmem:[%s231 + $0x890] sm:$0xf]
        %v1494 = vld [vmem:[%s231 + $0x894] sm:$0xf]
        %v1495 = vld [vmem:[%s231 + $0x898] sm:$0xf]
        %v1496 = vld [vmem:[%s231 + $0x89c] sm:$0xf]
        %v1497 = vld [vmem:[%s231 + $0x8a0] sm:$0xf]
        %v1498 = vld [vmem:[%s231 + $0x8a4] sm:$0xf]
        %v1499 = vld [vmem:[%s231 + $0x8a8] sm:$0xf]
        %v1500 = vld [vmem:[%s231 + $0x8ac] sm:$0xf]
        %v1501 = vld [vmem:[%s231 + $0x8b0] sm:$0xf]
        %v1502 = vld [vmem:[%s231 + $0x8b4] sm:$0xf]
        %v1503 = vld [vmem:[%s231 + $0x8b8] sm:$0xf]
        %v1504 = vld [vmem:[%s231 + $0x8bc] sm:$0xf]
        %v1505 = vld [vmem:[%s231 + $0x8c0] sm:$0xf]
        %v1506 = vld [vmem:[%s231 + $0x8c4] sm:$0xf]
        %v1507 = vld [vmem:[%s231 + $0x8c8] sm:$0xf]
        %v1508 = vld [vmem:[%s231 + $0x8cc] sm:$0xf]
        %v1509 = vld [vmem:[%s231 + $0x8d0] sm:$0xf]
        %v1510 = vld [vmem:[%s231 + $0x8d4] sm:$0xf]
        %v1511 = vld [vmem:[%s231 + $0x8d8] sm:$0xf]
        %v1512 = vld [vmem:[%s231 + $0x8dc] sm:$0xf]
        %v1513 = vld [vmem:[%s231 + $0x8e0] sm:$0xf]
        %v1514 = vld [vmem:[%s231 + $0x8e4] sm:$0xf]
        %v1515 = vld [vmem:[%s231 + $0x8e8] sm:$0xf]
        %v1516 = vld [vmem:[%s231 + $0x8ec] sm:$0xf]
        %v1517 = vld [vmem:[%s231 + $0x8f0] sm:$0xf]
        %v1518 = vld [vmem:[%s231 + $0x8f4] sm:$0xf]
        %v1519 = vld [vmem:[%s231 + $0x8f8] sm:$0xf]
        %v1520 = vld [vmem:[%s231 + $0x8fc] sm:$0xf]
        %v1521 = vld [vmem:[%s231 + $0x900] sm:$0xf]
        %v1522 = vld [vmem:[%s231 + $0x904] sm:$0xf]
        %v1523 = vld [vmem:[%s231 + $0x908] sm:$0xf]
        %v1524 = vld [vmem:[%s231 + $0x90c] sm:$0xf]
        %v1525 = vld [vmem:[%s231 + $0x910] sm:$0xf]
        %v1526 = vld [vmem:[%s231 + $0x914] sm:$0xf]
        %v1527 = vld [vmem:[%s231 + $0x918] sm:$0xf]
        %v1528 = vld [vmem:[%s231 + $0x91c] sm:$0xf]
        %v1529 = vld [vmem:[%s231 + $0x920] sm:$0xf]
        %v1530 = vld [vmem:[%s231 + $0x924] sm:$0xf]
        %v1531 = vld [vmem:[%s231 + $0x928] sm:$0xf]
        %v1532 = vld [vmem:[%s231 + $0x92c] sm:$0xf]
        %v1533 = vld [vmem:[%s231 + $0x930] sm:$0xf]
        %v1534 = vld [vmem:[%s231 + $0x934] sm:$0xf]
        %v1535 = vld [vmem:[%s231 + $0x938] sm:$0xf]
        %v1536 = vld [vmem:[%s231 + $0x93c] sm:$0xf]
        %v1537 = vld [vmem:[%s231 + $0x940] sm:$0xf]
        %v1538 = vld [vmem:[%s231 + $0x944] sm:$0xf]
        %v1539 = vld [vmem:[%s231 + $0x948] sm:$0xf]
        %v1540 = vld [vmem:[%s231 + $0x94c] sm:$0xf]
        %v1541 = vld [vmem:[%s231 + $0x950] sm:$0xf]
        %v1542 = vld [vmem:[%s231 + $0x954] sm:$0xf]
        %v1543 = vld [vmem:[%s231 + $0x958] sm:$0xf]
        %v1544 = vld [vmem:[%s231 + $0x95c] sm:$0xf]
        %v1545 = vld [vmem:[%s231 + $0x960] sm:$0xf]
        %v1546 = vld [vmem:[%s231 + $0x964] sm:$0xf]
        %v1547 = vld [vmem:[%s231 + $0x968] sm:$0xf]
        %v1548 = vld [vmem:[%s231 + $0x96c] sm:$0xf]
        %v1549 = vld [vmem:[%s231 + $0x970] sm:$0xf]
        %v1550 = vld [vmem:[%s231 + $0x974] sm:$0xf]
        %v1551 = vld [vmem:[%s231 + $0x978] sm:$0xf]
        %v1552 = vld [vmem:[%s231 + $0x97c] sm:$0xf]
        %v1553 = vld [vmem:[%s231 + $0x980] sm:$0xf]
        %v1554 = vld [vmem:[%s231 + $0x984] sm:$0xf]
        %v1555 = vld [vmem:[%s231 + $0x988] sm:$0xf]
        %v1556 = vld [vmem:[%s231 + $0x98c] sm:$0xf]
        %v1557 = vld [vmem:[%s231 + $0x990] sm:$0xf]
        %v1558 = vld [vmem:[%s231 + $0x994] sm:$0xf]
        %v1559 = vld [vmem:[%s231 + $0x998] sm:$0xf]
        %v1560 = vld [vmem:[%s231 + $0x99c] sm:$0xf]
        %v1561 = vld [vmem:[%s231 + $0x9a0] sm:$0xf]
        %v1562 = vld [vmem:[%s231 + $0x9a4] sm:$0xf]
        %v1563 = vld [vmem:[%s231 + $0x9a8] sm:$0xf]
        %v1564 = vld [vmem:[%s231 + $0x9ac] sm:$0xf]
        %v1565 = vld [vmem:[%s231 + $0x9b0] sm:$0xf]
        %v1566 = vld [vmem:[%s231 + $0x9b4] sm:$0xf]
        %v1567 = vld [vmem:[%s231 + $0x9b8] sm:$0xf]
        %v1568 = vld [vmem:[%s231 + $0x9bc] sm:$0xf]
        %v1569 = vld [vmem:[%s231 + $0x9c0] sm:$0xf]
        %v1570 = vld [vmem:[%s231 + $0x9c4] sm:$0xf]
        %v1571 = vld [vmem:[%s231 + $0x9c8] sm:$0xf]
        %v1572 = vld [vmem:[%s231 + $0x9cc] sm:$0xf]
        %v1573 = vld [vmem:[%s231 + $0x9d0] sm:$0xf]
        %v1574 = vld [vmem:[%s231 + $0x9d4] sm:$0xf]
        %v1575 = vld [vmem:[%s231 + $0x9d8] sm:$0xf]
        %v1576 = vld [vmem:[%s231 + $0x9dc] sm:$0xf]
        %v1577 = vld [vmem:[%s231 + $0x9e0] sm:$0xf]
        %v1578 = vld [vmem:[%s231 + $0x9e4] sm:$0xf]
        %v1579 = vld [vmem:[%s231 + $0x9e8] sm:$0xf]
        %v1580 = vld [vmem:[%s231 + $0x9ec] sm:$0xf]
        %v1581 = vld [vmem:[%s231 + $0x9f0] sm:$0xf]
        %v1582 = vld [vmem:[%s231 + $0x9f4] sm:$0xf]
        %v1583 = vld [vmem:[%s231 + $0x9f8] sm:$0xf]
        %v1584 = vld [vmem:[%s231 + $0x9fc] sm:$0xf]
        %v1585 = vld [vmem:[%s231 + $0xa00] sm:$0xf]
        %v1586 = vld [vmem:[%s231 + $0xa04] sm:$0xf]
        %v1587 = vld [vmem:[%s231 + $0xa08] sm:$0xf]
        %v1588 = vld [vmem:[%s231 + $0xa0c] sm:$0xf]
        %v1589 = vld [vmem:[%s231 + $0xa10] sm:$0xf]
        %v1590 = vld [vmem:[%s231 + $0xa14] sm:$0xf]
        %v1591 = vld [vmem:[%s231 + $0xa18] sm:$0xf]
        %v1592 = vld [vmem:[%s231 + $0xa1c] sm:$0xf]
        %v1593 = vld [vmem:[%s231 + $0xa20] sm:$0xf]
        %v1594 = vld [vmem:[%s231 + $0xa24] sm:$0xf]
        %v1595 = vld [vmem:[%s231 + $0xa28] sm:$0xf]
        %v1596 = vld [vmem:[%s231 + $0xa2c] sm:$0xf]
        %v1597 = vld [vmem:[%s231 + $0xa30] sm:$0xf]
        %v1598 = vld [vmem:[%s231 + $0xa34] sm:$0xf]
        %v1599 = vld [vmem:[%s231 + $0xa38] sm:$0xf]
        %v1600 = vld [vmem:[%s231 + $0xa3c] sm:$0xf]
        %v1601 = vld [vmem:[%s231 + $0xa40] sm:$0xf]
        %v1602 = vld [vmem:[%s231 + $0xa44] sm:$0xf]
        %v1603 = vld [vmem:[%s231 + $0xa48] sm:$0xf]
        %v1604 = vld [vmem:[%s231 + $0xa4c] sm:$0xf]
        %v1605 = vld [vmem:[%s231 + $0xa50] sm:$0xf]
        %v1606 = vld [vmem:[%s231 + $0xa54] sm:$0xf]
        %v1607 = vld [vmem:[%s231 + $0xa58] sm:$0xf]
        %v1608 = vld [vmem:[%s231 + $0xa5c] sm:$0xf]
        %v1609 = vld [vmem:[%s231 + $0xa60] sm:$0xf]
        %v1610 = vld [vmem:[%s231 + $0xa64] sm:$0xf]
        %v1611 = vld [vmem:[%s231 + $0xa68] sm:$0xf]
        %v1612 = vld [vmem:[%s231 + $0xa6c] sm:$0xf]
        %v1613 = vld [vmem:[%s231 + $0xa70] sm:$0xf]
        %v1614 = vld [vmem:[%s231 + $0xa74] sm:$0xf]
        %v1615 = vld [vmem:[%s231 + $0xa78] sm:$0xf]
        %v1616 = vld [vmem:[%s231 + $0xa7c] sm:$0xf]
        %v1617 = vld [vmem:[%s231 + $0xa80] sm:$0xf]
        %v1618 = vld [vmem:[%s231 + $0xa84] sm:$0xf]
        %v1619 = vld [vmem:[%s231 + $0xa88] sm:$0xf]
        %v1620 = vld [vmem:[%s231 + $0xa8c] sm:$0xf]
        %v1621 = vld [vmem:[%s231 + $0xa90] sm:$0xf]
        %v1622 = vld [vmem:[%s231 + $0xa94] sm:$0xf]
        %v1623 = vld [vmem:[%s231 + $0xa98] sm:$0xf]
        %v1624 = vld [vmem:[%s231 + $0xa9c] sm:$0xf]
        %v1625 = vld [vmem:[%s231 + $0xaa0] sm:$0xf]
        %v1626 = vld [vmem:[%s231 + $0xaa4] sm:$0xf]
        %v1627 = vld [vmem:[%s231 + $0xaa8] sm:$0xf]
        %v1628 = vld [vmem:[%s231 + $0xaac] sm:$0xf]
        %v1629 = vld [vmem:[%s231 + $0xab0] sm:$0xf]
        %v1630 = vld [vmem:[%s231 + $0xab4] sm:$0xf]
        %v1631 = vld [vmem:[%s231 + $0xab8] sm:$0xf]
        %v1632 = vld [vmem:[%s231 + $0xabc] sm:$0xf]
        %v1633 = vld [vmem:[%s231 + $0xac0] sm:$0xf]
        %v1634 = vld [vmem:[%s231 + $0xac4] sm:$0xf]
        %v1635 = vld [vmem:[%s231 + $0xac8] sm:$0xf]
        %v1636 = vld [vmem:[%s231 + $0xacc] sm:$0xf]
        %v1637 = vld [vmem:[%s231 + $0xad0] sm:$0xf]
        %v1638 = vld [vmem:[%s231 + $0xad4] sm:$0xf]
        %v1639 = vld [vmem:[%s231 + $0xad8] sm:$0xf]
        %v1640 = vld [vmem:[%s231 + $0xadc] sm:$0xf]
        %v1641 = vld [vmem:[%s231 + $0xae0] sm:$0xf]
        %v1642 = vld [vmem:[%s231 + $0xae4] sm:$0xf]
        %v1643 = vld [vmem:[%s231 + $0xae8] sm:$0xf]
        %v1644 = vld [vmem:[%s231 + $0xaec] sm:$0xf]
        %v1645 = vld [vmem:[%s231 + $0xaf0] sm:$0xf]
        %v1646 = vld [vmem:[%s231 + $0xaf4] sm:$0xf]
        %v1647 = vld [vmem:[%s231 + $0xaf8] sm:$0xf]
        %v1648 = vld [vmem:[%s231 + $0xafc] sm:$0xf]
        %v1649 = vld [vmem:[%s231 + $0xb00] sm:$0xf]
        %v1650 = vld [vmem:[%s231 + $0xb04] sm:$0xf]
        %v1651 = vld [vmem:[%s231 + $0xb08] sm:$0xf]
        %v1652 = vld [vmem:[%s231 + $0xb0c] sm:$0xf]
        %v1653 = vld [vmem:[%s231 + $0xb10] sm:$0xf]
        %v1654 = vld [vmem:[%s231 + $0xb14] sm:$0xf]
        %v1655 = vld [vmem:[%s231 + $0xb18] sm:$0xf]
        %v1656 = vld [vmem:[%s231 + $0xb1c] sm:$0xf]
        %v1657 = vld [vmem:[%s231 + $0xb20] sm:$0xf]
        %v1658 = vld [vmem:[%s231 + $0xb24] sm:$0xf]
        %v1659 = vld [vmem:[%s231 + $0xb28] sm:$0xf]
        %v1660 = vld [vmem:[%s231 + $0xb2c] sm:$0xf]
        %v1661 = vld [vmem:[%s231 + $0xb30] sm:$0xf]
        %v1662 = vld [vmem:[%s231 + $0xb34] sm:$0xf]
        %v1663 = vld [vmem:[%s231 + $0xb38] sm:$0xf]
        %v1664 = vld [vmem:[%s231 + $0xb3c] sm:$0xf]
        %v1665 = vld [vmem:[%s231 + $0xb40] sm:$0xf]
        %v1666 = vld [vmem:[%s231 + $0xb44] sm:$0xf]
        %v1667 = vld [vmem:[%s231 + $0xb48] sm:$0xf]
        %v1668 = vld [vmem:[%s231 + $0xb4c] sm:$0xf]
        %v1669 = vld [vmem:[%s231 + $0xb50] sm:$0xf]
        %v1670 = vld [vmem:[%s231 + $0xb54] sm:$0xf]
        %v1671 = vld [vmem:[%s231 + $0xb58] sm:$0xf]
        %v1672 = vld [vmem:[%s231 + $0xb5c] sm:$0xf]
        %v1673 = vld [vmem:[%s231 + $0xb60] sm:$0xf]
        %v1674 = vld [vmem:[%s231 + $0xb64] sm:$0xf]
        %v1675 = vld [vmem:[%s231 + $0xb68] sm:$0xf]
        %v1676 = vld [vmem:[%s231 + $0xb6c] sm:$0xf]
        %v1677 = vld [vmem:[%s231 + $0xb70] sm:$0xf]
        %v1678 = vld [vmem:[%s231 + $0xb74] sm:$0xf]
        %v1679 = vld [vmem:[%s231 + $0xb78] sm:$0xf]
        %v1680 = vld [vmem:[%s231 + $0xb7c] sm:$0xf]
        %v1681 = vld [vmem:[%s231 + $0xb80] sm:$0xf]
        %v1682 = vld [vmem:[%s231 + $0xb84] sm:$0xf]
        %v1683 = vld [vmem:[%s231 + $0xb88] sm:$0xf]
        %v1684 = vld [vmem:[%s231 + $0xb8c] sm:$0xf]
        %v1685 = vld [vmem:[%s231 + $0xb90] sm:$0xf]
        %v1686 = vld [vmem:[%s231 + $0xb94] sm:$0xf]
        %v1687 = vld [vmem:[%s231 + $0xb98] sm:$0xf]
        %v1688 = vld [vmem:[%s231 + $0xb9c] sm:$0xf]
        %v1689 = vld [vmem:[%s231 + $0xba0] sm:$0xf]
        %v1690 = vld [vmem:[%s231 + $0xba4] sm:$0xf]
        %v1691 = vld [vmem:[%s231 + $0xba8] sm:$0xf]
        %v1692 = vld [vmem:[%s231 + $0xbac] sm:$0xf]
        %v1693 = vld [vmem:[%s231 + $0xbb0] sm:$0xf]
        %v1694 = vld [vmem:[%s231 + $0xbb4] sm:$0xf]
        %v1695 = vld [vmem:[%s231 + $0xbb8] sm:$0xf]
        %v1696 = vld [vmem:[%s231 + $0xbbc] sm:$0xf]
        %v1697 = vld [vmem:[%s231 + $0xbc0] sm:$0xf]
        %v1698 = vld [vmem:[%s231 + $0xbc4] sm:$0xf]
        %v1699 = vld [vmem:[%s231 + $0xbc8] sm:$0xf]
        %v1700 = vld [vmem:[%s231 + $0xbcc] sm:$0xf]
        %v1701 = vld [vmem:[%s231 + $0xbd0] sm:$0xf]
        %v1702 = vld [vmem:[%s231 + $0xbd4] sm:$0xf]
        %v1703 = vld [vmem:[%s231 + $0xbd8] sm:$0xf]
        %v1704 = vld [vmem:[%s231 + $0xbdc] sm:$0xf]
        %v1705 = vld [vmem:[%s231 + $0xbe0] sm:$0xf]
        %v1706 = vld [vmem:[%s231 + $0xbe4] sm:$0xf]
        %v1707 = vld [vmem:[%s231 + $0xbe8] sm:$0xf]
        %v1708 = vld [vmem:[%s231 + $0xbec] sm:$0xf]
        %v1709 = vld [vmem:[%s231 + $0xbf0] sm:$0xf]
        %v1710 = vld [vmem:[%s231 + $0xbf4] sm:$0xf]
        %v1711 = vld [vmem:[%s231 + $0xbf8] sm:$0xf]
        %v1712 = vld [vmem:[%s231 + $0xbfc] sm:$0xf]
        %v1713 = vld [vmem:[%s231 + $0xc00] sm:$0xf]
        %v1714 = vld [vmem:[%s231 + $0xc04] sm:$0xf]
        %v1715 = vld [vmem:[%s231 + $0xc08] sm:$0xf]
        %v1716 = vld [vmem:[%s231 + $0xc0c] sm:$0xf]
        %v1717 = vld [vmem:[%s231 + $0xc10] sm:$0xf]
        %v1718 = vld [vmem:[%s231 + $0xc14] sm:$0xf]
        %v1719 = vld [vmem:[%s231 + $0xc18] sm:$0xf]
        %v1720 = vld [vmem:[%s231 + $0xc1c] sm:$0xf]
        %v1721 = vld [vmem:[%s231 + $0xc20] sm:$0xf]
        %v1722 = vld [vmem:[%s231 + $0xc24] sm:$0xf]
        %v1723 = vld [vmem:[%s231 + $0xc28] sm:$0xf]
        %v1724 = vld [vmem:[%s231 + $0xc2c] sm:$0xf]
        %v1725 = vld [vmem:[%s231 + $0xc30] sm:$0xf]
        %v1726 = vld [vmem:[%s231 + $0xc34] sm:$0xf]
        %v1727 = vld [vmem:[%s231 + $0xc38] sm:$0xf]
        %v1728 = vld [vmem:[%s231 + $0xc3c] sm:$0xf]
        %v1729 = vld [vmem:[%s231 + $0xc40] sm:$0xf]
        %v1730 = vld [vmem:[%s231 + $0xc44] sm:$0xf]
        %v1731 = vld [vmem:[%s231 + $0xc48] sm:$0xf]
        %v1732 = vld [vmem:[%s231 + $0xc4c] sm:$0xf]
        %v1733 = vld [vmem:[%s231 + $0xc50] sm:$0xf]
        %v1734 = vld [vmem:[%s231 + $0xc54] sm:$0xf]
        %v1735 = vld [vmem:[%s231 + $0xc58] sm:$0xf]
        %v1736 = vld [vmem:[%s231 + $0xc5c] sm:$0xf]
        %v1737 = vld [vmem:[%s231 + $0xc60] sm:$0xf]
        %v1738 = vld [vmem:[%s231 + $0xc64] sm:$0xf]
        %v1739 = vld [vmem:[%s231 + $0xc68] sm:$0xf]
        %v1740 = vld [vmem:[%s231 + $0xc6c] sm:$0xf]
        %v1741 = vld [vmem:[%s231 + $0xc70] sm:$0xf]
        %v1742 = vld [vmem:[%s231 + $0xc74] sm:$0xf]
        %v1743 = vld [vmem:[%s231 + $0xc78] sm:$0xf]
        %v1744 = vld [vmem:[%s231 + $0xc7c] sm:$0xf]
        %v1745 = vld [vmem:[%s231 + $0xc80] sm:$0xf]
        %v1746 = vld [vmem:[%s231 + $0xc84] sm:$0xf]
        %v1747 = vld [vmem:[%s231 + $0xc88] sm:$0xf]
        %v1748 = vld [vmem:[%s231 + $0xc8c] sm:$0xf]
        %v1749 = vld [vmem:[%s231 + $0xc90] sm:$0xf]
        %v1750 = vld [vmem:[%s231 + $0xc94] sm:$0xf]
        %v1751 = vld [vmem:[%s231 + $0xc98] sm:$0xf]
        %v1752 = vld [vmem:[%s231 + $0xc9c] sm:$0xf]
        %v1753 = vld [vmem:[%s231 + $0xca0] sm:$0xf]
        %v1754 = vld [vmem:[%s231 + $0xca4] sm:$0xf]
        %v1755 = vld [vmem:[%s231 + $0xca8] sm:$0xf]
        %v1756 = vld [vmem:[%s231 + $0xcac] sm:$0xf]
        %v1757 = vld [vmem:[%s231 + $0xcb0] sm:$0xf]
        %v1758 = vld [vmem:[%s231 + $0xcb4] sm:$0xf]
        %v1759 = vld [vmem:[%s231 + $0xcb8] sm:$0xf]
        %v1760 = vld [vmem:[%s231 + $0xcbc] sm:$0xf]
        %v1761 = vld [vmem:[%s231 + $0xcc0] sm:$0xf]
        %v1762 = vld [vmem:[%s231 + $0xcc4] sm:$0xf]
        %v1763 = vld [vmem:[%s231 + $0xcc8] sm:$0xf]
        %v1764 = vld [vmem:[%s231 + $0xccc] sm:$0xf]
        %v1765 = vld [vmem:[%s231 + $0xcd0] sm:$0xf]
        %v1766 = vld [vmem:[%s231 + $0xcd4] sm:$0xf]
        %v1767 = vld [vmem:[%s231 + $0xcd8] sm:$0xf]
        %v1768 = vld [vmem:[%s231 + $0xcdc] sm:$0xf]
        %v1769 = vld [vmem:[%s231 + $0xce0] sm:$0xf]
        %v1770 = vld [vmem:[%s231 + $0xce4] sm:$0xf]
        %v1771 = vld [vmem:[%s231 + $0xce8] sm:$0xf]
        %v1772 = vld [vmem:[%s231 + $0xcec] sm:$0xf]
        %v1773 = vld [vmem:[%s231 + $0xcf0] sm:$0xf]
        %v1774 = vld [vmem:[%s231 + $0xcf4] sm:$0xf]
        %v1775 = vld [vmem:[%s231 + $0xcf8] sm:$0xf]
        %v1776 = vld [vmem:[%s231 + $0xcfc] sm:$0xf]
        %v1777 = vld [vmem:[%s231 + $0xd00] sm:$0xf]
        %v1778 = vld [vmem:[%s231 + $0xd04] sm:$0xf]
        %v1779 = vld [vmem:[%s231 + $0xd08] sm:$0xf]
        %v1780 = vld [vmem:[%s231 + $0xd0c] sm:$0xf]
        %v1781 = vld [vmem:[%s231 + $0xd10] sm:$0xf]
        %v1782 = vld [vmem:[%s231 + $0xd14] sm:$0xf]
        %v1783 = vld [vmem:[%s231 + $0xd18] sm:$0xf]
        %v1784 = vld [vmem:[%s231 + $0xd1c] sm:$0xf]
        %v1785 = vld [vmem:[%s231 + $0xd20] sm:$0xf]
        %v1786 = vld [vmem:[%s231 + $0xd24] sm:$0xf]
        %v1787 = vld [vmem:[%s231 + $0xd28] sm:$0xf]
        %v1788 = vld [vmem:[%s231 + $0xd2c] sm:$0xf]
        %v1789 = vld [vmem:[%s231 + $0xd30] sm:$0xf]
        %v1790 = vld [vmem:[%s231 + $0xd34] sm:$0xf]
        %v1791 = vld [vmem:[%s231 + $0xd38] sm:$0xf]
        %v1792 = vld [vmem:[%s231 + $0xd3c] sm:$0xf]
        %v1793 = vld [vmem:[%s231 + $0xd40] sm:$0xf]
        %v1794 = vld [vmem:[%s231 + $0xd44] sm:$0xf]
        %v1795 = vld [vmem:[%s231 + $0xd48] sm:$0xf]
        %v1796 = vld [vmem:[%s231 + $0xd4c] sm:$0xf]
        %v1797 = vld [vmem:[%s231 + $0xd50] sm:$0xf]
        %v1798 = vld [vmem:[%s231 + $0xd54] sm:$0xf]
        %v1799 = vld [vmem:[%s231 + $0xd58] sm:$0xf]
        %v1800 = vld [vmem:[%s231 + $0xd5c] sm:$0xf]
        %v1801 = vld [vmem:[%s231 + $0xd60] sm:$0xf]
        %v1802 = vld [vmem:[%s231 + $0xd64] sm:$0xf]
        %v1803 = vld [vmem:[%s231 + $0xd68] sm:$0xf]
        %v1804 = vld [vmem:[%s231 + $0xd6c] sm:$0xf]
        %v1805 = vld [vmem:[%s231 + $0xd70] sm:$0xf]
        %v1806 = vld [vmem:[%s231 + $0xd74] sm:$0xf]
        %v1807 = vld [vmem:[%s231 + $0xd78] sm:$0xf]
        %v1808 = vld [vmem:[%s231 + $0xd7c] sm:$0xf]
        %v1809 = vld [vmem:[%s231 + $0xd80] sm:$0xf]
        %v1810 = vld [vmem:[%s231 + $0xd84] sm:$0xf]
        %v1811 = vld [vmem:[%s231 + $0xd88] sm:$0xf]
        %v1812 = vld [vmem:[%s231 + $0xd8c] sm:$0xf]
        %v1813 = vld [vmem:[%s231 + $0xd90] sm:$0xf]
        %v1814 = vld [vmem:[%s231 + $0xd94] sm:$0xf]
        %v1815 = vld [vmem:[%s231 + $0xd98] sm:$0xf]
        %v1816 = vld [vmem:[%s231 + $0xd9c] sm:$0xf]
        %v1817 = vld [vmem:[%s231 + $0xda0] sm:$0xf]
        %v1818 = vld [vmem:[%s231 + $0xda4] sm:$0xf]
        %v1819 = vld [vmem:[%s231 + $0xda8] sm:$0xf]
        %v1820 = vld [vmem:[%s231 + $0xdac] sm:$0xf]
        %v1821 = vld [vmem:[%s231 + $0xdb0] sm:$0xf]
        %v1822 = vld [vmem:[%s231 + $0xdb4] sm:$0xf]
        %v1823 = vld [vmem:[%s231 + $0xdb8] sm:$0xf]
        %v1824 = vld [vmem:[%s231 + $0xdbc] sm:$0xf]
        %v1825 = vld [vmem:[%s231 + $0xdc0] sm:$0xf]
        %v1826 = vld [vmem:[%s231 + $0xdc4] sm:$0xf]
        %v1827 = vld [vmem:[%s231 + $0xdc8] sm:$0xf]
        %v1828 = vld [vmem:[%s231 + $0xdcc] sm:$0xf]
        %v1829 = vld [vmem:[%s231 + $0xdd0] sm:$0xf]
        %v1830 = vld [vmem:[%s231 + $0xdd4] sm:$0xf]
        %v1831 = vld [vmem:[%s231 + $0xdd8] sm:$0xf]
        %v1832 = vld [vmem:[%s231 + $0xddc] sm:$0xf]
        %v1833 = vld [vmem:[%s231 + $0xde0] sm:$0xf]
        %v1834 = vld [vmem:[%s231 + $0xde4] sm:$0xf]
        %v1835 = vld [vmem:[%s231 + $0xde8] sm:$0xf]
        %v1836 = vld [vmem:[%s231 + $0xdec] sm:$0xf]
        %v1837 = vld [vmem:[%s231 + $0xdf0] sm:$0xf]
        %v1838 = vld [vmem:[%s231 + $0xdf4] sm:$0xf]
        %v1839 = vld [vmem:[%s231 + $0xdf8] sm:$0xf]
        %v1840 = vld [vmem:[%s231 + $0xdfc] sm:$0xf]
        %v1841 = vld [vmem:[%s231 + $0xe00] sm:$0xf]
        %v1842 = vld [vmem:[%s231 + $0xe04] sm:$0xf]
        %v1843 = vld [vmem:[%s231 + $0xe08] sm:$0xf]
        %v1844 = vld [vmem:[%s231 + $0xe0c] sm:$0xf]
        %v1845 = vld [vmem:[%s231 + $0xe10] sm:$0xf]
        %v1846 = vld [vmem:[%s231 + $0xe14] sm:$0xf]
        %v1847 = vld [vmem:[%s231 + $0xe18] sm:$0xf]
        %v1848 = vld [vmem:[%s231 + $0xe1c] sm:$0xf]
        %v1849 = vld [vmem:[%s231 + $0xe20] sm:$0xf]
        %v1850 = vld [vmem:[%s231 + $0xe24] sm:$0xf]
        %v1851 = vld [vmem:[%s231 + $0xe28] sm:$0xf]
        %v1852 = vld [vmem:[%s231 + $0xe2c] sm:$0xf]
        %v1853 = vld [vmem:[%s231 + $0xe30] sm:$0xf]
        %v1854 = vld [vmem:[%s231 + $0xe34] sm:$0xf]
        %v1855 = vld [vmem:[%s231 + $0xe38] sm:$0xf]
        %v1856 = vld [vmem:[%s231 + $0xe3c] sm:$0xf]
        %v1857 = vld [vmem:[%s231 + $0xe40] sm:$0xf]
        %v1858 = vld [vmem:[%s231 + $0xe44] sm:$0xf]
        %v1859 = vld [vmem:[%s231 + $0xe48] sm:$0xf]
        %v1860 = vld [vmem:[%s231 + $0xe4c] sm:$0xf]
        %v1861 = vld [vmem:[%s231 + $0xe50] sm:$0xf]
        %v1862 = vld [vmem:[%s231 + $0xe54] sm:$0xf]
        %v1863 = vld [vmem:[%s231 + $0xe58] sm:$0xf]
        %v1864 = vld [vmem:[%s231 + $0xe5c] sm:$0xf]
        %v1865 = vld [vmem:[%s231 + $0xe60] sm:$0xf]
        %v1866 = vld [vmem:[%s231 + $0xe64] sm:$0xf]
        %v1867 = vld [vmem:[%s231 + $0xe68] sm:$0xf]
        %v1868 = vld [vmem:[%s231 + $0xe6c] sm:$0xf]
        %v1869 = vld [vmem:[%s231 + $0xe70] sm:$0xf]
        %v1870 = vld [vmem:[%s231 + $0xe74] sm:$0xf]
        %v1871 = vld [vmem:[%s231 + $0xe78] sm:$0xf]
        %v1872 = vld [vmem:[%s231 + $0xe7c] sm:$0xf]
        %v1873 = vld [vmem:[%s231 + $0xe80] sm:$0xf]
        %v1874 = vld [vmem:[%s231 + $0xe84] sm:$0xf]
        %v1875 = vld [vmem:[%s231 + $0xe88] sm:$0xf]
        %v1876 = vld [vmem:[%s231 + $0xe8c] sm:$0xf]
        %v1877 = vld [vmem:[%s231 + $0xe90] sm:$0xf]
        %v1878 = vld [vmem:[%s231 + $0xe94] sm:$0xf]
        %v1879 = vld [vmem:[%s231 + $0xe98] sm:$0xf]
        %v1880 = vld [vmem:[%s231 + $0xe9c] sm:$0xf]
        %v1881 = vld [vmem:[%s231 + $0xea0] sm:$0xf]
        %v1882 = vld [vmem:[%s231 + $0xea4] sm:$0xf]
        %v1883 = vld [vmem:[%s231 + $0xea8] sm:$0xf]
        %v1884 = vld [vmem:[%s231 + $0xeac] sm:$0xf]
        %v1885 = vld [vmem:[%s231 + $0xeb0] sm:$0xf]
        %v1886 = vld [vmem:[%s231 + $0xeb4] sm:$0xf]
        %v1887 = vld [vmem:[%s231 + $0xeb8] sm:$0xf]
        %v1888 = vld [vmem:[%s231 + $0xebc] sm:$0xf]
        %v1889 = vld [vmem:[%s231 + $0xec0] sm:$0xf]
        %v1890 = vld [vmem:[%s231 + $0xec4] sm:$0xf]
        %v1891 = vld [vmem:[%s231 + $0xec8] sm:$0xf]
        %v1892 = vld [vmem:[%s231 + $0xecc] sm:$0xf]
        %v1893 = vld [vmem:[%s231 + $0xed0] sm:$0xf]
        %v1894 = vld [vmem:[%s231 + $0xed4] sm:$0xf]
        %v1895 = vld [vmem:[%s231 + $0xed8] sm:$0xf]
        %v1896 = vld [vmem:[%s231 + $0xedc] sm:$0xf]
        %v1897 = vld [vmem:[%s231 + $0xee0] sm:$0xf]
        %v1898 = vld [vmem:[%s231 + $0xee4] sm:$0xf]
        %v1899 = vld [vmem:[%s231 + $0xee8] sm:$0xf]
        %v1900 = vld [vmem:[%s231 + $0xeec] sm:$0xf]
        %v1901 = vld [vmem:[%s231 + $0xef0] sm:$0xf]
        %v1902 = vld [vmem:[%s231 + $0xef4] sm:$0xf]
        %v1903 = vld [vmem:[%s231 + $0xef8] sm:$0xf]
        %v1904 = vld [vmem:[%s231 + $0xefc] sm:$0xf]
        %v1905 = vld [vmem:[%s231 + $0xf00] sm:$0xf]
        %v1906 = vld [vmem:[%s231 + $0xf04] sm:$0xf]
        %v1907 = vld [vmem:[%s231 + $0xf08] sm:$0xf]
        %v1908 = vld [vmem:[%s231 + $0xf0c] sm:$0xf]
        %v1909 = vld [vmem:[%s231 + $0xf10] sm:$0xf]
        %v1910 = vld [vmem:[%s231 + $0xf14] sm:$0xf]
        %v1911 = vld [vmem:[%s231 + $0xf18] sm:$0xf]
        %v1912 = vld [vmem:[%s231 + $0xf1c] sm:$0xf]
        %v1913 = vld [vmem:[%s231 + $0xf20] sm:$0xf]
        %v1914 = vld [vmem:[%s231 + $0xf24] sm:$0xf]
        %v1915 = vld [vmem:[%s231 + $0xf28] sm:$0xf]
        %v1916 = vld [vmem:[%s231 + $0xf2c] sm:$0xf]
        %v1917 = vld [vmem:[%s231 + $0xf30] sm:$0xf]
        %v1918 = vld [vmem:[%s231 + $0xf34] sm:$0xf]
        %v1919 = vld [vmem:[%s231 + $0xf38] sm:$0xf]
        %v1920 = vld [vmem:[%s231 + $0xf3c] sm:$0xf]
        %v1921 = vld [vmem:[%s231 + $0xf40] sm:$0xf]
        %v1922 = vld [vmem:[%s231 + $0xf44] sm:$0xf]
        %v1923 = vld [vmem:[%s231 + $0xf48] sm:$0xf]
        %v1924 = vld [vmem:[%s231 + $0xf4c] sm:$0xf]
        %v1925 = vld [vmem:[%s231 + $0xf50] sm:$0xf]
        %v1926 = vld [vmem:[%s231 + $0xf54] sm:$0xf]
        %v1927 = vld [vmem:[%s231 + $0xf58] sm:$0xf]
        %v1928 = vld [vmem:[%s231 + $0xf5c] sm:$0xf]
        %v1929 = vld [vmem:[%s231 + $0xf60] sm:$0xf]
        %v1930 = vld [vmem:[%s231 + $0xf64] sm:$0xf]
        %v1931 = vld [vmem:[%s231 + $0xf68] sm:$0xf]
        %v1932 = vld [vmem:[%s231 + $0xf6c] sm:$0xf]
        %v1933 = vld [vmem:[%s231 + $0xf70] sm:$0xf]
        %v1934 = vld [vmem:[%s231 + $0xf74] sm:$0xf]
        %v1935 = vld [vmem:[%s231 + $0xf78] sm:$0xf]
        %v1936 = vld [vmem:[%s231 + $0xf7c] sm:$0xf]
        %v1937 = vld [vmem:[%s231 + $0xf80] sm:$0xf]
        %v1938 = vld [vmem:[%s231 + $0xf84] sm:$0xf]
        %v1939 = vld [vmem:[%s231 + $0xf88] sm:$0xf]
        %v1940 = vld [vmem:[%s231 + $0xf8c] sm:$0xf]
        %v1941 = vld [vmem:[%s231 + $0xf90] sm:$0xf]
        %v1942 = vld [vmem:[%s231 + $0xf94] sm:$0xf]
        %v1943 = vld [vmem:[%s231 + $0xf98] sm:$0xf]
        %v1944 = vld [vmem:[%s231 + $0xf9c] sm:$0xf]
        %v1945 = vld [vmem:[%s231 + $0xfa0] sm:$0xf]
        %v1946 = vld [vmem:[%s231 + $0xfa4] sm:$0xf]
        %v1947 = vld [vmem:[%s231 + $0xfa8] sm:$0xf]
        %v1948 = vld [vmem:[%s231 + $0xfac] sm:$0xf]
        %v1949 = vld [vmem:[%s231 + $0xfb0] sm:$0xf]
        %v1950 = vld [vmem:[%s231 + $0xfb4] sm:$0xf]
        %v1951 = vld [vmem:[%s231 + $0xfb8] sm:$0xf]
        %v1952 = vld [vmem:[%s231 + $0xfbc] sm:$0xf]
        %v1953 = vld [vmem:[%s231 + $0xfc0] sm:$0xf]
        %v1954 = vld [vmem:[%s231 + $0xfc4] sm:$0xf]
        %v1955 = vld [vmem:[%s231 + $0xfc8] sm:$0xf]
        %v1956 = vld [vmem:[%s231 + $0xfcc] sm:$0xf]
        %v1957 = vld [vmem:[%s231 + $0xfd0] sm:$0xf]
        %v1958 = vld [vmem:[%s231 + $0xfd4] sm:$0xf]
        %v1959 = vld [vmem:[%s231 + $0xfd8] sm:$0xf]
        %v1960 = vld [vmem:[%s231 + $0xfdc] sm:$0xf]
        %v1961 = vld [vmem:[%s231 + $0xfe0] sm:$0xf]
        %v1962 = vld [vmem:[%s231 + $0xfe4] sm:$0xf]
        %v1963 = vld [vmem:[%s231 + $0xfe8] sm:$0xf]
        %v1964 = vld [vmem:[%s231 + $0xfec] sm:$0xf]
        %v1965 = vld [vmem:[%s231 + $0xff0] sm:$0xf]
        %v1966 = vld [vmem:[%s231 + $0xff4] sm:$0xf]
        %v1967 = vld [vmem:[%s231 + $0xff8] sm:$0xf]
        %v1968 = vld [vmem:[%s231 + $0xffc] sm:$0xf]
        %v1969 = vld [vmem:[%s231 + $0x1000] sm:$0xf]
        %v1970 = vld [vmem:[%s231 + $0x1004] sm:$0xf]
        %v1971 = vld [vmem:[%s231 + $0x1008] sm:$0xf]
        %v1972 = vld [vmem:[%s231 + $0x100c] sm:$0xf]
        %v1973 = vld [vmem:[%s231 + $0x1010] sm:$0xf]
        %v1974 = vld [vmem:[%s231 + $0x1014] sm:$0xf]
        %v1975 = vld [vmem:[%s231 + $0x1018] sm:$0xf]
        %v1976 = vld [vmem:[%s231 + $0x101c] sm:$0xf]
        %v1977 = vld [vmem:[%s231 + $0x1020] sm:$0xf]
        %v1978 = vld [vmem:[%s231 + $0x1024] sm:$0xf]
        %v1979 = vld [vmem:[%s231 + $0x1028] sm:$0xf]
        %v1980 = vld [vmem:[%s231 + $0x102c] sm:$0xf]
        %v1981 = vld [vmem:[%s231 + $0x1030] sm:$0xf]
        %v1982 = vld [vmem:[%s231 + $0x1034] sm:$0xf]
        %v1983 = vld [vmem:[%s231 + $0x1038] sm:$0xf]
        %v1984 = vld [vmem:[%s231 + $0x103c] sm:$0xf]
        %v1985 = vld [vmem:[%s231 + $0x1040] sm:$0xf]
        %v1986 = vld [vmem:[%s231 + $0x1044] sm:$0xf]
        %v1987 = vld [vmem:[%s231 + $0x1048] sm:$0xf]
        %v1988 = vld [vmem:[%s231 + $0x104c] sm:$0xf]
        %v1989 = vld [vmem:[%s231 + $0x1050] sm:$0xf]
        %v1990 = vld [vmem:[%s231 + $0x1054] sm:$0xf]
        %v1991 = vld [vmem:[%s231 + $0x1058] sm:$0xf]
        %v1992 = vld [vmem:[%s231 + $0x105c] sm:$0xf]
        %v1993 = vld [vmem:[%s231 + $0x1060] sm:$0xf]
        %v1994 = vld [vmem:[%s231 + $0x1064] sm:$0xf]
        %v1995 = vld [vmem:[%s231 + $0x1068] sm:$0xf]
        %v1996 = vld [vmem:[%s231 + $0x106c] sm:$0xf]
        %v1997 = vld [vmem:[%s231 + $0x1070] sm:$0xf]
        %v1998 = vld [vmem:[%s231 + $0x1074] sm:$0xf]
        %v1999 = vld [vmem:[%s231 + $0x1078] sm:$0xf]
        %v2000 = vld [vmem:[%s231 + $0x107c] sm:$0xf]
        %v2001 = vld [vmem:[%s231 + $0x1080] sm:$0xf]
        %v2002 = vld [vmem:[%s231 + $0x1084] sm:$0xf]
        %v2003 = vld [vmem:[%s231 + $0x1088] sm:$0xf]
        %v2004 = vld [vmem:[%s231 + $0x108c] sm:$0xf]
        %v2005 = vld [vmem:[%s231 + $0x1090] sm:$0xf]
        %v2006 = vld [vmem:[%s231 + $0x1094] sm:$0xf]
        %v2007 = vld [vmem:[%s231 + $0x1098] sm:$0xf]
        %v2008 = vld [vmem:[%s231 + $0x109c] sm:$0xf]
        %v2009 = vld [vmem:[%s231 + $0x10a0] sm:$0xf]
        %v2010 = vld [vmem:[%s231 + $0x10a4] sm:$0xf]
        %v2011 = vld [vmem:[%s231 + $0x10a8] sm:$0xf]
        %v2012 = vld [vmem:[%s231 + $0x10ac] sm:$0xf]
        %v2013 = vld [vmem:[%s231 + $0x10b0] sm:$0xf]
        %v2014 = vld [vmem:[%s231 + $0x10b4] sm:$0xf]
        %v2015 = vld [vmem:[%s231 + $0x10b8] sm:$0xf]
        %v2016 = vld [vmem:[%s231 + $0x10bc] sm:$0xf]
        %v2017 = vld [vmem:[%s231 + $0x10c0] sm:$0xf]
        %v2018 = vld [vmem:[%s231 + $0x10c4] sm:$0xf]
        %v2019 = vld [vmem:[%s231 + $0x10c8] sm:$0xf]
        %v2020 = vld [vmem:[%s231 + $0x10cc] sm:$0xf]
        %v2021 = vld [vmem:[%s231 + $0x10d0] sm:$0xf]
        %v2022 = vld [vmem:[%s231 + $0x10d4] sm:$0xf]
        %v2023 = vld [vmem:[%s231 + $0x10d8] sm:$0xf]
        %v2024 = vld [vmem:[%s231 + $0x10dc] sm:$0xf]
        %v2025 = vld [vmem:[%s231 + $0x10e0] sm:$0xf]
        %v2026 = vld [vmem:[%s231 + $0x10e4] sm:$0xf]
        %v2027 = vld [vmem:[%s231 + $0x10e8] sm:$0xf]
        %v2028 = vld [vmem:[%s231 + $0x10ec] sm:$0xf]
        %v2029 = vld [vmem:[%s231 + $0x10f0] sm:$0xf]
        %v2030 = vld [vmem:[%s231 + $0x10f4] sm:$0xf]
        %v2031 = vld [vmem:[%s231 + $0x10f8] sm:$0xf]
        %v2032 = vld [vmem:[%s231 + $0x10fc] sm:$0xf]
        %v2033 = vld [vmem:[%s231 + $0x1100] sm:$0xf]
        %v2034 = vld [vmem:[%s231 + $0x1104] sm:$0xf]
        %v2035 = vld [vmem:[%s231 + $0x1108] sm:$0xf]
        %v2036 = vld [vmem:[%s231 + $0x110c] sm:$0xf]
        %v2037 = vld [vmem:[%s231 + $0x1110] sm:$0xf]
        %v2038 = vld [vmem:[%s231 + $0x1114] sm:$0xf]
        %v2039 = vld [vmem:[%s231 + $0x1118] sm:$0xf]
        %v2040 = vld [vmem:[%s231 + $0x111c] sm:$0xf]
        %v2041 = vld [vmem:[%s231 + $0x1120] sm:$0xf]
        %v2042 = vld [vmem:[%s231 + $0x1124] sm:$0xf]
        %v2043 = vld [vmem:[%s231 + $0x1128] sm:$0xf]
        %v2044 = vld [vmem:[%s231 + $0x112c] sm:$0xf]
        %v2045 = vld [vmem:[%s231 + $0x1130] sm:$0xf]
        %v2046 = vld [vmem:[%s231 + $0x1134] sm:$0xf]
        %v2047 = vld [vmem:[%s231 + $0x1138] sm:$0xf]
        %v2048 = vld [vmem:[%s231 + $0x113c] sm:$0xf]
        %v2049 = vld [vmem:[%s231 + $0x1140] sm:$0xf]
        %v2050 = vld [vmem:[%s231 + $0x1144] sm:$0xf]
        %v2051 = vld [vmem:[%s231 + $0x1148] sm:$0xf]
        %v2052 = vld [vmem:[%s231 + $0x114c] sm:$0xf]
        %v2053 = vld [vmem:[%s231 + $0x1150] sm:$0xf]
        %v2054 = vld [vmem:[%s231 + $0x1154] sm:$0xf]
        %v2055 = vld [vmem:[%s231 + $0x1158] sm:$0xf]
        %v2056 = vld [vmem:[%s231 + $0x115c] sm:$0xf]
        %v2057 = vld [vmem:[%s231 + $0x1160] sm:$0xf]
        %v2058 = vld [vmem:[%s231 + $0x1164] sm:$0xf]
        %v2059 = vld [vmem:[%s231 + $0x1168] sm:$0xf]
        %v2060 = vld [vmem:[%s231 + $0x116c] sm:$0xf]
        %v2061 = vld [vmem:[%s231 + $0x1170] sm:$0xf]
        %v2062 = vld [vmem:[%s231 + $0x1174] sm:$0xf]
        %v2063 = vld [vmem:[%s231 + $0x1178] sm:$0xf]
        %v2064 = vld [vmem:[%s231 + $0x117c] sm:$0xf]
        %v2065 = vld [vmem:[%s231 + $0x1180] sm:$0xf]
        %v2066 = vld [vmem:[%s231 + $0x1184] sm:$0xf]
        %v2067 = vld [vmem:[%s231 + $0x1188] sm:$0xf]
        %v2068 = vld [vmem:[%s231 + $0x118c] sm:$0xf]
        %v2069 = vld [vmem:[%s231 + $0x1190] sm:$0xf]
        %v2070 = vld [vmem:[%s231 + $0x1194] sm:$0xf]
        %v2071 = vld [vmem:[%s231 + $0x1198] sm:$0xf]
        %v2072 = vld [vmem:[%s231 + $0x119c] sm:$0xf]
        %v2073 = vld [vmem:[%s231 + $0x11a0] sm:$0xf]
        %v2074 = vld [vmem:[%s231 + $0x11a4] sm:$0xf]
        %v2075 = vld [vmem:[%s231 + $0x11a8] sm:$0xf]
        %v2076 = vld [vmem:[%s231 + $0x11ac] sm:$0xf]
        %v2077 = vld [vmem:[%s231 + $0x11b0] sm:$0xf]
        %v2078 = vld [vmem:[%s231 + $0x11b4] sm:$0xf]
        %v2079 = vld [vmem:[%s231 + $0x11b8] sm:$0xf]
        %v2080 = vld [vmem:[%s231 + $0x11bc] sm:$0xf]
        %v2081 = vld [vmem:[%s231 + $0x11c0] sm:$0xf]
        %v2082 = vld [vmem:[%s231 + $0x11c4] sm:$0xf]
        %v2083 = vld [vmem:[%s231 + $0x11c8] sm:$0xf]
        %v2084 = vld [vmem:[%s231 + $0x11cc] sm:$0xf]
        %v2085 = vld [vmem:[%s231 + $0x11d0] sm:$0xf]
        %v2086 = vld [vmem:[%s231 + $0x11d4] sm:$0xf]
        %v2087 = vld [vmem:[%s231 + $0x11d8] sm:$0xf]
        %v2088 = vld [vmem:[%s231 + $0x11dc] sm:$0xf]
        %v2089 = vld [vmem:[%s231 + $0x11e0] sm:$0xf]
        %v2090 = vld [vmem:[%s231 + $0x11e4] sm:$0xf]
        %v2091 = vld [vmem:[%s231 + $0x11e8] sm:$0xf]
        %v2092 = vld [vmem:[%s231 + $0x11ec] sm:$0xf]
        %v2093 = vld [vmem:[%s231 + $0x11f0] sm:$0xf]
        %v2094 = vld [vmem:[%s231 + $0x11f4] sm:$0xf]
        %v2095 = vld [vmem:[%s231 + $0x11f8] sm:$0xf]
        %v2096 = vld [vmem:[%s231 + $0x11fc] sm:$0xf]
        %v2097 = vld [vmem:[%s231 + $0x1200] sm:$0xf]
        %v2098 = vld [vmem:[%s231 + $0x1204] sm:$0xf]
        %v2099 = vld [vmem:[%s231 + $0x1208] sm:$0xf]
        %v2100 = vld [vmem:[%s231 + $0x120c] sm:$0xf]
        %v2101 = vld [vmem:[%s231 + $0x1210] sm:$0xf]
        %v2102 = vld [vmem:[%s231 + $0x1214] sm:$0xf]
        %v2103 = vld [vmem:[%s231 + $0x1218] sm:$0xf]
        %v2104 = vld [vmem:[%s231 + $0x121c] sm:$0xf]
        %v2105 = vld [vmem:[%s231 + $0x1220] sm:$0xf]
        %v2106 = vld [vmem:[%s231 + $0x1224] sm:$0xf]
        %v2107 = vld [vmem:[%s231 + $0x1228] sm:$0xf]
        %v2108 = vld [vmem:[%s231 + $0x122c] sm:$0xf]
        %v2109 = vld [vmem:[%s231 + $0x1230] sm:$0xf]
        %v2110 = vld [vmem:[%s231 + $0x1234] sm:$0xf]
        %v2111 = vld [vmem:[%s231 + $0x1238] sm:$0xf]
        %v2112 = vld [vmem:[%s231 + $0x123c] sm:$0xf]
        %v2113 = vld [vmem:[%s231 + $0x1240] sm:$0xf]
        %v2114 = vld [vmem:[%s231 + $0x1244] sm:$0xf]
        %v2115 = vld [vmem:[%s231 + $0x1248] sm:$0xf]
        %v2116 = vld [vmem:[%s231 + $0x124c] sm:$0xf]
        %v2117 = vld [vmem:[%s231 + $0x1250] sm:$0xf]
        %v2118 = vld [vmem:[%s231 + $0x1254] sm:$0xf]
        %v2119 = vld [vmem:[%s231 + $0x1258] sm:$0xf]
        %v2120 = vld [vmem:[%s231 + $0x125c] sm:$0xf]
        %v2121 = vld [vmem:[%s231 + $0x1260] sm:$0xf]
        %v2122 = vld [vmem:[%s231 + $0x1264] sm:$0xf]
        %v2123 = vld [vmem:[%s231 + $0x1268] sm:$0xf]
        %v2124 = vld [vmem:[%s231 + $0x126c] sm:$0xf]
        %v2125 = vld [vmem:[%s231 + $0x1270] sm:$0xf]
        %v2126 = vld [vmem:[%s231 + $0x1274] sm:$0xf]
        %v2127 = vld [vmem:[%s231 + $0x1278] sm:$0xf]
        %v2128 = vld [vmem:[%s231 + $0x127c] sm:$0xf]
        %v2129 = vld [vmem:[%s231 + $0x1280] sm:$0xf]
        %v2130 = vld [vmem:[%s231 + $0x1284] sm:$0xf]
        %v2131 = vld [vmem:[%s231 + $0x1288] sm:$0xf]
        %v2132 = vld [vmem:[%s231 + $0x128c] sm:$0xf]
        %v2133 = vld [vmem:[%s231 + $0x1290] sm:$0xf]
        %v2134 = vld [vmem:[%s231 + $0x1294] sm:$0xf]
        %v2135 = vld [vmem:[%s231 + $0x1298] sm:$0xf]
        %v2136 = vld [vmem:[%s231 + $0x129c] sm:$0xf]
        %v2137 = vld [vmem:[%s231 + $0x12a0] sm:$0xf]
        %v2138 = vld [vmem:[%s231 + $0x12a4] sm:$0xf]
        %v2139 = vld [vmem:[%s231 + $0x12a8] sm:$0xf]
        %v2140 = vld [vmem:[%s231 + $0x12ac] sm:$0xf]
        %v2141 = vld [vmem:[%s231 + $0x12b0] sm:$0xf]
        %v2142 = vld [vmem:[%s231 + $0x12b4] sm:$0xf]
        %v2143 = vld [vmem:[%s231 + $0x12b8] sm:$0xf]
        %v2144 = vld [vmem:[%s231 + $0x12bc] sm:$0xf]
        %v2145 = vld [vmem:[%s231 + $0x12c0] sm:$0xf]
        %v2146 = vld [vmem:[%s231 + $0x12c4] sm:$0xf]
        %v2147 = vld [vmem:[%s231 + $0x12c8] sm:$0xf]
        %v2148 = vld [vmem:[%s231 + $0x12cc] sm:$0xf]
        %v2149 = vld [vmem:[%s231 + $0x12d0] sm:$0xf]
        %v2150 = vld [vmem:[%s231 + $0x12d4] sm:$0xf]
        %v2151 = vld [vmem:[%s231 + $0x12d8] sm:$0xf]
        %v2152 = vld [vmem:[%s231 + $0x12dc] sm:$0xf]
        %v2153 = vld [vmem:[%s231 + $0x12e0] sm:$0xf]
        %v2154 = vld [vmem:[%s231 + $0x12e4] sm:$0xf]
        %v2155 = vld [vmem:[%s231 + $0x12e8] sm:$0xf]
        %v2156 = vld [vmem:[%s231 + $0x12ec] sm:$0xf]
        %v2157 = vld [vmem:[%s231 + $0x12f0] sm:$0xf]
        %v2158 = vld [vmem:[%s231 + $0x12f4] sm:$0xf]
        %v2159 = vld [vmem:[%s231 + $0x12f8] sm:$0xf]
        %v2160 = vld [vmem:[%s231 + $0x12fc] sm:$0xf]
        %v2161 = vld [vmem:[%s231 + $0x1300] sm:$0xf]
        %v2162 = vld [vmem:[%s231 + $0x1304] sm:$0xf]
        %v2163 = vld [vmem:[%s231 + $0x1308] sm:$0xf]
        %v2164 = vld [vmem:[%s231 + $0x130c] sm:$0xf]
        %v2165 = vld [vmem:[%s231 + $0x1310] sm:$0xf]
        %v2166 = vld [vmem:[%s231 + $0x1314] sm:$0xf]
        %v2167 = vld [vmem:[%s231 + $0x1318] sm:$0xf]
        %v2168 = vld [vmem:[%s231 + $0x131c] sm:$0xf]
        %v2169 = vld [vmem:[%s231 + $0x1320] sm:$0xf]
        %v2170 = vld [vmem:[%s231 + $0x1324] sm:$0xf]
        %v2171 = vld [vmem:[%s231 + $0x1328] sm:$0xf]
        %v2172 = vld [vmem:[%s231 + $0x132c] sm:$0xf]
        %v2173 = vld [vmem:[%s231 + $0x1330] sm:$0xf]
        %v2174 = vld [vmem:[%s231 + $0x1334] sm:$0xf]
        %v2175 = vld [vmem:[%s231 + $0x1338] sm:$0xf]
        %v2176 = vld [vmem:[%s231 + $0x133c] sm:$0xf]
        %v2177 = vld [vmem:[%s231 + $0x1340] sm:$0xf]
        %v2178 = vld [vmem:[%s231 + $0x1344] sm:$0xf]
        %v2179 = vld [vmem:[%s231 + $0x1348] sm:$0xf]
        %v2180 = vld [vmem:[%s231 + $0x134c] sm:$0xf]
        %v2181 = vld [vmem:[%s231 + $0x1350] sm:$0xf]
        %v2182 = vld [vmem:[%s231 + $0x1354] sm:$0xf]
        %v2183 = vld [vmem:[%s231 + $0x1358] sm:$0xf]
        %v2184 = vld [vmem:[%s231 + $0x135c] sm:$0xf]
        %v2185 = vld [vmem:[%s231 + $0x1360] sm:$0xf]
        %v2186 = vld [vmem:[%s231 + $0x1364] sm:$0xf]
        %v2187 = vld [vmem:[%s231 + $0x1368] sm:$0xf]
        %v2188 = vld [vmem:[%s231 + $0x136c] sm:$0xf]
        %v2189 = vld [vmem:[%s231 + $0x1370] sm:$0xf]
        %v2190 = vld [vmem:[%s231 + $0x1374] sm:$0xf]
        %v2191 = vld [vmem:[%s231 + $0x1378] sm:$0xf]
        %v2192 = vld [vmem:[%s231 + $0x137c] sm:$0xf]
        %v2193 = vld [vmem:[%s231 + $0x1380] sm:$0xf]
        %v2194 = vld [vmem:[%s231 + $0x1384] sm:$0xf]
        %v2195 = vld [vmem:[%s231 + $0x1388] sm:$0xf]
        %v2196 = vld [vmem:[%s231 + $0x138c] sm:$0xf]
        %v2197 = vld [vmem:[%s231 + $0x1390] sm:$0xf]
        %v2198 = vld [vmem:[%s231 + $0x1394] sm:$0xf]
        %v2199 = vld [vmem:[%s231 + $0x1398] sm:$0xf]
        %v2200 = vld [vmem:[%s231 + $0x139c] sm:$0xf]
        %v2201 = vld [vmem:[%s231 + $0x13a0] sm:$0xf]
        %v2202 = vld [vmem:[%s231 + $0x13a4] sm:$0xf]
        %v2203 = vld [vmem:[%s231 + $0x13a8] sm:$0xf]
        %v2204 = vld [vmem:[%s231 + $0x13ac] sm:$0xf]
        %v2205 = vld [vmem:[%s231 + $0x13b0] sm:$0xf]
        %v2206 = vld [vmem:[%s231 + $0x13b4] sm:$0xf]
        %v2207 = vld [vmem:[%s231 + $0x13b8] sm:$0xf]
        %v2208 = vld [vmem:[%s231 + $0x13bc] sm:$0xf]
        %v2209 = vld [vmem:[%s231 + $0x13c0] sm:$0xf]
        %v2210 = vld [vmem:[%s231 + $0x13c4] sm:$0xf]
        %v2211 = vld [vmem:[%s231 + $0x13c8] sm:$0xf]
        %v2212 = vld [vmem:[%s231 + $0x13cc] sm:$0xf]
        %v2213 = vld [vmem:[%s231 + $0x13d0] sm:$0xf]
        %v2214 = vld [vmem:[%s231 + $0x13d4] sm:$0xf]
        %v2215 = vld [vmem:[%s231 + $0x13d8] sm:$0xf]
        %v2216 = vld [vmem:[%s231 + $0x13dc] sm:$0xf]
        %v2217 = vld [vmem:[%s231 + $0x13e0] sm:$0xf]
        %v2218 = vld [vmem:[%s231 + $0x13e4] sm:$0xf]
        %v2219 = vld [vmem:[%s231 + $0x13e8] sm:$0xf]
        %v2220 = vld [vmem:[%s231 + $0x13ec] sm:$0xf]
        %v2221 = vld [vmem:[%s231 + $0x13f0] sm:$0xf]
        %v2222 = vld [vmem:[%s231 + $0x13f4] sm:$0xf]
        %v2223 = vld [vmem:[%s231 + $0x13f8] sm:$0xf]
        %v2224 = vld [vmem:[%s231 + $0x13fc] sm:$0xf]
        %v2225 = vld [vmem:[%s231 + $0x1400] sm:$0xf]
        %v2226 = vld [vmem:[%s231 + $0x1404] sm:$0xf]
        %v2227 = vld [vmem:[%s231 + $0x1408] sm:$0xf]
        %v2228 = vld [vmem:[%s231 + $0x140c] sm:$0xf]
        %v2229 = vld [vmem:[%s231 + $0x1410] sm:$0xf]
        %v2230 = vld [vmem:[%s231 + $0x1414] sm:$0xf]
        %v2231 = vld [vmem:[%s231 + $0x1418] sm:$0xf]
        %v2232 = vld [vmem:[%s231 + $0x141c] sm:$0xf]
        %v2233 = vld [vmem:[%s231 + $0x1420] sm:$0xf]
        %v2234 = vld [vmem:[%s231 + $0x1424] sm:$0xf]
        %v2235 = vld [vmem:[%s231 + $0x1428] sm:$0xf]
        %v2236 = vld [vmem:[%s231 + $0x142c] sm:$0xf]
        %v2237 = vld [vmem:[%s231 + $0x1430] sm:$0xf]
        %v2238 = vld [vmem:[%s231 + $0x1434] sm:$0xf]
        %v2239 = vld [vmem:[%s231 + $0x1438] sm:$0xf]
        %v2240 = vld [vmem:[%s231 + $0x143c] sm:$0xf]
        %v2241 = vld [vmem:[%s231 + $0x1440] sm:$0xf]
        %v2242 = vld [vmem:[%s231 + $0x1444] sm:$0xf]
        %v2243 = vld [vmem:[%s231 + $0x1448] sm:$0xf]
        %v2244 = vld [vmem:[%s231 + $0x144c] sm:$0xf]
        %v2245 = vld [vmem:[%s231 + $0x1450] sm:$0xf]
        %v2246 = vld [vmem:[%s231 + $0x1454] sm:$0xf]
        %v2247 = vld [vmem:[%s231 + $0x1458] sm:$0xf]
        %v2248 = vld [vmem:[%s231 + $0x145c] sm:$0xf]
        %v2249 = vld [vmem:[%s231 + $0x1460] sm:$0xf]
        %v2250 = vld [vmem:[%s231 + $0x1464] sm:$0xf]
        %v2251 = vld [vmem:[%s231 + $0x1468] sm:$0xf]
        %v2252 = vld [vmem:[%s231 + $0x146c] sm:$0xf]
        %v2253 = vld [vmem:[%s231 + $0x1470] sm:$0xf]
        %v2254 = vld [vmem:[%s231 + $0x1474] sm:$0xf]
        %v2255 = vld [vmem:[%s231 + $0x1478] sm:$0xf]
        %v2256 = vld [vmem:[%s231 + $0x147c] sm:$0xf]
        %v2257 = vld [vmem:[%s231 + $0x1480] sm:$0xf]
        %v2258 = vld [vmem:[%s231 + $0x1484] sm:$0xf]
        %v2259 = vld [vmem:[%s231 + $0x1488] sm:$0xf]
        %v2260 = vld [vmem:[%s231 + $0x148c] sm:$0xf]
        %v2261 = vld [vmem:[%s231 + $0x1490] sm:$0xf]
        %v2262 = vld [vmem:[%s231 + $0x1494] sm:$0xf]
        %v2263 = vld [vmem:[%s231 + $0x1498] sm:$0xf]
        %v2264 = vld [vmem:[%s231 + $0x149c] sm:$0xf]
        %v2265 = vld [vmem:[%s231 + $0x14a0] sm:$0xf]
        %v2266 = vld [vmem:[%s231 + $0x14a4] sm:$0xf]
        %v2267 = vld [vmem:[%s231 + $0x14a8] sm:$0xf]
        %v2268 = vld [vmem:[%s231 + $0x14ac] sm:$0xf]
        %v2269 = vld [vmem:[%s231 + $0x14b0] sm:$0xf]
        %v2270 = vld [vmem:[%s231 + $0x14b4] sm:$0xf]
        %v2271 = vld [vmem:[%s231 + $0x14b8] sm:$0xf]
        %v2272 = vld [vmem:[%s231 + $0x14bc] sm:$0xf]
        %v2273 = vld [vmem:[%s231 + $0x14c0] sm:$0xf]
        %v2274 = vld [vmem:[%s231 + $0x14c4] sm:$0xf]
        %v2275 = vld [vmem:[%s231 + $0x14c8] sm:$0xf]
        %v2276 = vld [vmem:[%s231 + $0x14cc] sm:$0xf]
        %v2277 = vld [vmem:[%s231 + $0x14d0] sm:$0xf]
        %v2278 = vld [vmem:[%s231 + $0x14d4] sm:$0xf]
        %v2279 = vld [vmem:[%s231 + $0x14d8] sm:$0xf]
        %v2280 = vld [vmem:[%s231 + $0x14dc] sm:$0xf]
        %v2281 = vld [vmem:[%s231 + $0x14e0] sm:$0xf]
        %v2282 = vld [vmem:[%s231 + $0x14e4] sm:$0xf]
        %v2283 = vld [vmem:[%s231 + $0x14e8] sm:$0xf]
        %v2284 = vld [vmem:[%s231 + $0x14ec] sm:$0xf]
        %v2285 = vld [vmem:[%s231 + $0x14f0] sm:$0xf]
        %v2286 = vld [vmem:[%s231 + $0x14f4] sm:$0xf]
        %v2287 = vld [vmem:[%s231 + $0x14f8] sm:$0xf]
        %v2288 = vld [vmem:[%s231 + $0x14fc] sm:$0xf]
        %v2289 = vld [vmem:[%s231 + $0x1500] sm:$0xf]
        %v2290 = vld [vmem:[%s231 + $0x1504] sm:$0xf]
        %v2291 = vld [vmem:[%s231 + $0x1508] sm:$0xf]
        %v2292 = vld [vmem:[%s231 + $0x150c] sm:$0xf]
        %v2293 = vld [vmem:[%s231 + $0x1510] sm:$0xf]
        %v2294 = vld [vmem:[%s231 + $0x1514] sm:$0xf]
        %v2295 = vld [vmem:[%s231 + $0x1518] sm:$0xf]
        %v2296 = vld [vmem:[%s231 + $0x151c] sm:$0xf]
        %v2297 = vld [vmem:[%s231 + $0x1520] sm:$0xf]
        %v2298 = vld [vmem:[%s231 + $0x1524] sm:$0xf]
        %v2299 = vld [vmem:[%s231 + $0x1528] sm:$0xf]
        %v2300 = vld [vmem:[%s231 + $0x152c] sm:$0xf]
        %v2301 = vld [vmem:[%s231 + $0x1530] sm:$0xf]
        %v2302 = vld [vmem:[%s231 + $0x1534] sm:$0xf]
        %v2303 = vld [vmem:[%s231 + $0x1538] sm:$0xf]
        %v2304 = vld [vmem:[%s231 + $0x153c] sm:$0xf]
        %v2305 = vld [vmem:[%s231 + $0x1540] sm:$0xf]
        %v2306 = vld [vmem:[%s231 + $0x1544] sm:$0xf]
        %v2307 = vld [vmem:[%s231 + $0x1548] sm:$0xf]
        %v2308 = vld [vmem:[%s231 + $0x154c] sm:$0xf]
        %v2309 = vld [vmem:[%s231 + $0x1550] sm:$0xf]
        %v2310 = vld [vmem:[%s231 + $0x1554] sm:$0xf]
        %v2311 = vld [vmem:[%s231 + $0x1558] sm:$0xf]
        %v2312 = vld [vmem:[%s231 + $0x155c] sm:$0xf]
        %v2313 = vld [vmem:[%s231 + $0x1560] sm:$0xf]
        %v2314 = vld [vmem:[%s231 + $0x1564] sm:$0xf]
        %v2315 = vld [vmem:[%s231 + $0x1568] sm:$0xf]
        %v2316 = vld [vmem:[%s231 + $0x156c] sm:$0xf]
        %v2317 = vld [vmem:[%s231 + $0x1570] sm:$0xf]
        %v2318 = vld [vmem:[%s231 + $0x1574] sm:$0xf]
        %v2319 = vld [vmem:[%s231 + $0x1578] sm:$0xf]
        %v2320 = vld [vmem:[%s231 + $0x157c] sm:$0xf]
        %v2321 = vld [vmem:[%s231 + $0x1580] sm:$0xf]
        %v2322 = vld [vmem:[%s231 + $0x1584] sm:$0xf]
        %v2323 = vld [vmem:[%s231 + $0x1588] sm:$0xf]
        %v2324 = vld [vmem:[%s231 + $0x158c] sm:$0xf]
        %v2325 = vld [vmem:[%s231 + $0x1590] sm:$0xf]
        %v2326 = vld [vmem:[%s231 + $0x1594] sm:$0xf]
        %v2327 = vld [vmem:[%s231 + $0x1598] sm:$0xf]
        %v2328 = vld [vmem:[%s231 + $0x159c] sm:$0xf]
        %v2329 = vld [vmem:[%s231 + $0x15a0] sm:$0xf]
        %v2330 = vld [vmem:[%s231 + $0x15a4] sm:$0xf]
        %v2331 = vld [vmem:[%s231 + $0x15a8] sm:$0xf]
        %v2332 = vld [vmem:[%s231 + $0x15ac] sm:$0xf]
        %v2333 = vld [vmem:[%s231 + $0x15b0] sm:$0xf]
        %v2334 = vld [vmem:[%s231 + $0x15b4] sm:$0xf]
        %v2335 = vld [vmem:[%s231 + $0x15b8] sm:$0xf]
        %v2336 = vld [vmem:[%s231 + $0x15bc] sm:$0xf]
        %v2337 = vld [vmem:[%s231 + $0x15c0] sm:$0xf]
        %v2338 = vld [vmem:[%s231 + $0x15c4] sm:$0xf]
        %v2339 = vld [vmem:[%s231 + $0x15c8] sm:$0xf]
        %v2340 = vld [vmem:[%s231 + $0x15cc] sm:$0xf]
        %v2341 = vld [vmem:[%s231 + $0x15d0] sm:$0xf]
        %v2342 = vld [vmem:[%s231 + $0x15d4] sm:$0xf]
        %v2343 = vld [vmem:[%s231 + $0x15d8] sm:$0xf]
        %v2344 = vld [vmem:[%s231 + $0x15dc] sm:$0xf]
        %v2345 = vld [vmem:[%s231 + $0x15e0] sm:$0xf]
        %v2346 = vld [vmem:[%s231 + $0x15e4] sm:$0xf]
        %v2347 = vld [vmem:[%s231 + $0x15e8] sm:$0xf]
        %v2348 = vld [vmem:[%s231 + $0x15ec] sm:$0xf]
        %v2349 = vld [vmem:[%s231 + $0x15f0] sm:$0xf]
        %v2350 = vld [vmem:[%s231 + $0x15f4] sm:$0xf]
        %v2351 = vld [vmem:[%s231 + $0x15f8] sm:$0xf]
        %v2352 = vld [vmem:[%s231 + $0x15fc] sm:$0xf]
        %v2353 = vld [vmem:[%s231 + $0x1600] sm:$0xf]
        %v2354 = vld [vmem:[%s231 + $0x1604] sm:$0xf]
        %v2355 = vld [vmem:[%s231 + $0x1608] sm:$0xf]
        %v2356 = vld [vmem:[%s231 + $0x160c] sm:$0xf]
        %v2357 = vld [vmem:[%s231 + $0x1610] sm:$0xf]
        %v2358 = vld [vmem:[%s231 + $0x1614] sm:$0xf]
        %v2359 = vld [vmem:[%s231 + $0x1618] sm:$0xf]
        %v2360 = vld [vmem:[%s231 + $0x161c] sm:$0xf]
        %v2361 = vld [vmem:[%s231 + $0x1620] sm:$0xf]
        %v2362 = vld [vmem:[%s231 + $0x1624] sm:$0xf]
        %v2363 = vld [vmem:[%s231 + $0x1628] sm:$0xf]
        %v2364 = vld [vmem:[%s231 + $0x162c] sm:$0xf]
        %v2365 = vld [vmem:[%s231 + $0x1630] sm:$0xf]
        %v2366 = vld [vmem:[%s231 + $0x1634] sm:$0xf]
        %v2367 = vld [vmem:[%s231 + $0x1638] sm:$0xf]
        %v2368 = vld [vmem:[%s231 + $0x163c] sm:$0xf]
        %v2369 = vld [vmem:[%s231 + $0x1640] sm:$0xf]
        %v2370 = vld [vmem:[%s231 + $0x1644] sm:$0xf]
        %v2371 = vld [vmem:[%s231 + $0x1648] sm:$0xf]
        %v2372 = vld [vmem:[%s231 + $0x164c] sm:$0xf]
        %v2373 = vld [vmem:[%s231 + $0x1650] sm:$0xf]
        %v2374 = vld [vmem:[%s231 + $0x1654] sm:$0xf]
        %v2375 = vld [vmem:[%s231 + $0x1658] sm:$0xf]
        %v2376 = vld [vmem:[%s231 + $0x165c] sm:$0xf]
        %v2377 = vld [vmem:[%s231 + $0x1660] sm:$0xf]
        %v2378 = vld [vmem:[%s231 + $0x1664] sm:$0xf]
        %v2379 = vld [vmem:[%s231 + $0x1668] sm:$0xf]
        %v2380 = vld [vmem:[%s231 + $0x166c] sm:$0xf]
        %v2381 = vld [vmem:[%s231 + $0x1670] sm:$0xf]
        %v2382 = vld [vmem:[%s231 + $0x1674] sm:$0xf]
        %v2383 = vld [vmem:[%s231 + $0x1678] sm:$0xf]
        %v2384 = vld [vmem:[%s231 + $0x167c] sm:$0xf]
        %v2385 = vld [vmem:[%s231 + $0x1680] sm:$0xf]
        %v2386 = vld [vmem:[%s231 + $0x1684] sm:$0xf]
        %v2387 = vld [vmem:[%s231 + $0x1688] sm:$0xf]
        %v2388 = vld [vmem:[%s231 + $0x168c] sm:$0xf]
        %v2389 = vld [vmem:[%s231 + $0x1690] sm:$0xf]
        %v2390 = vld [vmem:[%s231 + $0x1694] sm:$0xf]
        %v2391 = vld [vmem:[%s231 + $0x1698] sm:$0xf]
        %v2392 = vld [vmem:[%s231 + $0x169c] sm:$0xf]
        %v2393 = vld [vmem:[%s231 + $0x16a0] sm:$0xf]
        %v2394 = vld [vmem:[%s231 + $0x16a4] sm:$0xf]
        %v2395 = vld [vmem:[%s231 + $0x16a8] sm:$0xf]
        %v2396 = vld [vmem:[%s231 + $0x16ac] sm:$0xf]
        %v2397 = vld [vmem:[%s231 + $0x16b0] sm:$0xf]
        %v2398 = vld [vmem:[%s231 + $0x16b4] sm:$0xf]
        %v2399 = vld [vmem:[%s231 + $0x16b8] sm:$0xf]
        %v2400 = vld [vmem:[%s231 + $0x16bc] sm:$0xf]
        %v2401 = vld [vmem:[%s231 + $0x16c0] sm:$0xf]
        %v2402 = vld [vmem:[%s231 + $0x16c4] sm:$0xf]
        %v2403 = vld [vmem:[%s231 + $0x16c8] sm:$0xf]
        %v2404 = vld [vmem:[%s231 + $0x16cc] sm:$0xf]
        %v2405 = vld [vmem:[%s231 + $0x16d0] sm:$0xf]
        %v2406 = vld [vmem:[%s231 + $0x16d4] sm:$0xf]
        %v2407 = vld [vmem:[%s231 + $0x16d8] sm:$0xf]
        %v2408 = vld [vmem:[%s231 + $0x16dc] sm:$0xf]
        %v2409 = vld [vmem:[%s231 + $0x16e0] sm:$0xf]
        %v2410 = vld [vmem:[%s231 + $0x16e4] sm:$0xf]
        %v2411 = vld [vmem:[%s231 + $0x16e8] sm:$0xf]
        %v2412 = vld [vmem:[%s231 + $0x16ec] sm:$0xf]
        %v2413 = vld [vmem:[%s231 + $0x16f0] sm:$0xf]
        %v2414 = vld [vmem:[%s231 + $0x16f4] sm:$0xf]
        %v2415 = vld [vmem:[%s231 + $0x16f8] sm:$0xf]
        %v2416 = vld [vmem:[%s231 + $0x16fc] sm:$0xf]
        %v2417 = vld [vmem:[%s231 + $0x1700] sm:$0xf]
        %v2418 = vld [vmem:[%s231 + $0x1704] sm:$0xf]
        %v2419 = vld [vmem:[%s231 + $0x1708] sm:$0xf]
        %v2420 = vld [vmem:[%s231 + $0x170c] sm:$0xf]
        %v2421 = vld [vmem:[%s231 + $0x1710] sm:$0xf]
        %v2422 = vld [vmem:[%s231 + $0x1714] sm:$0xf]
        %v2423 = vld [vmem:[%s231 + $0x1718] sm:$0xf]
        %v2424 = vld [vmem:[%s231 + $0x171c] sm:$0xf]
        %v2425 = vld [vmem:[%s231 + $0x1720] sm:$0xf]
        %v2426 = vld [vmem:[%s231 + $0x1724] sm:$0xf]
        %v2427 = vld [vmem:[%s231 + $0x1728] sm:$0xf]
        %v2428 = vld [vmem:[%s231 + $0x172c] sm:$0xf]
        %v2429 = vld [vmem:[%s231 + $0x1730] sm:$0xf]
        %v2430 = vld [vmem:[%s231 + $0x1734] sm:$0xf]
        %v2431 = vld [vmem:[%s231 + $0x1738] sm:$0xf]
        %v2432 = vld [vmem:[%s231 + $0x173c] sm:$0xf]
        %v2433 = vld [vmem:[%s231 + $0x1740] sm:$0xf]
        %v2434 = vld [vmem:[%s231 + $0x1744] sm:$0xf]
        %v2435 = vld [vmem:[%s231 + $0x1748] sm:$0xf]
        %v2436 = vld [vmem:[%s231 + $0x174c] sm:$0xf]
        %v2437 = vld [vmem:[%s231 + $0x1750] sm:$0xf]
        %v2438 = vld [vmem:[%s231 + $0x1754] sm:$0xf]
        %v2439 = vld [vmem:[%s231 + $0x1758] sm:$0xf]
        %v2440 = vld [vmem:[%s231 + $0x175c] sm:$0xf]
        %v2441 = vld [vmem:[%s231 + $0x1760] sm:$0xf]
        %v2442 = vld [vmem:[%s231 + $0x1764] sm:$0xf]
        %v2443 = vld [vmem:[%s231 + $0x1768] sm:$0xf]
        %v2444 = vld [vmem:[%s231 + $0x176c] sm:$0xf]
        %v2445 = vld [vmem:[%s231 + $0x1770] sm:$0xf]
        %v2446 = vld [vmem:[%s231 + $0x1774] sm:$0xf]
        %v2447 = vld [vmem:[%s231 + $0x1778] sm:$0xf]
        %v2448 = vld [vmem:[%s231 + $0x177c] sm:$0xf]
        %v2449 = vld [vmem:[%s231 + $0x1780] sm:$0xf]
        %v2450 = vld [vmem:[%s231 + $0x1784] sm:$0xf]
        %v2451 = vld [vmem:[%s231 + $0x1788] sm:$0xf]
        %v2452 = vld [vmem:[%s231 + $0x178c] sm:$0xf]
        %v2453 = vld [vmem:[%s231 + $0x1790] sm:$0xf]
        %v2454 = vld [vmem:[%s231 + $0x1794] sm:$0xf]
        %v2455 = vld [vmem:[%s231 + $0x1798] sm:$0xf]
        %v2456 = vld [vmem:[%s231 + $0x179c] sm:$0xf]
        %v2457 = vld [vmem:[%s231 + $0x17a0] sm:$0xf]
        %v2458 = vld [vmem:[%s231 + $0x17a4] sm:$0xf]
        %v2459 = vld [vmem:[%s231 + $0x17a8] sm:$0xf]
        %v2460 = vld [vmem:[%s231 + $0x17ac] sm:$0xf]
        %v2461 = vld [vmem:[%s231 + $0x17b0] sm:$0xf]
        %v2462 = vld [vmem:[%s231 + $0x17b4] sm:$0xf]
        %v2463 = vld [vmem:[%s231 + $0x17b8] sm:$0xf]
        %v2464 = vld [vmem:[%s231 + $0x17bc] sm:$0xf]
        %v2465 = vld [vmem:[%s231 + $0x17c0] sm:$0xf]
        %v2466 = vld [vmem:[%s231 + $0x17c4] sm:$0xf]
        %v2467 = vld [vmem:[%s231 + $0x17c8] sm:$0xf]
        %v2468 = vld [vmem:[%s231 + $0x17cc] sm:$0xf]
        %v2469 = vld [vmem:[%s231 + $0x17d0] sm:$0xf]
        %v2470 = vld [vmem:[%s231 + $0x17d4] sm:$0xf]
        %v2471 = vld [vmem:[%s231 + $0x17d8] sm:$0xf]
        %v2472 = vld [vmem:[%s231 + $0x17dc] sm:$0xf]
        %v2473 = vld [vmem:[%s231 + $0x17e0] sm:$0xf]
        %v2474 = vld [vmem:[%s231 + $0x17e4] sm:$0xf]
        %v2475 = vld [vmem:[%s231 + $0x17e8] sm:$0xf]
        %v2476 = vld [vmem:[%s231 + $0x17ec] sm:$0xf]
        %v2477 = vld [vmem:[%s231 + $0x17f0] sm:$0xf]
        %v2478 = vld [vmem:[%s231 + $0x17f4] sm:$0xf]
        %v2479 = vld [vmem:[%s231 + $0x17f8] sm:$0xf]
        %v2480 = vld [vmem:[%s231 + $0x17fc] sm:$0xf]
        %v2481 = vld [vmem:[%s231 + $0x1800] sm:$0xf]
        %v2482 = vld [vmem:[%s231 + $0x1804] sm:$0xf]
        %v2483 = vld [vmem:[%s231 + $0x1808] sm:$0xf]
        %v2484 = vld [vmem:[%s231 + $0x180c] sm:$0xf]
        %v2485 = vld [vmem:[%s231 + $0x1810] sm:$0xf]
        %v2486 = vld [vmem:[%s231 + $0x1814] sm:$0xf]
        %v2487 = vld [vmem:[%s231 + $0x1818] sm:$0xf]
        %v2488 = vld [vmem:[%s231 + $0x181c] sm:$0xf]
        %v2489 = vld [vmem:[%s231 + $0x1820] sm:$0xf]
        %v2490 = vld [vmem:[%s231 + $0x1824] sm:$0xf]
        %v2491 = vld [vmem:[%s231 + $0x1828] sm:$0xf]
        %v2492 = vld [vmem:[%s231 + $0x182c] sm:$0xf]
        %v2493 = vld [vmem:[%s231 + $0x1830] sm:$0xf]
        %v2494 = vld [vmem:[%s231 + $0x1834] sm:$0xf]
        %v2495 = vld [vmem:[%s231 + $0x1838] sm:$0xf]
        %v2496 = vld [vmem:[%s231 + $0x183c] sm:$0xf]
        %v2497 = vld [vmem:[%s231 + $0x1840] sm:$0xf]
        %v2498 = vld [vmem:[%s231 + $0x1844] sm:$0xf]
        %v2499 = vld [vmem:[%s231 + $0x1848] sm:$0xf]
        %v2500 = vld [vmem:[%s231 + $0x184c] sm:$0xf]
        %v2501 = vld [vmem:[%s231 + $0x1850] sm:$0xf]
        %v2502 = vld [vmem:[%s231 + $0x1854] sm:$0xf]
        %v2503 = vld [vmem:[%s231 + $0x1858] sm:$0xf]
        %v2504 = vld [vmem:[%s231 + $0x185c] sm:$0xf]
        %v2505 = vld [vmem:[%s231 + $0x1860] sm:$0xf]
        %v2506 = vld [vmem:[%s231 + $0x1864] sm:$0xf]
        %v2507 = vld [vmem:[%s231 + $0x1868] sm:$0xf]
        %v2508 = vld [vmem:[%s231 + $0x186c] sm:$0xf]
        %v2509 = vld [vmem:[%s231 + $0x1870] sm:$0xf]
        %v2510 = vld [vmem:[%s231 + $0x1874] sm:$0xf]
        %v2511 = vld [vmem:[%s231 + $0x1878] sm:$0xf]
        %v2512 = vld [vmem:[%s231 + $0x187c] sm:$0xf]
        %v4081 = vunpack.c.l.b16 %v945
        %v4082 = vunpack.c.l.b16 %v946
        %v4083 = vunpack.c.l.b16 %v947
        %v4084 = vunpack.c.l.b16 %v948
        %v4085 = vunpack.c.l.b16 %v949
        %v4086 = vunpack.c.l.b16 %v950
        %v4087 = vunpack.c.l.b16 %v951
        %v4088 = vunpack.c.l.b16 %v952
        %v4089 = vunpack.c.l.b16 %v953
        %v4090 = vunpack.c.l.b16 %v954
        %v4091 = vunpack.c.l.b16 %v955
        %v4092 = vunpack.c.l.b16 %v956
        %v4093 = vunpack.c.l.b16 %v957
        %v4094 = vunpack.c.l.b16 %v958
        %v4095 = vunpack.c.l.b16 %v959
        %v4096 = vunpack.c.l.b16 %v960
        %v4097 = vunpack.c.l.b16 %v961
        %v4098 = vunpack.c.l.b16 %v962
        %v4099 = vunpack.c.l.b16 %v963
        %v4100 = vunpack.c.l.b16 %v964
        %v4101 = vunpack.c.l.b16 %v965
        %v4102 = vunpack.c.l.b16 %v966
        %v4103 = vunpack.c.l.b16 %v967
        %v4104 = vunpack.c.l.b16 %v968
        %v4105 = vunpack.c.l.b16 %v969
        %v4106 = vunpack.c.l.b16 %v970
        %v4107 = vunpack.c.l.b16 %v971
        %v4108 = vunpack.c.l.b16 %v972
        %v4109 = vunpack.c.l.b16 %v973
        %v4110 = vunpack.c.l.b16 %v974
        %v4111 = vunpack.c.l.b16 %v975
        %v4112 = vunpack.c.l.b16 %v976
        %v4113 = vunpack.c.l.b16 %v977
        %v4114 = vunpack.c.l.b16 %v978
        %v4115 = vunpack.c.l.b16 %v979
        %v4116 = vunpack.c.l.b16 %v980
        %v4117 = vunpack.c.l.b16 %v981
        %v4118 = vunpack.c.l.b16 %v982
        %v4119 = vunpack.c.l.b16 %v983
        %v4120 = vunpack.c.l.b16 %v984
        %v4121 = vunpack.c.l.b16 %v985
        %v4122 = vunpack.c.l.b16 %v986
        %v4123 = vunpack.c.l.b16 %v987
        %v4124 = vunpack.c.l.b16 %v988
        %v4125 = vunpack.c.l.b16 %v989
        %v4126 = vunpack.c.l.b16 %v990
        %v4127 = vunpack.c.l.b16 %v991
        %v4128 = vunpack.c.l.b16 %v992
        %v4129 = vunpack.c.l.b16 %v993
        %v4130 = vunpack.c.l.b16 %v994
        %v4131 = vunpack.c.l.b16 %v995
        %v4132 = vunpack.c.l.b16 %v996
        %v4133 = vunpack.c.l.b16 %v997
        %v4134 = vunpack.c.l.b16 %v998
        %v4135 = vunpack.c.l.b16 %v999
        %v4136 = vunpack.c.l.b16 %v1000
        %v4137 = vunpack.c.l.b16 %v1001
        %v4138 = vunpack.c.l.b16 %v1002
        %v4139 = vunpack.c.l.b16 %v1003
        %v4140 = vunpack.c.l.b16 %v1004
        %v4141 = vunpack.c.l.b16 %v1005
        %v4142 = vunpack.c.l.b16 %v1006
        %v4143 = vunpack.c.l.b16 %v1007
        %v4144 = vunpack.c.l.b16 %v1008
        %v4145 = vunpack.c.l.b16 %v1009
        %v4146 = vunpack.c.l.b16 %v1010
        %v4147 = vunpack.c.l.b16 %v1011
        %v4148 = vunpack.c.l.b16 %v1012
        %v4149 = vunpack.c.l.b16 %v1013
        %v4150 = vunpack.c.l.b16 %v1014
        %v4151 = vunpack.c.l.b16 %v1015
        %v4152 = vunpack.c.l.b16 %v1016
        %v4153 = vunpack.c.l.b16 %v1017
        %v4154 = vunpack.c.l.b16 %v1018
        %v4155 = vunpack.c.l.b16 %v1019
        %v4156 = vunpack.c.l.b16 %v1020
        %v4157 = vunpack.c.l.b16 %v1021
        %v4158 = vunpack.c.l.b16 %v1022
        %v4159 = vunpack.c.l.b16 %v1023
        %v4160 = vunpack.c.l.b16 %v1024
        %v4161 = vunpack.c.l.b16 %v1025
        %v4162 = vunpack.c.l.b16 %v1026
        %v4163 = vunpack.c.l.b16 %v1027
        %v4164 = vunpack.c.l.b16 %v1028
        %v4165 = vunpack.c.l.b16 %v1029
        %v4166 = vunpack.c.l.b16 %v1030
        %v4167 = vunpack.c.l.b16 %v1031
        %v4168 = vunpack.c.l.b16 %v1032
        %v4169 = vunpack.c.l.b16 %v1033
        %v4170 = vunpack.c.l.b16 %v1034
        %v4171 = vunpack.c.l.b16 %v1035
        %v4172 = vunpack.c.l.b16 %v1036
        %v4173 = vunpack.c.l.b16 %v1037
        %v4174 = vunpack.c.l.b16 %v1038
        %v4175 = vunpack.c.l.b16 %v1039
        %v4176 = vunpack.c.l.b16 %v1040
        %v4177 = vunpack.c.l.b16 %v1041
        %v4178 = vunpack.c.l.b16 %v1042
        %v4179 = vunpack.c.l.b16 %v1043
        %v4180 = vunpack.c.l.b16 %v1044
        %v4181 = vunpack.c.l.b16 %v1045
        %v4182 = vunpack.c.l.b16 %v1046
        %v4183 = vunpack.c.l.b16 %v1047
        %v4184 = vunpack.c.l.b16 %v1048
        %v4185 = vunpack.c.l.b16 %v1049
        %v4186 = vunpack.c.l.b16 %v1050
        %v4187 = vunpack.c.l.b16 %v1051
        %v4188 = vunpack.c.l.b16 %v1052
        %v4189 = vunpack.c.l.b16 %v1053
        %v4190 = vunpack.c.l.b16 %v1054
        %v4191 = vunpack.c.l.b16 %v1055
        %v4192 = vunpack.c.l.b16 %v1056
        %v4193 = vunpack.c.l.b16 %v1057
        %v4194 = vunpack.c.l.b16 %v1058
        %v4195 = vunpack.c.l.b16 %v1059
        %v4196 = vunpack.c.l.b16 %v1060
        %v4197 = vunpack.c.l.b16 %v1061
        %v4198 = vunpack.c.l.b16 %v1062
        %v4199 = vunpack.c.l.b16 %v1063
        %v4200 = vunpack.c.l.b16 %v1064
        %v4201 = vunpack.c.l.b16 %v1065
        %v4202 = vunpack.c.l.b16 %v1066
        %v4203 = vunpack.c.l.b16 %v1067
        %v4204 = vunpack.c.l.b16 %v1068
        %v4205 = vunpack.c.l.b16 %v1069
        %v4206 = vunpack.c.l.b16 %v1070
        %v4207 = vunpack.c.l.b16 %v1071
        %v4208 = vunpack.c.l.b16 %v1072
        %v4209 = vunpack.c.l.b16 %v1073
        %v4210 = vunpack.c.l.b16 %v1074
        %v4211 = vunpack.c.l.b16 %v1075
        %v4212 = vunpack.c.l.b16 %v1076
        %v4213 = vunpack.c.l.b16 %v1077
        %v4214 = vunpack.c.l.b16 %v1078
        %v4215 = vunpack.c.l.b16 %v1079
        %v4216 = vunpack.c.l.b16 %v1080
        %v4217 = vunpack.c.l.b16 %v1081
        %v4218 = vunpack.c.l.b16 %v1082
        %v4219 = vunpack.c.l.b16 %v1083
        %v4220 = vunpack.c.l.b16 %v1084
        %v4221 = vunpack.c.l.b16 %v1085
        %v4222 = vunpack.c.l.b16 %v1086
        %v4223 = vunpack.c.l.b16 %v1087
        %v4224 = vunpack.c.l.b16 %v1088
        %v4225 = vunpack.c.l.b16 %v1089
        %v4226 = vunpack.c.l.b16 %v1090
        %v4227 = vunpack.c.l.b16 %v1091
        %v4228 = vunpack.c.l.b16 %v1092
        %v4229 = vunpack.c.l.b16 %v1093
        %v4230 = vunpack.c.l.b16 %v1094
        %v4231 = vunpack.c.l.b16 %v1095
        %v4232 = vunpack.c.l.b16 %v1096
        %v4233 = vunpack.c.l.b16 %v1097
        %v4234 = vunpack.c.l.b16 %v1098
        %v4235 = vunpack.c.l.b16 %v1099
        %v4236 = vunpack.c.l.b16 %v1100
        %v4237 = vunpack.c.l.b16 %v1101
        %v4238 = vunpack.c.l.b16 %v1102
        %v4239 = vunpack.c.l.b16 %v1103
        %v4240 = vunpack.c.l.b16 %v1104
        %v4241 = vunpack.c.l.b16 %v1105
        %v4242 = vunpack.c.l.b16 %v1106
        %v4243 = vunpack.c.l.b16 %v1107
        %v4244 = vunpack.c.l.b16 %v1108
        %v4245 = vunpack.c.l.b16 %v1109
        %v4246 = vunpack.c.l.b16 %v1110
        %v4247 = vunpack.c.l.b16 %v1111
        %v4248 = vunpack.c.l.b16 %v1112
        %v4249 = vunpack.c.l.b16 %v1113
        %v4250 = vunpack.c.l.b16 %v1114
        %v4251 = vunpack.c.l.b16 %v1115
        %v4252 = vunpack.c.l.b16 %v1116
        %v4253 = vunpack.c.l.b16 %v1117
        %v4254 = vunpack.c.l.b16 %v1118
        %v4255 = vunpack.c.l.b16 %v1119
        %v4256 = vunpack.c.l.b16 %v1120
        %v4257 = vunpack.c.l.b16 %v1121
        %v4258 = vunpack.c.l.b16 %v1122
        %v4259 = vunpack.c.l.b16 %v1123
        %v4260 = vunpack.c.l.b16 %v1124
        %v4261 = vunpack.c.l.b16 %v1125
        %v4262 = vunpack.c.l.b16 %v1126
        %v4263 = vunpack.c.l.b16 %v1127
        %v4264 = vunpack.c.l.b16 %v1128
        %v4265 = vunpack.c.l.b16 %v1129
        %v4266 = vunpack.c.l.b16 %v1130
        %v4267 = vunpack.c.l.b16 %v1131
        %v4268 = vunpack.c.l.b16 %v1132
        %v4269 = vunpack.c.l.b16 %v1133
        %v4270 = vunpack.c.l.b16 %v1134
        %v4271 = vunpack.c.l.b16 %v1135
        %v4272 = vunpack.c.l.b16 %v1136
        %v4273 = vunpack.c.l.b16 %v1137
        %v4274 = vunpack.c.l.b16 %v1138
        %v4275 = vunpack.c.l.b16 %v1139
        %v4276 = vunpack.c.l.b16 %v1140
        %v4277 = vunpack.c.l.b16 %v1141
        %v4278 = vunpack.c.l.b16 %v1142
        %v4279 = vunpack.c.l.b16 %v1143
        %v4280 = vunpack.c.l.b16 %v1144
        %v4281 = vunpack.c.l.b16 %v1145
        %v4282 = vunpack.c.l.b16 %v1146
        %v4283 = vunpack.c.l.b16 %v1147
        %v4284 = vunpack.c.l.b16 %v1148
        %v4285 = vunpack.c.l.b16 %v1149
        %v4286 = vunpack.c.l.b16 %v1150
        %v4287 = vunpack.c.l.b16 %v1151
        %v4288 = vunpack.c.l.b16 %v1152
        %v4289 = vunpack.c.l.b16 %v1153
        %v4290 = vunpack.c.l.b16 %v1154
        %v4291 = vunpack.c.l.b16 %v1155
        %v4292 = vunpack.c.l.b16 %v1156
        %v4293 = vunpack.c.l.b16 %v1157
        %v4294 = vunpack.c.l.b16 %v1158
        %v4295 = vunpack.c.l.b16 %v1159
        %v4296 = vunpack.c.l.b16 %v1160
        %v4297 = vunpack.c.l.b16 %v1161
        %v4298 = vunpack.c.l.b16 %v1162
        %v4299 = vunpack.c.l.b16 %v1163
        %v4300 = vunpack.c.l.b16 %v1164
        %v4301 = vunpack.c.l.b16 %v1165
        %v4302 = vunpack.c.l.b16 %v1166
        %v4303 = vunpack.c.l.b16 %v1167
        %v4304 = vunpack.c.l.b16 %v1168
        %v4305 = vunpack.c.l.b16 %v1169
        %v4306 = vunpack.c.l.b16 %v1170
        %v4307 = vunpack.c.l.b16 %v1171
        %v4308 = vunpack.c.l.b16 %v1172
        %v4309 = vunpack.c.l.b16 %v1173
        %v4310 = vunpack.c.l.b16 %v1174
        %v4311 = vunpack.c.l.b16 %v1175
        %v4312 = vunpack.c.l.b16 %v1176
        %v4313 = vunpack.c.l.b16 %v1177
        %v4314 = vunpack.c.l.b16 %v1178
        %v4315 = vunpack.c.l.b16 %v1179
        %v4316 = vunpack.c.l.b16 %v1180
        %v4317 = vunpack.c.l.b16 %v1181
        %v4318 = vunpack.c.l.b16 %v1182
        %v4319 = vunpack.c.l.b16 %v1183
        %v4320 = vunpack.c.l.b16 %v1184
        %v4321 = vunpack.c.l.b16 %v1185
        %v4322 = vunpack.c.l.b16 %v1186
        %v4323 = vunpack.c.l.b16 %v1187
        %v4324 = vunpack.c.l.b16 %v1188
        %v4325 = vunpack.c.l.b16 %v1189
        %v4326 = vunpack.c.l.b16 %v1190
        %v4327 = vunpack.c.l.b16 %v1191
        %v4328 = vunpack.c.l.b16 %v1192
        %v4329 = vunpack.c.l.b16 %v1193
        %v4330 = vunpack.c.l.b16 %v1194
        %v4331 = vunpack.c.l.b16 %v1195
        %v4332 = vunpack.c.l.b16 %v1196
        %v4333 = vunpack.c.l.b16 %v1197
        %v4334 = vunpack.c.l.b16 %v1198
        %v4335 = vunpack.c.l.b16 %v1199
        %v4336 = vunpack.c.l.b16 %v1200
        %v4337 = vunpack.c.l.b16 %v1201
        %v4338 = vunpack.c.l.b16 %v1202
        %v4339 = vunpack.c.l.b16 %v1203
        %v4340 = vunpack.c.l.b16 %v1204
        %v4341 = vunpack.c.l.b16 %v1205
        %v4342 = vunpack.c.l.b16 %v1206
        %v4343 = vunpack.c.l.b16 %v1207
        %v4344 = vunpack.c.l.b16 %v1208
        %v4345 = vunpack.c.l.b16 %v1209
        %v4346 = vunpack.c.l.b16 %v1210
        %v4347 = vunpack.c.l.b16 %v1211
        %v4348 = vunpack.c.l.b16 %v1212
        %v4349 = vunpack.c.l.b16 %v1213
        %v4350 = vunpack.c.l.b16 %v1214
        %v4351 = vunpack.c.l.b16 %v1215
        %v4352 = vunpack.c.l.b16 %v1216
        %v4353 = vunpack.c.l.b16 %v1217
        %v4354 = vunpack.c.l.b16 %v1218
        %v4355 = vunpack.c.l.b16 %v1219
        %v4356 = vunpack.c.l.b16 %v1220
        %v4357 = vunpack.c.l.b16 %v1221
        %v4358 = vunpack.c.l.b16 %v1222
        %v4359 = vunpack.c.l.b16 %v1223
        %v4360 = vunpack.c.l.b16 %v1224
        %v4361 = vunpack.c.l.b16 %v1225
        %v4362 = vunpack.c.l.b16 %v1226
        %v4363 = vunpack.c.l.b16 %v1227
        %v4364 = vunpack.c.l.b16 %v1228
        %v4365 = vunpack.c.l.b16 %v1229
        %v4366 = vunpack.c.l.b16 %v1230
        %v4367 = vunpack.c.l.b16 %v1231
        %v4368 = vunpack.c.l.b16 %v1232
        %v4369 = vunpack.c.l.b16 %v1233
        %v4370 = vunpack.c.l.b16 %v1234
        %v4371 = vunpack.c.l.b16 %v1235
        %v4372 = vunpack.c.l.b16 %v1236
        %v4373 = vunpack.c.l.b16 %v1237
        %v4374 = vunpack.c.l.b16 %v1238
        %v4375 = vunpack.c.l.b16 %v1239
        %v4376 = vunpack.c.l.b16 %v1240
        %v4377 = vunpack.c.l.b16 %v1241
        %v4378 = vunpack.c.l.b16 %v1242
        %v4379 = vunpack.c.l.b16 %v1243
        %v4380 = vunpack.c.l.b16 %v1244
        %v4381 = vunpack.c.l.b16 %v1245
        %v4382 = vunpack.c.l.b16 %v1246
        %v4383 = vunpack.c.l.b16 %v1247
        %v4384 = vunpack.c.l.b16 %v1248
        %v4385 = vunpack.c.l.b16 %v1249
        %v4386 = vunpack.c.l.b16 %v1250
        %v4387 = vunpack.c.l.b16 %v1251
        %v4388 = vunpack.c.l.b16 %v1252
        %v4389 = vunpack.c.l.b16 %v1253
        %v4390 = vunpack.c.l.b16 %v1254
        %v4391 = vunpack.c.l.b16 %v1255
        %v4392 = vunpack.c.l.b16 %v1256
        %v4393 = vunpack.c.l.b16 %v1257
        %v4394 = vunpack.c.l.b16 %v1258
        %v4395 = vunpack.c.l.b16 %v1259
        %v4396 = vunpack.c.l.b16 %v1260
        %v4397 = vunpack.c.l.b16 %v1261
        %v4398 = vunpack.c.l.b16 %v1262
        %v4399 = vunpack.c.l.b16 %v1263
        %v4400 = vunpack.c.l.b16 %v1264
        %v4401 = vunpack.c.l.b16 %v1265
        %v4402 = vunpack.c.l.b16 %v1266
        %v4403 = vunpack.c.l.b16 %v1267
        %v4404 = vunpack.c.l.b16 %v1268
        %v4405 = vunpack.c.l.b16 %v1269
        %v4406 = vunpack.c.l.b16 %v1270
        %v4407 = vunpack.c.l.b16 %v1271
        %v4408 = vunpack.c.l.b16 %v1272
        %v4409 = vunpack.c.l.b16 %v1273
        %v4410 = vunpack.c.l.b16 %v1274
        %v4411 = vunpack.c.l.b16 %v1275
        %v4412 = vunpack.c.l.b16 %v1276
        %v4413 = vunpack.c.l.b16 %v1277
        %v4414 = vunpack.c.l.b16 %v1278
        %v4415 = vunpack.c.l.b16 %v1279
        %v4416 = vunpack.c.l.b16 %v1280
        %v4417 = vunpack.c.l.b16 %v1281
        %v4418 = vunpack.c.l.b16 %v1282
        %v4419 = vunpack.c.l.b16 %v1283
        %v4420 = vunpack.c.l.b16 %v1284
        %v4421 = vunpack.c.l.b16 %v1285
        %v4422 = vunpack.c.l.b16 %v1286
        %v4423 = vunpack.c.l.b16 %v1287
        %v4424 = vunpack.c.l.b16 %v1288
        %v4425 = vunpack.c.l.b16 %v1289
        %v4426 = vunpack.c.l.b16 %v1290
        %v4427 = vunpack.c.l.b16 %v1291
        %v4428 = vunpack.c.l.b16 %v1292
        %v4429 = vunpack.c.l.b16 %v1293
        %v4430 = vunpack.c.l.b16 %v1294
        %v4431 = vunpack.c.l.b16 %v1295
        %v4432 = vunpack.c.l.b16 %v1296
        %v4433 = vunpack.c.l.b16 %v1297
        %v4434 = vunpack.c.l.b16 %v1298
        %v4435 = vunpack.c.l.b16 %v1299
        %v4436 = vunpack.c.l.b16 %v1300
        %v4437 = vunpack.c.l.b16 %v1301
        %v4438 = vunpack.c.l.b16 %v1302
        %v4439 = vunpack.c.l.b16 %v1303
        %v4440 = vunpack.c.l.b16 %v1304
        %v4441 = vunpack.c.l.b16 %v1305
        %v4442 = vunpack.c.l.b16 %v1306
        %v4443 = vunpack.c.l.b16 %v1307
        %v4444 = vunpack.c.l.b16 %v1308
        %v4445 = vunpack.c.l.b16 %v1309
        %v4446 = vunpack.c.l.b16 %v1310
        %v4447 = vunpack.c.l.b16 %v1311
        %v4448 = vunpack.c.l.b16 %v1312
        %v4449 = vunpack.c.l.b16 %v1313
        %v4450 = vunpack.c.l.b16 %v1314
        %v4451 = vunpack.c.l.b16 %v1315
        %v4452 = vunpack.c.l.b16 %v1316
        %v4453 = vunpack.c.l.b16 %v1317
        %v4454 = vunpack.c.l.b16 %v1318
        %v4455 = vunpack.c.l.b16 %v1319
        %v4456 = vunpack.c.l.b16 %v1320
        %v4457 = vunpack.c.l.b16 %v1321
        %v4458 = vunpack.c.l.b16 %v1322
        %v4459 = vunpack.c.l.b16 %v1323
        %v4460 = vunpack.c.l.b16 %v1324
        %v4461 = vunpack.c.l.b16 %v1325
        %v4462 = vunpack.c.l.b16 %v1326
        %v4463 = vunpack.c.l.b16 %v1327
        %v4464 = vunpack.c.l.b16 %v1328
        %v4465 = vunpack.c.l.b16 %v1329
        %v4466 = vunpack.c.l.b16 %v1330
        %v4467 = vunpack.c.l.b16 %v1331
        %v4468 = vunpack.c.l.b16 %v1332
        %v4469 = vunpack.c.l.b16 %v1333
        %v4470 = vunpack.c.l.b16 %v1334
        %v4471 = vunpack.c.l.b16 %v1335
        %v4472 = vunpack.c.l.b16 %v1336
        %v4473 = vunpack.c.l.b16 %v1337
        %v4474 = vunpack.c.l.b16 %v1338
        %v4475 = vunpack.c.l.b16 %v1339
        %v4476 = vunpack.c.l.b16 %v1340
        %v4477 = vunpack.c.l.b16 %v1341
        %v4478 = vunpack.c.l.b16 %v1342
        %v4479 = vunpack.c.l.b16 %v1343
        %v4480 = vunpack.c.l.b16 %v1344
        %v4481 = vunpack.c.l.b16 %v1345
        %v4482 = vunpack.c.l.b16 %v1346
        %v4483 = vunpack.c.l.b16 %v1347
        %v4484 = vunpack.c.l.b16 %v1348
        %v4485 = vunpack.c.l.b16 %v1349
        %v4486 = vunpack.c.l.b16 %v1350
        %v4487 = vunpack.c.l.b16 %v1351
        %v4488 = vunpack.c.l.b16 %v1352
        %v4489 = vunpack.c.l.b16 %v1353
        %v4490 = vunpack.c.l.b16 %v1354
        %v4491 = vunpack.c.l.b16 %v1355
        %v4492 = vunpack.c.l.b16 %v1356
        %v4493 = vunpack.c.l.b16 %v1357
        %v4494 = vunpack.c.l.b16 %v1358
        %v4495 = vunpack.c.l.b16 %v1359
        %v4496 = vunpack.c.l.b16 %v1360
        %v4497 = vunpack.c.l.b16 %v1361
        %v4498 = vunpack.c.l.b16 %v1362
        %v4499 = vunpack.c.l.b16 %v1363
        %v4500 = vunpack.c.l.b16 %v1364
        %v4501 = vunpack.c.l.b16 %v1365
        %v4502 = vunpack.c.l.b16 %v1366
        %v4503 = vunpack.c.l.b16 %v1367
        %v4504 = vunpack.c.l.b16 %v1368
        %v4505 = vunpack.c.l.b16 %v1369
        %v4506 = vunpack.c.l.b16 %v1370
        %v4507 = vunpack.c.l.b16 %v1371
        %v4508 = vunpack.c.l.b16 %v1372
        %v4509 = vunpack.c.l.b16 %v1373
        %v4510 = vunpack.c.l.b16 %v1374
        %v4511 = vunpack.c.l.b16 %v1375
        %v4512 = vunpack.c.l.b16 %v1376
        %v4513 = vunpack.c.l.b16 %v1377
        %v4514 = vunpack.c.l.b16 %v1378
        %v4515 = vunpack.c.l.b16 %v1379
        %v4516 = vunpack.c.l.b16 %v1380
        %v4517 = vunpack.c.l.b16 %v1381
        %v4518 = vunpack.c.l.b16 %v1382
        %v4519 = vunpack.c.l.b16 %v1383
        %v4520 = vunpack.c.l.b16 %v1384
        %v4521 = vunpack.c.l.b16 %v1385
        %v4522 = vunpack.c.l.b16 %v1386
        %v4523 = vunpack.c.l.b16 %v1387
        %v4524 = vunpack.c.l.b16 %v1388
        %v4525 = vunpack.c.l.b16 %v1389
        %v4526 = vunpack.c.l.b16 %v1390
        %v4527 = vunpack.c.l.b16 %v1391
        %v4528 = vunpack.c.l.b16 %v1392
        %v4529 = vunpack.c.l.b16 %v1393
        %v4530 = vunpack.c.l.b16 %v1394
        %v4531 = vunpack.c.l.b16 %v1395
        %v4532 = vunpack.c.l.b16 %v1396
        %v4533 = vunpack.c.l.b16 %v1397
        %v4534 = vunpack.c.l.b16 %v1398
        %v4535 = vunpack.c.l.b16 %v1399
        %v4536 = vunpack.c.l.b16 %v1400
        %v4537 = vunpack.c.l.b16 %v1401
        %v4538 = vunpack.c.l.b16 %v1402
        %v4539 = vunpack.c.l.b16 %v1403
        %v4540 = vunpack.c.l.b16 %v1404
        %v4541 = vunpack.c.l.b16 %v1405
        %v4542 = vunpack.c.l.b16 %v1406
        %v4543 = vunpack.c.l.b16 %v1407
        %v4544 = vunpack.c.l.b16 %v1408
        %v4545 = vunpack.c.l.b16 %v1409
        %v4546 = vunpack.c.l.b16 %v1410
        %v4547 = vunpack.c.l.b16 %v1411
        %v4548 = vunpack.c.l.b16 %v1412
        %v4549 = vunpack.c.l.b16 %v1413
        %v4550 = vunpack.c.l.b16 %v1414
        %v4551 = vunpack.c.l.b16 %v1415
        %v4552 = vunpack.c.l.b16 %v1416
        %v4553 = vunpack.c.l.b16 %v1417
        %v4554 = vunpack.c.l.b16 %v1418
        %v4555 = vunpack.c.l.b16 %v1419
        %v4556 = vunpack.c.l.b16 %v1420
        %v4557 = vunpack.c.l.b16 %v1421
        %v4558 = vunpack.c.l.b16 %v1422
        %v4559 = vunpack.c.l.b16 %v1423
        %v4560 = vunpack.c.l.b16 %v1424
        %v4561 = vunpack.c.l.b16 %v1425
        %v4562 = vunpack.c.l.b16 %v1426
        %v4563 = vunpack.c.l.b16 %v1427
        %v4564 = vunpack.c.l.b16 %v1428
        %v4565 = vunpack.c.l.b16 %v1429
        %v4566 = vunpack.c.l.b16 %v1430
        %v4567 = vunpack.c.l.b16 %v1431
        %v4568 = vunpack.c.l.b16 %v1432
        %v4569 = vunpack.c.l.b16 %v1433
        %v4570 = vunpack.c.l.b16 %v1434
        %v4571 = vunpack.c.l.b16 %v1435
        %v4572 = vunpack.c.l.b16 %v1436
        %v4573 = vunpack.c.l.b16 %v1437
        %v4574 = vunpack.c.l.b16 %v1438
        %v4575 = vunpack.c.l.b16 %v1439
        %v4576 = vunpack.c.l.b16 %v1440
        %v4577 = vunpack.c.l.b16 %v1441
        %v4578 = vunpack.c.l.b16 %v1442
        %v4579 = vunpack.c.l.b16 %v1443
        %v4580 = vunpack.c.l.b16 %v1444
        %v4581 = vunpack.c.l.b16 %v1445
        %v4582 = vunpack.c.l.b16 %v1446
        %v4583 = vunpack.c.l.b16 %v1447
        %v4584 = vunpack.c.l.b16 %v1448
        %v4585 = vunpack.c.l.b16 %v1449
        %v4586 = vunpack.c.l.b16 %v1450
        %v4587 = vunpack.c.l.b16 %v1451
        %v4588 = vunpack.c.l.b16 %v1452
        %v4589 = vunpack.c.l.b16 %v1453
        %v4590 = vunpack.c.l.b16 %v1454
        %v4591 = vunpack.c.l.b16 %v1455
        %v4592 = vunpack.c.l.b16 %v1456
        %v4593 = vunpack.c.l.b16 %v1457
        %v4594 = vunpack.c.l.b16 %v1458
        %v4595 = vunpack.c.l.b16 %v1459
        %v4596 = vunpack.c.l.b16 %v1460
        %v4597 = vunpack.c.l.b16 %v1461
        %v4598 = vunpack.c.l.b16 %v1462
        %v4599 = vunpack.c.l.b16 %v1463
        %v4600 = vunpack.c.l.b16 %v1464
        %v4601 = vunpack.c.l.b16 %v1465
        %v4602 = vunpack.c.l.b16 %v1466
        %v4603 = vunpack.c.l.b16 %v1467
        %v4604 = vunpack.c.l.b16 %v1468
        %v4605 = vunpack.c.l.b16 %v1469
        %v4606 = vunpack.c.l.b16 %v1470
        %v4607 = vunpack.c.l.b16 %v1471
        %v4608 = vunpack.c.l.b16 %v1472
        %v4609 = vunpack.c.l.b16 %v1473
        %v4610 = vunpack.c.l.b16 %v1474
        %v4611 = vunpack.c.l.b16 %v1475
        %v4612 = vunpack.c.l.b16 %v1476
        %v4613 = vunpack.c.l.b16 %v1477
        %v4614 = vunpack.c.l.b16 %v1478
        %v4615 = vunpack.c.l.b16 %v1479
        %v4616 = vunpack.c.l.b16 %v1480
        %v4617 = vunpack.c.l.b16 %v1481
        %v4618 = vunpack.c.l.b16 %v1482
        %v4619 = vunpack.c.l.b16 %v1483
        %v4620 = vunpack.c.l.b16 %v1484
        %v4621 = vunpack.c.l.b16 %v1485
        %v4622 = vunpack.c.l.b16 %v1486
        %v4623 = vunpack.c.l.b16 %v1487
        %v4624 = vunpack.c.l.b16 %v1488
        %v4625 = vunpack.c.l.b16 %v1489
        %v4626 = vunpack.c.l.b16 %v1490
        %v4627 = vunpack.c.l.b16 %v1491
        %v4628 = vunpack.c.l.b16 %v1492
        %v4629 = vunpack.c.l.b16 %v1493
        %v4630 = vunpack.c.l.b16 %v1494
        %v4631 = vunpack.c.l.b16 %v1495
        %v4632 = vunpack.c.l.b16 %v1496
        %v4633 = vunpack.c.l.b16 %v1497
        %v4634 = vunpack.c.l.b16 %v1498
        %v4635 = vunpack.c.l.b16 %v1499
        %v4636 = vunpack.c.l.b16 %v1500
        %v4637 = vunpack.c.l.b16 %v1501
        %v4638 = vunpack.c.l.b16 %v1502
        %v4639 = vunpack.c.l.b16 %v1503
        %v4640 = vunpack.c.l.b16 %v1504
        %v4641 = vunpack.c.l.b16 %v1505
        %v4642 = vunpack.c.l.b16 %v1506
        %v4643 = vunpack.c.l.b16 %v1507
        %v4644 = vunpack.c.l.b16 %v1508
        %v4645 = vunpack.c.l.b16 %v1509
        %v4646 = vunpack.c.l.b16 %v1510
        %v4647 = vunpack.c.l.b16 %v1511
        %v4648 = vunpack.c.l.b16 %v1512
        %v4649 = vunpack.c.l.b16 %v1513
        %v4650 = vunpack.c.l.b16 %v1514
        %v4651 = vunpack.c.l.b16 %v1515
        %v4652 = vunpack.c.l.b16 %v1516
        %v4653 = vunpack.c.l.b16 %v1517
        %v4654 = vunpack.c.l.b16 %v1518
        %v4655 = vunpack.c.l.b16 %v1519
        %v4656 = vunpack.c.l.b16 %v1520
        %v4657 = vunpack.c.l.b16 %v1521
        %v4658 = vunpack.c.l.b16 %v1522
        %v4659 = vunpack.c.l.b16 %v1523
        %v4660 = vunpack.c.l.b16 %v1524
        %v4661 = vunpack.c.l.b16 %v1525
        %v4662 = vunpack.c.l.b16 %v1526
        %v4663 = vunpack.c.l.b16 %v1527
        %v4664 = vunpack.c.l.b16 %v1528
        %v4665 = vunpack.c.l.b16 %v1529
        %v4666 = vunpack.c.l.b16 %v1530
        %v4667 = vunpack.c.l.b16 %v1531
        %v4668 = vunpack.c.l.b16 %v1532
        %v4669 = vunpack.c.l.b16 %v1533
        %v4670 = vunpack.c.l.b16 %v1534
        %v4671 = vunpack.c.l.b16 %v1535
        %v4672 = vunpack.c.l.b16 %v1536
        %v4673 = vunpack.c.l.b16 %v1537
        %v4674 = vunpack.c.l.b16 %v1538
        %v4675 = vunpack.c.l.b16 %v1539
        %v4676 = vunpack.c.l.b16 %v1540
        %v4677 = vunpack.c.l.b16 %v1541
        %v4678 = vunpack.c.l.b16 %v1542
        %v4679 = vunpack.c.l.b16 %v1543
        %v4680 = vunpack.c.l.b16 %v1544
        %v4681 = vunpack.c.l.b16 %v1545
        %v4682 = vunpack.c.l.b16 %v1546
        %v4683 = vunpack.c.l.b16 %v1547
        %v4684 = vunpack.c.l.b16 %v1548
        %v4685 = vunpack.c.l.b16 %v1549
        %v4686 = vunpack.c.l.b16 %v1550
        %v4687 = vunpack.c.l.b16 %v1551
        %v4688 = vunpack.c.l.b16 %v1552
        %v4689 = vunpack.c.l.b16 %v1553
        %v4690 = vunpack.c.l.b16 %v1554
        %v4691 = vunpack.c.l.b16 %v1555
        %v4692 = vunpack.c.l.b16 %v1556
        %v4693 = vunpack.c.l.b16 %v1557
        %v4694 = vunpack.c.l.b16 %v1558
        %v4695 = vunpack.c.l.b16 %v1559
        %v4696 = vunpack.c.l.b16 %v1560
        %v4697 = vunpack.c.l.b16 %v1561
        %v4698 = vunpack.c.l.b16 %v1562
        %v4699 = vunpack.c.l.b16 %v1563
        %v4700 = vunpack.c.l.b16 %v1564
        %v4701 = vunpack.c.l.b16 %v1565
        %v4702 = vunpack.c.l.b16 %v1566
        %v4703 = vunpack.c.l.b16 %v1567
        %v4704 = vunpack.c.l.b16 %v1568
        %v4705 = vunpack.c.l.b16 %v1569
        %v4706 = vunpack.c.l.b16 %v1570
        %v4707 = vunpack.c.l.b16 %v1571
        %v4708 = vunpack.c.l.b16 %v1572
        %v4709 = vunpack.c.l.b16 %v1573
        %v4710 = vunpack.c.l.b16 %v1574
        %v4711 = vunpack.c.l.b16 %v1575
        %v4712 = vunpack.c.l.b16 %v1576
        %v4713 = vunpack.c.l.b16 %v1577
        %v4714 = vunpack.c.l.b16 %v1578
        %v4715 = vunpack.c.l.b16 %v1579
        %v4716 = vunpack.c.l.b16 %v1580
        %v4717 = vunpack.c.l.b16 %v1581
        %v4718 = vunpack.c.l.b16 %v1582
        %v4719 = vunpack.c.l.b16 %v1583
        %v4720 = vunpack.c.l.b16 %v1584
        %v4721 = vunpack.c.l.b16 %v1585
        %v4722 = vunpack.c.l.b16 %v1586
        %v4723 = vunpack.c.l.b16 %v1587
        %v4724 = vunpack.c.l.b16 %v1588
        %v4725 = vunpack.c.l.b16 %v1589
        %v4726 = vunpack.c.l.b16 %v1590
        %v4727 = vunpack.c.l.b16 %v1591
        %v4728 = vunpack.c.l.b16 %v1592
        %v4729 = vunpack.c.l.b16 %v1593
        %v4730 = vunpack.c.l.b16 %v1594
        %v4731 = vunpack.c.l.b16 %v1595
        %v4732 = vunpack.c.l.b16 %v1596
        %v4733 = vunpack.c.l.b16 %v1597
        %v4734 = vunpack.c.l.b16 %v1598
        %v4735 = vunpack.c.l.b16 %v1599
        %v4736 = vunpack.c.l.b16 %v1600
        %v4737 = vunpack.c.l.b16 %v1601
        %v4738 = vunpack.c.l.b16 %v1602
        %v4739 = vunpack.c.l.b16 %v1603
        %v4740 = vunpack.c.l.b16 %v1604
        %v4741 = vunpack.c.l.b16 %v1605
        %v4742 = vunpack.c.l.b16 %v1606
        %v4743 = vunpack.c.l.b16 %v1607
        %v4744 = vunpack.c.l.b16 %v1608
        %v4745 = vunpack.c.l.b16 %v1609
        %v4746 = vunpack.c.l.b16 %v1610
        %v4747 = vunpack.c.l.b16 %v1611
        %v4748 = vunpack.c.l.b16 %v1612
        %v4749 = vunpack.c.l.b16 %v1613
        %v4750 = vunpack.c.l.b16 %v1614
        %v4751 = vunpack.c.l.b16 %v1615
        %v4752 = vunpack.c.l.b16 %v1616
        %v4753 = vunpack.c.l.b16 %v1617
        %v4754 = vunpack.c.l.b16 %v1618
        %v4755 = vunpack.c.l.b16 %v1619
        %v4756 = vunpack.c.l.b16 %v1620
        %v4757 = vunpack.c.l.b16 %v1621
        %v4758 = vunpack.c.l.b16 %v1622
        %v4759 = vunpack.c.l.b16 %v1623
        %v4760 = vunpack.c.l.b16 %v1624
        %v4761 = vunpack.c.l.b16 %v1625
        %v4762 = vunpack.c.l.b16 %v1626
        %v4763 = vunpack.c.l.b16 %v1627
        %v4764 = vunpack.c.l.b16 %v1628
        %v4765 = vunpack.c.l.b16 %v1629
        %v4766 = vunpack.c.l.b16 %v1630
        %v4767 = vunpack.c.l.b16 %v1631
        %v4768 = vunpack.c.l.b16 %v1632
        %v4769 = vunpack.c.l.b16 %v1633
        %v4770 = vunpack.c.l.b16 %v1634
        %v4771 = vunpack.c.l.b16 %v1635
        %v4772 = vunpack.c.l.b16 %v1636
        %v4773 = vunpack.c.l.b16 %v1637
        %v4774 = vunpack.c.l.b16 %v1638
        %v4775 = vunpack.c.l.b16 %v1639
        %v4776 = vunpack.c.l.b16 %v1640
        %v4777 = vunpack.c.l.b16 %v1641
        %v4778 = vunpack.c.l.b16 %v1642
        %v4779 = vunpack.c.l.b16 %v1643
        %v4780 = vunpack.c.l.b16 %v1644
        %v4781 = vunpack.c.l.b16 %v1645
        %v4782 = vunpack.c.l.b16 %v1646
        %v4783 = vunpack.c.l.b16 %v1647
        %v4784 = vunpack.c.l.b16 %v1648
        %v4785 = vunpack.c.l.b16 %v1649
        %v4786 = vunpack.c.l.b16 %v1650
        %v4787 = vunpack.c.l.b16 %v1651
        %v4788 = vunpack.c.l.b16 %v1652
        %v4789 = vunpack.c.l.b16 %v1653
        %v4790 = vunpack.c.l.b16 %v1654
        %v4791 = vunpack.c.l.b16 %v1655
        %v4792 = vunpack.c.l.b16 %v1656
        %v4793 = vunpack.c.l.b16 %v1657
        %v4794 = vunpack.c.l.b16 %v1658
        %v4795 = vunpack.c.l.b16 %v1659
        %v4796 = vunpack.c.l.b16 %v1660
        %v4797 = vunpack.c.l.b16 %v1661
        %v4798 = vunpack.c.l.b16 %v1662
        %v4799 = vunpack.c.l.b16 %v1663
        %v4800 = vunpack.c.l.b16 %v1664
        %v4801 = vunpack.c.l.b16 %v1665
        %v4802 = vunpack.c.l.b16 %v1666
        %v4803 = vunpack.c.l.b16 %v1667
        %v4804 = vunpack.c.l.b16 %v1668
        %v4805 = vunpack.c.l.b16 %v1669
        %v4806 = vunpack.c.l.b16 %v1670
        %v4807 = vunpack.c.l.b16 %v1671
        %v4808 = vunpack.c.l.b16 %v1672
        %v4809 = vunpack.c.l.b16 %v1673
        %v4810 = vunpack.c.l.b16 %v1674
        %v4811 = vunpack.c.l.b16 %v1675
        %v4812 = vunpack.c.l.b16 %v1676
        %v4813 = vunpack.c.l.b16 %v1677
        %v4814 = vunpack.c.l.b16 %v1678
        %v4815 = vunpack.c.l.b16 %v1679
        %v4816 = vunpack.c.l.b16 %v1680
        %v4817 = vunpack.c.l.b16 %v1681
        %v4818 = vunpack.c.l.b16 %v1682
        %v4819 = vunpack.c.l.b16 %v1683
        %v4820 = vunpack.c.l.b16 %v1684
        %v4821 = vunpack.c.l.b16 %v1685
        %v4822 = vunpack.c.l.b16 %v1686
        %v4823 = vunpack.c.l.b16 %v1687
        %v4824 = vunpack.c.l.b16 %v1688
        %v4825 = vunpack.c.l.b16 %v1689
        %v4826 = vunpack.c.l.b16 %v1690
        %v4827 = vunpack.c.l.b16 %v1691
        %v4828 = vunpack.c.l.b16 %v1692
        %v4829 = vunpack.c.l.b16 %v1693
        %v4830 = vunpack.c.l.b16 %v1694
        %v4831 = vunpack.c.l.b16 %v1695
        %v4832 = vunpack.c.l.b16 %v1696
        %v4833 = vunpack.c.l.b16 %v1697
        %v4834 = vunpack.c.l.b16 %v1698
        %v4835 = vunpack.c.l.b16 %v1699
        %v4836 = vunpack.c.l.b16 %v1700
        %v4837 = vunpack.c.l.b16 %v1701
        %v4838 = vunpack.c.l.b16 %v1702
        %v4839 = vunpack.c.l.b16 %v1703
        %v4840 = vunpack.c.l.b16 %v1704
        %v4841 = vunpack.c.l.b16 %v1705
        %v4842 = vunpack.c.l.b16 %v1706
        %v4843 = vunpack.c.l.b16 %v1707
        %v4844 = vunpack.c.l.b16 %v1708
        %v4845 = vunpack.c.l.b16 %v1709
        %v4846 = vunpack.c.l.b16 %v1710
        %v4847 = vunpack.c.l.b16 %v1711
        %v4848 = vunpack.c.l.b16 %v1712
        %v4849 = vunpack.c.l.b16 %v1713
        %v4850 = vunpack.c.l.b16 %v1714
        %v4851 = vunpack.c.l.b16 %v1715
        %v4852 = vunpack.c.l.b16 %v1716
        %v4853 = vunpack.c.l.b16 %v1717
        %v4854 = vunpack.c.l.b16 %v1718
        %v4855 = vunpack.c.l.b16 %v1719
        %v4856 = vunpack.c.l.b16 %v1720
        %v4857 = vunpack.c.l.b16 %v1721
        %v4858 = vunpack.c.l.b16 %v1722
        %v4859 = vunpack.c.l.b16 %v1723
        %v4860 = vunpack.c.l.b16 %v1724
        %v4861 = vunpack.c.l.b16 %v1725
        %v4862 = vunpack.c.l.b16 %v1726
        %v4863 = vunpack.c.l.b16 %v1727
        %v4864 = vunpack.c.l.b16 %v1728
        %v4865 = vunpack.c.l.b16 %v1729
        %v4866 = vunpack.c.l.b16 %v1730
        %v4867 = vunpack.c.l.b16 %v1731
        %v4868 = vunpack.c.l.b16 %v1732
        %v4869 = vunpack.c.l.b16 %v1733
        %v4870 = vunpack.c.l.b16 %v1734
        %v4871 = vunpack.c.l.b16 %v1735
        %v4872 = vunpack.c.l.b16 %v1736
        %v4873 = vunpack.c.l.b16 %v1737
        %v4874 = vunpack.c.l.b16 %v1738
        %v4875 = vunpack.c.l.b16 %v1739
        %v4876 = vunpack.c.l.b16 %v1740
        %v4877 = vunpack.c.l.b16 %v1741
        %v4878 = vunpack.c.l.b16 %v1742
        %v4879 = vunpack.c.l.b16 %v1743
        %v4880 = vunpack.c.l.b16 %v1744
        %v4881 = vunpack.c.l.b16 %v1745
        %v4882 = vunpack.c.l.b16 %v1746
        %v4883 = vunpack.c.l.b16 %v1747
        %v4884 = vunpack.c.l.b16 %v1748
        %v4885 = vunpack.c.l.b16 %v1749
        %v4886 = vunpack.c.l.b16 %v1750
        %v4887 = vunpack.c.l.b16 %v1751
        %v4888 = vunpack.c.l.b16 %v1752
        %v4889 = vunpack.c.l.b16 %v1753
        %v4890 = vunpack.c.l.b16 %v1754
        %v4891 = vunpack.c.l.b16 %v1755
        %v4892 = vunpack.c.l.b16 %v1756
        %v4893 = vunpack.c.l.b16 %v1757
        %v4894 = vunpack.c.l.b16 %v1758
        %v4895 = vunpack.c.l.b16 %v1759
        %v4896 = vunpack.c.l.b16 %v1760
        %v4897 = vunpack.c.l.b16 %v1761
        %v4898 = vunpack.c.l.b16 %v1762
        %v4899 = vunpack.c.l.b16 %v1763
        %v4900 = vunpack.c.l.b16 %v1764
        %v4901 = vunpack.c.l.b16 %v1765
        %v4902 = vunpack.c.l.b16 %v1766
        %v4903 = vunpack.c.l.b16 %v1767
        %v4904 = vunpack.c.l.b16 %v1768
        %v4905 = vunpack.c.l.b16 %v1769
        %v4906 = vunpack.c.l.b16 %v1770
        %v4907 = vunpack.c.l.b16 %v1771
        %v4908 = vunpack.c.l.b16 %v1772
        %v4909 = vunpack.c.l.b16 %v1773
        %v4910 = vunpack.c.l.b16 %v1774
        %v4911 = vunpack.c.l.b16 %v1775
        %v4912 = vunpack.c.l.b16 %v1776
        %v4913 = vunpack.c.l.b16 %v1777
        %v4914 = vunpack.c.l.b16 %v1778
        %v4915 = vunpack.c.l.b16 %v1779
        %v4916 = vunpack.c.l.b16 %v1780
        %v4917 = vunpack.c.l.b16 %v1781
        %v4918 = vunpack.c.l.b16 %v1782
        %v4919 = vunpack.c.l.b16 %v1783
        %v4920 = vunpack.c.l.b16 %v1784
        %v4921 = vunpack.c.l.b16 %v1785
        %v4922 = vunpack.c.l.b16 %v1786
        %v4923 = vunpack.c.l.b16 %v1787
        %v4924 = vunpack.c.l.b16 %v1788
        %v4925 = vunpack.c.l.b16 %v1789
        %v4926 = vunpack.c.l.b16 %v1790
        %v4927 = vunpack.c.l.b16 %v1791
        %v4928 = vunpack.c.l.b16 %v1792
        %v4929 = vunpack.c.l.b16 %v1793
        %v4930 = vunpack.c.l.b16 %v1794
        %v4931 = vunpack.c.l.b16 %v1795
        %v4932 = vunpack.c.l.b16 %v1796
        %v4933 = vunpack.c.l.b16 %v1797
        %v4934 = vunpack.c.l.b16 %v1798
        %v4935 = vunpack.c.l.b16 %v1799
        %v4936 = vunpack.c.l.b16 %v1800
        %v4937 = vunpack.c.l.b16 %v1801
        %v4938 = vunpack.c.l.b16 %v1802
        %v4939 = vunpack.c.l.b16 %v1803
        %v4940 = vunpack.c.l.b16 %v1804
        %v4941 = vunpack.c.l.b16 %v1805
        %v4942 = vunpack.c.l.b16 %v1806
        %v4943 = vunpack.c.l.b16 %v1807
        %v4944 = vunpack.c.l.b16 %v1808
        %v4945 = vunpack.c.l.b16 %v1809
        %v4946 = vunpack.c.l.b16 %v1810
        %v4947 = vunpack.c.l.b16 %v1811
        %v4948 = vunpack.c.l.b16 %v1812
        %v4949 = vunpack.c.l.b16 %v1813
        %v4950 = vunpack.c.l.b16 %v1814
        %v4951 = vunpack.c.l.b16 %v1815
        %v4952 = vunpack.c.l.b16 %v1816
        %v4953 = vunpack.c.l.b16 %v1817
        %v4954 = vunpack.c.l.b16 %v1818
        %v4955 = vunpack.c.l.b16 %v1819
        %v4956 = vunpack.c.l.b16 %v1820
        %v4957 = vunpack.c.l.b16 %v1821
        %v4958 = vunpack.c.l.b16 %v1822
        %v4959 = vunpack.c.l.b16 %v1823
        %v4960 = vunpack.c.l.b16 %v1824
        %v4961 = vunpack.c.l.b16 %v1825
        %v4962 = vunpack.c.l.b16 %v1826
        %v4963 = vunpack.c.l.b16 %v1827
        %v4964 = vunpack.c.l.b16 %v1828
        %v4965 = vunpack.c.l.b16 %v1829
        %v4966 = vunpack.c.l.b16 %v1830
        %v4967 = vunpack.c.l.b16 %v1831
        %v4968 = vunpack.c.l.b16 %v1832
        %v4969 = vunpack.c.l.b16 %v1833
        %v4970 = vunpack.c.l.b16 %v1834
        %v4971 = vunpack.c.l.b16 %v1835
        %v4972 = vunpack.c.l.b16 %v1836
        %v4973 = vunpack.c.l.b16 %v1837
        %v4974 = vunpack.c.l.b16 %v1838
        %v4975 = vunpack.c.l.b16 %v1839
        %v4976 = vunpack.c.l.b16 %v1840
        %v4977 = vunpack.c.l.b16 %v1841
        %v4978 = vunpack.c.l.b16 %v1842
        %v4979 = vunpack.c.l.b16 %v1843
        %v4980 = vunpack.c.l.b16 %v1844
        %v4981 = vunpack.c.l.b16 %v1845
        %v4982 = vunpack.c.l.b16 %v1846
        %v4983 = vunpack.c.l.b16 %v1847
        %v4984 = vunpack.c.l.b16 %v1848
        %v4985 = vunpack.c.l.b16 %v1849
        %v4986 = vunpack.c.l.b16 %v1850
        %v4987 = vunpack.c.l.b16 %v1851
        %v4988 = vunpack.c.l.b16 %v1852
        %v4989 = vunpack.c.l.b16 %v1853
        %v4990 = vunpack.c.l.b16 %v1854
        %v4991 = vunpack.c.l.b16 %v1855
        %v4992 = vunpack.c.l.b16 %v1856
        %v4993 = vunpack.c.l.b16 %v1857
        %v4994 = vunpack.c.l.b16 %v1858
        %v4995 = vunpack.c.l.b16 %v1859
        %v4996 = vunpack.c.l.b16 %v1860
        %v4997 = vunpack.c.l.b16 %v1861
        %v4998 = vunpack.c.l.b16 %v1862
        %v4999 = vunpack.c.l.b16 %v1863
        %v5000 = vunpack.c.l.b16 %v1864
        %v5001 = vunpack.c.l.b16 %v1865
        %v5002 = vunpack.c.l.b16 %v1866
        %v5003 = vunpack.c.l.b16 %v1867
        %v5004 = vunpack.c.l.b16 %v1868
        %v5005 = vunpack.c.l.b16 %v1869
        %v5006 = vunpack.c.l.b16 %v1870
        %v5007 = vunpack.c.l.b16 %v1871
        %v5008 = vunpack.c.l.b16 %v1872
        %v5009 = vunpack.c.l.b16 %v1873
        %v5010 = vunpack.c.l.b16 %v1874
        %v5011 = vunpack.c.l.b16 %v1875
        %v5012 = vunpack.c.l.b16 %v1876
        %v5013 = vunpack.c.l.b16 %v1877
        %v5014 = vunpack.c.l.b16 %v1878
        %v5015 = vunpack.c.l.b16 %v1879
        %v5016 = vunpack.c.l.b16 %v1880
        %v5017 = vunpack.c.l.b16 %v1881
        %v5018 = vunpack.c.l.b16 %v1882
        %v5019 = vunpack.c.l.b16 %v1883
        %v5020 = vunpack.c.l.b16 %v1884
        %v5021 = vunpack.c.l.b16 %v1885
        %v5022 = vunpack.c.l.b16 %v1886
        %v5023 = vunpack.c.l.b16 %v1887
        %v5024 = vunpack.c.l.b16 %v1888
        %v5025 = vunpack.c.l.b16 %v1889
        %v5026 = vunpack.c.l.b16 %v1890
        %v5027 = vunpack.c.l.b16 %v1891
        %v5028 = vunpack.c.l.b16 %v1892
        %v5029 = vunpack.c.l.b16 %v1893
        %v5030 = vunpack.c.l.b16 %v1894
        %v5031 = vunpack.c.l.b16 %v1895
        %v5032 = vunpack.c.l.b16 %v1896
        %v5033 = vunpack.c.l.b16 %v1897
        %v5034 = vunpack.c.l.b16 %v1898
        %v5035 = vunpack.c.l.b16 %v1899
        %v5036 = vunpack.c.l.b16 %v1900
        %v5037 = vunpack.c.l.b16 %v1901
        %v5038 = vunpack.c.l.b16 %v1902
        %v5039 = vunpack.c.l.b16 %v1903
        %v5040 = vunpack.c.l.b16 %v1904
        %v5041 = vunpack.c.l.b16 %v1905
        %v5042 = vunpack.c.l.b16 %v1906
        %v5043 = vunpack.c.l.b16 %v1907
        %v5044 = vunpack.c.l.b16 %v1908
        %v5045 = vunpack.c.l.b16 %v1909
        %v5046 = vunpack.c.l.b16 %v1910
        %v5047 = vunpack.c.l.b16 %v1911
        %v5048 = vunpack.c.l.b16 %v1912
        %v5049 = vunpack.c.l.b16 %v1913
        %v5050 = vunpack.c.l.b16 %v1914
        %v5051 = vunpack.c.l.b16 %v1915
        %v5052 = vunpack.c.l.b16 %v1916
        %v5053 = vunpack.c.l.b16 %v1917
        %v5054 = vunpack.c.l.b16 %v1918
        %v5055 = vunpack.c.l.b16 %v1919
        %v5056 = vunpack.c.l.b16 %v1920
        %v5057 = vunpack.c.l.b16 %v1921
        %v5058 = vunpack.c.l.b16 %v1922
        %v5059 = vunpack.c.l.b16 %v1923
        %v5060 = vunpack.c.l.b16 %v1924
        %v5061 = vunpack.c.l.b16 %v1925
        %v5062 = vunpack.c.l.b16 %v1926
        %v5063 = vunpack.c.l.b16 %v1927
        %v5064 = vunpack.c.l.b16 %v1928
        %v5065 = vunpack.c.l.b16 %v1929
        %v5066 = vunpack.c.l.b16 %v1930
        %v5067 = vunpack.c.l.b16 %v1931
        %v5068 = vunpack.c.l.b16 %v1932
        %v5069 = vunpack.c.l.b16 %v1933
        %v5070 = vunpack.c.l.b16 %v1934
        %v5071 = vunpack.c.l.b16 %v1935
        %v5072 = vunpack.c.l.b16 %v1936
        %v5073 = vunpack.c.l.b16 %v1937
        %v5074 = vunpack.c.l.b16 %v1938
        %v5075 = vunpack.c.l.b16 %v1939
        %v5076 = vunpack.c.l.b16 %v1940
        %v5077 = vunpack.c.l.b16 %v1941
        %v5078 = vunpack.c.l.b16 %v1942
        %v5079 = vunpack.c.l.b16 %v1943
        %v5080 = vunpack.c.l.b16 %v1944
        %v5081 = vunpack.c.l.b16 %v1945
        %v5082 = vunpack.c.l.b16 %v1946
        %v5083 = vunpack.c.l.b16 %v1947
        %v5084 = vunpack.c.l.b16 %v1948
        %v5085 = vunpack.c.l.b16 %v1949
        %v5086 = vunpack.c.l.b16 %v1950
        %v5087 = vunpack.c.l.b16 %v1951
        %v5088 = vunpack.c.l.b16 %v1952
        %v5089 = vunpack.c.l.b16 %v1953
        %v5090 = vunpack.c.l.b16 %v1954
        %v5091 = vunpack.c.l.b16 %v1955
        %v5092 = vunpack.c.l.b16 %v1956
        %v5093 = vunpack.c.l.b16 %v1957
        %v5094 = vunpack.c.l.b16 %v1958
        %v5095 = vunpack.c.l.b16 %v1959
        %v5096 = vunpack.c.l.b16 %v1960
        %v5097 = vunpack.c.l.b16 %v1961
        %v5098 = vunpack.c.l.b16 %v1962
        %v5099 = vunpack.c.l.b16 %v1963
        %v5100 = vunpack.c.l.b16 %v1964
        %v5101 = vunpack.c.l.b16 %v1965
        %v5102 = vunpack.c.l.b16 %v1966
        %v5103 = vunpack.c.l.b16 %v1967
        %v5104 = vunpack.c.l.b16 %v1968
        %v5105 = vunpack.c.l.b16 %v1969
        %v5106 = vunpack.c.l.b16 %v1970
        %v5107 = vunpack.c.l.b16 %v1971
        %v5108 = vunpack.c.l.b16 %v1972
        %v5109 = vunpack.c.l.b16 %v1973
        %v5110 = vunpack.c.l.b16 %v1974
        %v5111 = vunpack.c.l.b16 %v1975
        %v5112 = vunpack.c.l.b16 %v1976
        %v5113 = vunpack.c.l.b16 %v1977
        %v5114 = vunpack.c.l.b16 %v1978
        %v5115 = vunpack.c.l.b16 %v1979
        %v5116 = vunpack.c.l.b16 %v1980
        %v5117 = vunpack.c.l.b16 %v1981
        %v5118 = vunpack.c.l.b16 %v1982
        %v5119 = vunpack.c.l.b16 %v1983
        %v5120 = vunpack.c.l.b16 %v1984
        %v5121 = vunpack.c.l.b16 %v1985
        %v5122 = vunpack.c.l.b16 %v1986
        %v5123 = vunpack.c.l.b16 %v1987
        %v5124 = vunpack.c.l.b16 %v1988
        %v5125 = vunpack.c.l.b16 %v1989
        %v5126 = vunpack.c.l.b16 %v1990
        %v5127 = vunpack.c.l.b16 %v1991
        %v5128 = vunpack.c.l.b16 %v1992
        %v5129 = vunpack.c.l.b16 %v1993
        %v5130 = vunpack.c.l.b16 %v1994
        %v5131 = vunpack.c.l.b16 %v1995
        %v5132 = vunpack.c.l.b16 %v1996
        %v5133 = vunpack.c.l.b16 %v1997
        %v5134 = vunpack.c.l.b16 %v1998
        %v5135 = vunpack.c.l.b16 %v1999
        %v5136 = vunpack.c.l.b16 %v2000
        %v5137 = vunpack.c.l.b16 %v2001
        %v5138 = vunpack.c.l.b16 %v2002
        %v5139 = vunpack.c.l.b16 %v2003
        %v5140 = vunpack.c.l.b16 %v2004
        %v5141 = vunpack.c.l.b16 %v2005
        %v5142 = vunpack.c.l.b16 %v2006
        %v5143 = vunpack.c.l.b16 %v2007
        %v5144 = vunpack.c.l.b16 %v2008
        %v5145 = vunpack.c.l.b16 %v2009
        %v5146 = vunpack.c.l.b16 %v2010
        %v5147 = vunpack.c.l.b16 %v2011
        %v5148 = vunpack.c.l.b16 %v2012
        %v5149 = vunpack.c.l.b16 %v2013
        %v5150 = vunpack.c.l.b16 %v2014
        %v5151 = vunpack.c.l.b16 %v2015
        %v5152 = vunpack.c.l.b16 %v2016
        %v5153 = vunpack.c.l.b16 %v2017
        %v5154 = vunpack.c.l.b16 %v2018
        %v5155 = vunpack.c.l.b16 %v2019
        %v5156 = vunpack.c.l.b16 %v2020
        %v5157 = vunpack.c.l.b16 %v2021
        %v5158 = vunpack.c.l.b16 %v2022
        %v5159 = vunpack.c.l.b16 %v2023
        %v5160 = vunpack.c.l.b16 %v2024
        %v5161 = vunpack.c.l.b16 %v2025
        %v5162 = vunpack.c.l.b16 %v2026
        %v5163 = vunpack.c.l.b16 %v2027
        %v5164 = vunpack.c.l.b16 %v2028
        %v5165 = vunpack.c.l.b16 %v2029
        %v5166 = vunpack.c.l.b16 %v2030
        %v5167 = vunpack.c.l.b16 %v2031
        %v5168 = vunpack.c.l.b16 %v2032
        %v5169 = vunpack.c.l.b16 %v2033
        %v5170 = vunpack.c.l.b16 %v2034
        %v5171 = vunpack.c.l.b16 %v2035
        %v5172 = vunpack.c.l.b16 %v2036
        %v5173 = vunpack.c.l.b16 %v2037
        %v5174 = vunpack.c.l.b16 %v2038
        %v5175 = vunpack.c.l.b16 %v2039
        %v5176 = vunpack.c.l.b16 %v2040
        %v5177 = vunpack.c.l.b16 %v2041
        %v5178 = vunpack.c.l.b16 %v2042
        %v5179 = vunpack.c.l.b16 %v2043
        %v5180 = vunpack.c.l.b16 %v2044
        %v5181 = vunpack.c.l.b16 %v2045
        %v5182 = vunpack.c.l.b16 %v2046
        %v5183 = vunpack.c.l.b16 %v2047
        %v5184 = vunpack.c.l.b16 %v2048
        %v5185 = vunpack.c.l.b16 %v2049
        %v5186 = vunpack.c.l.b16 %v2050
        %v5187 = vunpack.c.l.b16 %v2051
        %v5188 = vunpack.c.l.b16 %v2052
        %v5189 = vunpack.c.l.b16 %v2053
        %v5190 = vunpack.c.l.b16 %v2054
        %v5191 = vunpack.c.l.b16 %v2055
        %v5192 = vunpack.c.l.b16 %v2056
        %v5193 = vunpack.c.l.b16 %v2057
        %v5194 = vunpack.c.l.b16 %v2058
        %v5195 = vunpack.c.l.b16 %v2059
        %v5196 = vunpack.c.l.b16 %v2060
        %v5197 = vunpack.c.l.b16 %v2061
        %v5198 = vunpack.c.l.b16 %v2062
        %v5199 = vunpack.c.l.b16 %v2063
        %v5200 = vunpack.c.l.b16 %v2064
        %v5201 = vunpack.c.l.b16 %v2065
        %v5202 = vunpack.c.l.b16 %v2066
        %v5203 = vunpack.c.l.b16 %v2067
        %v5204 = vunpack.c.l.b16 %v2068
        %v5205 = vunpack.c.l.b16 %v2069
        %v5206 = vunpack.c.l.b16 %v2070
        %v5207 = vunpack.c.l.b16 %v2071
        %v5208 = vunpack.c.l.b16 %v2072
        %v5209 = vunpack.c.l.b16 %v2073
        %v5210 = vunpack.c.l.b16 %v2074
        %v5211 = vunpack.c.l.b16 %v2075
        %v5212 = vunpack.c.l.b16 %v2076
        %v5213 = vunpack.c.l.b16 %v2077
        %v5214 = vunpack.c.l.b16 %v2078
        %v5215 = vunpack.c.l.b16 %v2079
        %v5216 = vunpack.c.l.b16 %v2080
        %v5217 = vunpack.c.l.b16 %v2081
        %v5218 = vunpack.c.l.b16 %v2082
        %v5219 = vunpack.c.l.b16 %v2083
        %v5220 = vunpack.c.l.b16 %v2084
        %v5221 = vunpack.c.l.b16 %v2085
        %v5222 = vunpack.c.l.b16 %v2086
        %v5223 = vunpack.c.l.b16 %v2087
        %v5224 = vunpack.c.l.b16 %v2088
        %v5225 = vunpack.c.l.b16 %v2089
        %v5226 = vunpack.c.l.b16 %v2090
        %v5227 = vunpack.c.l.b16 %v2091
        %v5228 = vunpack.c.l.b16 %v2092
        %v5229 = vunpack.c.l.b16 %v2093
        %v5230 = vunpack.c.l.b16 %v2094
        %v5231 = vunpack.c.l.b16 %v2095
        %v5232 = vunpack.c.l.b16 %v2096
        %v5233 = vunpack.c.l.b16 %v2097
        %v5234 = vunpack.c.l.b16 %v2098
        %v5235 = vunpack.c.l.b16 %v2099
        %v5236 = vunpack.c.l.b16 %v2100
        %v5237 = vunpack.c.l.b16 %v2101
        %v5238 = vunpack.c.l.b16 %v2102
        %v5239 = vunpack.c.l.b16 %v2103
        %v5240 = vunpack.c.l.b16 %v2104
        %v5241 = vunpack.c.l.b16 %v2105
        %v5242 = vunpack.c.l.b16 %v2106
        %v5243 = vunpack.c.l.b16 %v2107
        %v5244 = vunpack.c.l.b16 %v2108
        %v5245 = vunpack.c.l.b16 %v2109
        %v5246 = vunpack.c.l.b16 %v2110
        %v5247 = vunpack.c.l.b16 %v2111
        %v5248 = vunpack.c.l.b16 %v2112
        %v5249 = vunpack.c.l.b16 %v2113
        %v5250 = vunpack.c.l.b16 %v2114
        %v5251 = vunpack.c.l.b16 %v2115
        %v5252 = vunpack.c.l.b16 %v2116
        %v5253 = vunpack.c.l.b16 %v2117
        %v5254 = vunpack.c.l.b16 %v2118
        %v5255 = vunpack.c.l.b16 %v2119
        %v5256 = vunpack.c.l.b16 %v2120
        %v5257 = vunpack.c.l.b16 %v2121
        %v5258 = vunpack.c.l.b16 %v2122
        %v5259 = vunpack.c.l.b16 %v2123
        %v5260 = vunpack.c.l.b16 %v2124
        %v5261 = vunpack.c.l.b16 %v2125
        %v5262 = vunpack.c.l.b16 %v2126
        %v5263 = vunpack.c.l.b16 %v2127
        %v5264 = vunpack.c.l.b16 %v2128
        %v5265 = vunpack.c.l.b16 %v2129
        %v5266 = vunpack.c.l.b16 %v2130
        %v5267 = vunpack.c.l.b16 %v2131
        %v5268 = vunpack.c.l.b16 %v2132
        %v5269 = vunpack.c.l.b16 %v2133
        %v5270 = vunpack.c.l.b16 %v2134
        %v5271 = vunpack.c.l.b16 %v2135
        %v5272 = vunpack.c.l.b16 %v2136
        %v5273 = vunpack.c.l.b16 %v2137
        %v5274 = vunpack.c.l.b16 %v2138
        %v5275 = vunpack.c.l.b16 %v2139
        %v5276 = vunpack.c.l.b16 %v2140
        %v5277 = vunpack.c.l.b16 %v2141
        %v5278 = vunpack.c.l.b16 %v2142
        %v5279 = vunpack.c.l.b16 %v2143
        %v5280 = vunpack.c.l.b16 %v2144
        %v5281 = vunpack.c.l.b16 %v2145
        %v5282 = vunpack.c.l.b16 %v2146
        %v5283 = vunpack.c.l.b16 %v2147
        %v5284 = vunpack.c.l.b16 %v2148
        %v5285 = vunpack.c.l.b16 %v2149
        %v5286 = vunpack.c.l.b16 %v2150
        %v5287 = vunpack.c.l.b16 %v2151
        %v5288 = vunpack.c.l.b16 %v2152
        %v5289 = vunpack.c.l.b16 %v2153
        %v5290 = vunpack.c.l.b16 %v2154
        %v5291 = vunpack.c.l.b16 %v2155
        %v5292 = vunpack.c.l.b16 %v2156
        %v5293 = vunpack.c.l.b16 %v2157
        %v5294 = vunpack.c.l.b16 %v2158
        %v5295 = vunpack.c.l.b16 %v2159
        %v5296 = vunpack.c.l.b16 %v2160
        %v5297 = vunpack.c.l.b16 %v2161
        %v5298 = vunpack.c.l.b16 %v2162
        %v5299 = vunpack.c.l.b16 %v2163
        %v5300 = vunpack.c.l.b16 %v2164
        %v5301 = vunpack.c.l.b16 %v2165
        %v5302 = vunpack.c.l.b16 %v2166
        %v5303 = vunpack.c.l.b16 %v2167
        %v5304 = vunpack.c.l.b16 %v2168
        %v5305 = vunpack.c.l.b16 %v2169
        %v5306 = vunpack.c.l.b16 %v2170
        %v5307 = vunpack.c.l.b16 %v2171
        %v5308 = vunpack.c.l.b16 %v2172
        %v5309 = vunpack.c.l.b16 %v2173
        %v5310 = vunpack.c.l.b16 %v2174
        %v5311 = vunpack.c.l.b16 %v2175
        %v5312 = vunpack.c.l.b16 %v2176
        %v5313 = vunpack.c.l.b16 %v2177
        %v5314 = vunpack.c.l.b16 %v2178
        %v5315 = vunpack.c.l.b16 %v2179
        %v5316 = vunpack.c.l.b16 %v2180
        %v5317 = vunpack.c.l.b16 %v2181
        %v5318 = vunpack.c.l.b16 %v2182
        %v5319 = vunpack.c.l.b16 %v2183
        %v5320 = vunpack.c.l.b16 %v2184
        %v5321 = vunpack.c.l.b16 %v2185
        %v5322 = vunpack.c.l.b16 %v2186
        %v5323 = vunpack.c.l.b16 %v2187
        %v5324 = vunpack.c.l.b16 %v2188
        %v5325 = vunpack.c.l.b16 %v2189
        %v5326 = vunpack.c.l.b16 %v2190
        %v5327 = vunpack.c.l.b16 %v2191
        %v5328 = vunpack.c.l.b16 %v2192
        %v5329 = vunpack.c.l.b16 %v2193
        %v5330 = vunpack.c.l.b16 %v2194
        %v5331 = vunpack.c.l.b16 %v2195
        %v5332 = vunpack.c.l.b16 %v2196
        %v5333 = vunpack.c.l.b16 %v2197
        %v5334 = vunpack.c.l.b16 %v2198
        %v5335 = vunpack.c.l.b16 %v2199
        %v5336 = vunpack.c.l.b16 %v2200
        %v5337 = vunpack.c.l.b16 %v2201
        %v5338 = vunpack.c.l.b16 %v2202
        %v5339 = vunpack.c.l.b16 %v2203
        %v5340 = vunpack.c.l.b16 %v2204
        %v5341 = vunpack.c.l.b16 %v2205
        %v5342 = vunpack.c.l.b16 %v2206
        %v5343 = vunpack.c.l.b16 %v2207
        %v5344 = vunpack.c.l.b16 %v2208
        %v5345 = vunpack.c.l.b16 %v2209
        %v5346 = vunpack.c.l.b16 %v2210
        %v5347 = vunpack.c.l.b16 %v2211
        %v5348 = vunpack.c.l.b16 %v2212
        %v5349 = vunpack.c.l.b16 %v2213
        %v5350 = vunpack.c.l.b16 %v2214
        %v5351 = vunpack.c.l.b16 %v2215
        %v5352 = vunpack.c.l.b16 %v2216
        %v5353 = vunpack.c.l.b16 %v2217
        %v5354 = vunpack.c.l.b16 %v2218
        %v5355 = vunpack.c.l.b16 %v2219
        %v5356 = vunpack.c.l.b16 %v2220
        %v5357 = vunpack.c.l.b16 %v2221
        %v5358 = vunpack.c.l.b16 %v2222
        %v5359 = vunpack.c.l.b16 %v2223
        %v5360 = vunpack.c.l.b16 %v2224
        %v5361 = vunpack.c.l.b16 %v2225
        %v5362 = vunpack.c.l.b16 %v2226
        %v5363 = vunpack.c.l.b16 %v2227
        %v5364 = vunpack.c.l.b16 %v2228
        %v5365 = vunpack.c.l.b16 %v2229
        %v5366 = vunpack.c.l.b16 %v2230
        %v5367 = vunpack.c.l.b16 %v2231
        %v5368 = vunpack.c.l.b16 %v2232
        %v5369 = vunpack.c.l.b16 %v2233
        %v5370 = vunpack.c.l.b16 %v2234
        %v5371 = vunpack.c.l.b16 %v2235
        %v5372 = vunpack.c.l.b16 %v2236
        %v5373 = vunpack.c.l.b16 %v2237
        %v5374 = vunpack.c.l.b16 %v2238
        %v5375 = vunpack.c.l.b16 %v2239
        %v5376 = vunpack.c.l.b16 %v2240
        %v5377 = vunpack.c.l.b16 %v2241
        %v5378 = vunpack.c.l.b16 %v2242
        %v5379 = vunpack.c.l.b16 %v2243
        %v5380 = vunpack.c.l.b16 %v2244
        %v5381 = vunpack.c.l.b16 %v2245
        %v5382 = vunpack.c.l.b16 %v2246
        %v5383 = vunpack.c.l.b16 %v2247
        %v5384 = vunpack.c.l.b16 %v2248
        %v5385 = vunpack.c.l.b16 %v2249
        %v5386 = vunpack.c.l.b16 %v2250
        %v5387 = vunpack.c.l.b16 %v2251
        %v5388 = vunpack.c.l.b16 %v2252
        %v5389 = vunpack.c.l.b16 %v2253
        %v5390 = vunpack.c.l.b16 %v2254
        %v5391 = vunpack.c.l.b16 %v2255
        %v5392 = vunpack.c.l.b16 %v2256
        %v5393 = vunpack.c.l.b16 %v2257
        %v5394 = vunpack.c.l.b16 %v2258
        %v5395 = vunpack.c.l.b16 %v2259
        %v5396 = vunpack.c.l.b16 %v2260
        %v5397 = vunpack.c.l.b16 %v2261
        %v5398 = vunpack.c.l.b16 %v2262
        %v5399 = vunpack.c.l.b16 %v2263
        %v5400 = vunpack.c.l.b16 %v2264
        %v5401 = vunpack.c.l.b16 %v2265
        %v5402 = vunpack.c.l.b16 %v2266
        %v5403 = vunpack.c.l.b16 %v2267
        %v5404 = vunpack.c.l.b16 %v2268
        %v5405 = vunpack.c.l.b16 %v2269
        %v5406 = vunpack.c.l.b16 %v2270
        %v5407 = vunpack.c.l.b16 %v2271
        %v5408 = vunpack.c.l.b16 %v2272
        %v5409 = vunpack.c.l.b16 %v2273
        %v5410 = vunpack.c.l.b16 %v2274
        %v5411 = vunpack.c.l.b16 %v2275
        %v5412 = vunpack.c.l.b16 %v2276
        %v5413 = vunpack.c.l.b16 %v2277
        %v5414 = vunpack.c.l.b16 %v2278
        %v5415 = vunpack.c.l.b16 %v2279
        %v5416 = vunpack.c.l.b16 %v2280
        %v5417 = vunpack.c.l.b16 %v2281
        %v5418 = vunpack.c.l.b16 %v2282
        %v5419 = vunpack.c.l.b16 %v2283
        %v5420 = vunpack.c.l.b16 %v2284
        %v5421 = vunpack.c.l.b16 %v2285
        %v5422 = vunpack.c.l.b16 %v2286
        %v5423 = vunpack.c.l.b16 %v2287
        %v5424 = vunpack.c.l.b16 %v2288
        %v5425 = vunpack.c.l.b16 %v2289
        %v5426 = vunpack.c.l.b16 %v2290
        %v5427 = vunpack.c.l.b16 %v2291
        %v5428 = vunpack.c.l.b16 %v2292
        %v5429 = vunpack.c.l.b16 %v2293
        %v5430 = vunpack.c.l.b16 %v2294
        %v5431 = vunpack.c.l.b16 %v2295
        %v5432 = vunpack.c.l.b16 %v2296
        %v5433 = vunpack.c.l.b16 %v2297
        %v5434 = vunpack.c.l.b16 %v2298
        %v5435 = vunpack.c.l.b16 %v2299
        %v5436 = vunpack.c.l.b16 %v2300
        %v5437 = vunpack.c.l.b16 %v2301
        %v5438 = vunpack.c.l.b16 %v2302
        %v5439 = vunpack.c.l.b16 %v2303
        %v5440 = vunpack.c.l.b16 %v2304
        %v5441 = vunpack.c.l.b16 %v2305
        %v5442 = vunpack.c.l.b16 %v2306
        %v5443 = vunpack.c.l.b16 %v2307
        %v5444 = vunpack.c.l.b16 %v2308
        %v5445 = vunpack.c.l.b16 %v2309
        %v5446 = vunpack.c.l.b16 %v2310
        %v5447 = vunpack.c.l.b16 %v2311
        %v5448 = vunpack.c.l.b16 %v2312
        %v5449 = vunpack.c.l.b16 %v2313
        %v5450 = vunpack.c.l.b16 %v2314
        %v5451 = vunpack.c.l.b16 %v2315
        %v5452 = vunpack.c.l.b16 %v2316
        %v5453 = vunpack.c.l.b16 %v2317
        %v5454 = vunpack.c.l.b16 %v2318
        %v5455 = vunpack.c.l.b16 %v2319
        %v5456 = vunpack.c.l.b16 %v2320
        %v5457 = vunpack.c.l.b16 %v2321
        %v5458 = vunpack.c.l.b16 %v2322
        %v5459 = vunpack.c.l.b16 %v2323
        %v5460 = vunpack.c.l.b16 %v2324
        %v5461 = vunpack.c.l.b16 %v2325
        %v5462 = vunpack.c.l.b16 %v2326
        %v5463 = vunpack.c.l.b16 %v2327
        %v5464 = vunpack.c.l.b16 %v2328
        %v5465 = vunpack.c.l.b16 %v2329
        %v5466 = vunpack.c.l.b16 %v2330
        %v5467 = vunpack.c.l.b16 %v2331
        %v5468 = vunpack.c.l.b16 %v2332
        %v5469 = vunpack.c.l.b16 %v2333
        %v5470 = vunpack.c.l.b16 %v2334
        %v5471 = vunpack.c.l.b16 %v2335
        %v5472 = vunpack.c.l.b16 %v2336
        %v5473 = vunpack.c.l.b16 %v2337
        %v5474 = vunpack.c.l.b16 %v2338
        %v5475 = vunpack.c.l.b16 %v2339
        %v5476 = vunpack.c.l.b16 %v2340
        %v5477 = vunpack.c.l.b16 %v2341
        %v5478 = vunpack.c.l.b16 %v2342
        %v5479 = vunpack.c.l.b16 %v2343
        %v5480 = vunpack.c.l.b16 %v2344
        %v5481 = vunpack.c.l.b16 %v2345
        %v5482 = vunpack.c.l.b16 %v2346
        %v5483 = vunpack.c.l.b16 %v2347
        %v5484 = vunpack.c.l.b16 %v2348
        %v5485 = vunpack.c.l.b16 %v2349
        %v5486 = vunpack.c.l.b16 %v2350
        %v5487 = vunpack.c.l.b16 %v2351
        %v5488 = vunpack.c.l.b16 %v2352
        %v5489 = vunpack.c.l.b16 %v2353
        %v5490 = vunpack.c.l.b16 %v2354
        %v5491 = vunpack.c.l.b16 %v2355
        %v5492 = vunpack.c.l.b16 %v2356
        %v5493 = vunpack.c.l.b16 %v2357
        %v5494 = vunpack.c.l.b16 %v2358
        %v5495 = vunpack.c.l.b16 %v2359
        %v5496 = vunpack.c.l.b16 %v2360
        %v5497 = vunpack.c.l.b16 %v2361
        %v5498 = vunpack.c.l.b16 %v2362
        %v5499 = vunpack.c.l.b16 %v2363
        %v5500 = vunpack.c.l.b16 %v2364
        %v5501 = vunpack.c.l.b16 %v2365
        %v5502 = vunpack.c.l.b16 %v2366
        %v5503 = vunpack.c.l.b16 %v2367
        %v5504 = vunpack.c.l.b16 %v2368
        %v5505 = vunpack.c.l.b16 %v2369
        %v5506 = vunpack.c.l.b16 %v2370
        %v5507 = vunpack.c.l.b16 %v2371
        %v5508 = vunpack.c.l.b16 %v2372
        %v5509 = vunpack.c.l.b16 %v2373
        %v5510 = vunpack.c.l.b16 %v2374
        %v5511 = vunpack.c.l.b16 %v2375
        %v5512 = vunpack.c.l.b16 %v2376
        %v5513 = vunpack.c.l.b16 %v2377
        %v5514 = vunpack.c.l.b16 %v2378
        %v5515 = vunpack.c.l.b16 %v2379
        %v5516 = vunpack.c.l.b16 %v2380
        %v5517 = vunpack.c.l.b16 %v2381
        %v5518 = vunpack.c.l.b16 %v2382
        %v5519 = vunpack.c.l.b16 %v2383
        %v5520 = vunpack.c.l.b16 %v2384
        %v5521 = vunpack.c.l.b16 %v2385
        %v5522 = vunpack.c.l.b16 %v2386
        %v5523 = vunpack.c.l.b16 %v2387
        %v5524 = vunpack.c.l.b16 %v2388
        %v5525 = vunpack.c.l.b16 %v2389
        %v5526 = vunpack.c.l.b16 %v2390
        %v5527 = vunpack.c.l.b16 %v2391
        %v5528 = vunpack.c.l.b16 %v2392
        %v5529 = vunpack.c.l.b16 %v2393
        %v5530 = vunpack.c.l.b16 %v2394
        %v5531 = vunpack.c.l.b16 %v2395
        %v5532 = vunpack.c.l.b16 %v2396
        %v5533 = vunpack.c.l.b16 %v2397
        %v5534 = vunpack.c.l.b16 %v2398
        %v5535 = vunpack.c.l.b16 %v2399
        %v5536 = vunpack.c.l.b16 %v2400
        %v5537 = vunpack.c.l.b16 %v2401
        %v5538 = vunpack.c.l.b16 %v2402
        %v5539 = vunpack.c.l.b16 %v2403
        %v5540 = vunpack.c.l.b16 %v2404
        %v5541 = vunpack.c.l.b16 %v2405
        %v5542 = vunpack.c.l.b16 %v2406
        %v5543 = vunpack.c.l.b16 %v2407
        %v5544 = vunpack.c.l.b16 %v2408
        %v5545 = vunpack.c.l.b16 %v2409
        %v5546 = vunpack.c.l.b16 %v2410
        %v5547 = vunpack.c.l.b16 %v2411
        %v5548 = vunpack.c.l.b16 %v2412
        %v5549 = vunpack.c.l.b16 %v2413
        %v5550 = vunpack.c.l.b16 %v2414
        %v5551 = vunpack.c.l.b16 %v2415
        %v5552 = vunpack.c.l.b16 %v2416
        %v5553 = vunpack.c.l.b16 %v2417
        %v5554 = vunpack.c.l.b16 %v2418
        %v5555 = vunpack.c.l.b16 %v2419
        %v5556 = vunpack.c.l.b16 %v2420
        %v5557 = vunpack.c.l.b16 %v2421
        %v5558 = vunpack.c.l.b16 %v2422
        %v5559 = vunpack.c.l.b16 %v2423
        %v5560 = vunpack.c.l.b16 %v2424
        %v5561 = vunpack.c.l.b16 %v2425
        %v5562 = vunpack.c.l.b16 %v2426
        %v5563 = vunpack.c.l.b16 %v2427
        %v5564 = vunpack.c.l.b16 %v2428
        %v5565 = vunpack.c.l.b16 %v2429
        %v5566 = vunpack.c.l.b16 %v2430
        %v5567 = vunpack.c.l.b16 %v2431
        %v5568 = vunpack.c.l.b16 %v2432
        %v5569 = vunpack.c.l.b16 %v2433
        %v5570 = vunpack.c.l.b16 %v2434
        %v5571 = vunpack.c.l.b16 %v2435
        %v5572 = vunpack.c.l.b16 %v2436
        %v5573 = vunpack.c.l.b16 %v2437
        %v5574 = vunpack.c.l.b16 %v2438
        %v5575 = vunpack.c.l.b16 %v2439
        %v5576 = vunpack.c.l.b16 %v2440
        %v5577 = vunpack.c.l.b16 %v2441
        %v5578 = vunpack.c.l.b16 %v2442
        %v5579 = vunpack.c.l.b16 %v2443
        %v5580 = vunpack.c.l.b16 %v2444
        %v5581 = vunpack.c.l.b16 %v2445
        %v5582 = vunpack.c.l.b16 %v2446
        %v5583 = vunpack.c.l.b16 %v2447
        %v5584 = vunpack.c.l.b16 %v2448
        %v5585 = vunpack.c.l.b16 %v2449
        %v5586 = vunpack.c.l.b16 %v2450
        %v5587 = vunpack.c.l.b16 %v2451
        %v5588 = vunpack.c.l.b16 %v2452
        %v5589 = vunpack.c.l.b16 %v2453
        %v5590 = vunpack.c.l.b16 %v2454
        %v5591 = vunpack.c.l.b16 %v2455
        %v5592 = vunpack.c.l.b16 %v2456
        %v5593 = vunpack.c.l.b16 %v2457
        %v5594 = vunpack.c.l.b16 %v2458
        %v5595 = vunpack.c.l.b16 %v2459
        %v5596 = vunpack.c.l.b16 %v2460
        %v5597 = vunpack.c.l.b16 %v2461
        %v5598 = vunpack.c.l.b16 %v2462
        %v5599 = vunpack.c.l.b16 %v2463
        %v5600 = vunpack.c.l.b16 %v2464
        %v5601 = vunpack.c.l.b16 %v2465
        %v5602 = vunpack.c.l.b16 %v2466
        %v5603 = vunpack.c.l.b16 %v2467
        %v5604 = vunpack.c.l.b16 %v2468
        %v5605 = vunpack.c.l.b16 %v2469
        %v5606 = vunpack.c.l.b16 %v2470
        %v5607 = vunpack.c.l.b16 %v2471
        %v5608 = vunpack.c.l.b16 %v2472
        %v5609 = vunpack.c.l.b16 %v2473
        %v5610 = vunpack.c.l.b16 %v2474
        %v5611 = vunpack.c.l.b16 %v2475
        %v5612 = vunpack.c.l.b16 %v2476
        %v5613 = vunpack.c.l.b16 %v2477
        %v5614 = vunpack.c.l.b16 %v2478
        %v5615 = vunpack.c.l.b16 %v2479
        %v5616 = vunpack.c.l.b16 %v2480
        %v5617 = vunpack.c.l.b16 %v2481
        %v5618 = vunpack.c.l.b16 %v2482
        %v5619 = vunpack.c.l.b16 %v2483
        %v5620 = vunpack.c.l.b16 %v2484
        %v5621 = vunpack.c.l.b16 %v2485
        %v5622 = vunpack.c.l.b16 %v2486
        %v5623 = vunpack.c.l.b16 %v2487
        %v5624 = vunpack.c.l.b16 %v2488
        %v5625 = vunpack.c.l.b16 %v2489
        %v5626 = vunpack.c.l.b16 %v2490
        %v5627 = vunpack.c.l.b16 %v2491
        %v5628 = vunpack.c.l.b16 %v2492
        %v5629 = vunpack.c.l.b16 %v2493
        %v5630 = vunpack.c.l.b16 %v2494
        %v5631 = vunpack.c.l.b16 %v2495
        %v5632 = vunpack.c.l.b16 %v2496
        %v5633 = vunpack.c.l.b16 %v2497
        %v5634 = vunpack.c.l.b16 %v2498
        %v5635 = vunpack.c.l.b16 %v2499
        %v5636 = vunpack.c.l.b16 %v2500
        %v5637 = vunpack.c.l.b16 %v2501
        %v5638 = vunpack.c.l.b16 %v2502
        %v5639 = vunpack.c.l.b16 %v2503
        %v5640 = vunpack.c.l.b16 %v2504
        %v5641 = vunpack.c.l.b16 %v2505
        %v5642 = vunpack.c.l.b16 %v2506
        %v5643 = vunpack.c.l.b16 %v2507
        %v5644 = vunpack.c.l.b16 %v2508
        %v5645 = vunpack.c.l.b16 %v2509
        %v5646 = vunpack.c.l.b16 %v2510
        %v5647 = vunpack.c.l.b16 %v2511
        %v5648 = vunpack.c.l.b16 %v2512
        %v5649 = vpack.c.b16 %v4082, %v4081
        %v5650 = vpack.c.b16 %v4084, %v4083
        %v5651 = vpack.c.b16 %v4086, %v4085
        %v5652 = vpack.c.b16 %v4088, %v4087
        %v5653 = vpack.c.b16 %v4090, %v4089
        %v5654 = vpack.c.b16 %v4092, %v4091
        %v5655 = vpack.c.b16 %v4094, %v4093
        %v5656 = vpack.c.b16 %v4096, %v4095
        %v5657 = vpack.c.b16 %v4098, %v4097
        %v5658 = vpack.c.b16 %v4100, %v4099
        %v5659 = vpack.c.b16 %v4102, %v4101
        %v5660 = vpack.c.b16 %v4104, %v4103
        %v5661 = vpack.c.b16 %v4106, %v4105
        %v5662 = vpack.c.b16 %v4108, %v4107
        %v5663 = vpack.c.b16 %v4110, %v4109
        %v5664 = vpack.c.b16 %v4112, %v4111
        %v5665 = vpack.c.b16 %v4114, %v4113
        %v5666 = vpack.c.b16 %v4116, %v4115
        %v5667 = vpack.c.b16 %v4118, %v4117
        %v5668 = vpack.c.b16 %v4120, %v4119
        %v5669 = vpack.c.b16 %v4122, %v4121
        %v5670 = vpack.c.b16 %v4124, %v4123
        %v5671 = vpack.c.b16 %v4126, %v4125
        %v5672 = vpack.c.b16 %v4128, %v4127
        %v5673 = vpack.c.b16 %v4130, %v4129
        %v5674 = vpack.c.b16 %v4132, %v4131
        %v5675 = vpack.c.b16 %v4134, %v4133
        %v5676 = vpack.c.b16 %v4136, %v4135
        %v5677 = vpack.c.b16 %v4138, %v4137
        %v5678 = vpack.c.b16 %v4140, %v4139
        %v5679 = vpack.c.b16 %v4142, %v4141
        %v5680 = vpack.c.b16 %v4144, %v4143
        %v5681 = vpack.c.b16 %v4146, %v4145
        %v5682 = vpack.c.b16 %v4148, %v4147
        %v5683 = vpack.c.b16 %v4150, %v4149
        %v5684 = vpack.c.b16 %v4152, %v4151
        %v5685 = vpack.c.b16 %v4154, %v4153
        %v5686 = vpack.c.b16 %v4156, %v4155
        %v5687 = vpack.c.b16 %v4158, %v4157
        %v5688 = vpack.c.b16 %v4160, %v4159
        %v5689 = vpack.c.b16 %v4162, %v4161
        %v5690 = vpack.c.b16 %v4164, %v4163
        %v5691 = vpack.c.b16 %v4166, %v4165
        %v5692 = vpack.c.b16 %v4168, %v4167
        %v5693 = vpack.c.b16 %v4170, %v4169
        %v5694 = vpack.c.b16 %v4172, %v4171
        %v5695 = vpack.c.b16 %v4174, %v4173
        %v5696 = vpack.c.b16 %v4176, %v4175
        %v5697 = vpack.c.b16 %v4178, %v4177
        %v5698 = vpack.c.b16 %v4180, %v4179
        %v5699 = vpack.c.b16 %v4182, %v4181
        %v5700 = vpack.c.b16 %v4184, %v4183
        %v5701 = vpack.c.b16 %v4186, %v4185
        %v5702 = vpack.c.b16 %v4188, %v4187
        %v5703 = vpack.c.b16 %v4190, %v4189
        %v5704 = vpack.c.b16 %v4192, %v4191
        %v5705 = vpack.c.b16 %v4194, %v4193
        %v5706 = vpack.c.b16 %v4196, %v4195
        %v5707 = vpack.c.b16 %v4198, %v4197
        %v5708 = vpack.c.b16 %v4200, %v4199
        %v5709 = vpack.c.b16 %v4202, %v4201
        %v5710 = vpack.c.b16 %v4204, %v4203
        %v5711 = vpack.c.b16 %v4206, %v4205
        %v5712 = vpack.c.b16 %v4208, %v4207
        %v5713 = vpack.c.b16 %v4210, %v4209
        %v5714 = vpack.c.b16 %v4212, %v4211
        %v5715 = vpack.c.b16 %v4214, %v4213
        %v5716 = vpack.c.b16 %v4216, %v4215
        %v5717 = vpack.c.b16 %v4218, %v4217
        %v5718 = vpack.c.b16 %v4220, %v4219
        %v5719 = vpack.c.b16 %v4222, %v4221
        %v5720 = vpack.c.b16 %v4224, %v4223
        %v5721 = vpack.c.b16 %v4226, %v4225
        %v5722 = vpack.c.b16 %v4228, %v4227
        %v5723 = vpack.c.b16 %v4230, %v4229
        %v5724 = vpack.c.b16 %v4232, %v4231
        %v5725 = vpack.c.b16 %v4234, %v4233
        %v5726 = vpack.c.b16 %v4236, %v4235
        %v5727 = vpack.c.b16 %v4238, %v4237
        %v5728 = vpack.c.b16 %v4240, %v4239
        %v5729 = vpack.c.b16 %v4242, %v4241
        %v5730 = vpack.c.b16 %v4244, %v4243
        %v5731 = vpack.c.b16 %v4246, %v4245
        %v5732 = vpack.c.b16 %v4248, %v4247
        %v5733 = vpack.c.b16 %v4250, %v4249
        %v5734 = vpack.c.b16 %v4252, %v4251
        %v5735 = vpack.c.b16 %v4254, %v4253
        %v5736 = vpack.c.b16 %v4256, %v4255
        %v5737 = vpack.c.b16 %v4258, %v4257
        %v5738 = vpack.c.b16 %v4260, %v4259
        %v5739 = vpack.c.b16 %v4262, %v4261
        %v5740 = vpack.c.b16 %v4264, %v4263
        %v5741 = vpack.c.b16 %v4266, %v4265
        %v5742 = vpack.c.b16 %v4268, %v4267
        %v5743 = vpack.c.b16 %v4270, %v4269
        %v5744 = vpack.c.b16 %v4272, %v4271
        %v5745 = vpack.c.b16 %v4274, %v4273
        %v5746 = vpack.c.b16 %v4276, %v4275
        %v5747 = vpack.c.b16 %v4278, %v4277
        %v5748 = vpack.c.b16 %v4280, %v4279
        %v5749 = vpack.c.b16 %v4282, %v4281
        %v5750 = vpack.c.b16 %v4284, %v4283
        %v5751 = vpack.c.b16 %v4286, %v4285
        %v5752 = vpack.c.b16 %v4288, %v4287
        %v5753 = vpack.c.b16 %v4290, %v4289
        %v5754 = vpack.c.b16 %v4292, %v4291
        %v5755 = vpack.c.b16 %v4294, %v4293
        %v5756 = vpack.c.b16 %v4296, %v4295
        %v5757 = vpack.c.b16 %v4298, %v4297
        %v5758 = vpack.c.b16 %v4300, %v4299
        %v5759 = vpack.c.b16 %v4302, %v4301
        %v5760 = vpack.c.b16 %v4304, %v4303
        %v5761 = vpack.c.b16 %v4306, %v4305
        %v5762 = vpack.c.b16 %v4308, %v4307
        %v5763 = vpack.c.b16 %v4310, %v4309
        %v5764 = vpack.c.b16 %v4312, %v4311
        %v5765 = vpack.c.b16 %v4314, %v4313
        %v5766 = vpack.c.b16 %v4316, %v4315
        %v5767 = vpack.c.b16 %v4318, %v4317
        %v5768 = vpack.c.b16 %v4320, %v4319
        %v5769 = vpack.c.b16 %v4322, %v4321
        %v5770 = vpack.c.b16 %v4324, %v4323
        %v5771 = vpack.c.b16 %v4326, %v4325
        %v5772 = vpack.c.b16 %v4328, %v4327
        %v5773 = vpack.c.b16 %v4330, %v4329
        %v5774 = vpack.c.b16 %v4332, %v4331
        %v5775 = vpack.c.b16 %v4334, %v4333
        %v5776 = vpack.c.b16 %v4336, %v4335
        %v5777 = vpack.c.b16 %v4338, %v4337
        %v5778 = vpack.c.b16 %v4340, %v4339
        %v5779 = vpack.c.b16 %v4342, %v4341
        %v5780 = vpack.c.b16 %v4344, %v4343
        %v5781 = vpack.c.b16 %v4346, %v4345
        %v5782 = vpack.c.b16 %v4348, %v4347
        %v5783 = vpack.c.b16 %v4350, %v4349
        %v5784 = vpack.c.b16 %v4352, %v4351
        %v5785 = vpack.c.b16 %v4354, %v4353
        %v5786 = vpack.c.b16 %v4356, %v4355
        %v5787 = vpack.c.b16 %v4358, %v4357
        %v5788 = vpack.c.b16 %v4360, %v4359
        %v5789 = vpack.c.b16 %v4362, %v4361
        %v5790 = vpack.c.b16 %v4364, %v4363
        %v5791 = vpack.c.b16 %v4366, %v4365
        %v5792 = vpack.c.b16 %v4368, %v4367
        %v5793 = vpack.c.b16 %v4370, %v4369
        %v5794 = vpack.c.b16 %v4372, %v4371
        %v5795 = vpack.c.b16 %v4374, %v4373
        %v5796 = vpack.c.b16 %v4376, %v4375
        %v5797 = vpack.c.b16 %v4378, %v4377
        %v5798 = vpack.c.b16 %v4380, %v4379
        %v5799 = vpack.c.b16 %v4382, %v4381
        %v5800 = vpack.c.b16 %v4384, %v4383
        %v5801 = vpack.c.b16 %v4386, %v4385
        %v5802 = vpack.c.b16 %v4388, %v4387
        %v5803 = vpack.c.b16 %v4390, %v4389
        %v5804 = vpack.c.b16 %v4392, %v4391
        %v5805 = vpack.c.b16 %v4394, %v4393
        %v5806 = vpack.c.b16 %v4396, %v4395
        %v5807 = vpack.c.b16 %v4398, %v4397
        %v5808 = vpack.c.b16 %v4400, %v4399
        %v5809 = vpack.c.b16 %v4402, %v4401
        %v5810 = vpack.c.b16 %v4404, %v4403
        %v5811 = vpack.c.b16 %v4406, %v4405
        %v5812 = vpack.c.b16 %v4408, %v4407
        %v5813 = vpack.c.b16 %v4410, %v4409
        %v5814 = vpack.c.b16 %v4412, %v4411
        %v5815 = vpack.c.b16 %v4414, %v4413
        %v5816 = vpack.c.b16 %v4416, %v4415
        %v5817 = vpack.c.b16 %v4418, %v4417
        %v5818 = vpack.c.b16 %v4420, %v4419
        %v5819 = vpack.c.b16 %v4422, %v4421
        %v5820 = vpack.c.b16 %v4424, %v4423
        %v5821 = vpack.c.b16 %v4426, %v4425
        %v5822 = vpack.c.b16 %v4428, %v4427
        %v5823 = vpack.c.b16 %v4430, %v4429
        %v5824 = vpack.c.b16 %v4432, %v4431
        %v5825 = vpack.c.b16 %v4434, %v4433
        %v5826 = vpack.c.b16 %v4436, %v4435
        %v5827 = vpack.c.b16 %v4438, %v4437
        %v5828 = vpack.c.b16 %v4440, %v4439
        %v5829 = vpack.c.b16 %v4442, %v4441
        %v5830 = vpack.c.b16 %v4444, %v4443
        %v5831 = vpack.c.b16 %v4446, %v4445
        %v5832 = vpack.c.b16 %v4448, %v4447
        %v5833 = vpack.c.b16 %v4450, %v4449
        %v5834 = vpack.c.b16 %v4452, %v4451
        %v5835 = vpack.c.b16 %v4454, %v4453
        %v5836 = vpack.c.b16 %v4456, %v4455
        %v5837 = vpack.c.b16 %v4458, %v4457
        %v5838 = vpack.c.b16 %v4460, %v4459
        %v5839 = vpack.c.b16 %v4462, %v4461
        %v5840 = vpack.c.b16 %v4464, %v4463
        %v5841 = vpack.c.b16 %v4466, %v4465
        %v5842 = vpack.c.b16 %v4468, %v4467
        %v5843 = vpack.c.b16 %v4470, %v4469
        %v5844 = vpack.c.b16 %v4472, %v4471
        %v5845 = vpack.c.b16 %v4474, %v4473
        %v5846 = vpack.c.b16 %v4476, %v4475
        %v5847 = vpack.c.b16 %v4478, %v4477
        %v5848 = vpack.c.b16 %v4480, %v4479
        %v5849 = vpack.c.b16 %v4482, %v4481
        %v5850 = vpack.c.b16 %v4484, %v4483
        %v5851 = vpack.c.b16 %v4486, %v4485
        %v5852 = vpack.c.b16 %v4488, %v4487
        %v5853 = vpack.c.b16 %v4490, %v4489
        %v5854 = vpack.c.b16 %v4492, %v4491
        %v5855 = vpack.c.b16 %v4494, %v4493
        %v5856 = vpack.c.b16 %v4496, %v4495
        %v5857 = vpack.c.b16 %v4498, %v4497
        %v5858 = vpack.c.b16 %v4500, %v4499
        %v5859 = vpack.c.b16 %v4502, %v4501
        %v5860 = vpack.c.b16 %v4504, %v4503
        %v5861 = vpack.c.b16 %v4506, %v4505
        %v5862 = vpack.c.b16 %v4508, %v4507
        %v5863 = vpack.c.b16 %v4510, %v4509
        %v5864 = vpack.c.b16 %v4512, %v4511
        %v5865 = vpack.c.b16 %v4514, %v4513
        %v5866 = vpack.c.b16 %v4516, %v4515
        %v5867 = vpack.c.b16 %v4518, %v4517
        %v5868 = vpack.c.b16 %v4520, %v4519
        %v5869 = vpack.c.b16 %v4522, %v4521
        %v5870 = vpack.c.b16 %v4524, %v4523
        %v5871 = vpack.c.b16 %v4526, %v4525
        %v5872 = vpack.c.b16 %v4528, %v4527
        %v5873 = vpack.c.b16 %v4530, %v4529
        %v5874 = vpack.c.b16 %v4532, %v4531
        %v5875 = vpack.c.b16 %v4534, %v4533
        %v5876 = vpack.c.b16 %v4536, %v4535
        %v5877 = vpack.c.b16 %v4538, %v4537
        %v5878 = vpack.c.b16 %v4540, %v4539
        %v5879 = vpack.c.b16 %v4542, %v4541
        %v5880 = vpack.c.b16 %v4544, %v4543
        %v5881 = vpack.c.b16 %v4546, %v4545
        %v5882 = vpack.c.b16 %v4548, %v4547
        %v5883 = vpack.c.b16 %v4550, %v4549
        %v5884 = vpack.c.b16 %v4552, %v4551
        %v5885 = vpack.c.b16 %v4554, %v4553
        %v5886 = vpack.c.b16 %v4556, %v4555
        %v5887 = vpack.c.b16 %v4558, %v4557
        %v5888 = vpack.c.b16 %v4560, %v4559
        %v5889 = vpack.c.b16 %v4562, %v4561
        %v5890 = vpack.c.b16 %v4564, %v4563
        %v5891 = vpack.c.b16 %v4566, %v4565
        %v5892 = vpack.c.b16 %v4568, %v4567
        %v5893 = vpack.c.b16 %v4570, %v4569
        %v5894 = vpack.c.b16 %v4572, %v4571
        %v5895 = vpack.c.b16 %v4574, %v4573
        %v5896 = vpack.c.b16 %v4576, %v4575
        %v5897 = vpack.c.b16 %v4578, %v4577
        %v5898 = vpack.c.b16 %v4580, %v4579
        %v5899 = vpack.c.b16 %v4582, %v4581
        %v5900 = vpack.c.b16 %v4584, %v4583
        %v5901 = vpack.c.b16 %v4586, %v4585
        %v5902 = vpack.c.b16 %v4588, %v4587
        %v5903 = vpack.c.b16 %v4590, %v4589
        %v5904 = vpack.c.b16 %v4592, %v4591
        %v5905 = vpack.c.b16 %v4594, %v4593
        %v5906 = vpack.c.b16 %v4596, %v4595
        %v5907 = vpack.c.b16 %v4598, %v4597
        %v5908 = vpack.c.b16 %v4600, %v4599
        %v5909 = vpack.c.b16 %v4602, %v4601
        %v5910 = vpack.c.b16 %v4604, %v4603
        %v5911 = vpack.c.b16 %v4606, %v4605
        %v5912 = vpack.c.b16 %v4608, %v4607
        %v5913 = vpack.c.b16 %v4610, %v4609
        %v5914 = vpack.c.b16 %v4612, %v4611
        %v5915 = vpack.c.b16 %v4614, %v4613
        %v5916 = vpack.c.b16 %v4616, %v4615
        %v5917 = vpack.c.b16 %v4618, %v4617
        %v5918 = vpack.c.b16 %v4620, %v4619
        %v5919 = vpack.c.b16 %v4622, %v4621
        %v5920 = vpack.c.b16 %v4624, %v4623
        %v5921 = vpack.c.b16 %v4626, %v4625
        %v5922 = vpack.c.b16 %v4628, %v4627
        %v5923 = vpack.c.b16 %v4630, %v4629
        %v5924 = vpack.c.b16 %v4632, %v4631
        %v5925 = vpack.c.b16 %v4634, %v4633
        %v5926 = vpack.c.b16 %v4636, %v4635
        %v5927 = vpack.c.b16 %v4638, %v4637
        %v5928 = vpack.c.b16 %v4640, %v4639
        %v5929 = vpack.c.b16 %v4642, %v4641
        %v5930 = vpack.c.b16 %v4644, %v4643
        %v5931 = vpack.c.b16 %v4646, %v4645
        %v5932 = vpack.c.b16 %v4648, %v4647
        %v5933 = vpack.c.b16 %v4650, %v4649
        %v5934 = vpack.c.b16 %v4652, %v4651
        %v5935 = vpack.c.b16 %v4654, %v4653
        %v5936 = vpack.c.b16 %v4656, %v4655
        %v5937 = vpack.c.b16 %v4658, %v4657
        %v5938 = vpack.c.b16 %v4660, %v4659
        %v5939 = vpack.c.b16 %v4662, %v4661
        %v5940 = vpack.c.b16 %v4664, %v4663
        %v5941 = vpack.c.b16 %v4666, %v4665
        %v5942 = vpack.c.b16 %v4668, %v4667
        %v5943 = vpack.c.b16 %v4670, %v4669
        %v5944 = vpack.c.b16 %v4672, %v4671
        %v5945 = vpack.c.b16 %v4674, %v4673
        %v5946 = vpack.c.b16 %v4676, %v4675
        %v5947 = vpack.c.b16 %v4678, %v4677
        %v5948 = vpack.c.b16 %v4680, %v4679
        %v5949 = vpack.c.b16 %v4682, %v4681
        %v5950 = vpack.c.b16 %v4684, %v4683
        %v5951 = vpack.c.b16 %v4686, %v4685
        %v5952 = vpack.c.b16 %v4688, %v4687
        %v5953 = vpack.c.b16 %v4690, %v4689
        %v5954 = vpack.c.b16 %v4692, %v4691
        %v5955 = vpack.c.b16 %v4694, %v4693
        %v5956 = vpack.c.b16 %v4696, %v4695
        %v5957 = vpack.c.b16 %v4698, %v4697
        %v5958 = vpack.c.b16 %v4700, %v4699
        %v5959 = vpack.c.b16 %v4702, %v4701
        %v5960 = vpack.c.b16 %v4704, %v4703
        %v5961 = vpack.c.b16 %v4706, %v4705
        %v5962 = vpack.c.b16 %v4708, %v4707
        %v5963 = vpack.c.b16 %v4710, %v4709
        %v5964 = vpack.c.b16 %v4712, %v4711
        %v5965 = vpack.c.b16 %v4714, %v4713
        %v5966 = vpack.c.b16 %v4716, %v4715
        %v5967 = vpack.c.b16 %v4718, %v4717
        %v5968 = vpack.c.b16 %v4720, %v4719
        %v5969 = vpack.c.b16 %v4722, %v4721
        %v5970 = vpack.c.b16 %v4724, %v4723
        %v5971 = vpack.c.b16 %v4726, %v4725
        %v5972 = vpack.c.b16 %v4728, %v4727
        %v5973 = vpack.c.b16 %v4730, %v4729
        %v5974 = vpack.c.b16 %v4732, %v4731
        %v5975 = vpack.c.b16 %v4734, %v4733
        %v5976 = vpack.c.b16 %v4736, %v4735
        %v5977 = vpack.c.b16 %v4738, %v4737
        %v5978 = vpack.c.b16 %v4740, %v4739
        %v5979 = vpack.c.b16 %v4742, %v4741
        %v5980 = vpack.c.b16 %v4744, %v4743
        %v5981 = vpack.c.b16 %v4746, %v4745
        %v5982 = vpack.c.b16 %v4748, %v4747
        %v5983 = vpack.c.b16 %v4750, %v4749
        %v5984 = vpack.c.b16 %v4752, %v4751
        %v5985 = vpack.c.b16 %v4754, %v4753
        %v5986 = vpack.c.b16 %v4756, %v4755
        %v5987 = vpack.c.b16 %v4758, %v4757
        %v5988 = vpack.c.b16 %v4760, %v4759
        %v5989 = vpack.c.b16 %v4762, %v4761
        %v5990 = vpack.c.b16 %v4764, %v4763
        %v5991 = vpack.c.b16 %v4766, %v4765
        %v5992 = vpack.c.b16 %v4768, %v4767
        %v5993 = vpack.c.b16 %v4770, %v4769
        %v5994 = vpack.c.b16 %v4772, %v4771
        %v5995 = vpack.c.b16 %v4774, %v4773
        %v5996 = vpack.c.b16 %v4776, %v4775
        %v5997 = vpack.c.b16 %v4778, %v4777
        %v5998 = vpack.c.b16 %v4780, %v4779
        %v5999 = vpack.c.b16 %v4782, %v4781
        %v6000 = vpack.c.b16 %v4784, %v4783
        %v6001 = vpack.c.b16 %v4786, %v4785
        %v6002 = vpack.c.b16 %v4788, %v4787
        %v6003 = vpack.c.b16 %v4790, %v4789
        %v6004 = vpack.c.b16 %v4792, %v4791
        %v6005 = vpack.c.b16 %v4794, %v4793
        %v6006 = vpack.c.b16 %v4796, %v4795
        %v6007 = vpack.c.b16 %v4798, %v4797
        %v6008 = vpack.c.b16 %v4800, %v4799
        %v6009 = vpack.c.b16 %v4802, %v4801
        %v6010 = vpack.c.b16 %v4804, %v4803
        %v6011 = vpack.c.b16 %v4806, %v4805
        %v6012 = vpack.c.b16 %v4808, %v4807
        %v6013 = vpack.c.b16 %v4810, %v4809
        %v6014 = vpack.c.b16 %v4812, %v4811
        %v6015 = vpack.c.b16 %v4814, %v4813
        %v6016 = vpack.c.b16 %v4816, %v4815
        %v6017 = vpack.c.b16 %v4818, %v4817
        %v6018 = vpack.c.b16 %v4820, %v4819
        %v6019 = vpack.c.b16 %v4822, %v4821
        %v6020 = vpack.c.b16 %v4824, %v4823
        %v6021 = vpack.c.b16 %v4826, %v4825
        %v6022 = vpack.c.b16 %v4828, %v4827
        %v6023 = vpack.c.b16 %v4830, %v4829
        %v6024 = vpack.c.b16 %v4832, %v4831
        %v6025 = vpack.c.b16 %v4834, %v4833
        %v6026 = vpack.c.b16 %v4836, %v4835
        %v6027 = vpack.c.b16 %v4838, %v4837
        %v6028 = vpack.c.b16 %v4840, %v4839
        %v6029 = vpack.c.b16 %v4842, %v4841
        %v6030 = vpack.c.b16 %v4844, %v4843
        %v6031 = vpack.c.b16 %v4846, %v4845
        %v6032 = vpack.c.b16 %v4848, %v4847
        %v6033 = vpack.c.b16 %v4850, %v4849
        %v6034 = vpack.c.b16 %v4852, %v4851
        %v6035 = vpack.c.b16 %v4854, %v4853
        %v6036 = vpack.c.b16 %v4856, %v4855
        %v6037 = vpack.c.b16 %v4858, %v4857
        %v6038 = vpack.c.b16 %v4860, %v4859
        %v6039 = vpack.c.b16 %v4862, %v4861
        %v6040 = vpack.c.b16 %v4864, %v4863
        %v6041 = vpack.c.b16 %v4866, %v4865
        %v6042 = vpack.c.b16 %v4868, %v4867
        %v6043 = vpack.c.b16 %v4870, %v4869
        %v6044 = vpack.c.b16 %v4872, %v4871
        %v6045 = vpack.c.b16 %v4874, %v4873
        %v6046 = vpack.c.b16 %v4876, %v4875
        %v6047 = vpack.c.b16 %v4878, %v4877
        %v6048 = vpack.c.b16 %v4880, %v4879
        %v6049 = vpack.c.b16 %v4882, %v4881
        %v6050 = vpack.c.b16 %v4884, %v4883
        %v6051 = vpack.c.b16 %v4886, %v4885
        %v6052 = vpack.c.b16 %v4888, %v4887
        %v6053 = vpack.c.b16 %v4890, %v4889
        %v6054 = vpack.c.b16 %v4892, %v4891
        %v6055 = vpack.c.b16 %v4894, %v4893
        %v6056 = vpack.c.b16 %v4896, %v4895
        %v6057 = vpack.c.b16 %v4898, %v4897
        %v6058 = vpack.c.b16 %v4900, %v4899
        %v6059 = vpack.c.b16 %v4902, %v4901
        %v6060 = vpack.c.b16 %v4904, %v4903
        %v6061 = vpack.c.b16 %v4906, %v4905
        %v6062 = vpack.c.b16 %v4908, %v4907
        %v6063 = vpack.c.b16 %v4910, %v4909
        %v6064 = vpack.c.b16 %v4912, %v4911
        %v6065 = vpack.c.b16 %v4914, %v4913
        %v6066 = vpack.c.b16 %v4916, %v4915
        %v6067 = vpack.c.b16 %v4918, %v4917
        %v6068 = vpack.c.b16 %v4920, %v4919
        %v6069 = vpack.c.b16 %v4922, %v4921
        %v6070 = vpack.c.b16 %v4924, %v4923
        %v6071 = vpack.c.b16 %v4926, %v4925
        %v6072 = vpack.c.b16 %v4928, %v4927
        %v6073 = vpack.c.b16 %v4930, %v4929
        %v6074 = vpack.c.b16 %v4932, %v4931
        %v6075 = vpack.c.b16 %v4934, %v4933
        %v6076 = vpack.c.b16 %v4936, %v4935
        %v6077 = vpack.c.b16 %v4938, %v4937
        %v6078 = vpack.c.b16 %v4940, %v4939
        %v6079 = vpack.c.b16 %v4942, %v4941
        %v6080 = vpack.c.b16 %v4944, %v4943
        %v6081 = vpack.c.b16 %v4946, %v4945
        %v6082 = vpack.c.b16 %v4948, %v4947
        %v6083 = vpack.c.b16 %v4950, %v4949
        %v6084 = vpack.c.b16 %v4952, %v4951
        %v6085 = vpack.c.b16 %v4954, %v4953
        %v6086 = vpack.c.b16 %v4956, %v4955
        %v6087 = vpack.c.b16 %v4958, %v4957
        %v6088 = vpack.c.b16 %v4960, %v4959
        %v6089 = vpack.c.b16 %v4962, %v4961
        %v6090 = vpack.c.b16 %v4964, %v4963
        %v6091 = vpack.c.b16 %v4966, %v4965
        %v6092 = vpack.c.b16 %v4968, %v4967
        %v6093 = vpack.c.b16 %v4970, %v4969
        %v6094 = vpack.c.b16 %v4972, %v4971
        %v6095 = vpack.c.b16 %v4974, %v4973
        %v6096 = vpack.c.b16 %v4976, %v4975
        %v6097 = vpack.c.b16 %v4978, %v4977
        %v6098 = vpack.c.b16 %v4980, %v4979
        %v6099 = vpack.c.b16 %v4982, %v4981
        %v6100 = vpack.c.b16 %v4984, %v4983
        %v6101 = vpack.c.b16 %v4986, %v4985
        %v6102 = vpack.c.b16 %v4988, %v4987
        %v6103 = vpack.c.b16 %v4990, %v4989
        %v6104 = vpack.c.b16 %v4992, %v4991
        %v6105 = vpack.c.b16 %v4994, %v4993
        %v6106 = vpack.c.b16 %v4996, %v4995
        %v6107 = vpack.c.b16 %v4998, %v4997
        %v6108 = vpack.c.b16 %v5000, %v4999
        %v6109 = vpack.c.b16 %v5002, %v5001
        %v6110 = vpack.c.b16 %v5004, %v5003
        %v6111 = vpack.c.b16 %v5006, %v5005
        %v6112 = vpack.c.b16 %v5008, %v5007
        %v6113 = vpack.c.b16 %v5010, %v5009
        %v6114 = vpack.c.b16 %v5012, %v5011
        %v6115 = vpack.c.b16 %v5014, %v5013
        %v6116 = vpack.c.b16 %v5016, %v5015
        %v6117 = vpack.c.b16 %v5018, %v5017
        %v6118 = vpack.c.b16 %v5020, %v5019
        %v6119 = vpack.c.b16 %v5022, %v5021
        %v6120 = vpack.c.b16 %v5024, %v5023
        %v6121 = vpack.c.b16 %v5026, %v5025
        %v6122 = vpack.c.b16 %v5028, %v5027
        %v6123 = vpack.c.b16 %v5030, %v5029
        %v6124 = vpack.c.b16 %v5032, %v5031
        %v6125 = vpack.c.b16 %v5034, %v5033
        %v6126 = vpack.c.b16 %v5036, %v5035
        %v6127 = vpack.c.b16 %v5038, %v5037
        %v6128 = vpack.c.b16 %v5040, %v5039
        %v6129 = vpack.c.b16 %v5042, %v5041
        %v6130 = vpack.c.b16 %v5044, %v5043
        %v6131 = vpack.c.b16 %v5046, %v5045
        %v6132 = vpack.c.b16 %v5048, %v5047
        %v6133 = vpack.c.b16 %v5050, %v5049
        %v6134 = vpack.c.b16 %v5052, %v5051
        %v6135 = vpack.c.b16 %v5054, %v5053
        %v6136 = vpack.c.b16 %v5056, %v5055
        %v6137 = vpack.c.b16 %v5058, %v5057
        %v6138 = vpack.c.b16 %v5060, %v5059
        %v6139 = vpack.c.b16 %v5062, %v5061
        %v6140 = vpack.c.b16 %v5064, %v5063
        %v6141 = vpack.c.b16 %v5066, %v5065
        %v6142 = vpack.c.b16 %v5068, %v5067
        %v6143 = vpack.c.b16 %v5070, %v5069
        %v6144 = vpack.c.b16 %v5072, %v5071
        %v6145 = vpack.c.b16 %v5074, %v5073
        %v6146 = vpack.c.b16 %v5076, %v5075
        %v6147 = vpack.c.b16 %v5078, %v5077
        %v6148 = vpack.c.b16 %v5080, %v5079
        %v6149 = vpack.c.b16 %v5082, %v5081
        %v6150 = vpack.c.b16 %v5084, %v5083
        %v6151 = vpack.c.b16 %v5086, %v5085
        %v6152 = vpack.c.b16 %v5088, %v5087
        %v6153 = vpack.c.b16 %v5090, %v5089
        %v6154 = vpack.c.b16 %v5092, %v5091
        %v6155 = vpack.c.b16 %v5094, %v5093
        %v6156 = vpack.c.b16 %v5096, %v5095
        %v6157 = vpack.c.b16 %v5098, %v5097
        %v6158 = vpack.c.b16 %v5100, %v5099
        %v6159 = vpack.c.b16 %v5102, %v5101
        %v6160 = vpack.c.b16 %v5104, %v5103
        %v6161 = vpack.c.b16 %v5106, %v5105
        %v6162 = vpack.c.b16 %v5108, %v5107
        %v6163 = vpack.c.b16 %v5110, %v5109
        %v6164 = vpack.c.b16 %v5112, %v5111
        %v6165 = vpack.c.b16 %v5114, %v5113
        %v6166 = vpack.c.b16 %v5116, %v5115
        %v6167 = vpack.c.b16 %v5118, %v5117
        %v6168 = vpack.c.b16 %v5120, %v5119
        %v6169 = vpack.c.b16 %v5122, %v5121
        %v6170 = vpack.c.b16 %v5124, %v5123
        %v6171 = vpack.c.b16 %v5126, %v5125
        %v6172 = vpack.c.b16 %v5128, %v5127
        %v6173 = vpack.c.b16 %v5130, %v5129
        %v6174 = vpack.c.b16 %v5132, %v5131
        %v6175 = vpack.c.b16 %v5134, %v5133
        %v6176 = vpack.c.b16 %v5136, %v5135
        %v6177 = vpack.c.b16 %v5138, %v5137
        %v6178 = vpack.c.b16 %v5140, %v5139
        %v6179 = vpack.c.b16 %v5142, %v5141
        %v6180 = vpack.c.b16 %v5144, %v5143
        %v6181 = vpack.c.b16 %v5146, %v5145
        %v6182 = vpack.c.b16 %v5148, %v5147
        %v6183 = vpack.c.b16 %v5150, %v5149
        %v6184 = vpack.c.b16 %v5152, %v5151
        %v6185 = vpack.c.b16 %v5154, %v5153
        %v6186 = vpack.c.b16 %v5156, %v5155
        %v6187 = vpack.c.b16 %v5158, %v5157
        %v6188 = vpack.c.b16 %v5160, %v5159
        %v6189 = vpack.c.b16 %v5162, %v5161
        %v6190 = vpack.c.b16 %v5164, %v5163
        %v6191 = vpack.c.b16 %v5166, %v5165
        %v6192 = vpack.c.b16 %v5168, %v5167
        %v6193 = vpack.c.b16 %v5170, %v5169
        %v6194 = vpack.c.b16 %v5172, %v5171
        %v6195 = vpack.c.b16 %v5174, %v5173
        %v6196 = vpack.c.b16 %v5176, %v5175
        %v6197 = vpack.c.b16 %v5178, %v5177
        %v6198 = vpack.c.b16 %v5180, %v5179
        %v6199 = vpack.c.b16 %v5182, %v5181
        %v6200 = vpack.c.b16 %v5184, %v5183
        %v6201 = vpack.c.b16 %v5186, %v5185
        %v6202 = vpack.c.b16 %v5188, %v5187
        %v6203 = vpack.c.b16 %v5190, %v5189
        %v6204 = vpack.c.b16 %v5192, %v5191
        %v6205 = vpack.c.b16 %v5194, %v5193
        %v6206 = vpack.c.b16 %v5196, %v5195
        %v6207 = vpack.c.b16 %v5198, %v5197
        %v6208 = vpack.c.b16 %v5200, %v5199
        %v6209 = vpack.c.b16 %v5202, %v5201
        %v6210 = vpack.c.b16 %v5204, %v5203
        %v6211 = vpack.c.b16 %v5206, %v5205
        %v6212 = vpack.c.b16 %v5208, %v5207
        %v6213 = vpack.c.b16 %v5210, %v5209
        %v6214 = vpack.c.b16 %v5212, %v5211
        %v6215 = vpack.c.b16 %v5214, %v5213
        %v6216 = vpack.c.b16 %v5216, %v5215
        %v6217 = vpack.c.b16 %v5218, %v5217
        %v6218 = vpack.c.b16 %v5220, %v5219
        %v6219 = vpack.c.b16 %v5222, %v5221
        %v6220 = vpack.c.b16 %v5224, %v5223
        %v6221 = vpack.c.b16 %v5226, %v5225
        %v6222 = vpack.c.b16 %v5228, %v5227
        %v6223 = vpack.c.b16 %v5230, %v5229
        %v6224 = vpack.c.b16 %v5232, %v5231
        %v6225 = vpack.c.b16 %v5234, %v5233
        %v6226 = vpack.c.b16 %v5236, %v5235
        %v6227 = vpack.c.b16 %v5238, %v5237
        %v6228 = vpack.c.b16 %v5240, %v5239
        %v6229 = vpack.c.b16 %v5242, %v5241
        %v6230 = vpack.c.b16 %v5244, %v5243
        %v6231 = vpack.c.b16 %v5246, %v5245
        %v6232 = vpack.c.b16 %v5248, %v5247
        %v6233 = vpack.c.b16 %v5250, %v5249
        %v6234 = vpack.c.b16 %v5252, %v5251
        %v6235 = vpack.c.b16 %v5254, %v5253
        %v6236 = vpack.c.b16 %v5256, %v5255
        %v6237 = vpack.c.b16 %v5258, %v5257
        %v6238 = vpack.c.b16 %v5260, %v5259
        %v6239 = vpack.c.b16 %v5262, %v5261
        %v6240 = vpack.c.b16 %v5264, %v5263
        %v6241 = vpack.c.b16 %v5266, %v5265
        %v6242 = vpack.c.b16 %v5268, %v5267
        %v6243 = vpack.c.b16 %v5270, %v5269
        %v6244 = vpack.c.b16 %v5272, %v5271
        %v6245 = vpack.c.b16 %v5274, %v5273
        %v6246 = vpack.c.b16 %v5276, %v5275
        %v6247 = vpack.c.b16 %v5278, %v5277
        %v6248 = vpack.c.b16 %v5280, %v5279
        %v6249 = vpack.c.b16 %v5282, %v5281
        %v6250 = vpack.c.b16 %v5284, %v5283
        %v6251 = vpack.c.b16 %v5286, %v5285
        %v6252 = vpack.c.b16 %v5288, %v5287
        %v6253 = vpack.c.b16 %v5290, %v5289
        %v6254 = vpack.c.b16 %v5292, %v5291
        %v6255 = vpack.c.b16 %v5294, %v5293
        %v6256 = vpack.c.b16 %v5296, %v5295
        %v6257 = vpack.c.b16 %v5298, %v5297
        %v6258 = vpack.c.b16 %v5300, %v5299
        %v6259 = vpack.c.b16 %v5302, %v5301
        %v6260 = vpack.c.b16 %v5304, %v5303
        %v6261 = vpack.c.b16 %v5306, %v5305
        %v6262 = vpack.c.b16 %v5308, %v5307
        %v6263 = vpack.c.b16 %v5310, %v5309
        %v6264 = vpack.c.b16 %v5312, %v5311
        %v6265 = vpack.c.b16 %v5314, %v5313
        %v6266 = vpack.c.b16 %v5316, %v5315
        %v6267 = vpack.c.b16 %v5318, %v5317
        %v6268 = vpack.c.b16 %v5320, %v5319
        %v6269 = vpack.c.b16 %v5322, %v5321
        %v6270 = vpack.c.b16 %v5324, %v5323
        %v6271 = vpack.c.b16 %v5326, %v5325
        %v6272 = vpack.c.b16 %v5328, %v5327
        %v6273 = vpack.c.b16 %v5330, %v5329
        %v6274 = vpack.c.b16 %v5332, %v5331
        %v6275 = vpack.c.b16 %v5334, %v5333
        %v6276 = vpack.c.b16 %v5336, %v5335
        %v6277 = vpack.c.b16 %v5338, %v5337
        %v6278 = vpack.c.b16 %v5340, %v5339
        %v6279 = vpack.c.b16 %v5342, %v5341
        %v6280 = vpack.c.b16 %v5344, %v5343
        %v6281 = vpack.c.b16 %v5346, %v5345
        %v6282 = vpack.c.b16 %v5348, %v5347
        %v6283 = vpack.c.b16 %v5350, %v5349
        %v6284 = vpack.c.b16 %v5352, %v5351
        %v6285 = vpack.c.b16 %v5354, %v5353
        %v6286 = vpack.c.b16 %v5356, %v5355
        %v6287 = vpack.c.b16 %v5358, %v5357
        %v6288 = vpack.c.b16 %v5360, %v5359
        %v6289 = vpack.c.b16 %v5362, %v5361
        %v6290 = vpack.c.b16 %v5364, %v5363
        %v6291 = vpack.c.b16 %v5366, %v5365
        %v6292 = vpack.c.b16 %v5368, %v5367
        %v6293 = vpack.c.b16 %v5370, %v5369
        %v6294 = vpack.c.b16 %v5372, %v5371
        %v6295 = vpack.c.b16 %v5374, %v5373
        %v6296 = vpack.c.b16 %v5376, %v5375
        %v6297 = vpack.c.b16 %v5378, %v5377
        %v6298 = vpack.c.b16 %v5380, %v5379
        %v6299 = vpack.c.b16 %v5382, %v5381
        %v6300 = vpack.c.b16 %v5384, %v5383
        %v6301 = vpack.c.b16 %v5386, %v5385
        %v6302 = vpack.c.b16 %v5388, %v5387
        %v6303 = vpack.c.b16 %v5390, %v5389
        %v6304 = vpack.c.b16 %v5392, %v5391
        %v6305 = vpack.c.b16 %v5394, %v5393
        %v6306 = vpack.c.b16 %v5396, %v5395
        %v6307 = vpack.c.b16 %v5398, %v5397
        %v6308 = vpack.c.b16 %v5400, %v5399
        %v6309 = vpack.c.b16 %v5402, %v5401
        %v6310 = vpack.c.b16 %v5404, %v5403
        %v6311 = vpack.c.b16 %v5406, %v5405
        %v6312 = vpack.c.b16 %v5408, %v5407
        %v6313 = vpack.c.b16 %v5410, %v5409
        %v6314 = vpack.c.b16 %v5412, %v5411
        %v6315 = vpack.c.b16 %v5414, %v5413
        %v6316 = vpack.c.b16 %v5416, %v5415
        %v6317 = vpack.c.b16 %v5418, %v5417
        %v6318 = vpack.c.b16 %v5420, %v5419
        %v6319 = vpack.c.b16 %v5422, %v5421
        %v6320 = vpack.c.b16 %v5424, %v5423
        %v6321 = vpack.c.b16 %v5426, %v5425
        %v6322 = vpack.c.b16 %v5428, %v5427
        %v6323 = vpack.c.b16 %v5430, %v5429
        %v6324 = vpack.c.b16 %v5432, %v5431
        %v6325 = vpack.c.b16 %v5434, %v5433
        %v6326 = vpack.c.b16 %v5436, %v5435
        %v6327 = vpack.c.b16 %v5438, %v5437
        %v6328 = vpack.c.b16 %v5440, %v5439
        %v6329 = vpack.c.b16 %v5442, %v5441
        %v6330 = vpack.c.b16 %v5444, %v5443
        %v6331 = vpack.c.b16 %v5446, %v5445
        %v6332 = vpack.c.b16 %v5448, %v5447
        %v6333 = vpack.c.b16 %v5450, %v5449
        %v6334 = vpack.c.b16 %v5452, %v5451
        %v6335 = vpack.c.b16 %v5454, %v5453
        %v6336 = vpack.c.b16 %v5456, %v5455
        %v6337 = vpack.c.b16 %v5458, %v5457
        %v6338 = vpack.c.b16 %v5460, %v5459
        %v6339 = vpack.c.b16 %v5462, %v5461
        %v6340 = vpack.c.b16 %v5464, %v5463
        %v6341 = vpack.c.b16 %v5466, %v5465
        %v6342 = vpack.c.b16 %v5468, %v5467
        %v6343 = vpack.c.b16 %v5470, %v5469
        %v6344 = vpack.c.b16 %v5472, %v5471
        %v6345 = vpack.c.b16 %v5474, %v5473
        %v6346 = vpack.c.b16 %v5476, %v5475
        %v6347 = vpack.c.b16 %v5478, %v5477
        %v6348 = vpack.c.b16 %v5480, %v5479
        %v6349 = vpack.c.b16 %v5482, %v5481
        %v6350 = vpack.c.b16 %v5484, %v5483
        %v6351 = vpack.c.b16 %v5486, %v5485
        %v6352 = vpack.c.b16 %v5488, %v5487
        %v6353 = vpack.c.b16 %v5490, %v5489
        %v6354 = vpack.c.b16 %v5492, %v5491
        %v6355 = vpack.c.b16 %v5494, %v5493
        %v6356 = vpack.c.b16 %v5496, %v5495
        %v6357 = vpack.c.b16 %v5498, %v5497
        %v6358 = vpack.c.b16 %v5500, %v5499
        %v6359 = vpack.c.b16 %v5502, %v5501
        %v6360 = vpack.c.b16 %v5504, %v5503
        %v6361 = vpack.c.b16 %v5506, %v5505
        %v6362 = vpack.c.b16 %v5508, %v5507
        %v6363 = vpack.c.b16 %v5510, %v5509
        %v6364 = vpack.c.b16 %v5512, %v5511
        %v6365 = vpack.c.b16 %v5514, %v5513
        %v6366 = vpack.c.b16 %v5516, %v5515
        %v6367 = vpack.c.b16 %v5518, %v5517
        %v6368 = vpack.c.b16 %v5520, %v5519
        %v6369 = vpack.c.b16 %v5522, %v5521
        %v6370 = vpack.c.b16 %v5524, %v5523
        %v6371 = vpack.c.b16 %v5526, %v5525
        %v6372 = vpack.c.b16 %v5528, %v5527
        %v6373 = vpack.c.b16 %v5530, %v5529
        %v6374 = vpack.c.b16 %v5532, %v5531
        %v6375 = vpack.c.b16 %v5534, %v5533
        %v6376 = vpack.c.b16 %v5536, %v5535
        %v6377 = vpack.c.b16 %v5538, %v5537
        %v6378 = vpack.c.b16 %v5540, %v5539
        %v6379 = vpack.c.b16 %v5542, %v5541
        %v6380 = vpack.c.b16 %v5544, %v5543
        %v6381 = vpack.c.b16 %v5546, %v5545
        %v6382 = vpack.c.b16 %v5548, %v5547
        %v6383 = vpack.c.b16 %v5550, %v5549
        %v6384 = vpack.c.b16 %v5552, %v5551
        %v6385 = vpack.c.b16 %v5554, %v5553
        %v6386 = vpack.c.b16 %v5556, %v5555
        %v6387 = vpack.c.b16 %v5558, %v5557
        %v6388 = vpack.c.b16 %v5560, %v5559
        %v6389 = vpack.c.b16 %v5562, %v5561
        %v6390 = vpack.c.b16 %v5564, %v5563
        %v6391 = vpack.c.b16 %v5566, %v5565
        %v6392 = vpack.c.b16 %v5568, %v5567
        %v6393 = vpack.c.b16 %v5570, %v5569
        %v6394 = vpack.c.b16 %v5572, %v5571
        %v6395 = vpack.c.b16 %v5574, %v5573
        %v6396 = vpack.c.b16 %v5576, %v5575
        %v6397 = vpack.c.b16 %v5578, %v5577
        %v6398 = vpack.c.b16 %v5580, %v5579
        %v6399 = vpack.c.b16 %v5582, %v5581
        %v6400 = vpack.c.b16 %v5584, %v5583
        %v6401 = vpack.c.b16 %v5586, %v5585
        %v6402 = vpack.c.b16 %v5588, %v5587
        %v6403 = vpack.c.b16 %v5590, %v5589
        %v6404 = vpack.c.b16 %v5592, %v5591
        %v6405 = vpack.c.b16 %v5594, %v5593
        %v6406 = vpack.c.b16 %v5596, %v5595
        %v6407 = vpack.c.b16 %v5598, %v5597
        %v6408 = vpack.c.b16 %v5600, %v5599
        %v6409 = vpack.c.b16 %v5602, %v5601
        %v6410 = vpack.c.b16 %v5604, %v5603
        %v6411 = vpack.c.b16 %v5606, %v5605
        %v6412 = vpack.c.b16 %v5608, %v5607
        %v6413 = vpack.c.b16 %v5610, %v5609
        %v6414 = vpack.c.b16 %v5612, %v5611
        %v6415 = vpack.c.b16 %v5614, %v5613
        %v6416 = vpack.c.b16 %v5616, %v5615
        %v6417 = vpack.c.b16 %v5618, %v5617
        %v6418 = vpack.c.b16 %v5620, %v5619
        %v6419 = vpack.c.b16 %v5622, %v5621
        %v6420 = vpack.c.b16 %v5624, %v5623
        %v6421 = vpack.c.b16 %v5626, %v5625
        %v6422 = vpack.c.b16 %v5628, %v5627
        %v6423 = vpack.c.b16 %v5630, %v5629
        %v6424 = vpack.c.b16 %v5632, %v5631
        %v6425 = vpack.c.b16 %v5634, %v5633
        %v6426 = vpack.c.b16 %v5636, %v5635
        %v6427 = vpack.c.b16 %v5638, %v5637
        %v6428 = vpack.c.b16 %v5640, %v5639
        %v6429 = vpack.c.b16 %v5642, %v5641
        %v6430 = vpack.c.b16 %v5644, %v5643
        %v6431 = vpack.c.b16 %v5646, %v5645
        %v6432 = vpack.c.b16 %v5648, %v5647
        %7217 = vmatprep.subr.bf16.mxu0 0
        %7218 = vmatpush1.bf16.msra.mxu0 %v5649
        %7219 = vmatprep.subr.bf16.mxu0 0
        %7220 = vmatpush1.bf16.msra.mxu0 %v5650
        %7221 = vmatprep.subr.bf16.mxu0 0
        %7222 = vmatpush1.bf16.msra.mxu0 %v5651
        %7223 = vmatprep.subr.bf16.mxu0 0
        %7224 = vmatpush1.bf16.msra.mxu0 %v5652
        %7225 = vmatprep.subr.bf16.mxu0 0
        %7226 = vmatpush1.bf16.msra.mxu0 %v5653
        %7227 = vmatprep.subr.bf16.mxu0 0
        %7228 = vmatpush1.bf16.msra.mxu0 %v5654
        %7229 = vmatprep.subr.bf16.mxu0 0
        %7230 = vmatpush1.bf16.msra.mxu0 %v5655
        %7231 = vmatprep.subr.bf16.mxu0 0
        %7232 = vmatpush1.bf16.msra.mxu0 %v5656
        %7233 = vmatprep.subr.bf16.mxu0 0
        %7234 = vmatpush1.bf16.msra.mxu0 %v5657
        %7235 = vmatprep.subr.bf16.mxu0 0
        %7236 = vmatpush1.bf16.msra.mxu0 %v5658
        %7237 = vmatprep.subr.bf16.mxu0 0
        %7238 = vmatpush1.bf16.msra.mxu0 %v5659
        %7239 = vmatprep.subr.bf16.mxu0 0
        %7240 = vmatpush1.bf16.msra.mxu0 %v5660
        %7241 = vmatprep.subr.bf16.mxu0 0
        %7242 = vmatpush1.bf16.msra.mxu0 %v5661
        %7243 = vmatprep.subr.bf16.mxu0 0
        %7244 = vmatpush1.bf16.msra.mxu0 %v5662
        %7245 = vmatprep.subr.bf16.mxu0 0
        %7246 = vmatpush1.bf16.msra.mxu0 %v5663
        %7247 = vmatprep.subr.bf16.mxu0 0
        %7248 = vmatpush1.bf16.msra.mxu0 %v5664
        %7249 = vmatprep.mubr.bf16.mxu0 %v848
        %7250 = vmatmul.mubr.bf16.gmra.mrb[0].mxu0 %v847
        %v7251 = vpop.f32.mrb[0].mxu0
        %v7252 = vadd.f32 0.0, %v7251
        %v7253 = vpop.f32.mrb[0].mxu0
        %v7254 = vpop.f32.mrb[0].mxu0
        %v7255 = vpop.f32.mrb[0].mxu0
        %7256 = vdwg.mxu0
        %7257 = vmatprep.subr.bf16.mxu0 0
        %7258 = vmatpush1.bf16.msra.mxu0 %v5665
        %7259 = vmatprep.subr.bf16.mxu0 0
        %7260 = vmatpush1.bf16.msra.mxu0 %v5666
        %7261 = vmatprep.subr.bf16.mxu0 0
        %7262 = vmatpush1.bf16.msra.mxu0 %v5667
        %7263 = vmatprep.subr.bf16.mxu0 0
        %7264 = vmatpush1.bf16.msra.mxu0 %v5668
        %7265 = vmatprep.subr.bf16.mxu0 0
        %7266 = vmatpush1.bf16.msra.mxu0 %v5669
        %7267 = vmatprep.subr.bf16.mxu0 0
        %7268 = vmatpush1.bf16.msra.mxu0 %v5670
        %7269 = vmatprep.subr.bf16.mxu0 0
        %7270 = vmatpush1.bf16.msra.mxu0 %v5671
        %7271 = vmatprep.subr.bf16.mxu0 0
        %7272 = vmatpush1.bf16.msra.mxu0 %v5672
        %7273 = vmatprep.subr.bf16.mxu0 0
        %7274 = vmatpush1.bf16.msra.mxu0 %v5673
        %7275 = vmatprep.subr.bf16.mxu0 0
        %7276 = vmatpush1.bf16.msra.mxu0 %v5674
        %7277 = vmatprep.subr.bf16.mxu0 0
        %7278 = vmatpush1.bf16.msra.mxu0 %v5675
        %7279 = vmatprep.subr.bf16.mxu0 0
        %7280 = vmatpush1.bf16.msra.mxu0 %v5676
        %7281 = vmatprep.subr.bf16.mxu0 0
        %7282 = vmatpush1.bf16.msra.mxu0 %v5677
        %7283 = vmatprep.subr.bf16.mxu0 0
        %7284 = vmatpush1.bf16.msra.mxu0 %v5678
        %7285 = vmatprep.subr.bf16.mxu0 0
        %7286 = vmatpush1.bf16.msra.mxu0 %v5679
        %7287 = vmatprep.subr.bf16.mxu0 0
        %7288 = vmatpush1.bf16.msra.mxu0 %v5680
        %7289 = vmatprep.mubr.bf16.mxu0 %v850
        %7290 = vmatmul.mubr.bf16.gmra.mrb[0].mxu0 %v849
        %v7291 = vpop.f32.mrb[0].mxu0
        %v7292 = vadd.f32 %v7252, %v7291
        %v7293 = vpop.f32.mrb[0].mxu0
        %v7294 = vpop.f32.mrb[0].mxu0
        %v7295 = vpop.f32.mrb[0].mxu0
        %7296 = vdwg.mxu0
        %7297 = vmatprep.subr.bf16.mxu0 0
        %7298 = vmatpush1.bf16.msra.mxu0 %v5681
        %7299 = vmatprep.subr.bf16.mxu0 0
        %7300 = vmatpush1.bf16.msra.mxu0 %v5682
        %7301 = vmatprep.subr.bf16.mxu0 0
        %7302 = vmatpush1.bf16.msra.mxu0 %v5683
        %7303 = vmatprep.subr.bf16.mxu0 0
        %7304 = vmatpush1.bf16.msra.mxu0 %v5684
        %7305 = vmatprep.subr.bf16.mxu0 0
        %7306 = vmatpush1.bf16.msra.mxu0 %v5685
        %7307 = vmatprep.subr.bf16.mxu0 0
        %7308 = vmatpush1.bf16.msra.mxu0 %v5686
        %7309 = vmatprep.subr.bf16.mxu0 0
        %7310 = vmatpush1.bf16.msra.mxu0 %v5687
        %7311 = vmatprep.subr.bf16.mxu0 0
        %7312 = vmatpush1.bf16.msra.mxu0 %v5688
        %7313 = vmatprep.subr.bf16.mxu0 0
        %7314 = vmatpush1.bf16.msra.mxu0 %v5689
        %7315 = vmatprep.subr.bf16.mxu0 0
        %7316 = vmatpush1.bf16.msra.mxu0 %v5690
        %7317 = vmatprep.subr.bf16.mxu0 0
        %7318 = vmatpush1.bf16.msra.mxu0 %v5691
        %7319 = vmatprep.subr.bf16.mxu0 0
        %7320 = vmatpush1.bf16.msra.mxu0 %v5692
        %7321 = vmatprep.subr.bf16.mxu0 0
        %7322 = vmatpush1.bf16.msra.mxu0 %v5693
        %7323 = vmatprep.subr.bf16.mxu0 0
        %7324 = vmatpush1.bf16.msra.mxu0 %v5694
        %7325 = vmatprep.subr.bf16.mxu0 0
        %7326 = vmatpush1.bf16.msra.mxu0 %v5695
        %7327 = vmatprep.subr.bf16.mxu0 0
        %7328 = vmatpush1.bf16.msra.mxu0 %v5696
        %7329 = vmatprep.mubr.bf16.mxu0 %v852
        %7330 = vmatmul.mubr.bf16.gmra.mrb[0].mxu0 %v851
        %v7331 = vpop.f32.mrb[0].mxu0
        %v7332 = vadd.f32 %v7292, %v7331
        %v7333 = vpop.f32.mrb[0].mxu0
        %v7334 = vpop.f32.mrb[0].mxu0
        %v7335 = vpop.f32.mrb[0].mxu0
        %7336 = vdwg.mxu0
        %7337 = vmatprep.subr.bf16.mxu0 0
        %7338 = vmatpush1.bf16.msra.mxu0 %v5697
        %7339 = vmatprep.subr.bf16.mxu0 0
        %7340 = vmatpush1.bf16.msra.mxu0 %v5698
        %7341 = vmatprep.subr.bf16.mxu0 0
        %7342 = vmatpush1.bf16.msra.mxu0 %v5699
        %7343 = vmatprep.subr.bf16.mxu0 0
        %7344 = vmatpush1.bf16.msra.mxu0 %v5700
        %7345 = vmatprep.subr.bf16.mxu0 0
        %7346 = vmatpush1.bf16.msra.mxu0 %v5701
        %7347 = vmatprep.subr.bf16.mxu0 0
        %7348 = vmatpush1.bf16.msra.mxu0 %v5702
        %7349 = vmatprep.subr.bf16.mxu0 0
        %7350 = vmatpush1.bf16.msra.mxu0 %v5703
        %7351 = vmatprep.subr.bf16.mxu0 0
        %7352 = vmatpush1.bf16.msra.mxu0 %v5704
        %7353 = vmatprep.subr.bf16.mxu0 0
        %7354 = vmatpush1.bf16.msra.mxu0 %v5705
        %7355 = vmatprep.subr.bf16.mxu0 0
        %7356 = vmatpush1.bf16.msra.mxu0 %v5706
        %7357 = vmatprep.subr.bf16.mxu0 0
        %7358 = vmatpush1.bf16.msra.mxu0 %v5707
        %7359 = vmatprep.subr.bf16.mxu0 0
        %7360 = vmatpush1.bf16.msra.mxu0 %v5708
        %7361 = vmatprep.subr.bf16.mxu0 0
        %7362 = vmatpush1.bf16.msra.mxu0 %v5709
        %7363 = vmatprep.subr.bf16.mxu0 0
        %7364 = vmatpush1.bf16.msra.mxu0 %v5710
        %7365 = vmatprep.subr.bf16.mxu0 0
        %7366 = vmatpush1.bf16.msra.mxu0 %v5711
        %7367 = vmatprep.subr.bf16.mxu0 0
        %7368 = vmatpush1.bf16.msra.mxu0 %v5712
        %7369 = vmatprep.mubr.bf16.mxu0 %v854
        %7370 = vmatmul.mubr.bf16.gmra.mrb[0].mxu0 %v853
        %v7371 = vpop.f32.mrb[0].mxu0
        %v7372 = vadd.f32 %v7332, %v7371
        %v7373 = vpop.f32.mrb[0].mxu0
        %v7374 = vpop.f32.mrb[0].mxu0
        %v7375 = vpop.f32.mrb[0].mxu0
        %7376 = vdwg.mxu0
        %7377 = vmatprep.subr.bf16.mxu0 0
        %7378 = vmatpush1.bf16.msra.mxu0 %v5713
        %7379 = vmatprep.subr.bf16.mxu0 0
        %7380 = vmatpush1.bf16.msra.mxu0 %v5714
        %7381 = vmatprep.subr.bf16.mxu0 0
        %7382 = vmatpush1.bf16.msra.mxu0 %v5715
        %7383 = vmatprep.subr.bf16.mxu0 0
        %7384 = vmatpush1.bf16.msra.mxu0 %v5716
        %7385 = vmatprep.subr.bf16.mxu0 0
        %7386 = vmatpush1.bf16.msra.mxu0 %v5717
        %7387 = vmatprep.subr.bf16.mxu0 0
        %7388 = vmatpush1.bf16.msra.mxu0 %v5718
        %7389 = vmatprep.subr.bf16.mxu0 0
        %7390 = vmatpush1.bf16.msra.mxu0 %v5719
        %7391 = vmatprep.subr.bf16.mxu0 0
        %7392 = vmatpush1.bf16.msra.mxu0 %v5720
        %7393 = vmatprep.subr.bf16.mxu0 0
        %7394 = vmatpush1.bf16.msra.mxu0 %v5721
        %7395 = vmatprep.subr.bf16.mxu0 0
        %7396 = vmatpush1.bf16.msra.mxu0 %v5722
        %7397 = vmatprep.subr.bf16.mxu0 0
        %7398 = vmatpush1.bf16.msra.mxu0 %v5723
        %7399 = vmatprep.subr.bf16.mxu0 0
        %7400 = vmatpush1.bf16.msra.mxu0 %v5724
        %7401 = vmatprep.subr.bf16.mxu0 0
        %7402 = vmatpush1.bf16.msra.mxu0 %v5725
        %7403 = vmatprep.subr.bf16.mxu0 0
        %7404 = vmatpush1.bf16.msra.mxu0 %v5726
        %7405 = vmatprep.subr.bf16.mxu0 0
        %7406 = vmatpush1.bf16.msra.mxu0 %v5727
        %7407 = vmatprep.subr.bf16.mxu0 0
        %7408 = vmatpush1.bf16.msra.mxu0 %v5728
        %7409 = vmatprep.mubr.bf16.mxu0 %v856
        %7410 = vmatmul.mubr.bf16.gmra.mrb[0].mxu0 %v855
        %v7411 = vpop.f32.mrb[0].mxu0
        %v7412 = vadd.f32 %v7372, %v7411
        %v7413 = vpop.f32.mrb[0].mxu0
        %v7414 = vpop.f32.mrb[0].mxu0
        %v7415 = vpop.f32.mrb[0].mxu0
        %7416 = vdwg.mxu0
        %7417 = vmatprep.subr.bf16.mxu0 0
        %7418 = vmatpush1.bf16.msra.mxu0 %v5729
        %7419 = vmatprep.subr.bf16.mxu0 0
        %7420 = vmatpush1.bf16.msra.mxu0 %v5730
        %7421 = vmatprep.subr.bf16.mxu0 0
        %7422 = vmatpush1.bf16.msra.mxu0 %v5731
        %7423 = vmatprep.subr.bf16.mxu0 0
        %7424 = vmatpush1.bf16.msra.mxu0 %v5732
        %7425 = vmatprep.subr.bf16.mxu0 0
        %7426 = vmatpush1.bf16.msra.mxu0 %v5733
        %7427 = vmatprep.subr.bf16.mxu0 0
        %7428 = vmatpush1.bf16.msra.mxu0 %v5734
        %7429 = vmatprep.subr.bf16.mxu0 0
        %7430 = vmatpush1.bf16.msra.mxu0 %v5735
        %7431 = vmatprep.subr.bf16.mxu0 0
        %7432 = vmatpush1.bf16.msra.mxu0 %v5736
        %7433 = vmatprep.subr.bf16.mxu0 0
        %7434 = vmatpush1.bf16.msra.mxu0 %v5737
        %7435 = vmatprep.subr.bf16.mxu0 0
        %7436 = vmatpush1.bf16.msra.mxu0 %v5738
        %7437 = vmatprep.subr.bf16.mxu0 0
        %7438 = vmatpush1.bf16.msra.mxu0 %v5739
        %7439 = vmatprep.subr.bf16.mxu0 0
        %7440 = vmatpush1.bf16.msra.mxu0 %v5740
        %7441 = vmatprep.subr.bf16.mxu0 0
        %7442 = vmatpush1.bf16.msra.mxu0 %v5741
        %7443 = vmatprep.subr.bf16.mxu0 0
        %7444 = vmatpush1.bf16.msra.mxu0 %v5742
        %7445 = vmatprep.subr.bf16.mxu0 0
        %7446 = vmatpush1.bf16.msra.mxu0 %v5743
        %7447 = vmatprep.subr.bf16.mxu0 0
        %7448 = vmatpush1.bf16.msra.mxu0 %v5744
        %7449 = vmatprep.mubr.bf16.mxu0 %v858
        %7450 = vmatmul.mubr.bf16.gmra.mrb[0].mxu0 %v857
        %v7451 = vpop.f32.mrb[0].mxu0
        %v7452 = vadd.f32 %v7412, %v7451
        %v7453 = vpop.f32.mrb[0].mxu0
        %v7454 = vpop.f32.mrb[0].mxu0
        %v7455 = vpop.f32.mrb[0].mxu0
        %7456 = vdwg.mxu0
        %7457 = vmatprep.subr.bf16.mxu0 0
        %7458 = vmatpush1.bf16.msra.mxu0 %v5745
        %7459 = vmatprep.subr.bf16.mxu0 0
        %7460 = vmatpush1.bf16.msra.mxu0 %v5746
        %7461 = vmatprep.subr.bf16.mxu0 0
        %7462 = vmatpush1.bf16.msra.mxu0 %v5747
        %7463 = vmatprep.subr.bf16.mxu0 0
        %7464 = vmatpush1.bf16.msra.mxu0 %v5748
        %7465 = vmatprep.subr.bf16.mxu0 0
        %7466 = vmatpush1.bf16.msra.mxu0 %v5749
        %7467 = vmatprep.subr.bf16.mxu0 0
        %7468 = vmatpush1.bf16.msra.mxu0 %v5750
        %7469 = vmatprep.subr.bf16.mxu0 0
        %7470 = vmatpush1.bf16.msra.mxu0 %v5751
        %7471 = vmatprep.subr.bf16.mxu0 0
        %7472 = vmatpush1.bf16.msra.mxu0 %v5752
        %7473 = vmatprep.subr.bf16.mxu0 0
        %7474 = vmatpush1.bf16.msra.mxu0 %v5753
        %7475 = vmatprep.subr.bf16.mxu0 0
        %7476 = vmatpush1.bf16.msra.mxu0 %v5754
        %7477 = vmatprep.subr.bf16.mxu0 0
        %7478 = vmatpush1.bf16.msra.mxu0 %v5755
        %7479 = vmatprep.subr.bf16.mxu0 0
        %7480 = vmatpush1.bf16.msra.mxu0 %v5756
        %7481 = vmatprep.subr.bf16.mxu0 0
        %7482 = vmatpush1.bf16.msra.mxu0 %v5757
        %7483 = vmatprep.subr.bf16.mxu0 0
        %7484 = vmatpush1.bf16.msra.mxu0 %v5758
        %7485 = vmatprep.subr.bf16.mxu0 0
        %7486 = vmatpush1.bf16.msra.mxu0 %v5759
        %7487 = vmatprep.subr.bf16.mxu0 0
        %7488 = vmatpush1.bf16.msra.mxu0 %v5760
        %7489 = vmatprep.mubr.bf16.mxu0 %v860
        %7490 = vmatmul.mubr.bf16.gmra.mrb[0].mxu0 %v859
        %v7491 = vpop.f32.mrb[0].mxu0
        %v7492 = vadd.f32 %v7452, %v7491
        %v7493 = vpop.f32.mrb[0].mxu0
        %v7494 = vpop.f32.mrb[0].mxu0
        %v7495 = vpop.f32.mrb[0].mxu0
        %7496 = vdwg.mxu0
        %7497 = vmatprep.subr.bf16.mxu0 0
        %7498 = vmatpush1.bf16.msra.mxu0 %v5761
        %7499 = vmatprep.subr.bf16.mxu0 0
        %7500 = vmatpush1.bf16.msra.mxu0 %v5762
        %7501 = vmatprep.subr.bf16.mxu0 0
        %7502 = vmatpush1.bf16.msra.mxu0 %v5763
        %7503 = vmatprep.subr.bf16.mxu0 0
        %7504 = vmatpush1.bf16.msra.mxu0 %v5764
        %7505 = vmatprep.subr.bf16.mxu0 0
        %7506 = vmatpush1.bf16.msra.mxu0 %v5765
        %7507 = vmatprep.subr.bf16.mxu0 0
        %7508 = vmatpush1.bf16.msra.mxu0 %v5766
        %7509 = vmatprep.subr.bf16.mxu0 0
        %7510 = vmatpush1.bf16.msra.mxu0 %v5767
        %7511 = vmatprep.subr.bf16.mxu0 0
        %7512 = vmatpush1.bf16.msra.mxu0 %v5768
        %7513 = vmatprep.subr.bf16.mxu0 0
        %7514 = vmatpush1.bf16.msra.mxu0 %v5769
        %7515 = vmatprep.subr.bf16.mxu0 0
        %7516 = vmatpush1.bf16.msra.mxu0 %v5770
        %7517 = vmatprep.subr.bf16.mxu0 0
        %7518 = vmatpush1.bf16.msra.mxu0 %v5771
        %7519 = vmatprep.subr.bf16.mxu0 0
        %7520 = vmatpush1.bf16.msra.mxu0 %v5772
        %7521 = vmatprep.subr.bf16.mxu0 0
        %7522 = vmatpush1.bf16.msra.mxu0 %v5773
        %7523 = vmatprep.subr.bf16.mxu0 0
        %7524 = vmatpush1.bf16.msra.mxu0 %v5774
        %7525 = vmatprep.subr.bf16.mxu0 0
        %7526 = vmatpush1.bf16.msra.mxu0 %v5775
        %7527 = vmatprep.subr.bf16.mxu0 0
        %7528 = vmatpush1.bf16.msra.mxu0 %v5776
        %7529 = vmatprep.mubr.bf16.mxu0 %v862
        %7530 = vmatmul.mubr.bf16.gmra.mrb[0].mxu0 %v861
        %v7531 = vpop.f32.mrb[0].mxu0
        %v7532 = vadd.f32 %v7492, %v7531
        %v7533 = vpop.f32.mrb[0].mxu0
        %v7534 = vpop.f32.mrb[0].mxu0
        %v7535 = vpop.f32.mrb[0].mxu0
        %7536 = vdwg.mxu0
        %7537 = vmatprep.subr.bf16.mxu0 0
        %7538 = vmatpush1.bf16.msra.mxu0 %v5777
        %7539 = vmatprep.subr.bf16.mxu0 0
        %7540 = vmatpush1.bf16.msra.mxu0 %v5778
        %7541 = vmatprep.subr.bf16.mxu0 0
        %7542 = vmatpush1.bf16.msra.mxu0 %v5779
        %7543 = vmatprep.subr.bf16.mxu0 0
        %7544 = vmatpush1.bf16.msra.mxu0 %v5780
        %7545 = vmatprep.subr.bf16.mxu0 0
        %7546 = vmatpush1.bf16.msra.mxu0 %v5781
        %7547 = vmatprep.subr.bf16.mxu0 0
        %7548 = vmatpush1.bf16.msra.mxu0 %v5782
        %7549 = vmatprep.subr.bf16.mxu0 0
        %7550 = vmatpush1.bf16.msra.mxu0 %v5783
        %7551 = vmatprep.subr.bf16.mxu0 0
        %7552 = vmatpush1.bf16.msra.mxu0 %v5784
        %7553 = vmatprep.subr.bf16.mxu0 0
        %7554 = vmatpush1.bf16.msra.mxu0 %v5785
        %7555 = vmatprep.subr.bf16.mxu0 0
        %7556 = vmatpush1.bf16.msra.mxu0 %v5786
        %7557 = vmatprep.subr.bf16.mxu0 0
        %7558 = vmatpush1.bf16.msra.mxu0 %v5787
        %7559 = vmatprep.subr.bf16.mxu0 0
        %7560 = vmatpush1.bf16.msra.mxu0 %v5788
        %7561 = vmatprep.subr.bf16.mxu0 0
        %7562 = vmatpush1.bf16.msra.mxu0 %v5789
        %7563 = vmatprep.subr.bf16.mxu0 0
        %7564 = vmatpush1.bf16.msra.mxu0 %v5790
        %7565 = vmatprep.subr.bf16.mxu0 0
        %7566 = vmatpush1.bf16.msra.mxu0 %v5791
        %7567 = vmatprep.subr.bf16.mxu0 0
        %7568 = vmatpush1.bf16.msra.mxu0 %v5792
        %7569 = vmatprep.mubr.bf16.mxu0 %v864
        %7570 = vmatmul.mubr.bf16.gmra.mrb[0].mxu0 %v863
        %v7571 = vpop.f32.mrb[0].mxu0
        %v7572 = vadd.f32 %v7532, %v7571
        %v7573 = vpop.f32.mrb[0].mxu0
        %v7574 = vpop.f32.mrb[0].mxu0
        %v7575 = vpop.f32.mrb[0].mxu0
        %7576 = vdwg.mxu0
        %7577 = vmatprep.subr.bf16.mxu0 0
        %7578 = vmatpush1.bf16.msra.mxu0 %v5793
        %7579 = vmatprep.subr.bf16.mxu0 0
        %7580 = vmatpush1.bf16.msra.mxu0 %v5794
        %7581 = vmatprep.subr.bf16.mxu0 0
        %7582 = vmatpush1.bf16.msra.mxu0 %v5795
        %7583 = vmatprep.subr.bf16.mxu0 0
        %7584 = vmatpush1.bf16.msra.mxu0 %v5796
        %7585 = vmatprep.subr.bf16.mxu0 0
        %7586 = vmatpush1.bf16.msra.mxu0 %v5797
        %7587 = vmatprep.subr.bf16.mxu0 0
        %7588 = vmatpush1.bf16.msra.mxu0 %v5798
        %7589 = vmatprep.subr.bf16.mxu0 0
        %7590 = vmatpush1.bf16.msra.mxu0 %v5799
        %7591 = vmatprep.subr.bf16.mxu0 0
        %7592 = vmatpush1.bf16.msra.mxu0 %v5800
        %7593 = vmatprep.subr.bf16.mxu0 0
        %7594 = vmatpush1.bf16.msra.mxu0 %v5801
        %7595 = vmatprep.subr.bf16.mxu0 0
        %7596 = vmatpush1.bf16.msra.mxu0 %v5802
        %7597 = vmatprep.subr.bf16.mxu0 0
        %7598 = vmatpush1.bf16.msra.mxu0 %v5803
        %7599 = vmatprep.subr.bf16.mxu0 0
        %7600 = vmatpush1.bf16.msra.mxu0 %v5804
        %7601 = vmatprep.subr.bf16.mxu0 0
        %7602 = vmatpush1.bf16.msra.mxu0 %v5805
        %7603 = vmatprep.subr.bf16.mxu0 0
        %7604 = vmatpush1.bf16.msra.mxu0 %v5806
        %7605 = vmatprep.subr.bf16.mxu0 0
        %7606 = vmatpush1.bf16.msra.mxu0 %v5807
        %7607 = vmatprep.subr.bf16.mxu0 0
        %7608 = vmatpush1.bf16.msra.mxu0 %v5808
        %7609 = vmatprep.mubr.bf16.mxu0 %v866
        %7610 = vmatmul.mubr.bf16.gmra.mrb[0].mxu0 %v865
        %v7611 = vpop.f32.mrb[0].mxu0
        %v7612 = vadd.f32 %v7572, %v7611
        %v7613 = vpop.f32.mrb[0].mxu0
        %v7614 = vpop.f32.mrb[0].mxu0
        %v7615 = vpop.f32.mrb[0].mxu0
        %7616 = vdwg.mxu0
        %7617 = vmatprep.subr.bf16.mxu0 0
        %7618 = vmatpush1.bf16.msra.mxu0 %v5809
        %7619 = vmatprep.subr.bf16.mxu0 0
        %7620 = vmatpush1.bf16.msra.mxu0 %v5810
        %7621 = vmatprep.subr.bf16.mxu0 0
        %7622 = vmatpush1.bf16.msra.mxu0 %v5811
        %7623 = vmatprep.subr.bf16.mxu0 0
        %7624 = vmatpush1.bf16.msra.mxu0 %v5812
        %7625 = vmatprep.subr.bf16.mxu0 0
        %7626 = vmatpush1.bf16.msra.mxu0 %v5813
        %7627 = vmatprep.subr.bf16.mxu0 0
        %7628 = vmatpush1.bf16.msra.mxu0 %v5814
        %7629 = vmatprep.subr.bf16.mxu0 0
        %7630 = vmatpush1.bf16.msra.mxu0 %v5815
        %7631 = vmatprep.subr.bf16.mxu0 0
        %7632 = vmatpush1.bf16.msra.mxu0 %v5816
        %7633 = vmatprep.subr.bf16.mxu0 0
        %7634 = vmatpush1.bf16.msra.mxu0 %v5817
        %7635 = vmatprep.subr.bf16.mxu0 0
        %7636 = vmatpush1.bf16.msra.mxu0 %v5818
        %7637 = vmatprep.subr.bf16.mxu0 0
        %7638 = vmatpush1.bf16.msra.mxu0 %v5819
        %7639 = vmatprep.subr.bf16.mxu0 0
        %7640 = vmatpush1.bf16.msra.mxu0 %v5820
        %7641 = vmatprep.subr.bf16.mxu0 0
        %7642 = vmatpush1.bf16.msra.mxu0 %v5821
        %7643 = vmatprep.subr.bf16.mxu0 0
        %7644 = vmatpush1.bf16.msra.mxu0 %v5822
        %7645 = vmatprep.subr.bf16.mxu0 0
        %7646 = vmatpush1.bf16.msra.mxu0 %v5823
        %7647 = vmatprep.subr.bf16.mxu0 0
        %7648 = vmatpush1.bf16.msra.mxu0 %v5824
        %7649 = vmatprep.mubr.bf16.mxu0 %v868
        %7650 = vmatmul.mubr.bf16.gmra.mrb[0].mxu0 %v867
        %v7651 = vpop.f32.mrb[0].mxu0
        %v7652 = vadd.f32 %v7612, %v7651
        %v7653 = vpop.f32.mrb[0].mxu0
        %v7654 = vpop.f32.mrb[0].mxu0
        %v7655 = vpop.f32.mrb[0].mxu0
        %7656 = vdwg.mxu0
        %7657 = vmatprep.subr.bf16.mxu0 0
        %7658 = vmatpush1.bf16.msra.mxu0 %v5825
        %7659 = vmatprep.subr.bf16.mxu0 0
        %7660 = vmatpush1.bf16.msra.mxu0 %v5826
        %7661 = vmatprep.subr.bf16.mxu0 0
        %7662 = vmatpush1.bf16.msra.mxu0 %v5827
        %7663 = vmatprep.subr.bf16.mxu0 0
        %7664 = vmatpush1.bf16.msra.mxu0 %v5828
        %7665 = vmatprep.subr.bf16.mxu0 0
        %7666 = vmatpush1.bf16.msra.mxu0 %v5829
        %7667 = vmatprep.subr.bf16.mxu0 0
        %7668 = vmatpush1.bf16.msra.mxu0 %v5830
        %7669 = vmatprep.subr.bf16.mxu0 0
        %7670 = vmatpush1.bf16.msra.mxu0 %v5831
        %7671 = vmatprep.subr.bf16.mxu0 0
        %7672 = vmatpush1.bf16.msra.mxu0 %v5832
        %7673 = vmatprep.subr.bf16.mxu0 0
        %7674 = vmatpush1.bf16.msra.mxu0 %v5833
        %7675 = vmatprep.subr.bf16.mxu0 0
        %7676 = vmatpush1.bf16.msra.mxu0 %v5834
        %7677 = vmatprep.subr.bf16.mxu0 0
        %7678 = vmatpush1.bf16.msra.mxu0 %v5835
        %7679 = vmatprep.subr.bf16.mxu0 0
        %7680 = vmatpush1.bf16.msra.mxu0 %v5836
        %7681 = vmatprep.subr.bf16.mxu0 0
        %7682 = vmatpush1.bf16.msra.mxu0 %v5837
        %7683 = vmatprep.subr.bf16.mxu0 0
        %7684 = vmatpush1.bf16.msra.mxu0 %v5838
        %7685 = vmatprep.subr.bf16.mxu0 0
        %7686 = vmatpush1.bf16.msra.mxu0 %v5839
        %7687 = vmatprep.subr.bf16.mxu0 0
        %7688 = vmatpush1.bf16.msra.mxu0 %v5840
        %7689 = vmatprep.mubr.bf16.mxu0 %v870
        %7690 = vmatmul.mubr.bf16.gmra.mrb[0].mxu0 %v869
        %v7691 = vpop.f32.mrb[0].mxu0
        %v7692 = vadd.f32 %v7652, %v7691
        %v7693 = vpop.f32.mrb[0].mxu0
        %v7694 = vpop.f32.mrb[0].mxu0
        %v7695 = vpop.f32.mrb[0].mxu0
        %7696 = vdwg.mxu0
        %7697 = vmatprep.subr.bf16.mxu0 0
        %7698 = vmatpush1.bf16.msra.mxu0 %v5841
        %7699 = vmatprep.subr.bf16.mxu0 0
        %7700 = vmatpush1.bf16.msra.mxu0 %v5842
        %7701 = vmatprep.subr.bf16.mxu0 0
        %7702 = vmatpush1.bf16.msra.mxu0 %v5843
        %7703 = vmatprep.subr.bf16.mxu0 0
        %7704 = vmatpush1.bf16.msra.mxu0 %v5844
        %7705 = vmatprep.subr.bf16.mxu0 0
        %7706 = vmatpush1.bf16.msra.mxu0 %v5845
        %7707 = vmatprep.subr.bf16.mxu0 0
        %7708 = vmatpush1.bf16.msra.mxu0 %v5846
        %7709 = vmatprep.subr.bf16.mxu0 0
        %7710 = vmatpush1.bf16.msra.mxu0 %v5847
        %7711 = vmatprep.subr.bf16.mxu0 0
        %7712 = vmatpush1.bf16.msra.mxu0 %v5848
        %7713 = vmatprep.subr.bf16.mxu0 0
        %7714 = vmatpush1.bf16.msra.mxu0 %v5849
        %7715 = vmatprep.subr.bf16.mxu0 0
        %7716 = vmatpush1.bf16.msra.mxu0 %v5850
        %7717 = vmatprep.subr.bf16.mxu0 0
        %7718 = vmatpush1.bf16.msra.mxu0 %v5851
        %7719 = vmatprep.subr.bf16.mxu0 0
        %7720 = vmatpush1.bf16.msra.mxu0 %v5852
        %7721 = vmatprep.subr.bf16.mxu0 0
        %7722 = vmatpush1.bf16.msra.mxu0 %v5853
        %7723 = vmatprep.subr.bf16.mxu0 0
        %7724 = vmatpush1.bf16.msra.mxu0 %v5854
        %7725 = vmatprep.subr.bf16.mxu0 0
        %7726 = vmatpush1.bf16.msra.mxu0 %v5855
        %7727 = vmatprep.subr.bf16.mxu0 0
        %7728 = vmatpush1.bf16.msra.mxu0 %v5856
        %7729 = vmatprep.mubr.bf16.mxu0 %v872
        %7730 = vmatmul.mubr.bf16.gmra.mrb[0].mxu0 %v871
        %v7731 = vpop.f32.mrb[0].mxu0
        %v7732 = vadd.f32 %v7692, %v7731
        %v7733 = vpop.f32.mrb[0].mxu0
        %v7734 = vpop.f32.mrb[0].mxu0
        %v7735 = vpop.f32.mrb[0].mxu0
        %7736 = vdwg.mxu0
        %7737 = vmatprep.subr.bf16.mxu0 0
        %7738 = vmatpush1.bf16.msra.mxu0 %v5857
        %7739 = vmatprep.subr.bf16.mxu0 0
        %7740 = vmatpush1.bf16.msra.mxu0 %v5858
        %7741 = vmatprep.subr.bf16.mxu0 0
        %7742 = vmatpush1.bf16.msra.mxu0 %v5859
        %7743 = vmatprep.subr.bf16.mxu0 0
        %7744 = vmatpush1.bf16.msra.mxu0 %v5860
        %7745 = vmatprep.subr.bf16.mxu0 0
        %7746 = vmatpush1.bf16.msra.mxu0 %v5861
        %7747 = vmatprep.subr.bf16.mxu0 0
        %7748 = vmatpush1.bf16.msra.mxu0 %v5862
        %7749 = vmatprep.subr.bf16.mxu0 0
        %7750 = vmatpush1.bf16.msra.mxu0 %v5863
        %7751 = vmatprep.subr.bf16.mxu0 0
        %7752 = vmatpush1.bf16.msra.mxu0 %v5864
        %7753 = vmatprep.subr.bf16.mxu0 0
        %7754 = vmatpush1.bf16.msra.mxu0 %v5865
        %7755 = vmatprep.subr.bf16.mxu0 0
        %7756 = vmatpush1.bf16.msra.mxu0 %v5866
        %7757 = vmatprep.subr.bf16.mxu0 0
        %7758 = vmatpush1.bf16.msra.mxu0 %v5867
        %7759 = vmatprep.subr.bf16.mxu0 0
        %7760 = vmatpush1.bf16.msra.mxu0 %v5868
        %7761 = vmatprep.subr.bf16.mxu0 0
        %7762 = vmatpush1.bf16.msra.mxu0 %v5869
        %7763 = vmatprep.subr.bf16.mxu0 0
        %7764 = vmatpush1.bf16.msra.mxu0 %v5870
        %7765 = vmatprep.subr.bf16.mxu0 0
        %7766 = vmatpush1.bf16.msra.mxu0 %v5871
        %7767 = vmatprep.subr.bf16.mxu0 0
        %7768 = vmatpush1.bf16.msra.mxu0 %v5872
        %7769 = vmatprep.mubr.bf16.mxu0 %v874
        %7770 = vmatmul.mubr.bf16.gmra.mrb[0].mxu0 %v873
        %v7771 = vpop.f32.mrb[0].mxu0
        %v7772 = vadd.f32 %v7732, %v7771
        %v7773 = vpop.f32.mrb[0].mxu0
        %v7774 = vpop.f32.mrb[0].mxu0
        %v7775 = vpop.f32.mrb[0].mxu0
        %7776 = vdwg.mxu0
        %7777 = vmatprep.subr.bf16.mxu0 0
        %7778 = vmatpush1.bf16.msra.mxu0 %v5873
        %7779 = vmatprep.subr.bf16.mxu0 0
        %7780 = vmatpush1.bf16.msra.mxu0 %v5874
        %7781 = vmatprep.subr.bf16.mxu0 0
        %7782 = vmatpush1.bf16.msra.mxu0 %v5875
        %7783 = vmatprep.subr.bf16.mxu0 0
        %7784 = vmatpush1.bf16.msra.mxu0 %v5876
        %7785 = vmatprep.subr.bf16.mxu0 0
        %7786 = vmatpush1.bf16.msra.mxu0 %v5877
        %7787 = vmatprep.subr.bf16.mxu0 0
        %7788 = vmatpush1.bf16.msra.mxu0 %v5878
        %7789 = vmatprep.subr.bf16.mxu0 0
        %7790 = vmatpush1.bf16.msra.mxu0 %v5879
        %7791 = vmatprep.subr.bf16.mxu0 0
        %7792 = vmatpush1.bf16.msra.mxu0 %v5880
        %7793 = vmatprep.subr.bf16.mxu0 0
        %7794 = vmatpush1.bf16.msra.mxu0 %v5881
        %7795 = vmatprep.subr.bf16.mxu0 0
        %7796 = vmatpush1.bf16.msra.mxu0 %v5882
        %7797 = vmatprep.subr.bf16.mxu0 0
        %7798 = vmatpush1.bf16.msra.mxu0 %v5883
        %7799 = vmatprep.subr.bf16.mxu0 0
        %7800 = vmatpush1.bf16.msra.mxu0 %v5884
        %7801 = vmatprep.subr.bf16.mxu0 0
        %7802 = vmatpush1.bf16.msra.mxu0 %v5885
        %7803 = vmatprep.subr.bf16.mxu0 0
        %7804 = vmatpush1.bf16.msra.mxu0 %v5886
        %7805 = vmatprep.subr.bf16.mxu0 0
        %7806 = vmatpush1.bf16.msra.mxu0 %v5887
        %7807 = vmatprep.subr.bf16.mxu0 0
        %7808 = vmatpush1.bf16.msra.mxu0 %v5888
        %7809 = vmatprep.mubr.bf16.mxu0 %v876
        %7810 = vmatmul.mubr.bf16.gmra.mrb[0].mxu0 %v875
        %v7811 = vpop.f32.mrb[0].mxu0
        %v7812 = vadd.f32 %v7772, %v7811
        %v7813 = vpop.f32.mrb[0].mxu0
        %v7814 = vpop.f32.mrb[0].mxu0
        %v7815 = vpop.f32.mrb[0].mxu0
        %7816 = vdwg.mxu0
        %7817 = vmatprep.subr.bf16.mxu0 0
        %7818 = vmatpush1.bf16.msra.mxu0 %v5889
        %7819 = vmatprep.subr.bf16.mxu0 0
        %7820 = vmatpush1.bf16.msra.mxu0 %v5890
        %7821 = vmatprep.subr.bf16.mxu0 0
        %7822 = vmatpush1.bf16.msra.mxu0 %v5891
        %7823 = vmatprep.subr.bf16.mxu0 0
        %7824 = vmatpush1.bf16.msra.mxu0 %v5892
        %7825 = vmatprep.subr.bf16.mxu0 0
        %7826 = vmatpush1.bf16.msra.mxu0 %v5893
        %7827 = vmatprep.subr.bf16.mxu0 0
        %7828 = vmatpush1.bf16.msra.mxu0 %v5894
        %7829 = vmatprep.subr.bf16.mxu0 0
        %7830 = vmatpush1.bf16.msra.mxu0 %v5895
        %7831 = vmatprep.subr.bf16.mxu0 0
        %7832 = vmatpush1.bf16.msra.mxu0 %v5896
        %7833 = vmatprep.subr.bf16.mxu0 0
        %7834 = vmatpush1.bf16.msra.mxu0 %v5897
        %7835 = vmatprep.subr.bf16.mxu0 0
        %7836 = vmatpush1.bf16.msra.mxu0 %v5898
        %7837 = vmatprep.subr.bf16.mxu0 0
        %7838 = vmatpush1.bf16.msra.mxu0 %v5899
        %7839 = vmatprep.subr.bf16.mxu0 0
        %7840 = vmatpush1.bf16.msra.mxu0 %v5900
        %7841 = vmatprep.subr.bf16.mxu0 0
        %7842 = vmatpush1.bf16.msra.mxu0 %v5901
        %7843 = vmatprep.subr.bf16.mxu0 0
        %7844 = vmatpush1.bf16.msra.mxu0 %v5902
        %7845 = vmatprep.subr.bf16.mxu0 0
        %7846 = vmatpush1.bf16.msra.mxu0 %v5903
        %7847 = vmatprep.subr.bf16.mxu0 0
        %7848 = vmatpush1.bf16.msra.mxu0 %v5904
        %7849 = vmatprep.mubr.bf16.mxu0 %v878
        %7850 = vmatmul.mubr.bf16.gmra.mrb[0].mxu0 %v877
        %v7851 = vpop.f32.mrb[0].mxu0
        %v7852 = vadd.f32 %v7812, %v7851
        %v7853 = vpop.f32.mrb[0].mxu0
        %v7854 = vpop.f32.mrb[0].mxu0
        %v7855 = vpop.f32.mrb[0].mxu0
        %7856 = vdwg.mxu0
        %7857 = vmatprep.subr.bf16.mxu0 0
        %7858 = vmatpush1.bf16.msra.mxu0 %v5905
        %7859 = vmatprep.subr.bf16.mxu0 0
        %7860 = vmatpush1.bf16.msra.mxu0 %v5906
        %7861 = vmatprep.subr.bf16.mxu0 0
        %7862 = vmatpush1.bf16.msra.mxu0 %v5907
        %7863 = vmatprep.subr.bf16.mxu0 0
        %7864 = vmatpush1.bf16.msra.mxu0 %v5908
        %7865 = vmatprep.subr.bf16.mxu0 0
        %7866 = vmatpush1.bf16.msra.mxu0 %v5909
        %7867 = vmatprep.subr.bf16.mxu0 0
        %7868 = vmatpush1.bf16.msra.mxu0 %v5910
        %7869 = vmatprep.subr.bf16.mxu0 0
        %7870 = vmatpush1.bf16.msra.mxu0 %v5911
        %7871 = vmatprep.subr.bf16.mxu0 0
        %7872 = vmatpush1.bf16.msra.mxu0 %v5912
        %7873 = vmatprep.subr.bf16.mxu0 0
        %7874 = vmatpush1.bf16.msra.mxu0 %v5913
        %7875 = vmatprep.subr.bf16.mxu0 0
        %7876 = vmatpush1.bf16.msra.mxu0 %v5914
        %7877 = vmatprep.subr.bf16.mxu0 0
        %7878 = vmatpush1.bf16.msra.mxu0 %v5915
        %7879 = vmatprep.subr.bf16.mxu0 0
        %7880 = vmatpush1.bf16.msra.mxu0 %v5916
        %7881 = vmatprep.subr.bf16.mxu0 0
        %7882 = vmatpush1.bf16.msra.mxu0 %v5917
        %7883 = vmatprep.subr.bf16.mxu0 0
        %7884 = vmatpush1.bf16.msra.mxu0 %v5918
        %7885 = vmatprep.subr.bf16.mxu0 0
        %7886 = vmatpush1.bf16.msra.mxu0 %v5919
        %7887 = vmatprep.subr.bf16.mxu0 0
        %7888 = vmatpush1.bf16.msra.mxu0 %v5920
        %7889 = vmatprep.mubr.bf16.mxu0 %v880
        %7890 = vmatmul.mubr.bf16.gmra.mrb[0].mxu0 %v879
        %v7891 = vpop.f32.mrb[0].mxu0
        %v7892 = vadd.f32 %v7852, %v7891
        %v7893 = vpop.f32.mrb[0].mxu0
        %v7894 = vpop.f32.mrb[0].mxu0
        %v7895 = vpop.f32.mrb[0].mxu0
        %7896 = vdwg.mxu0
        %7897 = vmatprep.subr.bf16.mxu0 0
        %7898 = vmatpush1.bf16.msra.mxu0 %v5921
        %7899 = vmatprep.subr.bf16.mxu0 0
        %7900 = vmatpush1.bf16.msra.mxu0 %v5922
        %7901 = vmatprep.subr.bf16.mxu0 0
        %7902 = vmatpush1.bf16.msra.mxu0 %v5923
        %7903 = vmatprep.subr.bf16.mxu0 0
        %7904 = vmatpush1.bf16.msra.mxu0 %v5924
        %7905 = vmatprep.subr.bf16.mxu0 0
        %7906 = vmatpush1.bf16.msra.mxu0 %v5925
        %7907 = vmatprep.subr.bf16.mxu0 0
        %7908 = vmatpush1.bf16.msra.mxu0 %v5926
        %7909 = vmatprep.subr.bf16.mxu0 0
        %7910 = vmatpush1.bf16.msra.mxu0 %v5927
        %7911 = vmatprep.subr.bf16.mxu0 0
        %7912 = vmatpush1.bf16.msra.mxu0 %v5928
        %7913 = vmatprep.subr.bf16.mxu0 0
        %7914 = vmatpush1.bf16.msra.mxu0 %v5929
        %7915 = vmatprep.subr.bf16.mxu0 0
        %7916 = vmatpush1.bf16.msra.mxu0 %v5930
        %7917 = vmatprep.subr.bf16.mxu0 0
        %7918 = vmatpush1.bf16.msra.mxu0 %v5931
        %7919 = vmatprep.subr.bf16.mxu0 0
        %7920 = vmatpush1.bf16.msra.mxu0 %v5932
        %7921 = vmatprep.subr.bf16.mxu0 0
        %7922 = vmatpush1.bf16.msra.mxu0 %v5933
        %7923 = vmatprep.subr.bf16.mxu0 0
        %7924 = vmatpush1.bf16.msra.mxu0 %v5934
        %7925 = vmatprep.subr.bf16.mxu0 0
        %7926 = vmatpush1.bf16.msra.mxu0 %v5935
        %7927 = vmatprep.subr.bf16.mxu0 0
        %7928 = vmatpush1.bf16.msra.mxu0 %v5936
        %7929 = vmatprep.mubr.bf16.mxu0 %v882
        %7930 = vmatmul.mubr.bf16.gmra.mrb[0].mxu0 %v881
        %v7931 = vpop.f32.mrb[0].mxu0
        %v7932 = vadd.f32 %v7892, %v7931
        %v7933 = vpop.f32.mrb[0].mxu0
        %v7934 = vpop.f32.mrb[0].mxu0
        %v7935 = vpop.f32.mrb[0].mxu0
        %7936 = vdwg.mxu0
        %7937 = vmatprep.subr.bf16.mxu0 0
        %7938 = vmatpush1.bf16.msra.mxu0 %v5937
        %7939 = vmatprep.subr.bf16.mxu0 0
        %7940 = vmatpush1.bf16.msra.mxu0 %v5938
        %7941 = vmatprep.subr.bf16.mxu0 0
        %7942 = vmatpush1.bf16.msra.mxu0 %v5939
        %7943 = vmatprep.subr.bf16.mxu0 0
        %7944 = vmatpush1.bf16.msra.mxu0 %v5940
        %7945 = vmatprep.subr.bf16.mxu0 0
        %7946 = vmatpush1.bf16.msra.mxu0 %v5941
        %7947 = vmatprep.subr.bf16.mxu0 0
        %7948 = vmatpush1.bf16.msra.mxu0 %v5942
        %7949 = vmatprep.subr.bf16.mxu0 0
        %7950 = vmatpush1.bf16.msra.mxu0 %v5943
        %7951 = vmatprep.subr.bf16.mxu0 0
        %7952 = vmatpush1.bf16.msra.mxu0 %v5944
        %7953 = vmatprep.subr.bf16.mxu0 0
        %7954 = vmatpush1.bf16.msra.mxu0 %v5945
        %7955 = vmatprep.subr.bf16.mxu0 0
        %7956 = vmatpush1.bf16.msra.mxu0 %v5946
        %7957 = vmatprep.subr.bf16.mxu0 0
        %7958 = vmatpush1.bf16.msra.mxu0 %v5947
        %7959 = vmatprep.subr.bf16.mxu0 0
        %7960 = vmatpush1.bf16.msra.mxu0 %v5948
        %7961 = vmatprep.subr.bf16.mxu0 0
        %7962 = vmatpush1.bf16.msra.mxu0 %v5949
        %7963 = vmatprep.subr.bf16.mxu0 0
        %7964 = vmatpush1.bf16.msra.mxu0 %v5950
        %7965 = vmatprep.subr.bf16.mxu0 0
        %7966 = vmatpush1.bf16.msra.mxu0 %v5951
        %7967 = vmatprep.subr.bf16.mxu0 0
        %7968 = vmatpush1.bf16.msra.mxu0 %v5952
        %7969 = vmatprep.mubr.bf16.mxu0 %v884
        %7970 = vmatmul.mubr.bf16.gmra.mrb[0].mxu0 %v883
        %v7971 = vpop.f32.mrb[0].mxu0
        %v7972 = vadd.f32 %v7932, %v7971
        %v7973 = vpop.f32.mrb[0].mxu0
        %v7974 = vpop.f32.mrb[0].mxu0
        %v7975 = vpop.f32.mrb[0].mxu0
        %7976 = vdwg.mxu0
        %7977 = vmatprep.subr.bf16.mxu0 0
        %7978 = vmatpush1.bf16.msra.mxu0 %v5953
        %7979 = vmatprep.subr.bf16.mxu0 0
        %7980 = vmatpush1.bf16.msra.mxu0 %v5954
        %7981 = vmatprep.subr.bf16.mxu0 0
        %7982 = vmatpush1.bf16.msra.mxu0 %v5955
        %7983 = vmatprep.subr.bf16.mxu0 0
        %7984 = vmatpush1.bf16.msra.mxu0 %v5956
        %7985 = vmatprep.subr.bf16.mxu0 0
        %7986 = vmatpush1.bf16.msra.mxu0 %v5957
        %7987 = vmatprep.subr.bf16.mxu0 0
        %7988 = vmatpush1.bf16.msra.mxu0 %v5958
        %7989 = vmatprep.subr.bf16.mxu0 0
        %7990 = vmatpush1.bf16.msra.mxu0 %v5959
        %7991 = vmatprep.subr.bf16.mxu0 0
        %7992 = vmatpush1.bf16.msra.mxu0 %v5960
        %7993 = vmatprep.subr.bf16.mxu0 0
        %7994 = vmatpush1.bf16.msra.mxu0 %v5961
        %7995 = vmatprep.subr.bf16.mxu0 0
        %7996 = vmatpush1.bf16.msra.mxu0 %v5962
        %7997 = vmatprep.subr.bf16.mxu0 0
        %7998 = vmatpush1.bf16.msra.mxu0 %v5963
        %7999 = vmatprep.subr.bf16.mxu0 0
        %8000 = vmatpush1.bf16.msra.mxu0 %v5964
        %8001 = vmatprep.subr.bf16.mxu0 0
        %8002 = vmatpush1.bf16.msra.mxu0 %v5965
        %8003 = vmatprep.subr.bf16.mxu0 0
        %8004 = vmatpush1.bf16.msra.mxu0 %v5966
        %8005 = vmatprep.subr.bf16.mxu0 0
        %8006 = vmatpush1.bf16.msra.mxu0 %v5967
        %8007 = vmatprep.subr.bf16.mxu0 0
        %8008 = vmatpush1.bf16.msra.mxu0 %v5968
        %8009 = vmatprep.mubr.bf16.mxu0 %v886
        %8010 = vmatmul.mubr.bf16.gmra.mrb[0].mxu0 %v885
        %v8011 = vpop.f32.mrb[0].mxu0
        %v8012 = vadd.f32 %v7972, %v8011
        %v8013 = vpop.f32.mrb[0].mxu0
        %v8014 = vpop.f32.mrb[0].mxu0
        %v8015 = vpop.f32.mrb[0].mxu0
        %8016 = vdwg.mxu0
        %8017 = vmatprep.subr.bf16.mxu0 0
        %8018 = vmatpush1.bf16.msra.mxu0 %v5969
        %8019 = vmatprep.subr.bf16.mxu0 0
        %8020 = vmatpush1.bf16.msra.mxu0 %v5970
        %8021 = vmatprep.subr.bf16.mxu0 0
        %8022 = vmatpush1.bf16.msra.mxu0 %v5971
        %8023 = vmatprep.subr.bf16.mxu0 0
        %8024 = vmatpush1.bf16.msra.mxu0 %v5972
        %8025 = vmatprep.subr.bf16.mxu0 0
        %8026 = vmatpush1.bf16.msra.mxu0 %v5973
        %8027 = vmatprep.subr.bf16.mxu0 0
        %8028 = vmatpush1.bf16.msra.mxu0 %v5974
        %8029 = vmatprep.subr.bf16.mxu0 0
        %8030 = vmatpush1.bf16.msra.mxu0 %v5975
        %8031 = vmatprep.subr.bf16.mxu0 0
        %8032 = vmatpush1.bf16.msra.mxu0 %v5976
        %8033 = vmatprep.subr.bf16.mxu0 0
        %8034 = vmatpush1.bf16.msra.mxu0 %v5977
        %8035 = vmatprep.subr.bf16.mxu0 0
        %8036 = vmatpush1.bf16.msra.mxu0 %v5978
        %8037 = vmatprep.subr.bf16.mxu0 0
        %8038 = vmatpush1.bf16.msra.mxu0 %v5979
        %8039 = vmatprep.subr.bf16.mxu0 0
        %8040 = vmatpush1.bf16.msra.mxu0 %v5980
        %8041 = vmatprep.subr.bf16.mxu0 0
        %8042 = vmatpush1.bf16.msra.mxu0 %v5981
        %8043 = vmatprep.subr.bf16.mxu0 0
        %8044 = vmatpush1.bf16.msra.mxu0 %v5982
        %8045 = vmatprep.subr.bf16.mxu0 0
        %8046 = vmatpush1.bf16.msra.mxu0 %v5983
        %8047 = vmatprep.subr.bf16.mxu0 0
        %8048 = vmatpush1.bf16.msra.mxu0 %v5984
        %8049 = vmatprep.mubr.bf16.mxu0 %v888
        %8050 = vmatmul.mubr.bf16.gmra.mrb[0].mxu0 %v887
        %v8051 = vpop.f32.mrb[0].mxu0
        %v8052 = vadd.f32 %v8012, %v8051
        %v8053 = vpop.f32.mrb[0].mxu0
        %v8054 = vpop.f32.mrb[0].mxu0
        %v8055 = vpop.f32.mrb[0].mxu0
        %8056 = vdwg.mxu0
        %8057 = vmatprep.subr.bf16.mxu0 0
        %8058 = vmatpush1.bf16.msra.mxu0 %v5985
        %8059 = vmatprep.subr.bf16.mxu0 0
        %8060 = vmatpush1.bf16.msra.mxu0 %v5986
        %8061 = vmatprep.subr.bf16.mxu0 0
        %8062 = vmatpush1.bf16.msra.mxu0 %v5987
        %8063 = vmatprep.subr.bf16.mxu0 0
        %8064 = vmatpush1.bf16.msra.mxu0 %v5988
        %8065 = vmatprep.subr.bf16.mxu0 0
        %8066 = vmatpush1.bf16.msra.mxu0 %v5989
        %8067 = vmatprep.subr.bf16.mxu0 0
        %8068 = vmatpush1.bf16.msra.mxu0 %v5990
        %8069 = vmatprep.subr.bf16.mxu0 0
        %8070 = vmatpush1.bf16.msra.mxu0 %v5991
        %8071 = vmatprep.subr.bf16.mxu0 0
        %8072 = vmatpush1.bf16.msra.mxu0 %v5992
        %8073 = vmatprep.subr.bf16.mxu0 0
        %8074 = vmatpush1.bf16.msra.mxu0 %v5993
        %8075 = vmatprep.subr.bf16.mxu0 0
        %8076 = vmatpush1.bf16.msra.mxu0 %v5994
        %8077 = vmatprep.subr.bf16.mxu0 0
        %8078 = vmatpush1.bf16.msra.mxu0 %v5995
        %8079 = vmatprep.subr.bf16.mxu0 0
        %8080 = vmatpush1.bf16.msra.mxu0 %v5996
        %8081 = vmatprep.subr.bf16.mxu0 0
        %8082 = vmatpush1.bf16.msra.mxu0 %v5997
        %8083 = vmatprep.subr.bf16.mxu0 0
        %8084 = vmatpush1.bf16.msra.mxu0 %v5998
        %8085 = vmatprep.subr.bf16.mxu0 0
        %8086 = vmatpush1.bf16.msra.mxu0 %v5999
        %8087 = vmatprep.subr.bf16.mxu0 0
        %8088 = vmatpush1.bf16.msra.mxu0 %v6000
        %8089 = vmatprep.mubr.bf16.mxu0 %v890
        %8090 = vmatmul.mubr.bf16.gmra.mrb[0].mxu0 %v889
        %v8091 = vpop.f32.mrb[0].mxu0
        %v8092 = vadd.f32 %v8052, %v8091
        %v8093 = vpop.f32.mrb[0].mxu0
        %v8094 = vpop.f32.mrb[0].mxu0
        %v8095 = vpop.f32.mrb[0].mxu0
        %8096 = vdwg.mxu0
        %8097 = vmatprep.subr.bf16.mxu0 0
        %8098 = vmatpush1.bf16.msra.mxu0 %v6001
        %8099 = vmatprep.subr.bf16.mxu0 0
        %8100 = vmatpush1.bf16.msra.mxu0 %v6002
        %8101 = vmatprep.subr.bf16.mxu0 0
        %8102 = vmatpush1.bf16.msra.mxu0 %v6003
        %8103 = vmatprep.subr.bf16.mxu0 0
        %8104 = vmatpush1.bf16.msra.mxu0 %v6004
        %8105 = vmatprep.subr.bf16.mxu0 0
        %8106 = vmatpush1.bf16.msra.mxu0 %v6005
        %8107 = vmatprep.subr.bf16.mxu0 0
        %8108 = vmatpush1.bf16.msra.mxu0 %v6006
        %8109 = vmatprep.subr.bf16.mxu0 0
        %8110 = vmatpush1.bf16.msra.mxu0 %v6007
        %8111 = vmatprep.subr.bf16.mxu0 0
        %8112 = vmatpush1.bf16.msra.mxu0 %v6008
        %8113 = vmatprep.subr.bf16.mxu0 0
        %8114 = vmatpush1.bf16.msra.mxu0 %v6009
        %8115 = vmatprep.subr.bf16.mxu0 0
        %8116 = vmatpush1.bf16.msra.mxu0 %v6010
        %8117 = vmatprep.subr.bf16.mxu0 0
        %8118 = vmatpush1.bf16.msra.mxu0 %v6011
        %8119 = vmatprep.subr.bf16.mxu0 0
        %8120 = vmatpush1.bf16.msra.mxu0 %v6012
        %8121 = vmatprep.subr.bf16.mxu0 0
        %8122 = vmatpush1.bf16.msra.mxu0 %v6013
        %8123 = vmatprep.subr.bf16.mxu0 0
        %8124 = vmatpush1.bf16.msra.mxu0 %v6014
        %8125 = vmatprep.subr.bf16.mxu0 0
        %8126 = vmatpush1.bf16.msra.mxu0 %v6015
        %8127 = vmatprep.subr.bf16.mxu0 0
        %8128 = vmatpush1.bf16.msra.mxu0 %v6016
        %8129 = vmatprep.mubr.bf16.mxu0 %v892
        %8130 = vmatmul.mubr.bf16.gmra.mrb[0].mxu0 %v891
        %v8131 = vpop.f32.mrb[0].mxu0
        %v8132 = vadd.f32 %v8092, %v8131
        %v8133 = vpop.f32.mrb[0].mxu0
        %v8134 = vpop.f32.mrb[0].mxu0
        %v8135 = vpop.f32.mrb[0].mxu0
        %8136 = vdwg.mxu0
        %8137 = vmatprep.subr.bf16.mxu0 0
        %8138 = vmatpush1.bf16.msra.mxu0 %v6017
        %8139 = vmatprep.subr.bf16.mxu0 0
        %8140 = vmatpush1.bf16.msra.mxu0 %v6018
        %8141 = vmatprep.subr.bf16.mxu0 0
        %8142 = vmatpush1.bf16.msra.mxu0 %v6019
        %8143 = vmatprep.subr.bf16.mxu0 0
        %8144 = vmatpush1.bf16.msra.mxu0 %v6020
        %8145 = vmatprep.subr.bf16.mxu0 0
        %8146 = vmatpush1.bf16.msra.mxu0 %v6021
        %8147 = vmatprep.subr.bf16.mxu0 0
        %8148 = vmatpush1.bf16.msra.mxu0 %v6022
        %8149 = vmatprep.subr.bf16.mxu0 0
        %8150 = vmatpush1.bf16.msra.mxu0 %v6023
        %8151 = vmatprep.subr.bf16.mxu0 0
        %8152 = vmatpush1.bf16.msra.mxu0 %v6024
        %8153 = vmatprep.subr.bf16.mxu0 0
        %8154 = vmatpush1.bf16.msra.mxu0 %v6025
        %8155 = vmatprep.subr.bf16.mxu0 0
        %8156 = vmatpush1.bf16.msra.mxu0 %v6026
        %8157 = vmatprep.subr.bf16.mxu0 0
        %8158 = vmatpush1.bf16.msra.mxu0 %v6027
        %8159 = vmatprep.subr.bf16.mxu0 0
        %8160 = vmatpush1.bf16.msra.mxu0 %v6028
        %8161 = vmatprep.subr.bf16.mxu0 0
        %8162 = vmatpush1.bf16.msra.mxu0 %v6029
        %8163 = vmatprep.subr.bf16.mxu0 0
        %8164 = vmatpush1.bf16.msra.mxu0 %v6030
        %8165 = vmatprep.subr.bf16.mxu0 0
        %8166 = vmatpush1.bf16.msra.mxu0 %v6031
        %8167 = vmatprep.subr.bf16.mxu0 0
        %8168 = vmatpush1.bf16.msra.mxu0 %v6032
        %8169 = vmatprep.mubr.bf16.mxu0 %v894
        %8170 = vmatmul.mubr.bf16.gmra.mrb[0].mxu0 %v893
        %v8171 = vpop.f32.mrb[0].mxu0
        %v8172 = vadd.f32 %v8132, %v8171
        %v8173 = vpop.f32.mrb[0].mxu0
        %v8174 = vpop.f32.mrb[0].mxu0
        %v8175 = vpop.f32.mrb[0].mxu0
        %8176 = vdwg.mxu0
        %8177 = vmatprep.subr.bf16.mxu0 0
        %8178 = vmatpush1.bf16.msra.mxu0 %v6033
        %8179 = vmatprep.subr.bf16.mxu0 0
        %8180 = vmatpush1.bf16.msra.mxu0 %v6034
        %8181 = vmatprep.subr.bf16.mxu0 0
        %8182 = vmatpush1.bf16.msra.mxu0 %v6035
        %8183 = vmatprep.subr.bf16.mxu0 0
        %8184 = vmatpush1.bf16.msra.mxu0 %v6036
        %8185 = vmatprep.subr.bf16.mxu0 0
        %8186 = vmatpush1.bf16.msra.mxu0 %v6037
        %8187 = vmatprep.subr.bf16.mxu0 0
        %8188 = vmatpush1.bf16.msra.mxu0 %v6038
        %8189 = vmatprep.subr.bf16.mxu0 0
        %8190 = vmatpush1.bf16.msra.mxu0 %v6039
        %8191 = vmatprep.subr.bf16.mxu0 0
        %8192 = vmatpush1.bf16.msra.mxu0 %v6040
        %8193 = vmatprep.subr.bf16.mxu0 0
        %8194 = vmatpush1.bf16.msra.mxu0 %v6041
        %8195 = vmatprep.subr.bf16.mxu0 0
        %8196 = vmatpush1.bf16.msra.mxu0 %v6042
        %8197 = vmatprep.subr.bf16.mxu0 0
        %8198 = vmatpush1.bf16.msra.mxu0 %v6043
        %8199 = vmatprep.subr.bf16.mxu0 0
        %8200 = vmatpush1.bf16.msra.mxu0 %v6044
        %8201 = vmatprep.subr.bf16.mxu0 0
        %8202 = vmatpush1.bf16.msra.mxu0 %v6045
        %8203 = vmatprep.subr.bf16.mxu0 0
        %8204 = vmatpush1.bf16.msra.mxu0 %v6046
        %8205 = vmatprep.subr.bf16.mxu0 0
        %8206 = vmatpush1.bf16.msra.mxu0 %v6047
        %8207 = vmatprep.subr.bf16.mxu0 0
        %8208 = vmatpush1.bf16.msra.mxu0 %v6048
        %8209 = vmatprep.mubr.bf16.mxu0 %v896
        %8210 = vmatmul.mubr.bf16.gmra.mrb[0].mxu0 %v895
        %v8211 = vpop.f32.mrb[0].mxu0
        %v8212 = vadd.f32 %v8172, %v8211
        %v8213 = vpop.f32.mrb[0].mxu0
        %v8214 = vpop.f32.mrb[0].mxu0
        %v8215 = vpop.f32.mrb[0].mxu0
        %8216 = vdwg.mxu0
        %8217 = vmatprep.subr.bf16.mxu0 0
        %8218 = vmatpush1.bf16.msra.mxu0 %v6049
        %8219 = vmatprep.subr.bf16.mxu0 0
        %8220 = vmatpush1.bf16.msra.mxu0 %v6050
        %8221 = vmatprep.subr.bf16.mxu0 0
        %8222 = vmatpush1.bf16.msra.mxu0 %v6051
        %8223 = vmatprep.subr.bf16.mxu0 0
        %8224 = vmatpush1.bf16.msra.mxu0 %v6052
        %8225 = vmatprep.subr.bf16.mxu0 0
        %8226 = vmatpush1.bf16.msra.mxu0 %v6053
        %8227 = vmatprep.subr.bf16.mxu0 0
        %8228 = vmatpush1.bf16.msra.mxu0 %v6054
        %8229 = vmatprep.subr.bf16.mxu0 0
        %8230 = vmatpush1.bf16.msra.mxu0 %v6055
        %8231 = vmatprep.subr.bf16.mxu0 0
        %8232 = vmatpush1.bf16.msra.mxu0 %v6056
        %8233 = vmatprep.subr.bf16.mxu0 0
        %8234 = vmatpush1.bf16.msra.mxu0 %v6057
        %8235 = vmatprep.subr.bf16.mxu0 0
        %8236 = vmatpush1.bf16.msra.mxu0 %v6058
        %8237 = vmatprep.subr.bf16.mxu0 0
        %8238 = vmatpush1.bf16.msra.mxu0 %v6059
        %8239 = vmatprep.subr.bf16.mxu0 0
        %8240 = vmatpush1.bf16.msra.mxu0 %v6060
        %8241 = vmatprep.subr.bf16.mxu0 0
        %8242 = vmatpush1.bf16.msra.mxu0 %v6061
        %8243 = vmatprep.subr.bf16.mxu0 0
        %8244 = vmatpush1.bf16.msra.mxu0 %v6062
        %8245 = vmatprep.subr.bf16.mxu0 0
        %8246 = vmatpush1.bf16.msra.mxu0 %v6063
        %8247 = vmatprep.subr.bf16.mxu0 0
        %8248 = vmatpush1.bf16.msra.mxu0 %v6064
        %8249 = vmatprep.mubr.bf16.mxu0 %v898
        %8250 = vmatmul.mubr.bf16.gmra.mrb[0].mxu0 %v897
        %v8251 = vpop.f32.mrb[0].mxu0
        %v8252 = vadd.f32 %v8212, %v8251
        %v8253 = vpop.f32.mrb[0].mxu0
        %v8254 = vpop.f32.mrb[0].mxu0
        %v8255 = vpop.f32.mrb[0].mxu0
        %8256 = vdwg.mxu0
        %8257 = vmatprep.subr.bf16.mxu0 0
        %8258 = vmatpush1.bf16.msra.mxu0 %v6065
        %8259 = vmatprep.subr.bf16.mxu0 0
        %8260 = vmatpush1.bf16.msra.mxu0 %v6066
        %8261 = vmatprep.subr.bf16.mxu0 0
        %8262 = vmatpush1.bf16.msra.mxu0 %v6067
        %8263 = vmatprep.subr.bf16.mxu0 0
        %8264 = vmatpush1.bf16.msra.mxu0 %v6068
        %8265 = vmatprep.subr.bf16.mxu0 0
        %8266 = vmatpush1.bf16.msra.mxu0 %v6069
        %8267 = vmatprep.subr.bf16.mxu0 0
        %8268 = vmatpush1.bf16.msra.mxu0 %v6070
        %8269 = vmatprep.subr.bf16.mxu0 0
        %8270 = vmatpush1.bf16.msra.mxu0 %v6071
        %8271 = vmatprep.subr.bf16.mxu0 0
        %8272 = vmatpush1.bf16.msra.mxu0 %v6072
        %8273 = vmatprep.subr.bf16.mxu0 0
        %8274 = vmatpush1.bf16.msra.mxu0 %v6073
        %8275 = vmatprep.subr.bf16.mxu0 0
        %8276 = vmatpush1.bf16.msra.mxu0 %v6074
        %8277 = vmatprep.subr.bf16.mxu0 0
        %8278 = vmatpush1.bf16.msra.mxu0 %v6075
        %8279 = vmatprep.subr.bf16.mxu0 0
        %8280 = vmatpush1.bf16.msra.mxu0 %v6076
        %8281 = vmatprep.subr.bf16.mxu0 0
        %8282 = vmatpush1.bf16.msra.mxu0 %v6077
        %8283 = vmatprep.subr.bf16.mxu0 0
        %8284 = vmatpush1.bf16.msra.mxu0 %v6078
        %8285 = vmatprep.subr.bf16.mxu0 0
        %8286 = vmatpush1.bf16.msra.mxu0 %v6079
        %8287 = vmatprep.subr.bf16.mxu0 0
        %8288 = vmatpush1.bf16.msra.mxu0 %v6080
        %8289 = vmatprep.mubr.bf16.mxu0 %v900
        %8290 = vmatmul.mubr.bf16.gmra.mrb[0].mxu0 %v899
        %v8291 = vpop.f32.mrb[0].mxu0
        %v8292 = vadd.f32 %v8252, %v8291
        %v8293 = vpop.f32.mrb[0].mxu0
        %v8294 = vpop.f32.mrb[0].mxu0
        %v8295 = vpop.f32.mrb[0].mxu0
        %8296 = vdwg.mxu0
        %8297 = vmatprep.subr.bf16.mxu0 0
        %8298 = vmatpush1.bf16.msra.mxu0 %v6081
        %8299 = vmatprep.subr.bf16.mxu0 0
        %8300 = vmatpush1.bf16.msra.mxu0 %v6082
        %8301 = vmatprep.subr.bf16.mxu0 0
        %8302 = vmatpush1.bf16.msra.mxu0 %v6083
        %8303 = vmatprep.subr.bf16.mxu0 0
        %8304 = vmatpush1.bf16.msra.mxu0 %v6084
        %8305 = vmatprep.subr.bf16.mxu0 0
        %8306 = vmatpush1.bf16.msra.mxu0 %v6085
        %8307 = vmatprep.subr.bf16.mxu0 0
        %8308 = vmatpush1.bf16.msra.mxu0 %v6086
        %8309 = vmatprep.subr.bf16.mxu0 0
        %8310 = vmatpush1.bf16.msra.mxu0 %v6087
        %8311 = vmatprep.subr.bf16.mxu0 0
        %8312 = vmatpush1.bf16.msra.mxu0 %v6088
        %8313 = vmatprep.subr.bf16.mxu0 0
        %8314 = vmatpush1.bf16.msra.mxu0 %v6089
        %8315 = vmatprep.subr.bf16.mxu0 0
        %8316 = vmatpush1.bf16.msra.mxu0 %v6090
        %8317 = vmatprep.subr.bf16.mxu0 0
        %8318 = vmatpush1.bf16.msra.mxu0 %v6091
        %8319 = vmatprep.subr.bf16.mxu0 0
        %8320 = vmatpush1.bf16.msra.mxu0 %v6092
        %8321 = vmatprep.subr.bf16.mxu0 0
        %8322 = vmatpush1.bf16.msra.mxu0 %v6093
        %8323 = vmatprep.subr.bf16.mxu0 0
        %8324 = vmatpush1.bf16.msra.mxu0 %v6094
        %8325 = vmatprep.subr.bf16.mxu0 0
        %8326 = vmatpush1.bf16.msra.mxu0 %v6095
        %8327 = vmatprep.subr.bf16.mxu0 0
        %8328 = vmatpush1.bf16.msra.mxu0 %v6096
        %8329 = vmatprep.mubr.bf16.mxu0 %v902
        %8330 = vmatmul.mubr.bf16.gmra.mrb[0].mxu0 %v901
        %v8331 = vpop.f32.mrb[0].mxu0
        %v8332 = vadd.f32 %v8292, %v8331
        %v8333 = vpop.f32.mrb[0].mxu0
        %v8334 = vpop.f32.mrb[0].mxu0
        %v8335 = vpop.f32.mrb[0].mxu0
        %8336 = vdwg.mxu0
        %8337 = vmatprep.subr.bf16.mxu0 0
        %8338 = vmatpush1.bf16.msra.mxu0 %v6097
        %8339 = vmatprep.subr.bf16.mxu0 0
        %8340 = vmatpush1.bf16.msra.mxu0 %v6098
        %8341 = vmatprep.subr.bf16.mxu0 0
        %8342 = vmatpush1.bf16.msra.mxu0 %v6099
        %8343 = vmatprep.subr.bf16.mxu0 0
        %8344 = vmatpush1.bf16.msra.mxu0 %v6100
        %8345 = vmatprep.subr.bf16.mxu0 0
        %8346 = vmatpush1.bf16.msra.mxu0 %v6101
        %8347 = vmatprep.subr.bf16.mxu0 0
        %8348 = vmatpush1.bf16.msra.mxu0 %v6102
        %8349 = vmatprep.subr.bf16.mxu0 0
        %8350 = vmatpush1.bf16.msra.mxu0 %v6103
        %8351 = vmatprep.subr.bf16.mxu0 0
        %8352 = vmatpush1.bf16.msra.mxu0 %v6104
        %8353 = vmatprep.subr.bf16.mxu0 0
        %8354 = vmatpush1.bf16.msra.mxu0 %v6105
        %8355 = vmatprep.subr.bf16.mxu0 0
        %8356 = vmatpush1.bf16.msra.mxu0 %v6106
        %8357 = vmatprep.subr.bf16.mxu0 0
        %8358 = vmatpush1.bf16.msra.mxu0 %v6107
        %8359 = vmatprep.subr.bf16.mxu0 0
        %8360 = vmatpush1.bf16.msra.mxu0 %v6108
        %8361 = vmatprep.subr.bf16.mxu0 0
        %8362 = vmatpush1.bf16.msra.mxu0 %v6109
        %8363 = vmatprep.subr.bf16.mxu0 0
        %8364 = vmatpush1.bf16.msra.mxu0 %v6110
        %8365 = vmatprep.subr.bf16.mxu0 0
        %8366 = vmatpush1.bf16.msra.mxu0 %v6111
        %8367 = vmatprep.subr.bf16.mxu0 0
        %8368 = vmatpush1.bf16.msra.mxu0 %v6112
        %8369 = vmatprep.mubr.bf16.mxu0 %v904
        %8370 = vmatmul.mubr.bf16.gmra.mrb[0].mxu0 %v903
        %v8371 = vpop.f32.mrb[0].mxu0
        %v8372 = vadd.f32 %v8332, %v8371
        %v8373 = vpop.f32.mrb[0].mxu0
        %v8374 = vpop.f32.mrb[0].mxu0
        %v8375 = vpop.f32.mrb[0].mxu0
        %8376 = vdwg.mxu0
        %8377 = vmatprep.subr.bf16.mxu0 0
        %8378 = vmatpush1.bf16.msra.mxu0 %v6113
        %8379 = vmatprep.subr.bf16.mxu0 0
        %8380 = vmatpush1.bf16.msra.mxu0 %v6114
        %8381 = vmatprep.subr.bf16.mxu0 0
        %8382 = vmatpush1.bf16.msra.mxu0 %v6115
        %8383 = vmatprep.subr.bf16.mxu0 0
        %8384 = vmatpush1.bf16.msra.mxu0 %v6116
        %8385 = vmatprep.subr.bf16.mxu0 0
        %8386 = vmatpush1.bf16.msra.mxu0 %v6117
        %8387 = vmatprep.subr.bf16.mxu0 0
        %8388 = vmatpush1.bf16.msra.mxu0 %v6118
        %8389 = vmatprep.subr.bf16.mxu0 0
        %8390 = vmatpush1.bf16.msra.mxu0 %v6119
        %8391 = vmatprep.subr.bf16.mxu0 0
        %8392 = vmatpush1.bf16.msra.mxu0 %v6120
        %8393 = vmatprep.subr.bf16.mxu0 0
        %8394 = vmatpush1.bf16.msra.mxu0 %v6121
        %8395 = vmatprep.subr.bf16.mxu0 0
        %8396 = vmatpush1.bf16.msra.mxu0 %v6122
        %8397 = vmatprep.subr.bf16.mxu0 0
        %8398 = vmatpush1.bf16.msra.mxu0 %v6123
        %8399 = vmatprep.subr.bf16.mxu0 0
        %8400 = vmatpush1.bf16.msra.mxu0 %v6124
        %8401 = vmatprep.subr.bf16.mxu0 0
        %8402 = vmatpush1.bf16.msra.mxu0 %v6125
        %8403 = vmatprep.subr.bf16.mxu0 0
        %8404 = vmatpush1.bf16.msra.mxu0 %v6126
        %8405 = vmatprep.subr.bf16.mxu0 0
        %8406 = vmatpush1.bf16.msra.mxu0 %v6127
        %8407 = vmatprep.subr.bf16.mxu0 0
        %8408 = vmatpush1.bf16.msra.mxu0 %v6128
        %8409 = vmatprep.mubr.bf16.mxu0 %v906
        %8410 = vmatmul.mubr.bf16.gmra.mrb[0].mxu0 %v905
        %v8411 = vpop.f32.mrb[0].mxu0
        %v8412 = vadd.f32 %v8372, %v8411
        %v8413 = vpop.f32.mrb[0].mxu0
        %v8414 = vpop.f32.mrb[0].mxu0
        %v8415 = vpop.f32.mrb[0].mxu0
        %8416 = vdwg.mxu0
        %8417 = vmatprep.subr.bf16.mxu0 0
        %8418 = vmatpush1.bf16.msra.mxu0 %v6129
        %8419 = vmatprep.subr.bf16.mxu0 0
        %8420 = vmatpush1.bf16.msra.mxu0 %v6130
        %8421 = vmatprep.subr.bf16.mxu0 0
        %8422 = vmatpush1.bf16.msra.mxu0 %v6131
        %8423 = vmatprep.subr.bf16.mxu0 0
        %8424 = vmatpush1.bf16.msra.mxu0 %v6132
        %8425 = vmatprep.subr.bf16.mxu0 0
        %8426 = vmatpush1.bf16.msra.mxu0 %v6133
        %8427 = vmatprep.subr.bf16.mxu0 0
        %8428 = vmatpush1.bf16.msra.mxu0 %v6134
        %8429 = vmatprep.subr.bf16.mxu0 0
        %8430 = vmatpush1.bf16.msra.mxu0 %v6135
        %8431 = vmatprep.subr.bf16.mxu0 0
        %8432 = vmatpush1.bf16.msra.mxu0 %v6136
        %8433 = vmatprep.subr.bf16.mxu0 0
        %8434 = vmatpush1.bf16.msra.mxu0 %v6137
        %8435 = vmatprep.subr.bf16.mxu0 0
        %8436 = vmatpush1.bf16.msra.mxu0 %v6138
        %8437 = vmatprep.subr.bf16.mxu0 0
        %8438 = vmatpush1.bf16.msra.mxu0 %v6139
        %8439 = vmatprep.subr.bf16.mxu0 0
        %8440 = vmatpush1.bf16.msra.mxu0 %v6140
        %8441 = vmatprep.subr.bf16.mxu0 0
        %8442 = vmatpush1.bf16.msra.mxu0 %v6141
        %8443 = vmatprep.subr.bf16.mxu0 0
        %8444 = vmatpush1.bf16.msra.mxu0 %v6142
        %8445 = vmatprep.subr.bf16.mxu0 0
        %8446 = vmatpush1.bf16.msra.mxu0 %v6143
        %8447 = vmatprep.subr.bf16.mxu0 0
        %8448 = vmatpush1.bf16.msra.mxu0 %v6144
        %8449 = vmatprep.mubr.bf16.mxu0 %v908
        %8450 = vmatmul.mubr.bf16.gmra.mrb[0].mxu0 %v907
        %v8451 = vpop.f32.mrb[0].mxu0
        %v8452 = vadd.f32 %v8412, %v8451
        %v8453 = vpop.f32.mrb[0].mxu0
        %v8454 = vpop.f32.mrb[0].mxu0
        %v8455 = vpop.f32.mrb[0].mxu0
        %8456 = vdwg.mxu0
        %8457 = vmatprep.subr.bf16.mxu0 0
        %8458 = vmatpush1.bf16.msra.mxu0 %v6145
        %8459 = vmatprep.subr.bf16.mxu0 0
        %8460 = vmatpush1.bf16.msra.mxu0 %v6146
        %8461 = vmatprep.subr.bf16.mxu0 0
        %8462 = vmatpush1.bf16.msra.mxu0 %v6147
        %8463 = vmatprep.subr.bf16.mxu0 0
        %8464 = vmatpush1.bf16.msra.mxu0 %v6148
        %8465 = vmatprep.subr.bf16.mxu0 0
        %8466 = vmatpush1.bf16.msra.mxu0 %v6149
        %8467 = vmatprep.subr.bf16.mxu0 0
        %8468 = vmatpush1.bf16.msra.mxu0 %v6150
        %8469 = vmatprep.subr.bf16.mxu0 0
        %8470 = vmatpush1.bf16.msra.mxu0 %v6151
        %8471 = vmatprep.subr.bf16.mxu0 0
        %8472 = vmatpush1.bf16.msra.mxu0 %v6152
        %8473 = vmatprep.subr.bf16.mxu0 0
        %8474 = vmatpush1.bf16.msra.mxu0 %v6153
        %8475 = vmatprep.subr.bf16.mxu0 0
        %8476 = vmatpush1.bf16.msra.mxu0 %v6154
        %8477 = vmatprep.subr.bf16.mxu0 0
        %8478 = vmatpush1.bf16.msra.mxu0 %v6155
        %8479 = vmatprep.subr.bf16.mxu0 0
        %8480 = vmatpush1.bf16.msra.mxu0 %v6156
        %8481 = vmatprep.subr.bf16.mxu0 0
        %8482 = vmatpush1.bf16.msra.mxu0 %v6157
        %8483 = vmatprep.subr.bf16.mxu0 0
        %8484 = vmatpush1.bf16.msra.mxu0 %v6158
        %8485 = vmatprep.subr.bf16.mxu0 0
        %8486 = vmatpush1.bf16.msra.mxu0 %v6159
        %8487 = vmatprep.subr.bf16.mxu0 0
        %8488 = vmatpush1.bf16.msra.mxu0 %v6160
        %8489 = vmatprep.mubr.bf16.mxu0 %v910
        %8490 = vmatmul.mubr.bf16.gmra.mrb[0].mxu0 %v909
        %v8491 = vpop.f32.mrb[0].mxu0
        %v8492 = vadd.f32 %v8452, %v8491
        %v8493 = vpop.f32.mrb[0].mxu0
        %v8494 = vpop.f32.mrb[0].mxu0
        %v8495 = vpop.f32.mrb[0].mxu0
        %8496 = vdwg.mxu0
        %8497 = vmatprep.subr.bf16.mxu0 0
        %8498 = vmatpush1.bf16.msra.mxu0 %v6161
        %8499 = vmatprep.subr.bf16.mxu0 0
        %8500 = vmatpush1.bf16.msra.mxu0 %v6162
        %8501 = vmatprep.subr.bf16.mxu0 0
        %8502 = vmatpush1.bf16.msra.mxu0 %v6163
        %8503 = vmatprep.subr.bf16.mxu0 0
        %8504 = vmatpush1.bf16.msra.mxu0 %v6164
        %8505 = vmatprep.subr.bf16.mxu0 0
        %8506 = vmatpush1.bf16.msra.mxu0 %v6165
        %8507 = vmatprep.subr.bf16.mxu0 0
        %8508 = vmatpush1.bf16.msra.mxu0 %v6166
        %8509 = vmatprep.subr.bf16.mxu0 0
        %8510 = vmatpush1.bf16.msra.mxu0 %v6167
        %8511 = vmatprep.subr.bf16.mxu0 0
        %8512 = vmatpush1.bf16.msra.mxu0 %v6168
        %8513 = vmatprep.subr.bf16.mxu0 0
        %8514 = vmatpush1.bf16.msra.mxu0 %v6169
        %8515 = vmatprep.subr.bf16.mxu0 0
        %8516 = vmatpush1.bf16.msra.mxu0 %v6170
        %8517 = vmatprep.subr.bf16.mxu0 0
        %8518 = vmatpush1.bf16.msra.mxu0 %v6171
        %8519 = vmatprep.subr.bf16.mxu0 0
        %8520 = vmatpush1.bf16.msra.mxu0 %v6172
        %8521 = vmatprep.subr.bf16.mxu0 0
        %8522 = vmatpush1.bf16.msra.mxu0 %v6173
        %8523 = vmatprep.subr.bf16.mxu0 0
        %8524 = vmatpush1.bf16.msra.mxu0 %v6174
        %8525 = vmatprep.subr.bf16.mxu0 0
        %8526 = vmatpush1.bf16.msra.mxu0 %v6175
        %8527 = vmatprep.subr.bf16.mxu0 0
        %8528 = vmatpush1.bf16.msra.mxu0 %v6176
        %8529 = vmatprep.mubr.bf16.mxu0 %v912
        %8530 = vmatmul.mubr.bf16.gmra.mrb[0].mxu0 %v911
        %v8531 = vpop.f32.mrb[0].mxu0
        %v8532 = vadd.f32 %v8492, %v8531
        %v8533 = vpop.f32.mrb[0].mxu0
        %v8534 = vpop.f32.mrb[0].mxu0
        %v8535 = vpop.f32.mrb[0].mxu0
        %8536 = vdwg.mxu0
        %8537 = vmatprep.subr.bf16.mxu0 0
        %8538 = vmatpush1.bf16.msra.mxu0 %v6177
        %8539 = vmatprep.subr.bf16.mxu0 0
        %8540 = vmatpush1.bf16.msra.mxu0 %v6178
        %8541 = vmatprep.subr.bf16.mxu0 0
        %8542 = vmatpush1.bf16.msra.mxu0 %v6179
        %8543 = vmatprep.subr.bf16.mxu0 0
        %8544 = vmatpush1.bf16.msra.mxu0 %v6180
        %8545 = vmatprep.subr.bf16.mxu0 0
        %8546 = vmatpush1.bf16.msra.mxu0 %v6181
        %8547 = vmatprep.subr.bf16.mxu0 0
        %8548 = vmatpush1.bf16.msra.mxu0 %v6182
        %8549 = vmatprep.subr.bf16.mxu0 0
        %8550 = vmatpush1.bf16.msra.mxu0 %v6183
        %8551 = vmatprep.subr.bf16.mxu0 0
        %8552 = vmatpush1.bf16.msra.mxu0 %v6184
        %8553 = vmatprep.subr.bf16.mxu0 0
        %8554 = vmatpush1.bf16.msra.mxu0 %v6185
        %8555 = vmatprep.subr.bf16.mxu0 0
        %8556 = vmatpush1.bf16.msra.mxu0 %v6186
        %8557 = vmatprep.subr.bf16.mxu0 0
        %8558 = vmatpush1.bf16.msra.mxu0 %v6187
        %8559 = vmatprep.subr.bf16.mxu0 0
        %8560 = vmatpush1.bf16.msra.mxu0 %v6188
        %8561 = vmatprep.subr.bf16.mxu0 0
        %8562 = vmatpush1.bf16.msra.mxu0 %v6189
        %8563 = vmatprep.subr.bf16.mxu0 0
        %8564 = vmatpush1.bf16.msra.mxu0 %v6190
        %8565 = vmatprep.subr.bf16.mxu0 0
        %8566 = vmatpush1.bf16.msra.mxu0 %v6191
        %8567 = vmatprep.subr.bf16.mxu0 0
        %8568 = vmatpush1.bf16.msra.mxu0 %v6192
        %8569 = vmatprep.mubr.bf16.mxu0 %v914
        %8570 = vmatmul.mubr.bf16.gmra.mrb[0].mxu0 %v913
        %v8571 = vpop.f32.mrb[0].mxu0
        %v8572 = vadd.f32 %v8532, %v8571
        %v8573 = vpop.f32.mrb[0].mxu0
        %v8574 = vpop.f32.mrb[0].mxu0
        %v8575 = vpop.f32.mrb[0].mxu0
        %8576 = vdwg.mxu0
        %8577 = vmatprep.subr.bf16.mxu0 0
        %8578 = vmatpush1.bf16.msra.mxu0 %v6193
        %8579 = vmatprep.subr.bf16.mxu0 0
        %8580 = vmatpush1.bf16.msra.mxu0 %v6194
        %8581 = vmatprep.subr.bf16.mxu0 0
        %8582 = vmatpush1.bf16.msra.mxu0 %v6195
        %8583 = vmatprep.subr.bf16.mxu0 0
        %8584 = vmatpush1.bf16.msra.mxu0 %v6196
        %8585 = vmatprep.subr.bf16.mxu0 0
        %8586 = vmatpush1.bf16.msra.mxu0 %v6197
        %8587 = vmatprep.subr.bf16.mxu0 0
        %8588 = vmatpush1.bf16.msra.mxu0 %v6198
        %8589 = vmatprep.subr.bf16.mxu0 0
        %8590 = vmatpush1.bf16.msra.mxu0 %v6199
        %8591 = vmatprep.subr.bf16.mxu0 0
        %8592 = vmatpush1.bf16.msra.mxu0 %v6200
        %8593 = vmatprep.subr.bf16.mxu0 0
        %8594 = vmatpush1.bf16.msra.mxu0 %v6201
        %8595 = vmatprep.subr.bf16.mxu0 0
        %8596 = vmatpush1.bf16.msra.mxu0 %v6202
        %8597 = vmatprep.subr.bf16.mxu0 0
        %8598 = vmatpush1.bf16.msra.mxu0 %v6203
        %8599 = vmatprep.subr.bf16.mxu0 0
        %8600 = vmatpush1.bf16.msra.mxu0 %v6204
        %8601 = vmatprep.subr.bf16.mxu0 0
        %8602 = vmatpush1.bf16.msra.mxu0 %v6205
        %8603 = vmatprep.subr.bf16.mxu0 0
        %8604 = vmatpush1.bf16.msra.mxu0 %v6206
        %8605 = vmatprep.subr.bf16.mxu0 0
        %8606 = vmatpush1.bf16.msra.mxu0 %v6207
        %8607 = vmatprep.subr.bf16.mxu0 0
        %8608 = vmatpush1.bf16.msra.mxu0 %v6208
        %8609 = vmatprep.mubr.bf16.mxu0 %v916
        %8610 = vmatmul.mubr.bf16.gmra.mrb[0].mxu0 %v915
        %v8611 = vpop.f32.mrb[0].mxu0
        %v8612 = vadd.f32 %v8572, %v8611
        %v8613 = vpop.f32.mrb[0].mxu0
        %v8614 = vpop.f32.mrb[0].mxu0
        %v8615 = vpop.f32.mrb[0].mxu0
        %8616 = vdwg.mxu0
        %8617 = vmatprep.subr.bf16.mxu0 0
        %8618 = vmatpush1.bf16.msra.mxu0 %v6209
        %8619 = vmatprep.subr.bf16.mxu0 0
        %8620 = vmatpush1.bf16.msra.mxu0 %v6210
        %8621 = vmatprep.subr.bf16.mxu0 0
        %8622 = vmatpush1.bf16.msra.mxu0 %v6211
        %8623 = vmatprep.subr.bf16.mxu0 0
        %8624 = vmatpush1.bf16.msra.mxu0 %v6212
        %8625 = vmatprep.subr.bf16.mxu0 0
        %8626 = vmatpush1.bf16.msra.mxu0 %v6213
        %8627 = vmatprep.subr.bf16.mxu0 0
        %8628 = vmatpush1.bf16.msra.mxu0 %v6214
        %8629 = vmatprep.subr.bf16.mxu0 0
        %8630 = vmatpush1.bf16.msra.mxu0 %v6215
        %8631 = vmatprep.subr.bf16.mxu0 0
        %8632 = vmatpush1.bf16.msra.mxu0 %v6216
        %8633 = vmatprep.subr.bf16.mxu0 0
        %8634 = vmatpush1.bf16.msra.mxu0 %v6217
        %8635 = vmatprep.subr.bf16.mxu0 0
        %8636 = vmatpush1.bf16.msra.mxu0 %v6218
        %8637 = vmatprep.subr.bf16.mxu0 0
        %8638 = vmatpush1.bf16.msra.mxu0 %v6219
        %8639 = vmatprep.subr.bf16.mxu0 0
        %8640 = vmatpush1.bf16.msra.mxu0 %v6220
        %8641 = vmatprep.subr.bf16.mxu0 0
        %8642 = vmatpush1.bf16.msra.mxu0 %v6221
        %8643 = vmatprep.subr.bf16.mxu0 0
        %8644 = vmatpush1.bf16.msra.mxu0 %v6222
        %8645 = vmatprep.subr.bf16.mxu0 0
        %8646 = vmatpush1.bf16.msra.mxu0 %v6223
        %8647 = vmatprep.subr.bf16.mxu0 0
        %8648 = vmatpush1.bf16.msra.mxu0 %v6224
        %8649 = vmatprep.mubr.bf16.mxu0 %v918
        %8650 = vmatmul.mubr.bf16.gmra.mrb[0].mxu0 %v917
        %v8651 = vpop.f32.mrb[0].mxu0
        %v8652 = vadd.f32 %v8612, %v8651
        %v8653 = vpop.f32.mrb[0].mxu0
        %v8654 = vpop.f32.mrb[0].mxu0
        %v8655 = vpop.f32.mrb[0].mxu0
        %8656 = vdwg.mxu0
        %8657 = vmatprep.subr.bf16.mxu0 0
        %8658 = vmatpush1.bf16.msra.mxu0 %v6225
        %8659 = vmatprep.subr.bf16.mxu0 0
        %8660 = vmatpush1.bf16.msra.mxu0 %v6226
        %8661 = vmatprep.subr.bf16.mxu0 0
        %8662 = vmatpush1.bf16.msra.mxu0 %v6227
        %8663 = vmatprep.subr.bf16.mxu0 0
        %8664 = vmatpush1.bf16.msra.mxu0 %v6228
        %8665 = vmatprep.subr.bf16.mxu0 0
        %8666 = vmatpush1.bf16.msra.mxu0 %v6229
        %8667 = vmatprep.subr.bf16.mxu0 0
        %8668 = vmatpush1.bf16.msra.mxu0 %v6230
        %8669 = vmatprep.subr.bf16.mxu0 0
        %8670 = vmatpush1.bf16.msra.mxu0 %v6231
        %8671 = vmatprep.subr.bf16.mxu0 0
        %8672 = vmatpush1.bf16.msra.mxu0 %v6232
        %8673 = vmatprep.subr.bf16.mxu0 0
        %8674 = vmatpush1.bf16.msra.mxu0 %v6233
        %8675 = vmatprep.subr.bf16.mxu0 0
        %8676 = vmatpush1.bf16.msra.mxu0 %v6234
        %8677 = vmatprep.subr.bf16.mxu0 0
        %8678 = vmatpush1.bf16.msra.mxu0 %v6235
        %8679 = vmatprep.subr.bf16.mxu0 0
        %8680 = vmatpush1.bf16.msra.mxu0 %v6236
        %8681 = vmatprep.subr.bf16.mxu0 0
        %8682 = vmatpush1.bf16.msra.mxu0 %v6237
        %8683 = vmatprep.subr.bf16.mxu0 0
        %8684 = vmatpush1.bf16.msra.mxu0 %v6238
        %8685 = vmatprep.subr.bf16.mxu0 0
        %8686 = vmatpush1.bf16.msra.mxu0 %v6239
        %8687 = vmatprep.subr.bf16.mxu0 0
        %8688 = vmatpush1.bf16.msra.mxu0 %v6240
        %8689 = vmatprep.mubr.bf16.mxu0 %v920
        %8690 = vmatmul.mubr.bf16.gmra.mrb[0].mxu0 %v919
        %v8691 = vpop.f32.mrb[0].mxu0
        %v8692 = vadd.f32 %v8652, %v8691
        %v8693 = vpop.f32.mrb[0].mxu0
        %v8694 = vpop.f32.mrb[0].mxu0
        %v8695 = vpop.f32.mrb[0].mxu0
        %8696 = vdwg.mxu0
        %8697 = vmatprep.subr.bf16.mxu0 0
        %8698 = vmatpush1.bf16.msra.mxu0 %v6241
        %8699 = vmatprep.subr.bf16.mxu0 0
        %8700 = vmatpush1.bf16.msra.mxu0 %v6242
        %8701 = vmatprep.subr.bf16.mxu0 0
        %8702 = vmatpush1.bf16.msra.mxu0 %v6243
        %8703 = vmatprep.subr.bf16.mxu0 0
        %8704 = vmatpush1.bf16.msra.mxu0 %v6244
        %8705 = vmatprep.subr.bf16.mxu0 0
        %8706 = vmatpush1.bf16.msra.mxu0 %v6245
        %8707 = vmatprep.subr.bf16.mxu0 0
        %8708 = vmatpush1.bf16.msra.mxu0 %v6246
        %8709 = vmatprep.subr.bf16.mxu0 0
        %8710 = vmatpush1.bf16.msra.mxu0 %v6247
        %8711 = vmatprep.subr.bf16.mxu0 0
        %8712 = vmatpush1.bf16.msra.mxu0 %v6248
        %8713 = vmatprep.subr.bf16.mxu0 0
        %8714 = vmatpush1.bf16.msra.mxu0 %v6249
        %8715 = vmatprep.subr.bf16.mxu0 0
        %8716 = vmatpush1.bf16.msra.mxu0 %v6250
        %8717 = vmatprep.subr.bf16.mxu0 0
        %8718 = vmatpush1.bf16.msra.mxu0 %v6251
        %8719 = vmatprep.subr.bf16.mxu0 0
        %8720 = vmatpush1.bf16.msra.mxu0 %v6252
        %8721 = vmatprep.subr.bf16.mxu0 0
        %8722 = vmatpush1.bf16.msra.mxu0 %v6253
        %8723 = vmatprep.subr.bf16.mxu0 0
        %8724 = vmatpush1.bf16.msra.mxu0 %v6254
        %8725 = vmatprep.subr.bf16.mxu0 0
        %8726 = vmatpush1.bf16.msra.mxu0 %v6255
        %8727 = vmatprep.subr.bf16.mxu0 0
        %8728 = vmatpush1.bf16.msra.mxu0 %v6256
        %8729 = vmatprep.mubr.bf16.mxu0 %v922
        %8730 = vmatmul.mubr.bf16.gmra.mrb[0].mxu0 %v921
        %v8731 = vpop.f32.mrb[0].mxu0
        %v8732 = vadd.f32 %v8692, %v8731
        %v8733 = vpop.f32.mrb[0].mxu0
        %v8734 = vpop.f32.mrb[0].mxu0
        %v8735 = vpop.f32.mrb[0].mxu0
        %8736 = vdwg.mxu0
        %8737 = vmatprep.subr.bf16.mxu0 0
        %8738 = vmatpush1.bf16.msra.mxu0 %v6257
        %8739 = vmatprep.subr.bf16.mxu0 0
        %8740 = vmatpush1.bf16.msra.mxu0 %v6258
        %8741 = vmatprep.subr.bf16.mxu0 0
        %8742 = vmatpush1.bf16.msra.mxu0 %v6259
        %8743 = vmatprep.subr.bf16.mxu0 0
        %8744 = vmatpush1.bf16.msra.mxu0 %v6260
        %8745 = vmatprep.subr.bf16.mxu0 0
        %8746 = vmatpush1.bf16.msra.mxu0 %v6261
        %8747 = vmatprep.subr.bf16.mxu0 0
        %8748 = vmatpush1.bf16.msra.mxu0 %v6262
        %8749 = vmatprep.subr.bf16.mxu0 0
        %8750 = vmatpush1.bf16.msra.mxu0 %v6263
        %8751 = vmatprep.subr.bf16.mxu0 0
        %8752 = vmatpush1.bf16.msra.mxu0 %v6264
        %8753 = vmatprep.subr.bf16.mxu0 0
        %8754 = vmatpush1.bf16.msra.mxu0 %v6265
        %8755 = vmatprep.subr.bf16.mxu0 0
        %8756 = vmatpush1.bf16.msra.mxu0 %v6266
        %8757 = vmatprep.subr.bf16.mxu0 0
        %8758 = vmatpush1.bf16.msra.mxu0 %v6267
        %8759 = vmatprep.subr.bf16.mxu0 0
        %8760 = vmatpush1.bf16.msra.mxu0 %v6268
        %8761 = vmatprep.subr.bf16.mxu0 0
        %8762 = vmatpush1.bf16.msra.mxu0 %v6269
        %8763 = vmatprep.subr.bf16.mxu0 0
        %8764 = vmatpush1.bf16.msra.mxu0 %v6270
        %8765 = vmatprep.subr.bf16.mxu0 0
        %8766 = vmatpush1.bf16.msra.mxu0 %v6271
        %8767 = vmatprep.subr.bf16.mxu0 0
        %8768 = vmatpush1.bf16.msra.mxu0 %v6272
        %8769 = vmatprep.mubr.bf16.mxu0 %v924
        %8770 = vmatmul.mubr.bf16.gmra.mrb[0].mxu0 %v923
        %v8771 = vpop.f32.mrb[0].mxu0
        %v8772 = vadd.f32 %v8732, %v8771
        %v8773 = vpop.f32.mrb[0].mxu0
        %v8774 = vpop.f32.mrb[0].mxu0
        %v8775 = vpop.f32.mrb[0].mxu0
        %8776 = vdwg.mxu0
        %8777 = vmatprep.subr.bf16.mxu0 0
        %8778 = vmatpush1.bf16.msra.mxu0 %v6273
        %8779 = vmatprep.subr.bf16.mxu0 0
        %8780 = vmatpush1.bf16.msra.mxu0 %v6274
        %8781 = vmatprep.subr.bf16.mxu0 0
        %8782 = vmatpush1.bf16.msra.mxu0 %v6275
        %8783 = vmatprep.subr.bf16.mxu0 0
        %8784 = vmatpush1.bf16.msra.mxu0 %v6276
        %8785 = vmatprep.subr.bf16.mxu0 0
        %8786 = vmatpush1.bf16.msra.mxu0 %v6277
        %8787 = vmatprep.subr.bf16.mxu0 0
        %8788 = vmatpush1.bf16.msra.mxu0 %v6278
        %8789 = vmatprep.subr.bf16.mxu0 0
        %8790 = vmatpush1.bf16.msra.mxu0 %v6279
        %8791 = vmatprep.subr.bf16.mxu0 0
        %8792 = vmatpush1.bf16.msra.mxu0 %v6280
        %8793 = vmatprep.subr.bf16.mxu0 0
        %8794 = vmatpush1.bf16.msra.mxu0 %v6281
        %8795 = vmatprep.subr.bf16.mxu0 0
        %8796 = vmatpush1.bf16.msra.mxu0 %v6282
        %8797 = vmatprep.subr.bf16.mxu0 0
        %8798 = vmatpush1.bf16.msra.mxu0 %v6283
        %8799 = vmatprep.subr.bf16.mxu0 0
        %8800 = vmatpush1.bf16.msra.mxu0 %v6284
        %8801 = vmatprep.subr.bf16.mxu0 0
        %8802 = vmatpush1.bf16.msra.mxu0 %v6285
        %8803 = vmatprep.subr.bf16.mxu0 0
        %8804 = vmatpush1.bf16.msra.mxu0 %v6286
        %8805 = vmatprep.subr.bf16.mxu0 0
        %8806 = vmatpush1.bf16.msra.mxu0 %v6287
        %8807 = vmatprep.subr.bf16.mxu0 0
        %8808 = vmatpush1.bf16.msra.mxu0 %v6288
        %8809 = vmatprep.mubr.bf16.mxu0 %v926
        %8810 = vmatmul.mubr.bf16.gmra.mrb[0].mxu0 %v925
        %v8811 = vpop.f32.mrb[0].mxu0
        %v8812 = vadd.f32 %v8772, %v8811
        %v8813 = vpop.f32.mrb[0].mxu0
        %v8814 = vpop.f32.mrb[0].mxu0
        %v8815 = vpop.f32.mrb[0].mxu0
        %8816 = vdwg.mxu0
        %8817 = vmatprep.subr.bf16.mxu0 0
        %8818 = vmatpush1.bf16.msra.mxu0 %v6289
        %8819 = vmatprep.subr.bf16.mxu0 0
        %8820 = vmatpush1.bf16.msra.mxu0 %v6290
        %8821 = vmatprep.subr.bf16.mxu0 0
        %8822 = vmatpush1.bf16.msra.mxu0 %v6291
        %8823 = vmatprep.subr.bf16.mxu0 0
        %8824 = vmatpush1.bf16.msra.mxu0 %v6292
        %8825 = vmatprep.subr.bf16.mxu0 0
        %8826 = vmatpush1.bf16.msra.mxu0 %v6293
        %8827 = vmatprep.subr.bf16.mxu0 0
        %8828 = vmatpush1.bf16.msra.mxu0 %v6294
        %8829 = vmatprep.subr.bf16.mxu0 0
        %8830 = vmatpush1.bf16.msra.mxu0 %v6295
        %8831 = vmatprep.subr.bf16.mxu0 0
        %8832 = vmatpush1.bf16.msra.mxu0 %v6296
        %8833 = vmatprep.subr.bf16.mxu0 0
        %8834 = vmatpush1.bf16.msra.mxu0 %v6297
        %8835 = vmatprep.subr.bf16.mxu0 0
        %8836 = vmatpush1.bf16.msra.mxu0 %v6298
        %8837 = vmatprep.subr.bf16.mxu0 0
        %8838 = vmatpush1.bf16.msra.mxu0 %v6299
        %8839 = vmatprep.subr.bf16.mxu0 0
        %8840 = vmatpush1.bf16.msra.mxu0 %v6300
        %8841 = vmatprep.subr.bf16.mxu0 0
        %8842 = vmatpush1.bf16.msra.mxu0 %v6301
        %8843 = vmatprep.subr.bf16.mxu0 0
        %8844 = vmatpush1.bf16.msra.mxu0 %v6302
        %8845 = vmatprep.subr.bf16.mxu0 0
        %8846 = vmatpush1.bf16.msra.mxu0 %v6303
        %8847 = vmatprep.subr.bf16.mxu0 0
        %8848 = vmatpush1.bf16.msra.mxu0 %v6304
        %8849 = vmatprep.mubr.bf16.mxu0 %v928
        %8850 = vmatmul.mubr.bf16.gmra.mrb[0].mxu0 %v927
        %v8851 = vpop.f32.mrb[0].mxu0
        %v8852 = vadd.f32 %v8812, %v8851
        %v8853 = vpop.f32.mrb[0].mxu0
        %v8854 = vpop.f32.mrb[0].mxu0
        %v8855 = vpop.f32.mrb[0].mxu0
        %8856 = vdwg.mxu0
        %8857 = vmatprep.subr.bf16.mxu0 0
        %8858 = vmatpush1.bf16.msra.mxu0 %v6305
        %8859 = vmatprep.subr.bf16.mxu0 0
        %8860 = vmatpush1.bf16.msra.mxu0 %v6306
        %8861 = vmatprep.subr.bf16.mxu0 0
        %8862 = vmatpush1.bf16.msra.mxu0 %v6307
        %8863 = vmatprep.subr.bf16.mxu0 0
        %8864 = vmatpush1.bf16.msra.mxu0 %v6308
        %8865 = vmatprep.subr.bf16.mxu0 0
        %8866 = vmatpush1.bf16.msra.mxu0 %v6309
        %8867 = vmatprep.subr.bf16.mxu0 0
        %8868 = vmatpush1.bf16.msra.mxu0 %v6310
        %8869 = vmatprep.subr.bf16.mxu0 0
        %8870 = vmatpush1.bf16.msra.mxu0 %v6311
        %8871 = vmatprep.subr.bf16.mxu0 0
        %8872 = vmatpush1.bf16.msra.mxu0 %v6312
        %8873 = vmatprep.subr.bf16.mxu0 0
        %8874 = vmatpush1.bf16.msra.mxu0 %v6313
        %8875 = vmatprep.subr.bf16.mxu0 0
        %8876 = vmatpush1.bf16.msra.mxu0 %v6314
        %8877 = vmatprep.subr.bf16.mxu0 0
        %8878 = vmatpush1.bf16.msra.mxu0 %v6315
        %8879 = vmatprep.subr.bf16.mxu0 0
        %8880 = vmatpush1.bf16.msra.mxu0 %v6316
        %8881 = vmatprep.subr.bf16.mxu0 0
        %8882 = vmatpush1.bf16.msra.mxu0 %v6317
        %8883 = vmatprep.subr.bf16.mxu0 0
        %8884 = vmatpush1.bf16.msra.mxu0 %v6318
        %8885 = vmatprep.subr.bf16.mxu0 0
        %8886 = vmatpush1.bf16.msra.mxu0 %v6319
        %8887 = vmatprep.subr.bf16.mxu0 0
        %8888 = vmatpush1.bf16.msra.mxu0 %v6320
        %8889 = vmatprep.mubr.bf16.mxu0 %v930
        %8890 = vmatmul.mubr.bf16.gmra.mrb[0].mxu0 %v929
        %v8891 = vpop.f32.mrb[0].mxu0
        %v8892 = vadd.f32 %v8852, %v8891
        %v8893 = vpop.f32.mrb[0].mxu0
        %v8894 = vpop.f32.mrb[0].mxu0
        %v8895 = vpop.f32.mrb[0].mxu0
        %8896 = vdwg.mxu0
        %8897 = vmatprep.subr.bf16.mxu0 0
        %8898 = vmatpush1.bf16.msra.mxu0 %v6321
        %8899 = vmatprep.subr.bf16.mxu0 0
        %8900 = vmatpush1.bf16.msra.mxu0 %v6322
        %8901 = vmatprep.subr.bf16.mxu0 0
        %8902 = vmatpush1.bf16.msra.mxu0 %v6323
        %8903 = vmatprep.subr.bf16.mxu0 0
        %8904 = vmatpush1.bf16.msra.mxu0 %v6324
        %8905 = vmatprep.subr.bf16.mxu0 0
        %8906 = vmatpush1.bf16.msra.mxu0 %v6325
        %8907 = vmatprep.subr.bf16.mxu0 0
        %8908 = vmatpush1.bf16.msra.mxu0 %v6326
        %8909 = vmatprep.subr.bf16.mxu0 0
        %8910 = vmatpush1.bf16.msra.mxu0 %v6327
        %8911 = vmatprep.subr.bf16.mxu0 0
        %8912 = vmatpush1.bf16.msra.mxu0 %v6328
        %8913 = vmatprep.subr.bf16.mxu0 0
        %8914 = vmatpush1.bf16.msra.mxu0 %v6329
        %8915 = vmatprep.subr.bf16.mxu0 0
        %8916 = vmatpush1.bf16.msra.mxu0 %v6330
        %8917 = vmatprep.subr.bf16.mxu0 0
        %8918 = vmatpush1.bf16.msra.mxu0 %v6331
        %8919 = vmatprep.subr.bf16.mxu0 0
        %8920 = vmatpush1.bf16.msra.mxu0 %v6332
        %8921 = vmatprep.subr.bf16.mxu0 0
        %8922 = vmatpush1.bf16.msra.mxu0 %v6333
        %8923 = vmatprep.subr.bf16.mxu0 0
        %8924 = vmatpush1.bf16.msra.mxu0 %v6334
        %8925 = vmatprep.subr.bf16.mxu0 0
        %8926 = vmatpush1.bf16.msra.mxu0 %v6335
        %8927 = vmatprep.subr.bf16.mxu0 0
        %8928 = vmatpush1.bf16.msra.mxu0 %v6336
        %8929 = vmatprep.mubr.bf16.mxu0 %v932
        %8930 = vmatmul.mubr.bf16.gmra.mrb[0].mxu0 %v931
        %v8931 = vpop.f32.mrb[0].mxu0
        %v8932 = vadd.f32 %v8892, %v8931
        %v8933 = vpop.f32.mrb[0].mxu0
        %v8934 = vpop.f32.mrb[0].mxu0
        %v8935 = vpop.f32.mrb[0].mxu0
        %8936 = vdwg.mxu0
        %8937 = vmatprep.subr.bf16.mxu0 0
        %8938 = vmatpush1.bf16.msra.mxu0 %v6337
        %8939 = vmatprep.subr.bf16.mxu0 0
        %8940 = vmatpush1.bf16.msra.mxu0 %v6338
        %8941 = vmatprep.subr.bf16.mxu0 0
        %8942 = vmatpush1.bf16.msra.mxu0 %v6339
        %8943 = vmatprep.subr.bf16.mxu0 0
        %8944 = vmatpush1.bf16.msra.mxu0 %v6340
        %8945 = vmatprep.subr.bf16.mxu0 0
        %8946 = vmatpush1.bf16.msra.mxu0 %v6341
        %8947 = vmatprep.subr.bf16.mxu0 0
        %8948 = vmatpush1.bf16.msra.mxu0 %v6342
        %8949 = vmatprep.subr.bf16.mxu0 0
        %8950 = vmatpush1.bf16.msra.mxu0 %v6343
        %8951 = vmatprep.subr.bf16.mxu0 0
        %8952 = vmatpush1.bf16.msra.mxu0 %v6344
        %8953 = vmatprep.subr.bf16.mxu0 0
        %8954 = vmatpush1.bf16.msra.mxu0 %v6345
        %8955 = vmatprep.subr.bf16.mxu0 0
        %8956 = vmatpush1.bf16.msra.mxu0 %v6346
        %8957 = vmatprep.subr.bf16.mxu0 0
        %8958 = vmatpush1.bf16.msra.mxu0 %v6347
        %8959 = vmatprep.subr.bf16.mxu0 0
        %8960 = vmatpush1.bf16.msra.mxu0 %v6348
        %8961 = vmatprep.subr.bf16.mxu0 0
        %8962 = vmatpush1.bf16.msra.mxu0 %v6349
        %8963 = vmatprep.subr.bf16.mxu0 0
        %8964 = vmatpush1.bf16.msra.mxu0 %v6350
        %8965 = vmatprep.subr.bf16.mxu0 0
        %8966 = vmatpush1.bf16.msra.mxu0 %v6351
        %8967 = vmatprep.subr.bf16.mxu0 0
        %8968 = vmatpush1.bf16.msra.mxu0 %v6352
        %8969 = vmatprep.mubr.bf16.mxu0 %v934
        %8970 = vmatmul.mubr.bf16.gmra.mrb[0].mxu0 %v933
        %v8971 = vpop.f32.mrb[0].mxu0
        %v8972 = vadd.f32 %v8932, %v8971
        %v8973 = vpop.f32.mrb[0].mxu0
        %v8974 = vpop.f32.mrb[0].mxu0
        %v8975 = vpop.f32.mrb[0].mxu0
        %8976 = vdwg.mxu0
        %8977 = vmatprep.subr.bf16.mxu0 0
        %8978 = vmatpush1.bf16.msra.mxu0 %v6353
        %8979 = vmatprep.subr.bf16.mxu0 0
        %8980 = vmatpush1.bf16.msra.mxu0 %v6354
        %8981 = vmatprep.subr.bf16.mxu0 0
        %8982 = vmatpush1.bf16.msra.mxu0 %v6355
        %8983 = vmatprep.subr.bf16.mxu0 0
        %8984 = vmatpush1.bf16.msra.mxu0 %v6356
        %8985 = vmatprep.subr.bf16.mxu0 0
        %8986 = vmatpush1.bf16.msra.mxu0 %v6357
        %8987 = vmatprep.subr.bf16.mxu0 0
        %8988 = vmatpush1.bf16.msra.mxu0 %v6358
        %8989 = vmatprep.subr.bf16.mxu0 0
        %8990 = vmatpush1.bf16.msra.mxu0 %v6359
        %8991 = vmatprep.subr.bf16.mxu0 0
        %8992 = vmatpush1.bf16.msra.mxu0 %v6360
        %8993 = vmatprep.subr.bf16.mxu0 0
        %8994 = vmatpush1.bf16.msra.mxu0 %v6361
        %8995 = vmatprep.subr.bf16.mxu0 0
        %8996 = vmatpush1.bf16.msra.mxu0 %v6362
        %8997 = vmatprep.subr.bf16.mxu0 0
        %8998 = vmatpush1.bf16.msra.mxu0 %v6363
        %8999 = vmatprep.subr.bf16.mxu0 0
        %9000 = vmatpush1.bf16.msra.mxu0 %v6364
        %9001 = vmatprep.subr.bf16.mxu0 0
        %9002 = vmatpush1.bf16.msra.mxu0 %v6365
        %9003 = vmatprep.subr.bf16.mxu0 0
        %9004 = vmatpush1.bf16.msra.mxu0 %v6366
        %9005 = vmatprep.subr.bf16.mxu0 0
        %9006 = vmatpush1.bf16.msra.mxu0 %v6367
        %9007 = vmatprep.subr.bf16.mxu0 0
        %9008 = vmatpush1.bf16.msra.mxu0 %v6368
        %9009 = vmatprep.mubr.bf16.mxu0 %v936
        %9010 = vmatmul.mubr.bf16.gmra.mrb[0].mxu0 %v935
        %v9011 = vpop.f32.mrb[0].mxu0
        %v9012 = vadd.f32 %v8972, %v9011
        %v9013 = vpop.f32.mrb[0].mxu0
        %v9014 = vpop.f32.mrb[0].mxu0
        %v9015 = vpop.f32.mrb[0].mxu0
        %9016 = vdwg.mxu0
        %9017 = vmatprep.subr.bf16.mxu0 0
        %9018 = vmatpush1.bf16.msra.mxu0 %v6369
        %9019 = vmatprep.subr.bf16.mxu0 0
        %9020 = vmatpush1.bf16.msra.mxu0 %v6370
        %9021 = vmatprep.subr.bf16.mxu0 0
        %9022 = vmatpush1.bf16.msra.mxu0 %v6371
        %9023 = vmatprep.subr.bf16.mxu0 0
        %9024 = vmatpush1.bf16.msra.mxu0 %v6372
        %9025 = vmatprep.subr.bf16.mxu0 0
        %9026 = vmatpush1.bf16.msra.mxu0 %v6373
        %9027 = vmatprep.subr.bf16.mxu0 0
        %9028 = vmatpush1.bf16.msra.mxu0 %v6374
        %9029 = vmatprep.subr.bf16.mxu0 0
        %9030 = vmatpush1.bf16.msra.mxu0 %v6375
        %9031 = vmatprep.subr.bf16.mxu0 0
        %9032 = vmatpush1.bf16.msra.mxu0 %v6376
        %9033 = vmatprep.subr.bf16.mxu0 0
        %9034 = vmatpush1.bf16.msra.mxu0 %v6377
        %9035 = vmatprep.subr.bf16.mxu0 0
        %9036 = vmatpush1.bf16.msra.mxu0 %v6378
        %9037 = vmatprep.subr.bf16.mxu0 0
        %9038 = vmatpush1.bf16.msra.mxu0 %v6379
        %9039 = vmatprep.subr.bf16.mxu0 0
        %9040 = vmatpush1.bf16.msra.mxu0 %v6380
        %9041 = vmatprep.subr.bf16.mxu0 0
        %9042 = vmatpush1.bf16.msra.mxu0 %v6381
        %9043 = vmatprep.subr.bf16.mxu0 0
        %9044 = vmatpush1.bf16.msra.mxu0 %v6382
        %9045 = vmatprep.subr.bf16.mxu0 0
        %9046 = vmatpush1.bf16.msra.mxu0 %v6383
        %9047 = vmatprep.subr.bf16.mxu0 0
        %9048 = vmatpush1.bf16.msra.mxu0 %v6384
        %9049 = vmatprep.mubr.bf16.mxu0 %v938
        %9050 = vmatmul.mubr.bf16.gmra.mrb[0].mxu0 %v937
        %v9051 = vpop.f32.mrb[0].mxu0
        %v9052 = vadd.f32 %v9012, %v9051
        %v9053 = vpop.f32.mrb[0].mxu0
        %v9054 = vpop.f32.mrb[0].mxu0
        %v9055 = vpop.f32.mrb[0].mxu0
        %9056 = vdwg.mxu0
        %9057 = vmatprep.subr.bf16.mxu0 0
        %9058 = vmatpush1.bf16.msra.mxu0 %v6385
        %9059 = vmatprep.subr.bf16.mxu0 0
        %9060 = vmatpush1.bf16.msra.mxu0 %v6386
        %9061 = vmatprep.subr.bf16.mxu0 0
        %9062 = vmatpush1.bf16.msra.mxu0 %v6387
        %9063 = vmatprep.subr.bf16.mxu0 0
        %9064 = vmatpush1.bf16.msra.mxu0 %v6388
        %9065 = vmatprep.subr.bf16.mxu0 0
        %9066 = vmatpush1.bf16.msra.mxu0 %v6389
        %9067 = vmatprep.subr.bf16.mxu0 0
        %9068 = vmatpush1.bf16.msra.mxu0 %v6390
        %9069 = vmatprep.subr.bf16.mxu0 0
        %9070 = vmatpush1.bf16.msra.mxu0 %v6391
        %9071 = vmatprep.subr.bf16.mxu0 0
        %9072 = vmatpush1.bf16.msra.mxu0 %v6392
        %9073 = vmatprep.subr.bf16.mxu0 0
        %9074 = vmatpush1.bf16.msra.mxu0 %v6393
        %9075 = vmatprep.subr.bf16.mxu0 0
        %9076 = vmatpush1.bf16.msra.mxu0 %v6394
        %9077 = vmatprep.subr.bf16.mxu0 0
        %9078 = vmatpush1.bf16.msra.mxu0 %v6395
        %9079 = vmatprep.subr.bf16.mxu0 0
        %9080 = vmatpush1.bf16.msra.mxu0 %v6396
        %9081 = vmatprep.subr.bf16.mxu0 0
        %9082 = vmatpush1.bf16.msra.mxu0 %v6397
        %9083 = vmatprep.subr.bf16.mxu0 0
        %9084 = vmatpush1.bf16.msra.mxu0 %v6398
        %9085 = vmatprep.subr.bf16.mxu0 0
        %9086 = vmatpush1.bf16.msra.mxu0 %v6399
        %9087 = vmatprep.subr.bf16.mxu0 0
        %9088 = vmatpush1.bf16.msra.mxu0 %v6400
        %9089 = vmatprep.mubr.bf16.mxu0 %v940
        %9090 = vmatmul.mubr.bf16.gmra.mrb[0].mxu0 %v939
        %v9091 = vpop.f32.mrb[0].mxu0
        %v9092 = vadd.f32 %v9052, %v9091
        %v9093 = vpop.f32.mrb[0].mxu0
        %v9094 = vpop.f32.mrb[0].mxu0
        %v9095 = vpop.f32.mrb[0].mxu0
        %9096 = vdwg.mxu0
        %9097 = vmatprep.subr.bf16.mxu0 0
        %9098 = vmatpush1.bf16.msra.mxu0 %v6401
        %9099 = vmatprep.subr.bf16.mxu0 0
        %9100 = vmatpush1.bf16.msra.mxu0 %v6402
        %9101 = vmatprep.subr.bf16.mxu0 0
        %9102 = vmatpush1.bf16.msra.mxu0 %v6403
        %9103 = vmatprep.subr.bf16.mxu0 0
        %9104 = vmatpush1.bf16.msra.mxu0 %v6404
        %9105 = vmatprep.subr.bf16.mxu0 0
        %9106 = vmatpush1.bf16.msra.mxu0 %v6405
        %9107 = vmatprep.subr.bf16.mxu0 0
        %9108 = vmatpush1.bf16.msra.mxu0 %v6406
        %9109 = vmatprep.subr.bf16.mxu0 0
        %9110 = vmatpush1.bf16.msra.mxu0 %v6407
        %9111 = vmatprep.subr.bf16.mxu0 0
        %9112 = vmatpush1.bf16.msra.mxu0 %v6408
        %9113 = vmatprep.subr.bf16.mxu0 0
        %9114 = vmatpush1.bf16.msra.mxu0 %v6409
        %9115 = vmatprep.subr.bf16.mxu0 0
        %9116 = vmatpush1.bf16.msra.mxu0 %v6410
        %9117 = vmatprep.subr.bf16.mxu0 0
        %9118 = vmatpush1.bf16.msra.mxu0 %v6411
        %9119 = vmatprep.subr.bf16.mxu0 0
        %9120 = vmatpush1.bf16.msra.mxu0 %v6412
        %9121 = vmatprep.subr.bf16.mxu0 0
        %9122 = vmatpush1.bf16.msra.mxu0 %v6413
        %9123 = vmatprep.subr.bf16.mxu0 0
        %9124 = vmatpush1.bf16.msra.mxu0 %v6414
        %9125 = vmatprep.subr.bf16.mxu0 0
        %9126 = vmatpush1.bf16.msra.mxu0 %v6415
        %9127 = vmatprep.subr.bf16.mxu0 0
        %9128 = vmatpush1.bf16.msra.mxu0 %v6416
        %9129 = vmatprep.mubr.bf16.mxu0 %v942
        %9130 = vmatmul.mubr.bf16.gmra.mrb[0].mxu0 %v941
        %v9131 = vpop.f32.mrb[0].mxu0
        %v9132 = vadd.f32 %v9092, %v9131
        %v9133 = vpop.f32.mrb[0].mxu0
        %v9134 = vpop.f32.mrb[0].mxu0
        %v9135 = vpop.f32.mrb[0].mxu0
        %9136 = vdwg.mxu0
        %9137 = vmatprep.subr.bf16.mxu0 0
        %9138 = vmatpush1.bf16.msra.mxu0 %v6417
        %9139 = vmatprep.subr.bf16.mxu0 0
        %9140 = vmatpush1.bf16.msra.mxu0 %v6418
        %9141 = vmatprep.subr.bf16.mxu0 0
        %9142 = vmatpush1.bf16.msra.mxu0 %v6419
        %9143 = vmatprep.subr.bf16.mxu0 0
        %9144 = vmatpush1.bf16.msra.mxu0 %v6420
        %9145 = vmatprep.subr.bf16.mxu0 0
        %9146 = vmatpush1.bf16.msra.mxu0 %v6421
        %9147 = vmatprep.subr.bf16.mxu0 0
        %9148 = vmatpush1.bf16.msra.mxu0 %v6422
        %9149 = vmatprep.subr.bf16.mxu0 0
        %9150 = vmatpush1.bf16.msra.mxu0 %v6423
        %9151 = vmatprep.subr.bf16.mxu0 0
        %9152 = vmatpush1.bf16.msra.mxu0 %v6424
        %9153 = vmatprep.subr.bf16.mxu0 0
        %9154 = vmatpush1.bf16.msra.mxu0 %v6425
        %9155 = vmatprep.subr.bf16.mxu0 0
        %9156 = vmatpush1.bf16.msra.mxu0 %v6426
        %9157 = vmatprep.subr.bf16.mxu0 0
        %9158 = vmatpush1.bf16.msra.mxu0 %v6427
        %9159 = vmatprep.subr.bf16.mxu0 0
        %9160 = vmatpush1.bf16.msra.mxu0 %v6428
        %9161 = vmatprep.subr.bf16.mxu0 0
        %9162 = vmatpush1.bf16.msra.mxu0 %v6429
        %9163 = vmatprep.subr.bf16.mxu0 0
        %9164 = vmatpush1.bf16.msra.mxu0 %v6430
        %9165 = vmatprep.subr.bf16.mxu0 0
        %9166 = vmatpush1.bf16.msra.mxu0 %v6431
        %9167 = vmatprep.subr.bf16.mxu0 0
        %9168 = vmatpush1.bf16.msra.mxu0 %v6432
        %9169 = vmatprep.mubr.bf16.mxu0 %v944
        %9170 = vmatmul.mubr.bf16.gmra.mrb[0].mxu0 %v943
        %v9171 = vpop.f32.mrb[0].mxu0
        %v9172 = vadd.f32 %v9132, %v9171
        %v9173 = vpop.f32.mrb[0].mxu0
        %v9174 = vpop.f32.mrb[0].mxu0
        %v9175 = vpop.f32.mrb[0].mxu0
        %9176 = vdwg.mxu0
        %v9177 = vadd.f32 %v282, %v9172
        %9178 = vst [vmem:[#allocation2] sm:$0x3] %v9177
        %p9179 = scmp.eq.s32.totalorder %s25, 1
        // Predicated region
        $region49: #{classifier_forward.2} parent=31 // pred_check
          %p9180 = pneg %p9179
        $region50: #{classifier_forward.2} parent=31 // pred_check_branch
          %9182 = sbr.rel (%p9180) target = $region52
        $region51: #{classifier_forward.2} parent=31 // pred_region
          %v9183 = vld [vmem:[#allocation2] sm:$0x3]
          %v9184 = vld [vmem:[%s239] sm:$0x1]
          %v9186 = vlaneseq
          %v9187 = vshrl.u32 %v9186, 7
          %v9188 = vsub.s32 0, %v9187
          %v9189 = vrot.slane %v9184, %v9188
          %v9191 = vadd.f32 %v9183, %v9189
          %v9192 = vmax.f32 %v9191, 0.0
          %9193 = vst [vmem:[%s275] sm:$0x3] %v9192
        $region52: #{classifier_forward.2} parent=31 // pred_fallthru
          _
        %p9194 = scmp.lt.s32.totalorder %s24, 1
        %s9195 = scalar_select %p9194, %s24, 1
        %s9196 = smul.addr %s9195, 2
        %s9197 = scalar_lea.vmem %s3, %s9196
        // Predicated region
        $region53: #{classifier_forward.2} parent=31 // pred_check
          %p9198 = pneg %p130
        $region54: #{classifier_forward.2} parent=31 // pred_check_branch
          %9200 = sbr.rel (%p9198) target = $region56
        $region55: #{classifier_forward.2} parent=31 // pred_region
          _
        $region56: #{classifier_forward.2} parent=31 // pred_fallthru
          _
      $region32: #{classifier_forward.2} parent=5 // pred_fallthru
        _
      %p9201 = scmp.le.s32.totalorder 2, %s15
      // Predicated region
      $region57: #{classifier_forward.2} parent=5 // pred_check
        %p9202 = pneg %p9201
      $region58: #{classifier_forward.2} parent=5 // pred_check_branch
        %9204 = sbr.rel (%p9202) target = $region60
      $region59: #{classifier_forward.2} parent=5 // pred_region
        %s9205 = ssub.s32 %s15, 2
        // Predicated region
        $region61: #{classifier_forward.2} parent=59 // pred_check
          %p9206 = pneg %p136
        $region62: #{classifier_forward.2} parent=59 // pred_check_branch
          %9208 = sbr.rel (%p9206) target = $region64
        $region63: #{classifier_forward.2} parent=59 // pred_region
          %p9209 = scmp.lt.s32.totalorder %s26, 1
          %s9210 = scalar_select %p9209, %s26, 1
          %s9211 = smul.addr %s9210, 2
          %s9212 = scalar_lea.vmem %s3, %s9211
        $region64: #{classifier_forward.2} parent=59 // pred_fallthru
          _
      $region60: #{classifier_forward.2} parent=5 // pred_fallthru
        _
    $region6: #{classifier_forward.2} parent=1 // loop_footer
      %s19 = sadd.s32 1, %s15
    $region7: #{classifier_forward.2} parent=1 // loop_footer_branch
      %14 = sbr.rel target = $region3
    $region8: #{classifier_forward.2} parent=1 // loop_exit
      _
    %9213 = vsyncpa [#allocation4], 1
    %s9214 = scalar_lea.sflag [#allocation4], 1
    %9215 = vsyncpa %s9214, 1
    %9216 = vsyncpa [#allocation6], 1
    %s9217 = scalar_lea.sflag [#allocation6], 1
    %9218 = vsyncpa %s9217, 1

</llo_original>
